<compile_context>
chip_gen: v7x
topology: tpu7x:2x2x1
jax: 0.10.0
libtpu: 0.0.40
codegen_flags: <defaults>
</compile_context>

<pallas_src>
import functools

import jax
import jax.numpy as jnp
from jax import lax
from jax.experimental import pallas as pl
from jax.experimental.pallas import tpu as pltpu

EPS = 1e-5


def _silu(v):
    # x * sigmoid(x); exp goes to the EUP, rest stays f32 on the VPU.
    return v * (1.0 / (1.0 + jnp.exp(-v)))


def _group_norm(x2, a_ref, gamma_ref, beta_ref, group_size):
    # x2: [N, C] f32. a_ref: [C, C] 0/1 group-membership. gamma/beta: [1, C].
    n_elems = x2.shape[0] * group_size
    s = jnp.sum(x2, axis=0, keepdims=True)                  # [1, C]
    ss = jnp.sum(x2 * x2, axis=0, keepdims=True)            # [1, C]
    if group_size == 1:
        gs, gss = s, ss                                     # per-channel norm
    else:
        stats = jnp.concatenate([s, ss], axis=0)            # [2, C]
        g = jnp.dot(stats, a_ref[...], preferred_element_type=jnp.float32)
        gs, gss = g[0:1, :], g[1:2, :]
    inv_n = 1.0 / float(n_elems)
    mean = gs * inv_n
    var = jnp.maximum(gss * inv_n - mean * mean, 0.0)       # clamp >= 0
    inv = lax.rsqrt(var + EPS)
    return (x2 - mean) * inv * gamma_ref[...] + beta_ref[...]


def _conv3x3(pad_ref, w_ref, H, W, C):
    # pad_ref: VMEM [(H+2), (W+2), C] bf16 with a zero 1-px border.
    # w_ref:   [(9*C), Cout] bf16.   Returns [H*W, Cout] f32.
    taps = []
    for dh in range(3):
        for dw in range(3):
            taps.append(pad_ref[dh:dh + H, dw:dw + W, :].reshape(H * W, C))
    patches = jnp.concatenate(taps, axis=1)                 # [H*W, 9*C] bf16
    return jnp.dot(patches, w_ref[...], preferred_element_type=jnp.float32)


def down_block_kernel(
    x_ref, tbias_ref,
    gn1_a_ref, gn1_g_ref, gn1_b_ref, w1_ref, b1_ref,
    gn2_a_ref, gn2_g_ref, gn2_b_ref, w2_ref, b2_ref,
    out_ref, pool_ref,
    pad1_ref, pad2_ref,
    *, H, W, Cin, Cout, g1_size, g2_size,
):
    # Zero the padded scratches (cheap; keeps the 1-px border zero and stays
    # correct even when the batch grid axis is split across TensorCores).
    pad1_ref[...] = jnp.zeros((H + 2, W + 2, Cin), jnp.bfloat16)
    pad2_ref[...] = jnp.zeros((H + 2, W + 2, Cout), jnp.bfloat16)

    x2 = x_ref[0].reshape(H * W, Cin)                       # NHWC tile -> [HW, Cin]

    # --- conv1 = GroupNorm -> Conv2d(3x3, pad=1); + bias + hoisted time bias.
    xn = _group_norm(x2, gn1_a_ref, gn1_g_ref, gn1_b_ref, g1_size)
    pad1_ref[1:H + 1, 1:W + 1, :] = xn.reshape(H, W, Cin).astype(jnp.bfloat16)
    acc = _conv3x3(pad1_ref, w1_ref, H, W, Cin)
    acc = acc + b1_ref[...] + tbias_ref[0]                  # [HW, Cout]

    # --- conv2 = GroupNorm(16) -> Conv2d(3x3, pad=1) -> SiLU.
    yn = _group_norm(acc, gn2_a_ref, gn2_g_ref, gn2_b_ref, g2_size)
    pad2_ref[1:H + 1, 1:W + 1, :] = yn.reshape(H, W, Cout).astype(jnp.bfloat16)
    acc2 = _conv3x3(pad2_ref, w2_ref, H, W, Cout) + b2_ref[...]
    y = _silu(acc2)                                         # [HW, Cout] f32

    # Channel-major output: [Cout, H*W] == NCHW layout, lane-dense (H*W lanes).
    out_ref[0] = y.T

    # --- MaxPool2d(2) from the live value (no readback of out_ref).
    Hh, Wh = H // 2, W // 2
    y4 = y.reshape(Hh, 2, Wh, 2, Cout)
    pooled = jnp.maximum(
        jnp.maximum(y4[:, 0, :, 0, :], y4[:, 0, :, 1, :]),
        jnp.maximum(y4[:, 1, :, 0, :], y4[:, 1, :, 1, :]))  # [Hh, Wh, Cout]
    pool_ref[0] = pooled.reshape(Hh * Wh, Cout).T           # [Cout, Hh*Wh]


def down_block(x_nchw, t_emb, params):
    """Pallas implementation. x_nchw: [B, Cin, H, W]; t_emb: [B, T].
    Returns (y, maxpool(y)) in NCHW, matching the PyTorch module."""
    B, Cin, H, W = x_nchw.shape
    Cout = params["conv1_w"].shape[0]
    g1 = Cin if Cin % 8 else 8
    g2 = 16
    f32 = jnp.float32
    HIGH = lax.Precision.HIGHEST

    # Kernel works on NHWC tiles (lane = channels); input transpose is tiny
    # (Cin channels). Outputs come back already NCHW (channel-major).
    x = jnp.transpose(x_nchw, (0, 2, 3, 1)).astype(f32)

    # Hoisted time-MLP: one batched matmul for all B, outside the kernel.
    h = jnp.dot(t_emb.astype(f32), params["lin1_w"].T, precision=HIGH) + params["lin1_b"]
    h = jax.nn.silu(h)
    t_bias = jnp.dot(h, params["lin2_w"].T, precision=HIGH) + params["lin2_b"]
    t_bias = t_bias.reshape(B, 1, Cout).astype(f32)         # [B, 1, Cout]

    def group_mat(C, groups):
        g = jnp.arange(C) // (C // groups)
        return (g[:, None] == g[None, :]).astype(f32)

    gn1_a = group_mat(Cin, g1)
    gn2_a = group_mat(Cout, g2)
    gn1_g = params["gn1_g"].reshape(1, Cin).astype(f32)
    gn1_b = params["gn1_b"].reshape(1, Cin).astype(f32)
    gn2_g = params["gn2_g"].reshape(1, Cout).astype(f32)
    gn2_b = params["gn2_b"].reshape(1, Cout).astype(f32)
    # Conv weights (O, I, 3, 3) -> (3, 3, I, O) -> (9*I, O), bf16 MXU operand.
    w1 = jnp.transpose(params["conv1_w"], (2, 3, 1, 0)).reshape(9 * Cin, Cout)
    w2 = jnp.transpose(params["conv2_w"], (2, 3, 1, 0)).reshape(9 * Cout, Cout)
    w1 = w1.astype(jnp.bfloat16)
    w2 = w2.astype(jnp.bfloat16)
    b1 = params["conv1_b"].reshape(1, Cout).astype(f32)
    b2 = params["conv2_b"].reshape(1, Cout).astype(f32)

    def full_spec(shape):
        return pl.BlockSpec(shape, lambda b: (0,) * len(shape))

    kernel = functools.partial(
        down_block_kernel, H=H, W=W, Cin=Cin, Cout=Cout,
        g1_size=Cin // g1, g2_size=Cout // g2)

    Hh, Wh = H // 2, W // 2
    y_flat, pool_flat = pl.pallas_call(
        kernel,
        out_shape=(
            jax.ShapeDtypeStruct((B, Cout, H * W), f32),
            jax.ShapeDtypeStruct((B, Cout, Hh * Wh), f32),
        ),
        grid=(B,),
        in_specs=[
            pl.BlockSpec((1, H, W, Cin), lambda b: (b, 0, 0, 0)),
            pl.BlockSpec((1, 1, Cout), lambda b: (b, 0, 0)),
            full_spec((Cin, Cin)), full_spec((1, Cin)), full_spec((1, Cin)),
            full_spec((9 * Cin, Cout)), full_spec((1, Cout)),
            full_spec((Cout, Cout)), full_spec((1, Cout)), full_spec((1, Cout)),
            full_spec((9 * Cout, Cout)), full_spec((1, Cout)),
        ],
        out_specs=[
            pl.BlockSpec((1, Cout, H * W), lambda b: (b, 0, 0)),
            pl.BlockSpec((1, Cout, Hh * Wh), lambda b: (b, 0, 0)),
        ],
        scratch_shapes=[
            pltpu.VMEM((H + 2, W + 2, Cin), jnp.bfloat16),
            pltpu.VMEM((H + 2, W + 2, Cout), jnp.bfloat16),
        ],
        compiler_params=pltpu.CompilerParams(
            dimension_semantics=("parallel",)),
    )(x, t_bias, gn1_a, gn1_g, gn1_b, w1, b1, gn2_a, gn2_g, gn2_b, w2, b2)

    # [B, Cout, H*W] is NCHW up to a free (contiguous) reshape.
    return (y_flat.reshape(B, Cout, H, W),
            pool_flat.reshape(B, Cout, Hh, Wh))


# ----------------------------- reference (plain JAX, NCHW) -----------------
def reference(x, t, p):
    B, Cin, H, W = x.shape
    g1 = Cin if Cin % 8 else 8
    g2 = 16

    def gn(h, groups, gamma, beta):
        b, c, hh, ww = h.shape
        hg = h.reshape(b, groups, (c // groups) * hh * ww)
        mean = hg.mean(axis=2, keepdims=True)
        var = hg.var(axis=2, keepdims=True)
        hn = ((hg - mean) / jnp.sqrt(var + EPS)).reshape(b, c, hh, ww)
        return hn * gamma[None, :, None, None] + beta[None, :, None, None]

    def conv(h, w, bias):
        out = lax.conv_general_dilated(
            h, w, window_strides=(1, 1), padding="SAME",
            dimension_numbers=("NCHW", "OIHW", "NCHW"),
            precision=lax.Precision.HIGHEST)
        return out + bias[None, :, None, None]

    h = gn(x, g1, p["gn1_g"], p["gn1_b"])
    h = conv(h, p["conv1_w"], p["conv1_b"])
    tm = jnp.dot(t, p["lin1_w"].T, precision=lax.Precision.HIGHEST) + p["lin1_b"]
    tm = jax.nn.silu(tm)
    tm = jnp.dot(tm, p["lin2_w"].T, precision=lax.Precision.HIGHEST) + p["lin2_b"]
    h = h + tm[:, :, None, None]
    h = gn(h, g2, p["gn2_g"], p["gn2_b"])
    h = conv(h, p["conv2_w"], p["conv2_b"])
    h = jax.nn.silu(h)
    pooled = lax.reduce_window(h, -jnp.inf, lax.max,
                               (1, 1, 2, 2), (1, 1, 2, 2), "VALID")
    return h, pooled


def init_params(key, Cin, Cout, T):
    ks = jax.random.split(key, 12)
    f32 = jnp.float32
    return {
        "gn1_g": 1.0 + 0.1 * jax.random.normal(ks[0], (Cin,), f32),
        "gn1_b": 0.1 * jax.random.normal(ks[1], (Cin,), f32),
        "conv1_w": 0.2 * jax.random.normal(ks[2], (Cout, Cin, 3, 3), f32),
        "conv1_b": 0.1 * jax.random.normal(ks[3], (Cout,), f32),
        "lin1_w": 0.2 * jax.random.normal(ks[4], (Cout, T), f32),
        "lin1_b": 0.1 * jax.random.normal(ks[5], (Cout,), f32),
        "lin2_w": 0.2 * jax.random.normal(ks[6], (Cout, Cout), f32),
        "lin2_b": 0.1 * jax.random.normal(ks[7], (Cout,), f32),
        "gn2_g": 1.0 + 0.1 * jax.random.normal(ks[8], (Cout,), f32),
        "gn2_b": 0.1 * jax.random.normal(ks[9], (Cout,), f32),
        "conv2_w": 0.1 * jax.random.normal(ks[10], (Cout, Cout, 3, 3), f32),
        "conv2_b": 0.1 * jax.random.normal(ks[11], (Cout,), f32),
    }


if __name__ == "__main__":
    B, Cin, Cout, T, H, W = 2, 4, 32, 16, 16, 16
    key = jax.random.PRNGKey(0)
    kx, kt, kp = jax.random.split(key, 3)
    x = jax.random.normal(kx, (B, Cin, H, W), jnp.float32)
    t = jax.random.normal(kt, (B, T), jnp.float32)
    params = init_params(kp, Cin, Cout, T)

    y, y_down = down_block(x, t, params)
    jax.block_until_ready((y, y_down))

    y_ref, y_down_ref = reference(x, t, params)
    assert y.shape == (B, Cout, H, W)
    assert y_down.shape == (B, Cout, H // 2, W // 2)
    # Tolerance sized for bf16 MXU operands (f32 accumulation) in the conv
    # dots vs. the HIGHEST-precision f32 reference; structural errors are O(1).
    TOL = 2e-2
    assert jnp.allclose(y, y_ref, atol=TOL, rtol=TOL), \
        float(jnp.max(jnp.abs(y - y_ref)))
    assert jnp.allclose(y_down, y_down_ref, atol=TOL, rtol=TOL), \
        float(jnp.max(jnp.abs(y_down - y_down_ref)))
    print("KERNEL_OK")
</pallas_src>

<mosaic_0001>
module attributes {stable_mosaic.version = 11 : i64} {
  func.func @down_block_kernel(%arg0: i32, %arg1: memref<1x16x16x4xf32, #tpu.memory_space<vmem>>, %arg2: memref<1x1x32xf32, #tpu.memory_space<vmem>>, %arg3: memref<4x4xf32, #tpu.memory_space<vmem>>, %arg4: memref<1x4xf32, #tpu.memory_space<vmem>>, %arg5: memref<1x4xf32, #tpu.memory_space<vmem>>, %arg6: memref<36x32xbf16, #tpu.memory_space<vmem>>, %arg7: memref<1x32xf32, #tpu.memory_space<vmem>>, %arg8: memref<32x32xf32, #tpu.memory_space<vmem>>, %arg9: memref<1x32xf32, #tpu.memory_space<vmem>>, %arg10: memref<1x32xf32, #tpu.memory_space<vmem>>, %arg11: memref<288x32xbf16, #tpu.memory_space<vmem>>, %arg12: memref<1x32xf32, #tpu.memory_space<vmem>>, %arg13: memref<1x32x256xf32, #tpu.memory_space<vmem>>, %arg14: memref<1x32x64xf32, #tpu.memory_space<vmem>>, %arg15: memref<18x18x4xbf16, #tpu.memory_space<vmem>>, %arg16: memref<18x18x32xbf16, #tpu.memory_space<vmem>>) attributes {dimension_semantics = [#tpu.dimension_semantics<parallel>], iteration_bounds = array<i64: 2>, scalar_prefetch = 0 : i64, scratch_operands = 2 : i64, tpu.core_type = #tpu.core_type<tc>, window_params = [{transform_indices = @transform_0, window_bounds = array<i64: 1, 16, 16, 4>}, {transform_indices = @transform_1, window_bounds = array<i64: 1, 1, 32>}, {pipeline_mode = #tpu.pipeline_mode<synchronous>, transform_indices = @transform_2, window_bounds = array<i64: 4, 4>}, {pipeline_mode = #tpu.pipeline_mode<synchronous>, transform_indices = @transform_3, window_bounds = array<i64: 1, 4>}, {pipeline_mode = #tpu.pipeline_mode<synchronous>, transform_indices = @transform_4, window_bounds = array<i64: 1, 4>}, {pipeline_mode = #tpu.pipeline_mode<synchronous>, transform_indices = @transform_5, window_bounds = array<i64: 36, 32>}, {pipeline_mode = #tpu.pipeline_mode<synchronous>, transform_indices = @transform_6, window_bounds = array<i64: 1, 32>}, {pipeline_mode = #tpu.pipeline_mode<synchronous>, transform_indices = @transform_7, window_bounds = array<i64: 32, 32>}, {pipeline_mode = #tpu.pipeline_mode<synchronous>, transform_indices = @transform_8, window_bounds = array<i64: 1, 32>}, {pipeline_mode = #tpu.pipeline_mode<synchronous>, transform_indices = @transform_9, window_bounds = array<i64: 1, 32>}, {pipeline_mode = #tpu.pipeline_mode<synchronous>, transform_indices = @transform_10, window_bounds = array<i64: 288, 32>}, {pipeline_mode = #tpu.pipeline_mode<synchronous>, transform_indices = @transform_11, window_bounds = array<i64: 1, 32>}, {transform_indices = @transform_12, window_bounds = array<i64: 1, 32, 256>}, {transform_indices = @transform_13, window_bounds = array<i64: 1, 32, 64>}]} {
    %cst = arith.constant 0.000000e+00 : bf16
    %0 = vector.broadcast %cst : bf16 to vector<18x18x4xbf16>
    %c0 = arith.constant 0 : index
    %c0_0 = arith.constant 0 : index
    %c0_1 = arith.constant 0 : index
    %1 = vector.load %arg15[%c0, %c0_0, %c0_1] : memref<18x18x4xbf16, #tpu.memory_space<vmem>>, vector<18x18x4xbf16>
    tpu.vector_store %arg15[%c0, %c0_0, %c0_1], %0 {strides = array<i32>} : memref<18x18x4xbf16, #tpu.memory_space<vmem>>, vector<18x18x4xbf16>,
    %cst_2 = arith.constant 0.000000e+00 : bf16
    %2 = vector.broadcast %cst_2 : bf16 to vector<18x18x32xbf16>
    %c0_3 = arith.constant 0 : index
    %c0_4 = arith.constant 0 : index
    %c0_5 = arith.constant 0 : index
    %3 = vector.load %arg16[%c0_3, %c0_4, %c0_5] : memref<18x18x32xbf16, #tpu.memory_space<vmem>>, vector<18x18x32xbf16>
    tpu.vector_store %arg16[%c0_3, %c0_4, %c0_5], %2 {strides = array<i32>} : memref<18x18x32xbf16, #tpu.memory_space<vmem>>, vector<18x18x32xbf16>,
    %c0_6 = arith.constant 0 : index
    %c0_7 = arith.constant 0 : index
    %c0_8 = arith.constant 0 : index
    %c0_9 = arith.constant 0 : index
    %4 = vector.load %arg1[%c0_6, %c0_7, %c0_8, %c0_9] : memref<1x16x16x4xf32, #tpu.memory_space<vmem>>, vector<1x16x16x4xf32>
    %5 = vector.shape_cast %4 : vector<1x16x16x4xf32> to vector<16x16x4xf32>
    %6 = vector.shape_cast %5 : vector<16x16x4xf32> to vector<256x4xf32>
    %cst_10 = arith.constant dense<0.000000e+00> : vector<4xf32>
    %7 = vector.multi_reduction <add>, %6, %cst_10 [0] : vector<256x4xf32> to vector<4xf32>
    %8 = vector.shape_cast %7 : vector<4xf32> to vector<1x4xf32>
    %9 = arith.mulf %6, %6 : vector<256x4xf32>
    %cst_11 = arith.constant dense<0.000000e+00> : vector<4xf32>
    %10 = vector.multi_reduction <add>, %9, %cst_11 [0] : vector<256x4xf32> to vector<4xf32>
    %11 = vector.shape_cast %10 : vector<4xf32> to vector<1x4xf32>
    %cst_12 = arith.constant 3.906250e-03 : f32
    %12 = vector.broadcast %cst_12 : f32 to vector<1x4xf32>
    %13 = arith.mulf %8, %12 : vector<1x4xf32>
    %cst_13 = arith.constant 3.906250e-03 : f32
    %14 = vector.broadcast %cst_13 : f32 to vector<1x4xf32>
    %15 = arith.mulf %11, %14 : vector<1x4xf32>
    %16 = arith.mulf %13, %13 : vector<1x4xf32>
    %17 = arith.subf %15, %16 : vector<1x4xf32>
    %cst_14 = arith.constant 0.000000e+00 : f32
    %18 = vector.broadcast %cst_14 : f32 to vector<1x4xf32>
    %19 = arith.maximumf %17, %18 : vector<1x4xf32>
    %cst_15 = arith.constant 9.99999974E-6 : f32
    %20 = vector.broadcast %cst_15 : f32 to vector<1x4xf32>
    %21 = arith.addf %19, %20 : vector<1x4xf32>
    %22 = math.rsqrt %21 : vector<1x4xf32>
    %23 = vector.broadcast %13 : vector<1x4xf32> to vector<256x4xf32>
    %24 = arith.subf %6, %23 : vector<256x4xf32>
    %25 = vector.broadcast %22 : vector<1x4xf32> to vector<256x4xf32>
    %26 = arith.mulf %24, %25 : vector<256x4xf32>
    %c0_16 = arith.constant 0 : index
    %c0_17 = arith.constant 0 : index
    %27 = vector.load %arg4[%c0_16, %c0_17] : memref<1x4xf32, #tpu.memory_space<vmem>>, vector<1x4xf32>
    %28 = vector.broadcast %27 : vector<1x4xf32> to vector<256x4xf32>
    %29 = arith.mulf %26, %28 : vector<256x4xf32>
    %c0_18 = arith.constant 0 : index
    %c0_19 = arith.constant 0 : index
    %30 = vector.load %arg5[%c0_18, %c0_19] : memref<1x4xf32, #tpu.memory_space<vmem>>, vector<1x4xf32>
    %31 = vector.broadcast %30 : vector<1x4xf32> to vector<256x4xf32>
    %32 = arith.addf %29, %31 : vector<256x4xf32>
    %33 = vector.shape_cast %32 : vector<256x4xf32> to vector<16x16x4xf32>
    %34 = arith.truncf %33 : vector<16x16x4xf32> to vector<16x16x4xbf16>
    %c1 = arith.constant 1 : index
    %c1_20 = arith.constant 1 : index
    %c0_21 = arith.constant 0 : index
    %35 = vector.load %arg15[%c1, %c1_20, %c0_21] : memref<18x18x4xbf16, #tpu.memory_space<vmem>>, vector<16x16x4xbf16>
    tpu.vector_store %arg15[%c1, %c1_20, %c0_21], %34 {strides = array<i32>} : memref<18x18x4xbf16, #tpu.memory_space<vmem>>, vector<16x16x4xbf16>,
    %c0_22 = arith.constant 0 : index
    %c0_23 = arith.constant 0 : index
    %c0_24 = arith.constant 0 : index
    %36 = vector.load %arg15[%c0_22, %c0_23, %c0_24] : memref<18x18x4xbf16, #tpu.memory_space<vmem>>, vector<16x16x4xbf16>
    %37 = vector.shape_cast %36 : vector<16x16x4xbf16> to vector<256x4xbf16>
    %c0_25 = arith.constant 0 : index
    %c1_26 = arith.constant 1 : index
    %c0_27 = arith.constant 0 : index
    %38 = vector.load %arg15[%c0_25, %c1_26, %c0_27] : memref<18x18x4xbf16, #tpu.memory_space<vmem>>, vector<16x16x4xbf16>
    %39 = vector.shape_cast %38 : vector<16x16x4xbf16> to vector<256x4xbf16>
    %c0_28 = arith.constant 0 : index
    %c2 = arith.constant 2 : index
    %c0_29 = arith.constant 0 : index
    %40 = vector.load %arg15[%c0_28, %c2, %c0_29] : memref<18x18x4xbf16, #tpu.memory_space<vmem>>, vector<16x16x4xbf16>
    %41 = vector.shape_cast %40 : vector<16x16x4xbf16> to vector<256x4xbf16>
    %c1_30 = arith.constant 1 : index
    %c0_31 = arith.constant 0 : index
    %c0_32 = arith.constant 0 : index
    %42 = vector.load %arg15[%c1_30, %c0_31, %c0_32] : memref<18x18x4xbf16, #tpu.memory_space<vmem>>, vector<16x16x4xbf16>
    %43 = vector.shape_cast %42 : vector<16x16x4xbf16> to vector<256x4xbf16>
    %c1_33 = arith.constant 1 : index
    %c1_34 = arith.constant 1 : index
    %c0_35 = arith.constant 0 : index
    %44 = vector.load %arg15[%c1_33, %c1_34, %c0_35] : memref<18x18x4xbf16, #tpu.memory_space<vmem>>, vector<16x16x4xbf16>
    %45 = vector.shape_cast %44 : vector<16x16x4xbf16> to vector<256x4xbf16>
    %c1_36 = arith.constant 1 : index
    %c2_37 = arith.constant 2 : index
    %c0_38 = arith.constant 0 : index
    %46 = vector.load %arg15[%c1_36, %c2_37, %c0_38] : memref<18x18x4xbf16, #tpu.memory_space<vmem>>, vector<16x16x4xbf16>
    %47 = vector.shape_cast %46 : vector<16x16x4xbf16> to vector<256x4xbf16>
    %c2_39 = arith.constant 2 : index
    %c0_40 = arith.constant 0 : index
    %c0_41 = arith.constant 0 : index
    %48 = vector.load %arg15[%c2_39, %c0_40, %c0_41] : memref<18x18x4xbf16, #tpu.memory_space<vmem>>, vector<16x16x4xbf16>
    %49 = vector.shape_cast %48 : vector<16x16x4xbf16> to vector<256x4xbf16>
    %c2_42 = arith.constant 2 : index
    %c1_43 = arith.constant 1 : index
    %c0_44 = arith.constant 0 : index
    %50 = vector.load %arg15[%c2_42, %c1_43, %c0_44] : memref<18x18x4xbf16, #tpu.memory_space<vmem>>, vector<16x16x4xbf16>
    %51 = vector.shape_cast %50 : vector<16x16x4xbf16> to vector<256x4xbf16>
    %c2_45 = arith.constant 2 : index
    %c2_46 = arith.constant 2 : index
    %c0_47 = arith.constant 0 : index
    %52 = vector.load %arg15[%c2_45, %c2_46, %c0_47] : memref<18x18x4xbf16, #tpu.memory_space<vmem>>, vector<16x16x4xbf16>
    %53 = vector.shape_cast %52 : vector<16x16x4xbf16> to vector<256x4xbf16>
    %54 = tpu.concatenate %37, %39, %41, %43, %45, %47, %49, %51, %53 in 1 : vector<256x4xbf16>, vector<256x4xbf16>, vector<256x4xbf16>, vector<256x4xbf16>, vector<256x4xbf16>, vector<256x4xbf16>, vector<256x4xbf16>, vector<256x4xbf16>, vector<256x4xbf16> -> vector<256x36xbf16>
    %c0_48 = arith.constant 0 : index
    %c0_49 = arith.constant 0 : index
    %55 = vector.load %arg6[%c0_48, %c0_49] : memref<36x32xbf16, #tpu.memory_space<vmem>>, vector<36x32xbf16>
    %cst_50 = arith.constant dense<0.000000e+00> : vector<256x32xf32>
    %56 = tpu.matmul %54, %55, %cst_50 {dimension_numbers = #tpu.dot_dimension_numbers<[1], [0], [0], [1], [0, 0, 1, 1], [], []>} : vector<256x36xbf16>, vector<36x32xbf16>, vector<256x32xf32> -> vector<256x32xf32>
    %c0_51 = arith.constant 0 : index
    %c0_52 = arith.constant 0 : index
    %57 = vector.load %arg7[%c0_51, %c0_52] : memref<1x32xf32, #tpu.memory_space<vmem>>, vector<1x32xf32>
    %58 = vector.broadcast %57 : vector<1x32xf32> to vector<256x32xf32>
    %59 = arith.addf %56, %58 : vector<256x32xf32>
    %c0_53 = arith.constant 0 : index
    %c0_54 = arith.constant 0 : index
    %c0_55 = arith.constant 0 : index
    %60 = vector.load %arg2[%c0_53, %c0_54, %c0_55] : memref<1x1x32xf32, #tpu.memory_space<vmem>>, vector<1x1x32xf32>
    %61 = vector.shape_cast %60 : vector<1x1x32xf32> to vector<1x32xf32>
    %62 = vector.broadcast %61 : vector<1x32xf32> to vector<256x32xf32>
    %63 = arith.addf %59, %62 : vector<256x32xf32>
    %cst_56 = arith.constant dense<0.000000e+00> : vector<32xf32>
    %64 = vector.multi_reduction <add>, %63, %cst_56 [0] : vector<256x32xf32> to vector<32xf32>
    %65 = vector.shape_cast %64 : vector<32xf32> to vector<1x32xf32>
    %66 = arith.mulf %63, %63 : vector<256x32xf32>
    %cst_57 = arith.constant dense<0.000000e+00> : vector<32xf32>
    %67 = vector.multi_reduction <add>, %66, %cst_57 [0] : vector<256x32xf32> to vector<32xf32>
    %68 = vector.shape_cast %67 : vector<32xf32> to vector<1x32xf32>
    %69 = tpu.concatenate %65, %68 in 0 : vector<1x32xf32>, vector<1x32xf32> -> vector<2x32xf32>
    %c0_58 = arith.constant 0 : index
    %c0_59 = arith.constant 0 : index
    %70 = vector.load %arg8[%c0_58, %c0_59] : memref<32x32xf32, #tpu.memory_space<vmem>>, vector<32x32xf32>
    %cst_60 = arith.constant dense<0.000000e+00> : vector<2x32xf32>
    %71 = tpu.matmul %69, %70, %cst_60 {dimension_numbers = #tpu.dot_dimension_numbers<[1], [0], [0], [1], [0, 0, 1, 1], [], []>} : vector<2x32xf32>, vector<32x32xf32>, vector<2x32xf32> -> vector<2x32xf32>
    %72 = vector.extract_strided_slice %71 {offsets = [0, 0], sizes = [1, 32], strides = [1, 1]} : vector<2x32xf32> to vector<1x32xf32>
    %73 = vector.extract_strided_slice %71 {offsets = [1, 0], sizes = [1, 32], strides = [1, 1]} : vector<2x32xf32> to vector<1x32xf32>
    %cst_61 = arith.constant 0.001953125 : f32
    %74 = vector.broadcast %cst_61 : f32 to vector<1x32xf32>
    %75 = arith.mulf %72, %74 : vector<1x32xf32>
    %cst_62 = arith.constant 0.001953125 : f32
    %76 = vector.broadcast %cst_62 : f32 to vector<1x32xf32>
    %77 = arith.mulf %73, %76 : vector<1x32xf32>
    %78 = arith.mulf %75, %75 : vector<1x32xf32>
    %79 = arith.subf %77, %78 : vector<1x32xf32>
    %cst_63 = arith.constant 0.000000e+00 : f32
    %80 = vector.broadcast %cst_63 : f32 to vector<1x32xf32>
    %81 = arith.maximumf %79, %80 : vector<1x32xf32>
    %cst_64 = arith.constant 9.99999974E-6 : f32
    %82 = vector.broadcast %cst_64 : f32 to vector<1x32xf32>
    %83 = arith.addf %81, %82 : vector<1x32xf32>
    %84 = math.rsqrt %83 : vector<1x32xf32>
    %85 = vector.broadcast %75 : vector<1x32xf32> to vector<256x32xf32>
    %86 = arith.subf %63, %85 : vector<256x32xf32>
    %87 = vector.broadcast %84 : vector<1x32xf32> to vector<256x32xf32>
    %88 = arith.mulf %86, %87 : vector<256x32xf32>
    %c0_65 = arith.constant 0 : index
    %c0_66 = arith.constant 0 : index
    %89 = vector.load %arg9[%c0_65, %c0_66] : memref<1x32xf32, #tpu.memory_space<vmem>>, vector<1x32xf32>
    %90 = vector.broadcast %89 : vector<1x32xf32> to vector<256x32xf32>
    %91 = arith.mulf %88, %90 : vector<256x32xf32>
    %c0_67 = arith.constant 0 : index
    %c0_68 = arith.constant 0 : index
    %92 = vector.load %arg10[%c0_67, %c0_68] : memref<1x32xf32, #tpu.memory_space<vmem>>, vector<1x32xf32>
    %93 = vector.broadcast %92 : vector<1x32xf32> to vector<256x32xf32>
    %94 = arith.addf %91, %93 : vector<256x32xf32>
    %95 = vector.shape_cast %94 : vector<256x32xf32> to vector<16x16x32xf32>
    %96 = arith.truncf %95 : vector<16x16x32xf32> to vector<16x16x32xbf16>
    %c1_69 = arith.constant 1 : index
    %c1_70 = arith.constant 1 : index
    %c0_71 = arith.constant 0 : index
    %97 = vector.load %arg16[%c1_69, %c1_70, %c0_71] : memref<18x18x32xbf16, #tpu.memory_space<vmem>>, vector<16x16x32xbf16>
    tpu.vector_store %arg16[%c1_69, %c1_70, %c0_71], %96 {strides = array<i32>} : memref<18x18x32xbf16, #tpu.memory_space<vmem>>, vector<16x16x32xbf16>,
    %c0_72 = arith.constant 0 : index
    %c0_73 = arith.constant 0 : index
    %c0_74 = arith.constant 0 : index
    %98 = vector.load %arg16[%c0_72, %c0_73, %c0_74] : memref<18x18x32xbf16, #tpu.memory_space<vmem>>, vector<16x16x32xbf16>
    %99 = vector.shape_cast %98 : vector<16x16x32xbf16> to vector<256x32xbf16>
    %c0_75 = arith.constant 0 : index
    %c1_76 = arith.constant 1 : index
    %c0_77 = arith.constant 0 : index
    %100 = vector.load %arg16[%c0_75, %c1_76, %c0_77] : memref<18x18x32xbf16, #tpu.memory_space<vmem>>, vector<16x16x32xbf16>
    %101 = vector.shape_cast %100 : vector<16x16x32xbf16> to vector<256x32xbf16>
    %c0_78 = arith.constant 0 : index
    %c2_79 = arith.constant 2 : index
    %c0_80 = arith.constant 0 : index
    %102 = vector.load %arg16[%c0_78, %c2_79, %c0_80] : memref<18x18x32xbf16, #tpu.memory_space<vmem>>, vector<16x16x32xbf16>
    %103 = vector.shape_cast %102 : vector<16x16x32xbf16> to vector<256x32xbf16>
    %c1_81 = arith.constant 1 : index
    %c0_82 = arith.constant 0 : index
    %c0_83 = arith.constant 0 : index
    %104 = vector.load %arg16[%c1_81, %c0_82, %c0_83] : memref<18x18x32xbf16, #tpu.memory_space<vmem>>, vector<16x16x32xbf16>
    %105 = vector.shape_cast %104 : vector<16x16x32xbf16> to vector<256x32xbf16>
    %c1_84 = arith.constant 1 : index
    %c1_85 = arith.constant 1 : index
    %c0_86 = arith.constant 0 : index
    %106 = vector.load %arg16[%c1_84, %c1_85, %c0_86] : memref<18x18x32xbf16, #tpu.memory_space<vmem>>, vector<16x16x32xbf16>
    %107 = vector.shape_cast %106 : vector<16x16x32xbf16> to vector<256x32xbf16>
    %c1_87 = arith.constant 1 : index
    %c2_88 = arith.constant 2 : index
    %c0_89 = arith.constant 0 : index
    %108 = vector.load %arg16[%c1_87, %c2_88, %c0_89] : memref<18x18x32xbf16, #tpu.memory_space<vmem>>, vector<16x16x32xbf16>
    %109 = vector.shape_cast %108 : vector<16x16x32xbf16> to vector<256x32xbf16>
    %c2_90 = arith.constant 2 : index
    %c0_91 = arith.constant 0 : index
    %c0_92 = arith.constant 0 : index
    %110 = vector.load %arg16[%c2_90, %c0_91, %c0_92] : memref<18x18x32xbf16, #tpu.memory_space<vmem>>, vector<16x16x32xbf16>
    %111 = vector.shape_cast %110 : vector<16x16x32xbf16> to vector<256x32xbf16>
    %c2_93 = arith.constant 2 : index
    %c1_94 = arith.constant 1 : index
    %c0_95 = arith.constant 0 : index
    %112 = vector.load %arg16[%c2_93, %c1_94, %c0_95] : memref<18x18x32xbf16, #tpu.memory_space<vmem>>, vector<16x16x32xbf16>
    %113 = vector.shape_cast %112 : vector<16x16x32xbf16> to vector<256x32xbf16>
    %c2_96 = arith.constant 2 : index
    %c2_97 = arith.constant 2 : index
    %c0_98 = arith.constant 0 : index
    %114 = vector.load %arg16[%c2_96, %c2_97, %c0_98] : memref<18x18x32xbf16, #tpu.memory_space<vmem>>, vector<16x16x32xbf16>
    %115 = vector.shape_cast %114 : vector<16x16x32xbf16> to vector<256x32xbf16>
    %116 = tpu.concatenate %99, %101, %103, %105, %107, %109, %111, %113, %115 in 1 : vector<256x32xbf16>, vector<256x32xbf16>, vector<256x32xbf16>, vector<256x32xbf16>, vector<256x32xbf16>, vector<256x32xbf16>, vector<256x32xbf16>, vector<256x32xbf16>, vector<256x32xbf16> -> vector<256x288xbf16>
    %c0_99 = arith.constant 0 : index
    %c0_100 = arith.constant 0 : index
    %117 = vector.load %arg11[%c0_99, %c0_100] : memref<288x32xbf16, #tpu.memory_space<vmem>>, vector<288x32xbf16>
    %cst_101 = arith.constant dense<0.000000e+00> : vector<256x32xf32>
    %118 = tpu.matmul %116, %117, %cst_101 {dimension_numbers = #tpu.dot_dimension_numbers<[1], [0], [0], [1], [0, 0, 1, 1], [], []>} : vector<256x288xbf16>, vector<288x32xbf16>, vector<256x32xf32> -> vector<256x32xf32>
    %c0_102 = arith.constant 0 : index
    %c0_103 = arith.constant 0 : index
    %119 = vector.load %arg12[%c0_102, %c0_103] : memref<1x32xf32, #tpu.memory_space<vmem>>, vector<1x32xf32>
    %120 = vector.broadcast %119 : vector<1x32xf32> to vector<256x32xf32>
    %121 = arith.addf %118, %120 : vector<256x32xf32>
    %cst_104 = arith.constant 0.000000e+00 : f32
    %122 = vector.broadcast %cst_104 : f32 to vector<256x32xf32>
    %123 = arith.subf %122, %121 : vector<256x32xf32>
    %124 = math.exp %123 : vector<256x32xf32>
    %cst_105 = arith.constant 1.000000e+00 : f32
    %125 = vector.broadcast %cst_105 : f32 to vector<256x32xf32>
    %126 = arith.addf %125, %124 : vector<256x32xf32>
    %cst_106 = arith.constant 1.000000e+00 : f32
    %127 = vector.broadcast %cst_106 : f32 to vector<256x32xf32>
    %128 = arith.divf %127, %126 : vector<256x32xf32>
    %129 = arith.mulf %121, %128 : vector<256x32xf32>
    %130 = tpu.transpose %129, [1, 0] : vector<256x32xf32> -> vector<32x256xf32>
    %c0_107 = arith.constant 0 : index
    %c0_108 = arith.constant 0 : index
    %c0_109 = arith.constant 0 : index
    %131 = vector.load %arg13[%c0_107, %c0_108, %c0_109] : memref<1x32x256xf32, #tpu.memory_space<vmem>>, vector<1x32x256xf32>
    %132 = vector.shape_cast %131 : vector<1x32x256xf32> to vector<32x256xf32>
    %133 = vector.shape_cast %130 : vector<32x256xf32> to vector<1x32x256xf32>
    tpu.vector_store %arg13[%c0_107, %c0_108, %c0_109], %133 {strides = array<i32>} : memref<1x32x256xf32, #tpu.memory_space<vmem>>, vector<1x32x256xf32>,
    %134 = vector.shape_cast %129 : vector<256x32xf32> to vector<8x2x8x2x32xf32>
    %135 = vector.extract_strided_slice %134 {offsets = [0, 0, 0, 0, 0], sizes = [8, 1, 8, 1, 32], strides = [1, 1, 1, 1, 1]} : vector<8x2x8x2x32xf32> to vector<8x1x8x1x32xf32>
    %136 = vector.shape_cast %135 : vector<8x1x8x1x32xf32> to vector<8x8x32xf32>
    %137 = vector.extract_strided_slice %134 {offsets = [0, 0, 0, 1, 0], sizes = [8, 1, 8, 1, 32], strides = [1, 1, 1, 1, 1]} : vector<8x2x8x2x32xf32> to vector<8x1x8x1x32xf32>
    %138 = vector.shape_cast %137 : vector<8x1x8x1x32xf32> to vector<8x8x32xf32>
    %139 = arith.maximumf %136, %138 : vector<8x8x32xf32>
    %140 = vector.extract_strided_slice %134 {offsets = [0, 1, 0, 0, 0], sizes = [8, 1, 8, 1, 32], strides = [1, 1, 1, 1, 1]} : vector<8x2x8x2x32xf32> to vector<8x1x8x1x32xf32>
    %141 = vector.shape_cast %140 : vector<8x1x8x1x32xf32> to vector<8x8x32xf32>
    %142 = vector.extract_strided_slice %134 {offsets = [0, 1, 0, 1, 0], sizes = [8, 1, 8, 1, 32], strides = [1, 1, 1, 1, 1]} : vector<8x2x8x2x32xf32> to vector<8x1x8x1x32xf32>
    %143 = vector.shape_cast %142 : vector<8x1x8x1x32xf32> to vector<8x8x32xf32>
    %144 = arith.maximumf %141, %143 : vector<8x8x32xf32>
    %145 = arith.maximumf %139, %144 : vector<8x8x32xf32>
    %146 = vector.shape_cast %145 : vector<8x8x32xf32> to vector<64x32xf32>
    %147 = tpu.transpose %146, [1, 0] : vector<64x32xf32> -> vector<32x64xf32>
    %c0_110 = arith.constant 0 : index
    %c0_111 = arith.constant 0 : index
    %c0_112 = arith.constant 0 : index
    %148 = vector.load %arg14[%c0_110, %c0_111, %c0_112] : memref<1x32x64xf32, #tpu.memory_space<vmem>>, vector<1x32x64xf32>
    %149 = vector.shape_cast %148 : vector<1x32x64xf32> to vector<32x64xf32>
    %150 = vector.shape_cast %147 : vector<32x64xf32> to vector<1x32x64xf32>
    tpu.vector_store %arg14[%c0_110, %c0_111, %c0_112], %150 {strides = array<i32>} : memref<1x32x64xf32, #tpu.memory_space<vmem>>, vector<1x32x64xf32>,
    return
  }
  func.func @transform_0(%arg0: i32) -> (i32, i32, i32, i32) {
    %c0_i32 = arith.constant 0 : i32
    %c0_i32_0 = arith.constant 0 : i32
    %c0_i32_1 = arith.constant 0 : i32
    %c0_i32_2 = arith.constant 0 : i32
    return %arg0, %c0_i32, %c0_i32_0, %c0_i32_1 : i32, i32, i32, i32
  }
  func.func @transform_1(%arg0: i32) -> (i32, i32, i32) {
    %c0_i32 = arith.constant 0 : i32
    %c0_i32_0 = arith.constant 0 : i32
    %c0_i32_1 = arith.constant 0 : i32
    return %arg0, %c0_i32, %c0_i32_0 : i32, i32, i32
  }
  func.func @transform_2(%arg0: i32) -> (i32, i32) {
    %c0_i32 = arith.constant 0 : i32
    %c0_i32_0 = arith.constant 0 : i32
    %c0_i32_1 = arith.constant 0 : i32
    return %c0_i32, %c0_i32_0 : i32, i32
  }
  func.func @transform_3(%arg0: i32) -> (i32, i32) {
    %c0_i32 = arith.constant 0 : i32
    %c0_i32_0 = arith.constant 0 : i32
    %c0_i32_1 = arith.constant 0 : i32
    return %c0_i32, %c0_i32_0 : i32, i32
  }
  func.func @transform_4(%arg0: i32) -> (i32, i32) {
    %c0_i32 = arith.constant 0 : i32
    %c0_i32_0 = arith.constant 0 : i32
    %c0_i32_1 = arith.constant 0 : i32
    return %c0_i32, %c0_i32_0 : i32, i32
  }
  func.func @transform_5(%arg0: i32) -> (i32, i32) {
    %c0_i32 = arith.constant 0 : i32
    %c0_i32_0 = arith.constant 0 : i32
    %c0_i32_1 = arith.constant 0 : i32
    return %c0_i32, %c0_i32_0 : i32, i32
  }
  func.func @transform_6(%arg0: i32) -> (i32, i32) {
    %c0_i32 = arith.constant 0 : i32
    %c0_i32_0 = arith.constant 0 : i32
    %c0_i32_1 = arith.constant 0 : i32
    return %c0_i32, %c0_i32_0 : i32, i32
  }
  func.func @transform_7(%arg0: i32) -> (i32, i32) {
    %c0_i32 = arith.constant 0 : i32
    %c0_i32_0 = arith.constant 0 : i32
    %c0_i32_1 = arith.constant 0 : i32
    return %c0_i32, %c0_i32_0 : i32, i32
  }
  func.func @transform_8(%arg0: i32) -> (i32, i32) {
    %c0_i32 = arith.constant 0 : i32
    %c0_i32_0 = arith.constant 0 : i32
    %c0_i32_1 = arith.constant 0 : i32
    return %c0_i32, %c0_i32_0 : i32, i32
  }
  func.func @transform_9(%arg0: i32) -> (i32, i32) {
    %c0_i32 = arith.constant 0 : i32
    %c0_i32_0 = arith.constant 0 : i32
    %c0_i32_1 = arith.constant 0 : i32
    return %c0_i32, %c0_i32_0 : i32, i32
  }
  func.func @transform_10(%arg0: i32) -> (i32, i32) {
    %c0_i32 = arith.constant 0 : i32
    %c0_i32_0 = arith.constant 0 : i32
    %c0_i32_1 = arith.constant 0 : i32
    return %c0_i32, %c0_i32_0 : i32, i32
  }
  func.func @transform_11(%arg0: i32) -> (i32, i32) {
    %c0_i32 = arith.constant 0 : i32
    %c0_i32_0 = arith.constant 0 : i32
    %c0_i32_1 = arith.constant 0 : i32
    return %c0_i32, %c0_i32_0 : i32, i32
  }
  func.func @transform_12(%arg0: i32) -> (i32, i32, i32) {
    %c0_i32 = arith.constant 0 : i32
    %c0_i32_0 = arith.constant 0 : i32
    %c0_i32_1 = arith.constant 0 : i32
    return %arg0, %c0_i32, %c0_i32_0 : i32, i32, i32
  }
  func.func @transform_13(%arg0: i32) -> (i32, i32, i32) {
    %c0_i32 = arith.constant 0 : i32
    %c0_i32_0 = arith.constant 0 : i32
    %c0_i32_1 = arith.constant 0 : i32
    return %arg0, %c0_i32, %c0_i32_0 : i32, i32, i32
  }
}

</mosaic_0001>

<llo_original>
// kernel: tpu_custom_call.1
$region0: #{tpu_custom_call.1}
  #allocation0 [shape = 'u32[]', space=smem, size = 0x4, offset = 0x4, fixed_abs, tag = 'smem constant byte address 0x4 - core index']
  #allocation1 [shape = 'u32[144,128]{1,0:T(1,128)}', space=vmem, size = 0x12000, scoped, tag = 'internal scratch']
  #allocation2 [shape = 'bf16[18,18,4]{2,1,0:T(8,128)(2,1)}', space=vmem, size = 0x1b000, scoped, tag = 'scratch operand']
  #allocation3 [shape = 'bf16[18,18,32]{2,1,0:T(8,128)(2,1)}', space=vmem, size = 0x1b000, scoped, tag = 'scratch operand']
  %s0 = inlined_call_operand.vmem [shape: f32[2,16,16,4], index: 0, kind: input, shape index: {}]
  %s1 = inlined_call_operand.vmem [shape: f32[2,1,32], index: 1, kind: input, shape index: {}]
  %s2 = inlined_call_operand.vmem [shape: f32[4,4], index: 2, kind: input, shape index: {}]
  %s3 = inlined_call_operand.vmem [shape: f32[1,4], index: 3, kind: input, shape index: {}]
  %s4 = inlined_call_operand.vmem [shape: f32[1,4], index: 4, kind: input, shape index: {}]
  %s5 = inlined_call_operand.vmem [shape: bf16[36,32], index: 5, kind: input, shape index: {}]
  %s6 = inlined_call_operand.vmem [shape: f32[1,32], index: 6, kind: input, shape index: {}]
  %s7 = inlined_call_operand.vmem [shape: f32[32,32], index: 7, kind: input, shape index: {}]
  %s8 = inlined_call_operand.vmem [shape: f32[1,32], index: 8, kind: input, shape index: {}]
  %s9 = inlined_call_operand.vmem [shape: f32[1,32], index: 9, kind: input, shape index: {}]
  %s10 = inlined_call_operand.vmem [shape: bf16[288,32], index: 10, kind: input, shape index: {}]
  %s11 = inlined_call_operand.vmem [shape: f32[1,32], index: 11, kind: input, shape index: {}]
  %s12 = inlined_call_operand.hbm [shape: f32[2,32,256], index: 12, kind: output, shape index: {0}]
  %s13 = inlined_call_operand.hbm [shape: f32[2,32,64], index: 13, kind: output, shape index: {1}]
  %14 = xla_tuple %s12, %s13
  %s15 = sld [smem:[#allocation0]]
  $region89: #{tpu_custom_call.1} parent=0
    _
  %s17 = ssub.s32 1, %s15
  %s18 = scalar_select 0, %s17, %s15
  $region1: #{tpu_custom_call.1} parent=0
    #allocation4 [shape = 'u8[65536]{0}', space=vmem, size = 0x10000, scoped, tag = 'output window, operand 0']
    #allocation5 [shape = 's32[2]{0}', space=sflag, size = 0x8, scoped, tag = 'scoped memory for tpu_custom_call.1']
    #allocation6 [shape = 'u8[32768]{0}', space=vmem, size = 0x8000, scoped, tag = 'output window, operand 1']
    #allocation7 [shape = 's32[2]{0}', space=sflag, size = 0x8, scoped, tag = 'scoped memory for tpu_custom_call.1']
    %19 = vsyncpa [#allocation5], 0
    %s20 = scalar_lea.sflag [#allocation5], 1
    %21 = vsyncpa %s20, 0
    %22 = vsyncpa [#allocation7], 0
    %s23 = scalar_lea.sflag [#allocation7], 1
    %24 = vsyncpa %s23, 0
    loop: start=0, step=1, limit=4
    $region2: #{tpu_custom_call.1} parent=1 // loop_pre_header
      _
    $region3: #{tpu_custom_call.1} parent=1 // loop_header
      %s26 = sphi 0, %s30
      %p27 = scmp.ge.s32.totalorder %s26, 4
      %s36 = sphi 0, %s38
      %s39 = sphi 0, %s36
      %s40 = sphi 0, %s39
      %s56 = sphi 0, %s40
      %s62 = sphi 0, %s64
      %s65 = sphi 0, %s62
      %s66 = sphi 0, %s65
      %s82 = sphi 0, %s66
      %s86 = sphi 0, %s86
      %s88 = sphi 0, %s86
      %s89 = sphi 0, %s88
      %s103 = sphi 0, %s89
      %s107 = sphi 0, %s107
      %s109 = sphi 0, %s107
      %s110 = sphi 0, %s109
      %s124 = sphi 0, %s110
      %s128 = sphi 0, %s128
      %s130 = sphi 0, %s128
      %s131 = sphi 0, %s130
      %s145 = sphi 0, %s131
      %s149 = sphi 0, %s149
      %s151 = sphi 0, %s149
      %s152 = sphi 0, %s151
      %s166 = sphi 0, %s152
      %s170 = sphi 0, %s170
      %s172 = sphi 0, %s170
      %s173 = sphi 0, %s172
      %s187 = sphi 0, %s173
      %s191 = sphi 0, %s191
      %s193 = sphi 0, %s191
      %s194 = sphi 0, %s193
      %s208 = sphi 0, %s194
      %s212 = sphi 0, %s212
      %s214 = sphi 0, %s212
      %s215 = sphi 0, %s214
      %s229 = sphi 0, %s215
      %s233 = sphi 0, %s233
      %s235 = sphi 0, %s233
      %s236 = sphi 0, %s235
      %s250 = sphi 0, %s236
      %s254 = sphi 0, %s254
      %s256 = sphi 0, %s254
      %s257 = sphi 0, %s256
      %s271 = sphi 0, %s257
      %s275 = sphi 0, %s275
      %s277 = sphi 0, %s275
      %s278 = sphi 0, %s277
      %s292 = sphi 0, %s278
      %s298 = sphi 0, %s300
      %s301 = sphi 0, %s298
      %s302 = sphi 0, %s301
      %s318 = sphi 0, %s302
      %s324 = sphi 0, %s326
      %s327 = sphi 0, %s324
      %s328 = sphi 0, %s327
      %s344 = sphi 0, %s328
    $region4: #{tpu_custom_call.1} parent=1 // loop_header_branch
      %29 = sbr.rel (%p27) target = $region8
    $region5: #{tpu_custom_call.1} parent=1 // loop_body
      %s31 = ssub.s32 %s26, 1
      %s32 = ssub.s32 %s26, 2
      %s33 = sadd.s32 %s26, 1
      %s34 = ssub.s32 %s26, %s33
      %p35 = scmp.eq.s32.totalorder %s34, 0
      %s37 = sadd.s32 %s36, 1
      %s38 = scalar_select %p35, %s36, %s37
      %p41 = pneg %p35
      %p42 = scmp.eq.s32.totalorder %s26, 1
      %p43 = por %p41, %p42
      %p44 = scmp.ne.s32.totalorder %s36, %s39
      %p45 = scmp.eq.s32.totalorder %s26, 0
      %p46 = por %p44, %p45
      %p47 = scmp.ne.s32.totalorder %s36, %s39
      %p48 = scmp.eq.s32.totalorder %s31, 1
      %p49 = por %p47, %p48
      %p50 = scmp.ne.s32.totalorder %s39, %s40
      %p51 = scmp.eq.s32.totalorder %s31, 0
      %p52 = por %p50, %p51
      %p53 = scmp.ne.s32.totalorder %s39, %s40
      %p54 = scmp.eq.s32.totalorder %s32, 1
      %p55 = por %p53, %p54
      %p57 = scmp.ne.s32.totalorder %s40, %s56
      %p58 = scmp.eq.s32.totalorder %s32, 0
      %p59 = por %p57, %p58
      %s60 = ssub.s32 %s26, %s33
      %p61 = scmp.eq.s32.totalorder %s60, 0
      %s63 = sadd.s32 %s62, 1
      %s64 = scalar_select %p61, %s62, %s63
      %p67 = pneg %p61
      %p68 = scmp.eq.s32.totalorder %s26, 1
      %p69 = por %p67, %p68
      %p70 = scmp.ne.s32.totalorder %s62, %s65
      %p71 = scmp.eq.s32.totalorder %s26, 0
      %p72 = por %p70, %p71
      %p73 = scmp.ne.s32.totalorder %s62, %s65
      %p74 = scmp.eq.s32.totalorder %s31, 1
      %p75 = por %p73, %p74
      %p76 = scmp.ne.s32.totalorder %s65, %s66
      %p77 = scmp.eq.s32.totalorder %s31, 0
      %p78 = por %p76, %p77
      %p79 = scmp.ne.s32.totalorder %s65, %s66
      %p80 = scmp.eq.s32.totalorder %s32, 1
      %p81 = por %p79, %p80
      %p83 = scmp.ne.s32.totalorder %s66, %s82
      %p84 = scmp.eq.s32.totalorder %s32, 0
      %p85 = por %p83, %p84
      %s87 = sadd.s32 %s86, 1
      %p90 = scmp.eq.s32.totalorder %s26, 1
      %p91 = scmp.ne.s32.totalorder %s86, %s88
      %p92 = scmp.eq.s32.totalorder %s26, 0
      %p93 = por %p91, %p92
      %p94 = scmp.ne.s32.totalorder %s86, %s88
      %p95 = scmp.eq.s32.totalorder %s31, 1
      %p96 = por %p94, %p95
      %p97 = scmp.ne.s32.totalorder %s88, %s89
      %p98 = scmp.eq.s32.totalorder %s31, 0
      %p99 = por %p97, %p98
      %p100 = scmp.ne.s32.totalorder %s88, %s89
      %p101 = scmp.eq.s32.totalorder %s32, 1
      %p102 = por %p100, %p101
      %p104 = scmp.ne.s32.totalorder %s89, %s103
      %p105 = scmp.eq.s32.totalorder %s32, 0
      %p106 = por %p104, %p105
      %s108 = sadd.s32 %s107, 1
      %p111 = scmp.eq.s32.totalorder %s26, 1
      %p112 = scmp.ne.s32.totalorder %s107, %s109
      %p113 = scmp.eq.s32.totalorder %s26, 0
      %p114 = por %p112, %p113
      %p115 = scmp.ne.s32.totalorder %s107, %s109
      %p116 = scmp.eq.s32.totalorder %s31, 1
      %p117 = por %p115, %p116
      %p118 = scmp.ne.s32.totalorder %s109, %s110
      %p119 = scmp.eq.s32.totalorder %s31, 0
      %p120 = por %p118, %p119
      %p121 = scmp.ne.s32.totalorder %s109, %s110
      %p122 = scmp.eq.s32.totalorder %s32, 1
      %p123 = por %p121, %p122
      %p125 = scmp.ne.s32.totalorder %s110, %s124
      %p126 = scmp.eq.s32.totalorder %s32, 0
      %p127 = por %p125, %p126
      %s129 = sadd.s32 %s128, 1
      %p132 = scmp.eq.s32.totalorder %s26, 1
      %p133 = scmp.ne.s32.totalorder %s128, %s130
      %p134 = scmp.eq.s32.totalorder %s26, 0
      %p135 = por %p133, %p134
      %p136 = scmp.ne.s32.totalorder %s128, %s130
      %p137 = scmp.eq.s32.totalorder %s31, 1
      %p138 = por %p136, %p137
      %p139 = scmp.ne.s32.totalorder %s130, %s131
      %p140 = scmp.eq.s32.totalorder %s31, 0
      %p141 = por %p139, %p140
      %p142 = scmp.ne.s32.totalorder %s130, %s131
      %p143 = scmp.eq.s32.totalorder %s32, 1
      %p144 = por %p142, %p143
      %p146 = scmp.ne.s32.totalorder %s131, %s145
      %p147 = scmp.eq.s32.totalorder %s32, 0
      %p148 = por %p146, %p147
      %s150 = sadd.s32 %s149, 1
      %p153 = scmp.eq.s32.totalorder %s26, 1
      %p154 = scmp.ne.s32.totalorder %s149, %s151
      %p155 = scmp.eq.s32.totalorder %s26, 0
      %p156 = por %p154, %p155
      %p157 = scmp.ne.s32.totalorder %s149, %s151
      %p158 = scmp.eq.s32.totalorder %s31, 1
      %p159 = por %p157, %p158
      %p160 = scmp.ne.s32.totalorder %s151, %s152
      %p161 = scmp.eq.s32.totalorder %s31, 0
      %p162 = por %p160, %p161
      %p163 = scmp.ne.s32.totalorder %s151, %s152
      %p164 = scmp.eq.s32.totalorder %s32, 1
      %p165 = por %p163, %p164
      %p167 = scmp.ne.s32.totalorder %s152, %s166
      %p168 = scmp.eq.s32.totalorder %s32, 0
      %p169 = por %p167, %p168
      %s171 = sadd.s32 %s170, 1
      %p174 = scmp.eq.s32.totalorder %s26, 1
      %p175 = scmp.ne.s32.totalorder %s170, %s172
      %p176 = scmp.eq.s32.totalorder %s26, 0
      %p177 = por %p175, %p176
      %p178 = scmp.ne.s32.totalorder %s170, %s172
      %p179 = scmp.eq.s32.totalorder %s31, 1
      %p180 = por %p178, %p179
      %p181 = scmp.ne.s32.totalorder %s172, %s173
      %p182 = scmp.eq.s32.totalorder %s31, 0
      %p183 = por %p181, %p182
      %p184 = scmp.ne.s32.totalorder %s172, %s173
      %p185 = scmp.eq.s32.totalorder %s32, 1
      %p186 = por %p184, %p185
      %p188 = scmp.ne.s32.totalorder %s173, %s187
      %p189 = scmp.eq.s32.totalorder %s32, 0
      %p190 = por %p188, %p189
      %s192 = sadd.s32 %s191, 1
      %p195 = scmp.eq.s32.totalorder %s26, 1
      %p196 = scmp.ne.s32.totalorder %s191, %s193
      %p197 = scmp.eq.s32.totalorder %s26, 0
      %p198 = por %p196, %p197
      %p199 = scmp.ne.s32.totalorder %s191, %s193
      %p200 = scmp.eq.s32.totalorder %s31, 1
      %p201 = por %p199, %p200
      %p202 = scmp.ne.s32.totalorder %s193, %s194
      %p203 = scmp.eq.s32.totalorder %s31, 0
      %p204 = por %p202, %p203
      %p205 = scmp.ne.s32.totalorder %s193, %s194
      %p206 = scmp.eq.s32.totalorder %s32, 1
      %p207 = por %p205, %p206
      %p209 = scmp.ne.s32.totalorder %s194, %s208
      %p210 = scmp.eq.s32.totalorder %s32, 0
      %p211 = por %p209, %p210
      %s213 = sadd.s32 %s212, 1
      %p216 = scmp.eq.s32.totalorder %s26, 1
      %p217 = scmp.ne.s32.totalorder %s212, %s214
      %p218 = scmp.eq.s32.totalorder %s26, 0
      %p219 = por %p217, %p218
      %p220 = scmp.ne.s32.totalorder %s212, %s214
      %p221 = scmp.eq.s32.totalorder %s31, 1
      %p222 = por %p220, %p221
      %p223 = scmp.ne.s32.totalorder %s214, %s215
      %p224 = scmp.eq.s32.totalorder %s31, 0
      %p225 = por %p223, %p224
      %p226 = scmp.ne.s32.totalorder %s214, %s215
      %p227 = scmp.eq.s32.totalorder %s32, 1
      %p228 = por %p226, %p227
      %p230 = scmp.ne.s32.totalorder %s215, %s229
      %p231 = scmp.eq.s32.totalorder %s32, 0
      %p232 = por %p230, %p231
      %s234 = sadd.s32 %s233, 1
      %p237 = scmp.eq.s32.totalorder %s26, 1
      %p238 = scmp.ne.s32.totalorder %s233, %s235
      %p239 = scmp.eq.s32.totalorder %s26, 0
      %p240 = por %p238, %p239
      %p241 = scmp.ne.s32.totalorder %s233, %s235
      %p242 = scmp.eq.s32.totalorder %s31, 1
      %p243 = por %p241, %p242
      %p244 = scmp.ne.s32.totalorder %s235, %s236
      %p245 = scmp.eq.s32.totalorder %s31, 0
      %p246 = por %p244, %p245
      %p247 = scmp.ne.s32.totalorder %s235, %s236
      %p248 = scmp.eq.s32.totalorder %s32, 1
      %p249 = por %p247, %p248
      %p251 = scmp.ne.s32.totalorder %s236, %s250
      %p252 = scmp.eq.s32.totalorder %s32, 0
      %p253 = por %p251, %p252
      %s255 = sadd.s32 %s254, 1
      %p258 = scmp.eq.s32.totalorder %s26, 1
      %p259 = scmp.ne.s32.totalorder %s254, %s256
      %p260 = scmp.eq.s32.totalorder %s26, 0
      %p261 = por %p259, %p260
      %p262 = scmp.ne.s32.totalorder %s254, %s256
      %p263 = scmp.eq.s32.totalorder %s31, 1
      %p264 = por %p262, %p263
      %p265 = scmp.ne.s32.totalorder %s256, %s257
      %p266 = scmp.eq.s32.totalorder %s31, 0
      %p267 = por %p265, %p266
      %p268 = scmp.ne.s32.totalorder %s256, %s257
      %p269 = scmp.eq.s32.totalorder %s32, 1
      %p270 = por %p268, %p269
      %p272 = scmp.ne.s32.totalorder %s257, %s271
      %p273 = scmp.eq.s32.totalorder %s32, 0
      %p274 = por %p272, %p273
      %s276 = sadd.s32 %s275, 1
      %p279 = scmp.eq.s32.totalorder %s26, 1
      %p280 = scmp.ne.s32.totalorder %s275, %s277
      %p281 = scmp.eq.s32.totalorder %s26, 0
      %p282 = por %p280, %p281
      %p283 = scmp.ne.s32.totalorder %s275, %s277
      %p284 = scmp.eq.s32.totalorder %s31, 1
      %p285 = por %p283, %p284
      %p286 = scmp.ne.s32.totalorder %s277, %s278
      %p287 = scmp.eq.s32.totalorder %s31, 0
      %p288 = por %p286, %p287
      %p289 = scmp.ne.s32.totalorder %s277, %s278
      %p290 = scmp.eq.s32.totalorder %s32, 1
      %p291 = por %p289, %p290
      %p293 = scmp.ne.s32.totalorder %s278, %s292
      %p294 = scmp.eq.s32.totalorder %s32, 0
      %p295 = por %p293, %p294
      %s296 = ssub.s32 %s26, %s33
      %p297 = scmp.eq.s32.totalorder %s296, 0
      %s299 = sadd.s32 %s298, 1
      %s300 = scalar_select %p297, %s298, %s299
      %p303 = pneg %p297
      %p304 = scmp.eq.s32.totalorder %s26, 1
      %p305 = por %p303, %p304
      %p306 = scmp.ne.s32.totalorder %s298, %s301
      %p307 = scmp.eq.s32.totalorder %s26, 0
      %p308 = por %p306, %p307
      %p309 = scmp.ne.s32.totalorder %s298, %s301
      %p310 = scmp.eq.s32.totalorder %s31, 1
      %p311 = por %p309, %p310
      %p312 = scmp.ne.s32.totalorder %s301, %s302
      %p313 = scmp.eq.s32.totalorder %s31, 0
      %p314 = por %p312, %p313
      %p315 = scmp.ne.s32.totalorder %s301, %s302
      %p316 = scmp.eq.s32.totalorder %s32, 1
      %p317 = por %p315, %p316
      %p319 = scmp.ne.s32.totalorder %s302, %s318
      %p320 = scmp.eq.s32.totalorder %s32, 0
      %p321 = por %p319, %p320
      %s322 = ssub.s32 %s26, %s33
      %p323 = scmp.eq.s32.totalorder %s322, 0
      %s325 = sadd.s32 %s324, 1
      %s326 = scalar_select %p323, %s324, %s325
      %p329 = pneg %p323
      %p330 = scmp.eq.s32.totalorder %s26, 1
      %p331 = por %p329, %p330
      %p332 = scmp.ne.s32.totalorder %s324, %s327
      %p333 = scmp.eq.s32.totalorder %s26, 0
      %p334 = por %p332, %p333
      %p335 = scmp.ne.s32.totalorder %s324, %s327
      %p336 = scmp.eq.s32.totalorder %s31, 1
      %p337 = por %p335, %p336
      %p338 = scmp.ne.s32.totalorder %s327, %s328
      %p339 = scmp.eq.s32.totalorder %s31, 0
      %p340 = por %p338, %p339
      %p341 = scmp.ne.s32.totalorder %s327, %s328
      %p342 = scmp.eq.s32.totalorder %s32, 1
      %p343 = por %p341, %p342
      %p345 = scmp.ne.s32.totalorder %s328, %s344
      %p346 = scmp.eq.s32.totalorder %s32, 0
      %p347 = por %p345, %p346
      %p348 = scmp.le.s32.totalorder 1, %s26
      %p349 = scmp.lt.s32.totalorder %s26, 3
      %p350 = pnand %p348, %p349
      %p351 = pneg %p350
      // Predicated region
      $region9: #{tpu_custom_call.1} parent=5 // pred_check
        _
      $region10: #{tpu_custom_call.1} parent=5 // pred_check_branch
        %353 = sbr.rel (%p350) target = $region12
      $region11: #{tpu_custom_call.1} parent=5 // pred_region
        %s354 = ssub.s32 %s26, 1
        // Predicated region
        $region13: #{tpu_custom_call.1} parent=11 // pred_check
          %p355 = pneg %p99
        $region14: #{tpu_custom_call.1} parent=11 // pred_check_branch
          %357 = sbr.rel (%p355) target = $region16
        $region15: #{tpu_custom_call.1} parent=11 // pred_region
          _
        $region16: #{tpu_custom_call.1} parent=11 // pred_fallthru
          _
        // Predicated region
        $region17: #{tpu_custom_call.1} parent=11 // pred_check
          %p358 = pneg %p120
        $region18: #{tpu_custom_call.1} parent=11 // pred_check_branch
          %360 = sbr.rel (%p358) target = $region20
        $region19: #{tpu_custom_call.1} parent=11 // pred_region
          _
        $region20: #{tpu_custom_call.1} parent=11 // pred_fallthru
          _
        // Predicated region
        $region21: #{tpu_custom_call.1} parent=11 // pred_check
          %p361 = pneg %p141
        $region22: #{tpu_custom_call.1} parent=11 // pred_check_branch
          %363 = sbr.rel (%p361) target = $region24
        $region23: #{tpu_custom_call.1} parent=11 // pred_region
          _
        $region24: #{tpu_custom_call.1} parent=11 // pred_fallthru
          _
        // Predicated region
        $region25: #{tpu_custom_call.1} parent=11 // pred_check
          %p364 = pneg %p162
        $region26: #{tpu_custom_call.1} parent=11 // pred_check_branch
          %366 = sbr.rel (%p364) target = $region28
        $region27: #{tpu_custom_call.1} parent=11 // pred_region
          _
        $region28: #{tpu_custom_call.1} parent=11 // pred_fallthru
          _
        // Predicated region
        $region29: #{tpu_custom_call.1} parent=11 // pred_check
          %p367 = pneg %p183
        $region30: #{tpu_custom_call.1} parent=11 // pred_check_branch
          %369 = sbr.rel (%p367) target = $region32
        $region31: #{tpu_custom_call.1} parent=11 // pred_region
          _
        $region32: #{tpu_custom_call.1} parent=11 // pred_fallthru
          _
        // Predicated region
        $region33: #{tpu_custom_call.1} parent=11 // pred_check
          %p370 = pneg %p204
        $region34: #{tpu_custom_call.1} parent=11 // pred_check_branch
          %372 = sbr.rel (%p370) target = $region36
        $region35: #{tpu_custom_call.1} parent=11 // pred_region
          _
        $region36: #{tpu_custom_call.1} parent=11 // pred_fallthru
          _
        // Predicated region
        $region37: #{tpu_custom_call.1} parent=11 // pred_check
          %p373 = pneg %p225
        $region38: #{tpu_custom_call.1} parent=11 // pred_check_branch
          %375 = sbr.rel (%p373) target = $region40
        $region39: #{tpu_custom_call.1} parent=11 // pred_region
          _
        $region40: #{tpu_custom_call.1} parent=11 // pred_fallthru
          _
        // Predicated region
        $region41: #{tpu_custom_call.1} parent=11 // pred_check
          %p376 = pneg %p246
        $region42: #{tpu_custom_call.1} parent=11 // pred_check_branch
          %378 = sbr.rel (%p376) target = $region44
        $region43: #{tpu_custom_call.1} parent=11 // pred_region
          _
        $region44: #{tpu_custom_call.1} parent=11 // pred_fallthru
          _
        // Predicated region
        $region45: #{tpu_custom_call.1} parent=11 // pred_check
          %p379 = pneg %p267
        $region46: #{tpu_custom_call.1} parent=11 // pred_check_branch
          %381 = sbr.rel (%p379) target = $region48
        $region47: #{tpu_custom_call.1} parent=11 // pred_region
          _
        $region48: #{tpu_custom_call.1} parent=11 // pred_fallthru
          _
        // Predicated region
        $region49: #{tpu_custom_call.1} parent=11 // pred_check
          %p382 = pneg %p288
        $region50: #{tpu_custom_call.1} parent=11 // pred_check_branch
          %384 = sbr.rel (%p382) target = $region52
        $region51: #{tpu_custom_call.1} parent=11 // pred_region
          _
        $region52: #{tpu_custom_call.1} parent=11 // pred_fallthru
          _
      $region12: #{tpu_custom_call.1} parent=5 // pred_fallthru
        _
      %p385 = scmp.lt.s32.totalorder %s26, 2
      // Predicated region
      $region53: #{tpu_custom_call.1} parent=5 // pred_check
        %p386 = pneg %p385
      $region54: #{tpu_custom_call.1} parent=5 // pred_check_branch
        %388 = sbr.rel (%p386) target = $region56
      $region55: #{tpu_custom_call.1} parent=5 // pred_region
        // Predicated region
        $region57: #{tpu_custom_call.1} parent=55 // pred_check
          %p389 = pneg %p46
        $region58: #{tpu_custom_call.1} parent=55 // pred_check_branch
          %391 = sbr.rel (%p389) target = $region60
        $region59: #{tpu_custom_call.1} parent=55 // pred_region
          %p392 = scmp.lt.s32.totalorder %s26, 1
          %s393 = scalar_select %p392, %s26, 1
          %s394 = smul.addr %s393, 32
          %s395 = smul.addr %s394, 8
          %s396 = scalar_lea.vmem %s0, %s395
        $region60: #{tpu_custom_call.1} parent=55 // pred_fallthru
          _
        // Predicated region
        $region61: #{tpu_custom_call.1} parent=55 // pred_check
          %p397 = pneg %p72
        $region62: #{tpu_custom_call.1} parent=55 // pred_check_branch
          %399 = sbr.rel (%p397) target = $region64
        $region63: #{tpu_custom_call.1} parent=55 // pred_region
          %p400 = scmp.lt.s32.totalorder %s26, 1
          %s401 = scalar_select %p400, %s26, 1
          %s402 = scalar_lea.vmem %s1, %s401
        $region64: #{tpu_custom_call.1} parent=55 // pred_fallthru
          _
      $region56: #{tpu_custom_call.1} parent=5 // pred_fallthru
        _
      %p403 = scmp.le.s32.totalorder 1, %s26
      %p404 = scmp.lt.s32.totalorder %s26, 3
      %p405 = pnand %p403, %p404
      %p406 = pneg %p405
      // Predicated region
      $region65: #{tpu_custom_call.1} parent=5 // pred_check
        _
      $region66: #{tpu_custom_call.1} parent=5 // pred_check_branch
        %408 = sbr.rel (%p405) target = $region68
      $region67: #{tpu_custom_call.1} parent=5 // pred_region
        %s409 = ssub.s32 %s26, 1
        %p410 = scmp.lt.s32.totalorder %s31, 1
        %s411 = scalar_select %p410, %s31, 1
        %s412 = smul.addr %s411, 32
        %s413 = smul.addr %s412, 8
        %s414 = scalar_lea.vmem %s0, %s413
        %p415 = pneg %p52
        %p416 = pneg %p49
        %p417 = scmp.lt.s32.totalorder %s31, 1
        %s418 = scalar_select %p417, %s31, 1
        %s419 = scalar_lea.vmem %s1, %s418
        %p420 = pneg %p78
        %p421 = pneg %p75
        %p422 = pneg %p99
        %p423 = pneg %p96
        %p424 = pneg %p120
        %p425 = pneg %p117
        %p426 = pneg %p141
        %p427 = pneg %p138
        %p428 = pneg %p162
        %p429 = pneg %p159
        %p430 = pneg %p183
        %p431 = pneg %p180
        %p432 = pneg %p204
        %p433 = pneg %p201
        %p434 = pneg %p225
        %p435 = pneg %p222
        %p436 = pneg %p246
        %p437 = pneg %p243
        %p438 = pneg %p267
        %p439 = pneg %p264
        %p440 = pneg %p288
        %p441 = pneg %p285
        %p442 = pneg %p314
        %p443 = pneg %p311
        %s444 = sand.u32 %s301, 1
        %s445 = scalar_lea.sflag [#allocation5], %s444
        %s446 = sand.u32 %s301, 1
        %s447 = smul.addr %s446, 64
        %s448 = scalar_lea.vmem [#allocation4], %s447
        %p449 = pneg %p340
        %p450 = pneg %p337
        %s451 = sand.u32 %s327, 1
        %s452 = scalar_lea.sflag [#allocation7], %s451
        %s453 = sand.u32 %s327, 1
        %s454 = smul.addr %s453, 32
        %s455 = scalar_lea.vmem [#allocation6], %s454
        %p456 = scmp.lt.s32.totalorder %s31, 1
        %s457 = scalar_select %p456, %s31, 1
        %s458 = smul.addr %s457, 32
        %s459 = smul.addr %s458, 8
        %s460 = scalar_lea.vmem %s0, %s459
        %p461 = scmp.lt.s32.totalorder %s31, 1
        %s462 = scalar_select %p461, %s31, 1
        %s463 = scalar_lea.vmem %s1, %s462
        %vm465 = vcmask 27648
        %466 = vst.msk [vmem:[#allocation2] sm:$0xf] %vm465, 0
        %467 = vst.msk [vmem:[#allocation2 + $0x4] sm:$0xf] %vm465, 0
        %vm468 = vcmask 24576
        %469 = vst.msk [vmem:[#allocation2 + $0x8] sm:$0x1] %vm468, 0
        %470 = vst.msk [vmem:[#allocation2 + $0xc] sm:$0xf] %vm465, 0
        %471 = vst.msk [vmem:[#allocation2 + $0x10] sm:$0xf] %vm465, 0
        %472 = vst.msk [vmem:[#allocation2 + $0x14] sm:$0x1] %vm468, 0
        %473 = vst.msk [vmem:[#allocation2 + $0x18] sm:$0xf] %vm465, 0
        %474 = vst.msk [vmem:[#allocation2 + $0x1c] sm:$0xf] %vm465, 0
        %475 = vst.msk [vmem:[#allocation2 + $0x20] sm:$0x1] %vm468, 0
        %476 = vst.msk [vmem:[#allocation2 + $0x24] sm:$0xf] %vm465, 0
        %477 = vst.msk [vmem:[#allocation2 + $0x28] sm:$0xf] %vm465, 0
        %478 = vst.msk [vmem:[#allocation2 + $0x2c] sm:$0x1] %vm468, 0
        %479 = vst.msk [vmem:[#allocation2 + $0x30] sm:$0xf] %vm465, 0
        %480 = vst.msk [vmem:[#allocation2 + $0x34] sm:$0xf] %vm465, 0
        %481 = vst.msk [vmem:[#allocation2 + $0x38] sm:$0x1] %vm468, 0
        %482 = vst.msk [vmem:[#allocation2 + $0x3c] sm:$0xf] %vm465, 0
        %483 = vst.msk [vmem:[#allocation2 + $0x40] sm:$0xf] %vm465, 0
        %484 = vst.msk [vmem:[#allocation2 + $0x44] sm:$0x1] %vm468, 0
        %485 = vst.msk [vmem:[#allocation2 + $0x48] sm:$0xf] %vm465, 0
        %486 = vst.msk [vmem:[#allocation2 + $0x4c] sm:$0xf] %vm465, 0
        %487 = vst.msk [vmem:[#allocation2 + $0x50] sm:$0x1] %vm468, 0
        %488 = vst.msk [vmem:[#allocation2 + $0x54] sm:$0xf] %vm465, 0
        %489 = vst.msk [vmem:[#allocation2 + $0x58] sm:$0xf] %vm465, 0
        %490 = vst.msk [vmem:[#allocation2 + $0x5c] sm:$0x1] %vm468, 0
        %491 = vst.msk [vmem:[#allocation2 + $0x60] sm:$0xf] %vm465, 0
        %492 = vst.msk [vmem:[#allocation2 + $0x64] sm:$0xf] %vm465, 0
        %493 = vst.msk [vmem:[#allocation2 + $0x68] sm:$0x1] %vm468, 0
        %494 = vst.msk [vmem:[#allocation2 + $0x6c] sm:$0xf] %vm465, 0
        %495 = vst.msk [vmem:[#allocation2 + $0x70] sm:$0xf] %vm465, 0
        %496 = vst.msk [vmem:[#allocation2 + $0x74] sm:$0x1] %vm468, 0
        %497 = vst.msk [vmem:[#allocation2 + $0x78] sm:$0xf] %vm465, 0
        %498 = vst.msk [vmem:[#allocation2 + $0x7c] sm:$0xf] %vm465, 0
        %499 = vst.msk [vmem:[#allocation2 + $0x80] sm:$0x1] %vm468, 0
        %500 = vst.msk [vmem:[#allocation2 + $0x84] sm:$0xf] %vm465, 0
        %501 = vst.msk [vmem:[#allocation2 + $0x88] sm:$0xf] %vm465, 0
        %502 = vst.msk [vmem:[#allocation2 + $0x8c] sm:$0x1] %vm468, 0
        %503 = vst.msk [vmem:[#allocation2 + $0x90] sm:$0xf] %vm465, 0
        %504 = vst.msk [vmem:[#allocation2 + $0x94] sm:$0xf] %vm465, 0
        %505 = vst.msk [vmem:[#allocation2 + $0x98] sm:$0x1] %vm468, 0
        %506 = vst.msk [vmem:[#allocation2 + $0x9c] sm:$0xf] %vm465, 0
        %507 = vst.msk [vmem:[#allocation2 + $0xa0] sm:$0xf] %vm465, 0
        %508 = vst.msk [vmem:[#allocation2 + $0xa4] sm:$0x1] %vm468, 0
        %509 = vst.msk [vmem:[#allocation2 + $0xa8] sm:$0xf] %vm465, 0
        %510 = vst.msk [vmem:[#allocation2 + $0xac] sm:$0xf] %vm465, 0
        %511 = vst.msk [vmem:[#allocation2 + $0xb0] sm:$0x1] %vm468, 0
        %512 = vst.msk [vmem:[#allocation2 + $0xb4] sm:$0xf] %vm465, 0
        %513 = vst.msk [vmem:[#allocation2 + $0xb8] sm:$0xf] %vm465, 0
        %514 = vst.msk [vmem:[#allocation2 + $0xbc] sm:$0x1] %vm468, 0
        %515 = vst.msk [vmem:[#allocation2 + $0xc0] sm:$0xf] %vm465, 0
        %516 = vst.msk [vmem:[#allocation2 + $0xc4] sm:$0xf] %vm465, 0
        %517 = vst.msk [vmem:[#allocation2 + $0xc8] sm:$0x1] %vm468, 0
        %518 = vst.msk [vmem:[#allocation2 + $0xcc] sm:$0xf] %vm465, 0
        %519 = vst.msk [vmem:[#allocation2 + $0xd0] sm:$0xf] %vm465, 0
        %520 = vst.msk [vmem:[#allocation2 + $0xd4] sm:$0x1] %vm468, 0
        %vm521 = vcmask 257024
        %522 = vst.msk [vmem:[#allocation3] sm:$0xf] %vm521, 0
        %523 = vst.msk [vmem:[#allocation3 + $0x4] sm:$0xf] %vm521, 0
        %vm524 = vcmask 253952
        %525 = vst.msk [vmem:[#allocation3 + $0x8] sm:$0x1] %vm524, 0
        %526 = vst.msk [vmem:[#allocation3 + $0xc] sm:$0xf] %vm521, 0
        %527 = vst.msk [vmem:[#allocation3 + $0x10] sm:$0xf] %vm521, 0
        %528 = vst.msk [vmem:[#allocation3 + $0x14] sm:$0x1] %vm524, 0
        %529 = vst.msk [vmem:[#allocation3 + $0x18] sm:$0xf] %vm521, 0
        %530 = vst.msk [vmem:[#allocation3 + $0x1c] sm:$0xf] %vm521, 0
        %531 = vst.msk [vmem:[#allocation3 + $0x20] sm:$0x1] %vm524, 0
        %532 = vst.msk [vmem:[#allocation3 + $0x24] sm:$0xf] %vm521, 0
        %533 = vst.msk [vmem:[#allocation3 + $0x28] sm:$0xf] %vm521, 0
        %534 = vst.msk [vmem:[#allocation3 + $0x2c] sm:$0x1] %vm524, 0
        %535 = vst.msk [vmem:[#allocation3 + $0x30] sm:$0xf] %vm521, 0
        %536 = vst.msk [vmem:[#allocation3 + $0x34] sm:$0xf] %vm521, 0
        %537 = vst.msk [vmem:[#allocation3 + $0x38] sm:$0x1] %vm524, 0
        %538 = vst.msk [vmem:[#allocation3 + $0x3c] sm:$0xf] %vm521, 0
        %539 = vst.msk [vmem:[#allocation3 + $0x40] sm:$0xf] %vm521, 0
        %540 = vst.msk [vmem:[#allocation3 + $0x44] sm:$0x1] %vm524, 0
        %541 = vst.msk [vmem:[#allocation3 + $0x48] sm:$0xf] %vm521, 0
        %542 = vst.msk [vmem:[#allocation3 + $0x4c] sm:$0xf] %vm521, 0
        %543 = vst.msk [vmem:[#allocation3 + $0x50] sm:$0x1] %vm524, 0
        %544 = vst.msk [vmem:[#allocation3 + $0x54] sm:$0xf] %vm521, 0
        %545 = vst.msk [vmem:[#allocation3 + $0x58] sm:$0xf] %vm521, 0
        %546 = vst.msk [vmem:[#allocation3 + $0x5c] sm:$0x1] %vm524, 0
        %547 = vst.msk [vmem:[#allocation3 + $0x60] sm:$0xf] %vm521, 0
        %548 = vst.msk [vmem:[#allocation3 + $0x64] sm:$0xf] %vm521, 0
        %549 = vst.msk [vmem:[#allocation3 + $0x68] sm:$0x1] %vm524, 0
        %550 = vst.msk [vmem:[#allocation3 + $0x6c] sm:$0xf] %vm521, 0
        %551 = vst.msk [vmem:[#allocation3 + $0x70] sm:$0xf] %vm521, 0
        %552 = vst.msk [vmem:[#allocation3 + $0x74] sm:$0x1] %vm524, 0
        %553 = vst.msk [vmem:[#allocation3 + $0x78] sm:$0xf] %vm521, 0
        %554 = vst.msk [vmem:[#allocation3 + $0x7c] sm:$0xf] %vm521, 0
        %555 = vst.msk [vmem:[#allocation3 + $0x80] sm:$0x1] %vm524, 0
        %556 = vst.msk [vmem:[#allocation3 + $0x84] sm:$0xf] %vm521, 0
        %557 = vst.msk [vmem:[#allocation3 + $0x88] sm:$0xf] %vm521, 0
        %558 = vst.msk [vmem:[#allocation3 + $0x8c] sm:$0x1] %vm524, 0
        %559 = vst.msk [vmem:[#allocation3 + $0x90] sm:$0xf] %vm521, 0
        %560 = vst.msk [vmem:[#allocation3 + $0x94] sm:$0xf] %vm521, 0
        %561 = vst.msk [vmem:[#allocation3 + $0x98] sm:$0x1] %vm524, 0
        %562 = vst.msk [vmem:[#allocation3 + $0x9c] sm:$0xf] %vm521, 0
        %563 = vst.msk [vmem:[#allocation3 + $0xa0] sm:$0xf] %vm521, 0
        %564 = vst.msk [vmem:[#allocation3 + $0xa4] sm:$0x1] %vm524, 0
        %565 = vst.msk [vmem:[#allocation3 + $0xa8] sm:$0xf] %vm521, 0
        %566 = vst.msk [vmem:[#allocation3 + $0xac] sm:$0xf] %vm521, 0
        %567 = vst.msk [vmem:[#allocation3 + $0xb0] sm:$0x1] %vm524, 0
        %568 = vst.msk [vmem:[#allocation3 + $0xb4] sm:$0xf] %vm521, 0
        %569 = vst.msk [vmem:[#allocation3 + $0xb8] sm:$0xf] %vm521, 0
        %570 = vst.msk [vmem:[#allocation3 + $0xbc] sm:$0x1] %vm524, 0
        %571 = vst.msk [vmem:[#allocation3 + $0xc0] sm:$0xf] %vm521, 0
        %572 = vst.msk [vmem:[#allocation3 + $0xc4] sm:$0xf] %vm521, 0
        %573 = vst.msk [vmem:[#allocation3 + $0xc8] sm:$0x1] %vm524, 0
        %574 = vst.msk [vmem:[#allocation3 + $0xcc] sm:$0xf] %vm521, 0
        %575 = vst.msk [vmem:[#allocation3 + $0xd0] sm:$0xf] %vm521, 0
        %576 = vst.msk [vmem:[#allocation3 + $0xd4] sm:$0x1] %vm524, 0
        %v577 = vld [vmem:[%s460] sm:$0xff]
        %v578 = vld [vmem:[%s460 + $0x8] sm:$0xff]
        %v579 = vld [vmem:[%s460 + $0x10] sm:$0xff]
        %v580 = vld [vmem:[%s460 + $0x18] sm:$0xff]
        %v581 = vld [vmem:[%s460 + $0x20] sm:$0xff]
        %v582 = vld [vmem:[%s460 + $0x28] sm:$0xff]
        %v583 = vld [vmem:[%s460 + $0x30] sm:$0xff]
        %v584 = vld [vmem:[%s460 + $0x38] sm:$0xff]
        %v585 = vld [vmem:[%s460 + $0x40] sm:$0xff]
        %v586 = vld [vmem:[%s460 + $0x48] sm:$0xff]
        %v587 = vld [vmem:[%s460 + $0x50] sm:$0xff]
        %v588 = vld [vmem:[%s460 + $0x58] sm:$0xff]
        %v589 = vld [vmem:[%s460 + $0x60] sm:$0xff]
        %v590 = vld [vmem:[%s460 + $0x68] sm:$0xff]
        %v591 = vld [vmem:[%s460 + $0x70] sm:$0xff]
        %v592 = vld [vmem:[%s460 + $0x78] sm:$0xff]
        %v593 = vld [vmem:[%s460 + $0x80] sm:$0xff]
        %v594 = vld [vmem:[%s460 + $0x88] sm:$0xff]
        %v595 = vld [vmem:[%s460 + $0x90] sm:$0xff]
        %v596 = vld [vmem:[%s460 + $0x98] sm:$0xff]
        %v597 = vld [vmem:[%s460 + $0xa0] sm:$0xff]
        %v598 = vld [vmem:[%s460 + $0xa8] sm:$0xff]
        %v599 = vld [vmem:[%s460 + $0xb0] sm:$0xff]
        %v600 = vld [vmem:[%s460 + $0xb8] sm:$0xff]
        %v601 = vld [vmem:[%s460 + $0xc0] sm:$0xff]
        %v602 = vld [vmem:[%s460 + $0xc8] sm:$0xff]
        %v603 = vld [vmem:[%s460 + $0xd0] sm:$0xff]
        %v604 = vld [vmem:[%s460 + $0xd8] sm:$0xff]
        %v605 = vld [vmem:[%s460 + $0xe0] sm:$0xff]
        %v606 = vld [vmem:[%s460 + $0xe8] sm:$0xff]
        %v607 = vld [vmem:[%s460 + $0xf0] sm:$0xff]
        %v608 = vld [vmem:[%s460 + $0xf8] sm:$0xff]
        %vm609 = vcmask 31744
        %v610 = vsel %vm609, %v577, 0.0
        %v611 = vsel %vm609, %v578, 0.0
        %v612 = vadd.f32 %v610, %v611
        %v613 = vsel %vm609, %v579, 0.0
        %v614 = vadd.f32 %v612, %v613
        %v615 = vsel %vm609, %v580, 0.0
        %v616 = vadd.f32 %v614, %v615
        %v617 = vsel %vm609, %v581, 0.0
        %v618 = vadd.f32 %v616, %v617
        %v619 = vsel %vm609, %v582, 0.0
        %v620 = vadd.f32 %v618, %v619
        %v621 = vsel %vm609, %v583, 0.0
        %v622 = vadd.f32 %v620, %v621
        %v623 = vsel %vm609, %v584, 0.0
        %v624 = vadd.f32 %v622, %v623
        %v625 = vsel %vm609, %v585, 0.0
        %v626 = vadd.f32 %v624, %v625
        %v627 = vsel %vm609, %v586, 0.0
        %v628 = vadd.f32 %v626, %v627
        %v629 = vsel %vm609, %v587, 0.0
        %v630 = vadd.f32 %v628, %v629
        %v631 = vsel %vm609, %v588, 0.0
        %v632 = vadd.f32 %v630, %v631
        %v633 = vsel %vm609, %v589, 0.0
        %v634 = vadd.f32 %v632, %v633
        %v635 = vsel %vm609, %v590, 0.0
        %v636 = vadd.f32 %v634, %v635
        %v637 = vsel %vm609, %v591, 0.0
        %v638 = vadd.f32 %v636, %v637
        %v639 = vsel %vm609, %v592, 0.0
        %v640 = vadd.f32 %v638, %v639
        %v641 = vsel %vm609, %v593, 0.0
        %v642 = vadd.f32 %v640, %v641
        %v643 = vsel %vm609, %v594, 0.0
        %v644 = vadd.f32 %v642, %v643
        %v645 = vsel %vm609, %v595, 0.0
        %v646 = vadd.f32 %v644, %v645
        %v647 = vsel %vm609, %v596, 0.0
        %v648 = vadd.f32 %v646, %v647
        %v649 = vsel %vm609, %v597, 0.0
        %v650 = vadd.f32 %v648, %v649
        %v651 = vsel %vm609, %v598, 0.0
        %v652 = vadd.f32 %v650, %v651
        %v653 = vsel %vm609, %v599, 0.0
        %v654 = vadd.f32 %v652, %v653
        %v655 = vsel %vm609, %v600, 0.0
        %v656 = vadd.f32 %v654, %v655
        %v657 = vsel %vm609, %v601, 0.0
        %v658 = vadd.f32 %v656, %v657
        %v659 = vsel %vm609, %v602, 0.0
        %v660 = vadd.f32 %v658, %v659
        %v661 = vsel %vm609, %v603, 0.0
        %v662 = vadd.f32 %v660, %v661
        %v663 = vsel %vm609, %v604, 0.0
        %v664 = vadd.f32 %v662, %v663
        %v665 = vsel %vm609, %v605, 0.0
        %v666 = vadd.f32 %v664, %v665
        %v667 = vsel %vm609, %v606, 0.0
        %v668 = vadd.f32 %v666, %v667
        %v669 = vsel %vm609, %v607, 0.0
        %v670 = vadd.f32 %v668, %v669
        %v671 = vsel %vm609, %v608, 0.0
        %v672 = vadd.f32 %v670, %v671
        %v673 = vrot.slane %v672, 4
        %v674 = vadd.f32 %v672, %v673
        %v675 = vrot.slane %v674, 2
        %v676 = vadd.f32 %v674, %v675
        %v677 = vrot.slane %v676, 1
        %v678 = vadd.f32 %v676, %v677
        %v679 = vmul.f32 %v577, %v577
        %v680 = vmul.f32 %v578, %v578
        %v681 = vmul.f32 %v579, %v579
        %v682 = vmul.f32 %v580, %v580
        %v683 = vmul.f32 %v581, %v581
        %v684 = vmul.f32 %v582, %v582
        %v685 = vmul.f32 %v583, %v583
        %v686 = vmul.f32 %v584, %v584
        %v687 = vmul.f32 %v585, %v585
        %v688 = vmul.f32 %v586, %v586
        %v689 = vmul.f32 %v587, %v587
        %v690 = vmul.f32 %v588, %v588
        %v691 = vmul.f32 %v589, %v589
        %v692 = vmul.f32 %v590, %v590
        %v693 = vmul.f32 %v591, %v591
        %v694 = vmul.f32 %v592, %v592
        %v695 = vmul.f32 %v593, %v593
        %v696 = vmul.f32 %v594, %v594
        %v697 = vmul.f32 %v595, %v595
        %v698 = vmul.f32 %v596, %v596
        %v699 = vmul.f32 %v597, %v597
        %v700 = vmul.f32 %v598, %v598
        %v701 = vmul.f32 %v599, %v599
        %v702 = vmul.f32 %v600, %v600
        %v703 = vmul.f32 %v601, %v601
        %v704 = vmul.f32 %v602, %v602
        %v705 = vmul.f32 %v603, %v603
        %v706 = vmul.f32 %v604, %v604
        %v707 = vmul.f32 %v605, %v605
        %v708 = vmul.f32 %v606, %v606
        %v709 = vmul.f32 %v607, %v607
        %v710 = vmul.f32 %v608, %v608
        %v711 = vsel %vm609, %v679, 0.0
        %v712 = vsel %vm609, %v680, 0.0
        %v713 = vadd.f32 %v711, %v712
        %v714 = vsel %vm609, %v681, 0.0
        %v715 = vadd.f32 %v713, %v714
        %v716 = vsel %vm609, %v682, 0.0
        %v717 = vadd.f32 %v715, %v716
        %v718 = vsel %vm609, %v683, 0.0
        %v719 = vadd.f32 %v717, %v718
        %v720 = vsel %vm609, %v684, 0.0
        %v721 = vadd.f32 %v719, %v720
        %v722 = vsel %vm609, %v685, 0.0
        %v723 = vadd.f32 %v721, %v722
        %v724 = vsel %vm609, %v686, 0.0
        %v725 = vadd.f32 %v723, %v724
        %v726 = vsel %vm609, %v687, 0.0
        %v727 = vadd.f32 %v725, %v726
        %v728 = vsel %vm609, %v688, 0.0
        %v729 = vadd.f32 %v727, %v728
        %v730 = vsel %vm609, %v689, 0.0
        %v731 = vadd.f32 %v729, %v730
        %v732 = vsel %vm609, %v690, 0.0
        %v733 = vadd.f32 %v731, %v732
        %v734 = vsel %vm609, %v691, 0.0
        %v735 = vadd.f32 %v733, %v734
        %v736 = vsel %vm609, %v692, 0.0
        %v737 = vadd.f32 %v735, %v736
        %v738 = vsel %vm609, %v693, 0.0
        %v739 = vadd.f32 %v737, %v738
        %v740 = vsel %vm609, %v694, 0.0
        %v741 = vadd.f32 %v739, %v740
        %v742 = vsel %vm609, %v695, 0.0
        %v743 = vadd.f32 %v741, %v742
        %v744 = vsel %vm609, %v696, 0.0
        %v745 = vadd.f32 %v743, %v744
        %v746 = vsel %vm609, %v697, 0.0
        %v747 = vadd.f32 %v745, %v746
        %v748 = vsel %vm609, %v698, 0.0
        %v749 = vadd.f32 %v747, %v748
        %v750 = vsel %vm609, %v699, 0.0
        %v751 = vadd.f32 %v749, %v750
        %v752 = vsel %vm609, %v700, 0.0
        %v753 = vadd.f32 %v751, %v752
        %v754 = vsel %vm609, %v701, 0.0
        %v755 = vadd.f32 %v753, %v754
        %v756 = vsel %vm609, %v702, 0.0
        %v757 = vadd.f32 %v755, %v756
        %v758 = vsel %vm609, %v703, 0.0
        %v759 = vadd.f32 %v757, %v758
        %v760 = vsel %vm609, %v704, 0.0
        %v761 = vadd.f32 %v759, %v760
        %v762 = vsel %vm609, %v705, 0.0
        %v763 = vadd.f32 %v761, %v762
        %v764 = vsel %vm609, %v706, 0.0
        %v765 = vadd.f32 %v763, %v764
        %v766 = vsel %vm609, %v707, 0.0
        %v767 = vadd.f32 %v765, %v766
        %v768 = vsel %vm609, %v708, 0.0
        %v769 = vadd.f32 %v767, %v768
        %v770 = vsel %vm609, %v709, 0.0
        %v771 = vadd.f32 %v769, %v770
        %v772 = vsel %vm609, %v710, 0.0
        %v773 = vadd.f32 %v771, %v772
        %v774 = vrot.slane %v773, 4
        %v775 = vadd.f32 %v773, %v774
        %v776 = vrot.slane %v775, 2
        %v777 = vadd.f32 %v775, %v776
        %v778 = vrot.slane %v777, 1
        %v779 = vadd.f32 %v777, %v778
        %v780 = vmul.f32 %v678, 0.00390625
        %v781 = vmul.f32 %v779, 0.00390625
        %v782 = vmul.f32 %v780, %v780
        %v783 = vsub.f32 %v781, %v782
        %v784 = vmax.f32 %v783, 0.0
        %v785 = vadd.f32 %v784, 1e-05
        %v786 = vrsqrt.pop %v785
        %v787 = vsub.f32 %v577, %v780
        %v788 = vsub.f32 %v578, %v780
        %v789 = vsub.f32 %v579, %v780
        %v790 = vsub.f32 %v580, %v780
        %v791 = vsub.f32 %v581, %v780
        %v792 = vsub.f32 %v582, %v780
        %v793 = vsub.f32 %v583, %v780
        %v794 = vsub.f32 %v584, %v780
        %v795 = vsub.f32 %v585, %v780
        %v796 = vsub.f32 %v586, %v780
        %v797 = vsub.f32 %v587, %v780
        %v798 = vsub.f32 %v588, %v780
        %v799 = vsub.f32 %v589, %v780
        %v800 = vsub.f32 %v590, %v780
        %v801 = vsub.f32 %v591, %v780
        %v802 = vsub.f32 %v592, %v780
        %v803 = vsub.f32 %v593, %v780
        %v804 = vsub.f32 %v594, %v780
        %v805 = vsub.f32 %v595, %v780
        %v806 = vsub.f32 %v596, %v780
        %v807 = vsub.f32 %v597, %v780
        %v808 = vsub.f32 %v598, %v780
        %v809 = vsub.f32 %v599, %v780
        %v810 = vsub.f32 %v600, %v780
        %v811 = vsub.f32 %v601, %v780
        %v812 = vsub.f32 %v602, %v780
        %v813 = vsub.f32 %v603, %v780
        %v814 = vsub.f32 %v604, %v780
        %v815 = vsub.f32 %v605, %v780
        %v816 = vsub.f32 %v606, %v780
        %v817 = vsub.f32 %v607, %v780
        %v818 = vsub.f32 %v608, %v780
        %v819 = vmul.f32 %v787, %v786
        %v820 = vmul.f32 %v788, %v786
        %v821 = vmul.f32 %v789, %v786
        %v822 = vmul.f32 %v790, %v786
        %v823 = vmul.f32 %v791, %v786
        %v824 = vmul.f32 %v792, %v786
        %v825 = vmul.f32 %v793, %v786
        %v826 = vmul.f32 %v794, %v786
        %v827 = vmul.f32 %v795, %v786
        %v828 = vmul.f32 %v796, %v786
        %v829 = vmul.f32 %v797, %v786
        %v830 = vmul.f32 %v798, %v786
        %v831 = vmul.f32 %v799, %v786
        %v832 = vmul.f32 %v800, %v786
        %v833 = vmul.f32 %v801, %v786
        %v834 = vmul.f32 %v802, %v786
        %v835 = vmul.f32 %v803, %v786
        %v836 = vmul.f32 %v804, %v786
        %v837 = vmul.f32 %v805, %v786
        %v838 = vmul.f32 %v806, %v786
        %v839 = vmul.f32 %v807, %v786
        %v840 = vmul.f32 %v808, %v786
        %v841 = vmul.f32 %v809, %v786
        %v842 = vmul.f32 %v810, %v786
        %v843 = vmul.f32 %v811, %v786
        %v844 = vmul.f32 %v812, %v786
        %v845 = vmul.f32 %v813, %v786
        %v846 = vmul.f32 %v814, %v786
        %v847 = vmul.f32 %v815, %v786
        %v848 = vmul.f32 %v816, %v786
        %v849 = vmul.f32 %v817, %v786
        %v850 = vmul.f32 %v818, %v786
        %v851 = vld [vmem:[%s3] sm:$0x1]
        %v853 = vlaneseq
        %v854 = vshrl.u32 %v853, 7
        %v855 = vsub.s32 0, %v854
        %v856 = vrot.slane %v851, %v855
        %v858 = vmul.f32 %v819, %v856
        %v859 = vmul.f32 %v820, %v856
        %v860 = vmul.f32 %v821, %v856
        %v861 = vmul.f32 %v822, %v856
        %v862 = vmul.f32 %v823, %v856
        %v863 = vmul.f32 %v824, %v856
        %v864 = vmul.f32 %v825, %v856
        %v865 = vmul.f32 %v826, %v856
        %v866 = vmul.f32 %v827, %v856
        %v867 = vmul.f32 %v828, %v856
        %v868 = vmul.f32 %v829, %v856
        %v869 = vmul.f32 %v830, %v856
        %v870 = vmul.f32 %v831, %v856
        %v871 = vmul.f32 %v832, %v856
        %v872 = vmul.f32 %v833, %v856
        %v873 = vmul.f32 %v834, %v856
        %v874 = vmul.f32 %v835, %v856
        %v875 = vmul.f32 %v836, %v856
        %v876 = vmul.f32 %v837, %v856
        %v877 = vmul.f32 %v838, %v856
        %v878 = vmul.f32 %v839, %v856
        %v879 = vmul.f32 %v840, %v856
        %v880 = vmul.f32 %v841, %v856
        %v881 = vmul.f32 %v842, %v856
        %v882 = vmul.f32 %v843, %v856
        %v883 = vmul.f32 %v844, %v856
        %v884 = vmul.f32 %v845, %v856
        %v885 = vmul.f32 %v846, %v856
        %v886 = vmul.f32 %v847, %v856
        %v887 = vmul.f32 %v848, %v856
        %v888 = vmul.f32 %v849, %v856
        %v889 = vmul.f32 %v850, %v856
        %v890 = vld [vmem:[%s4] sm:$0x1]
        %v892 = vlaneseq
        %v893 = vshrl.u32 %v892, 7
        %v894 = vsub.s32 0, %v893
        %v895 = vrot.slane %v890, %v894
        %v897 = vadd.f32 %v858, %v895
        %v898 = vadd.f32 %v859, %v895
        %v899 = vadd.f32 %v860, %v895
        %v900 = vadd.f32 %v861, %v895
        %v901 = vadd.f32 %v862, %v895
        %v902 = vadd.f32 %v863, %v895
        %v903 = vadd.f32 %v864, %v895
        %v904 = vadd.f32 %v865, %v895
        %v905 = vadd.f32 %v866, %v895
        %v906 = vadd.f32 %v867, %v895
        %v907 = vadd.f32 %v868, %v895
        %v908 = vadd.f32 %v869, %v895
        %v909 = vadd.f32 %v870, %v895
        %v910 = vadd.f32 %v871, %v895
        %v911 = vadd.f32 %v872, %v895
        %v912 = vadd.f32 %v873, %v895
        %v913 = vadd.f32 %v874, %v895
        %v914 = vadd.f32 %v875, %v895
        %v915 = vadd.f32 %v876, %v895
        %v916 = vadd.f32 %v877, %v895
        %v917 = vadd.f32 %v878, %v895
        %v918 = vadd.f32 %v879, %v895
        %v919 = vadd.f32 %v880, %v895
        %v920 = vadd.f32 %v881, %v895
        %v921 = vadd.f32 %v882, %v895
        %v922 = vadd.f32 %v883, %v895
        %v923 = vadd.f32 %v884, %v895
        %v924 = vadd.f32 %v885, %v895
        %v925 = vadd.f32 %v886, %v895
        %v926 = vadd.f32 %v887, %v895
        %v927 = vadd.f32 %v888, %v895
        %v928 = vadd.f32 %v889, %v895
        %v929 = vpack.c.bf16 %v898, %v897
        %v930 = vpack.c.bf16 %v900, %v899
        %v931 = vpack.c.bf16 %v902, %v901
        %v932 = vpack.c.bf16 %v904, %v903
        %v933 = vpack.c.bf16 %v906, %v905
        %v934 = vpack.c.bf16 %v908, %v907
        %v935 = vpack.c.bf16 %v910, %v909
        %v936 = vpack.c.bf16 %v912, %v911
        %v937 = vpack.c.bf16 %v914, %v913
        %v938 = vpack.c.bf16 %v916, %v915
        %v939 = vpack.c.bf16 %v918, %v917
        %v940 = vpack.c.bf16 %v920, %v919
        %v941 = vpack.c.bf16 %v922, %v921
        %v942 = vpack.c.bf16 %v924, %v923
        %v943 = vpack.c.bf16 %v926, %v925
        %v944 = vpack.c.bf16 %v928, %v927
        %v961 = vunpack.c.l.b16 %v929
        %v962 = vunpack.c.h.b16 %v929
        %v963 = vunpack.c.l.b16 %v930
        %v964 = vunpack.c.h.b16 %v930
        %v965 = vunpack.c.l.b16 %v931
        %v966 = vunpack.c.h.b16 %v931
        %v967 = vunpack.c.l.b16 %v932
        %v968 = vunpack.c.h.b16 %v932
        %v969 = vunpack.c.l.b16 %v933
        %v970 = vunpack.c.h.b16 %v933
        %v971 = vunpack.c.l.b16 %v934
        %v972 = vunpack.c.h.b16 %v934
        %v973 = vunpack.c.l.b16 %v935
        %v974 = vunpack.c.h.b16 %v935
        %v975 = vunpack.c.l.b16 %v936
        %v976 = vunpack.c.h.b16 %v936
        %v977 = vunpack.c.l.b16 %v937
        %v978 = vunpack.c.h.b16 %v937
        %v979 = vunpack.c.l.b16 %v938
        %v980 = vunpack.c.h.b16 %v938
        %v981 = vunpack.c.l.b16 %v939
        %v982 = vunpack.c.h.b16 %v939
        %v983 = vunpack.c.l.b16 %v940
        %v984 = vunpack.c.h.b16 %v940
        %v985 = vunpack.c.l.b16 %v941
        %v986 = vunpack.c.h.b16 %v941
        %v987 = vunpack.c.l.b16 %v942
        %v988 = vunpack.c.h.b16 %v942
        %v989 = vunpack.c.l.b16 %v943
        %v990 = vunpack.c.h.b16 %v943
        %v991 = vunpack.c.l.b16 %v944
        %v992 = vunpack.c.h.b16 %v944
        %v993 = vpack.c.b16 %v961, %v961
        %v994 = vpack.c.b16 %v962, %v962
        %v995 = vpack.c.b16 %v963, %v963
        %v996 = vpack.c.b16 %v964, %v964
        %v997 = vpack.c.b16 %v965, %v965
        %v998 = vpack.c.b16 %v966, %v966
        %v999 = vpack.c.b16 %v967, %v967
        %v1000 = vpack.c.b16 %v968, %v968
        %v1001 = vpack.c.b16 %v969, %v969
        %v1002 = vpack.c.b16 %v970, %v970
        %v1003 = vpack.c.b16 %v971, %v971
        %v1004 = vpack.c.b16 %v972, %v972
        %v1005 = vpack.c.b16 %v973, %v973
        %v1006 = vpack.c.b16 %v974, %v974
        %v1007 = vpack.c.b16 %v975, %v975
        %v1008 = vpack.c.b16 %v976, %v976
        %v1009 = vpack.c.b16 %v977, %v977
        %v1010 = vpack.c.b16 %v978, %v978
        %v1011 = vpack.c.b16 %v979, %v979
        %v1012 = vpack.c.b16 %v980, %v980
        %v1013 = vpack.c.b16 %v981, %v981
        %v1014 = vpack.c.b16 %v982, %v982
        %v1015 = vpack.c.b16 %v983, %v983
        %v1016 = vpack.c.b16 %v984, %v984
        %v1017 = vpack.c.b16 %v985, %v985
        %v1018 = vpack.c.b16 %v986, %v986
        %v1019 = vpack.c.b16 %v987, %v987
        %v1020 = vpack.c.b16 %v988, %v988
        %v1021 = vpack.c.b16 %v989, %v989
        %v1022 = vpack.c.b16 %v990, %v990
        %v1023 = vpack.c.b16 %v991, %v991
        %v1024 = vpack.c.b16 %v992, %v992
        %vm1025 = vsmask.f32 256
        %vm1026 = vsmask.f32 4368
        %vm1027 = vmor %vm1025, %vm1026
        %v1029 = vshrl.u32 %v993, 16
        %v1031 = vrot.slane %v1029, 7
        %v1032 = vshll.u32 %v993, 16
        %v1034 = vor.u32 %v1031, %v1032
        %v1035 = vrot.slane %v1031, 4
        %v1037 = vshrl.u32 %v994, 16
        %v1039 = vrot.slane %v1037, 7
        %v1040 = vshll.u32 %v994, 16
        %v1042 = vor.u32 %v1039, %v1040
        %v1043 = vsel %vm1027, %v1035, %v1042
        %v1044 = vrot.slane %v1039, 4
        %v1046 = vshrl.u32 %v995, 16
        %v1048 = vrot.slane %v1046, 7
        %v1049 = vshll.u32 %v995, 16
        %v1051 = vor.u32 %v1048, %v1049
        %v1052 = vrot.slane %v1048, 4
        %v1054 = vshrl.u32 %v996, 16
        %v1056 = vrot.slane %v1054, 7
        %v1057 = vshll.u32 %v996, 16
        %v1059 = vor.u32 %v1056, %v1057
        %v1060 = vsel %vm1027, %v1052, %v1059
        %v1061 = vrot.slane %v1056, 4
        %v1063 = vshrl.u32 %v997, 16
        %v1065 = vrot.slane %v1063, 7
        %v1066 = vshll.u32 %v997, 16
        %v1068 = vor.u32 %v1065, %v1066
        %v1069 = vrot.slane %v1065, 4
        %v1071 = vshrl.u32 %v998, 16
        %v1073 = vrot.slane %v1071, 7
        %v1074 = vshll.u32 %v998, 16
        %v1076 = vor.u32 %v1073, %v1074
        %v1077 = vsel %vm1027, %v1069, %v1076
        %v1078 = vrot.slane %v1073, 4
        %v1080 = vshrl.u32 %v999, 16
        %v1082 = vrot.slane %v1080, 7
        %v1083 = vshll.u32 %v999, 16
        %v1085 = vor.u32 %v1082, %v1083
        %v1086 = vrot.slane %v1082, 4
        %v1088 = vshrl.u32 %v1000, 16
        %v1090 = vrot.slane %v1088, 7
        %v1091 = vshll.u32 %v1000, 16
        %v1093 = vor.u32 %v1090, %v1091
        %v1094 = vsel %vm1027, %v1086, %v1093
        %v1095 = vrot.slane %v1090, 4
        %v1097 = vshrl.u32 %v1001, 16
        %v1099 = vrot.slane %v1097, 7
        %v1100 = vshll.u32 %v1001, 16
        %v1102 = vor.u32 %v1099, %v1100
        %v1103 = vrot.slane %v1099, 4
        %v1105 = vshrl.u32 %v1002, 16
        %v1107 = vrot.slane %v1105, 7
        %v1108 = vshll.u32 %v1002, 16
        %v1110 = vor.u32 %v1107, %v1108
        %v1111 = vsel %vm1027, %v1103, %v1110
        %v1112 = vrot.slane %v1107, 4
        %v1114 = vshrl.u32 %v1003, 16
        %v1116 = vrot.slane %v1114, 7
        %v1117 = vshll.u32 %v1003, 16
        %v1119 = vor.u32 %v1116, %v1117
        %v1120 = vrot.slane %v1116, 4
        %v1122 = vshrl.u32 %v1004, 16
        %v1124 = vrot.slane %v1122, 7
        %v1125 = vshll.u32 %v1004, 16
        %v1127 = vor.u32 %v1124, %v1125
        %v1128 = vsel %vm1027, %v1120, %v1127
        %v1129 = vrot.slane %v1124, 4
        %v1131 = vshrl.u32 %v1005, 16
        %v1133 = vrot.slane %v1131, 7
        %v1134 = vshll.u32 %v1005, 16
        %v1136 = vor.u32 %v1133, %v1134
        %v1137 = vrot.slane %v1133, 4
        %v1139 = vshrl.u32 %v1006, 16
        %v1141 = vrot.slane %v1139, 7
        %v1142 = vshll.u32 %v1006, 16
        %v1144 = vor.u32 %v1141, %v1142
        %v1145 = vsel %vm1027, %v1137, %v1144
        %v1146 = vrot.slane %v1141, 4
        %v1148 = vshrl.u32 %v1007, 16
        %v1150 = vrot.slane %v1148, 7
        %v1151 = vshll.u32 %v1007, 16
        %v1153 = vor.u32 %v1150, %v1151
        %v1154 = vrot.slane %v1150, 4
        %v1156 = vshrl.u32 %v1008, 16
        %v1158 = vrot.slane %v1156, 7
        %v1159 = vshll.u32 %v1008, 16
        %v1161 = vor.u32 %v1158, %v1159
        %v1162 = vsel %vm1027, %v1154, %v1161
        %v1163 = vrot.slane %v1158, 4
        %v1165 = vshrl.u32 %v1009, 16
        %v1167 = vrot.slane %v1165, 7
        %v1168 = vshll.u32 %v1009, 16
        %v1170 = vor.u32 %v1167, %v1168
        %v1171 = vrot.slane %v1167, 4
        %v1173 = vshrl.u32 %v1010, 16
        %v1175 = vrot.slane %v1173, 7
        %v1176 = vshll.u32 %v1010, 16
        %v1178 = vor.u32 %v1175, %v1176
        %v1179 = vsel %vm1027, %v1171, %v1178
        %v1180 = vrot.slane %v1175, 4
        %v1182 = vshrl.u32 %v1011, 16
        %v1184 = vrot.slane %v1182, 7
        %v1185 = vshll.u32 %v1011, 16
        %v1187 = vor.u32 %v1184, %v1185
        %v1188 = vrot.slane %v1184, 4
        %v1190 = vshrl.u32 %v1012, 16
        %v1192 = vrot.slane %v1190, 7
        %v1193 = vshll.u32 %v1012, 16
        %v1195 = vor.u32 %v1192, %v1193
        %v1196 = vsel %vm1027, %v1188, %v1195
        %v1197 = vrot.slane %v1192, 4
        %v1199 = vshrl.u32 %v1013, 16
        %v1201 = vrot.slane %v1199, 7
        %v1202 = vshll.u32 %v1013, 16
        %v1204 = vor.u32 %v1201, %v1202
        %v1205 = vrot.slane %v1201, 4
        %v1207 = vshrl.u32 %v1014, 16
        %v1209 = vrot.slane %v1207, 7
        %v1210 = vshll.u32 %v1014, 16
        %v1212 = vor.u32 %v1209, %v1210
        %v1213 = vsel %vm1027, %v1205, %v1212
        %v1214 = vrot.slane %v1209, 4
        %v1216 = vshrl.u32 %v1015, 16
        %v1218 = vrot.slane %v1216, 7
        %v1219 = vshll.u32 %v1015, 16
        %v1221 = vor.u32 %v1218, %v1219
        %v1222 = vrot.slane %v1218, 4
        %v1224 = vshrl.u32 %v1016, 16
        %v1226 = vrot.slane %v1224, 7
        %v1227 = vshll.u32 %v1016, 16
        %v1229 = vor.u32 %v1226, %v1227
        %v1230 = vsel %vm1027, %v1222, %v1229
        %v1231 = vrot.slane %v1226, 4
        %v1233 = vshrl.u32 %v1017, 16
        %v1235 = vrot.slane %v1233, 7
        %v1236 = vshll.u32 %v1017, 16
        %v1238 = vor.u32 %v1235, %v1236
        %v1239 = vrot.slane %v1235, 4
        %v1241 = vshrl.u32 %v1018, 16
        %v1243 = vrot.slane %v1241, 7
        %v1244 = vshll.u32 %v1018, 16
        %v1246 = vor.u32 %v1243, %v1244
        %v1247 = vsel %vm1027, %v1239, %v1246
        %v1248 = vrot.slane %v1243, 4
        %v1250 = vshrl.u32 %v1019, 16
        %v1252 = vrot.slane %v1250, 7
        %v1253 = vshll.u32 %v1019, 16
        %v1255 = vor.u32 %v1252, %v1253
        %v1256 = vrot.slane %v1252, 4
        %v1258 = vshrl.u32 %v1020, 16
        %v1260 = vrot.slane %v1258, 7
        %v1261 = vshll.u32 %v1020, 16
        %v1263 = vor.u32 %v1260, %v1261
        %v1264 = vsel %vm1027, %v1256, %v1263
        %v1265 = vrot.slane %v1260, 4
        %v1267 = vshrl.u32 %v1021, 16
        %v1269 = vrot.slane %v1267, 7
        %v1270 = vshll.u32 %v1021, 16
        %v1272 = vor.u32 %v1269, %v1270
        %v1273 = vrot.slane %v1269, 4
        %v1275 = vshrl.u32 %v1022, 16
        %v1277 = vrot.slane %v1275, 7
        %v1278 = vshll.u32 %v1022, 16
        %v1280 = vor.u32 %v1277, %v1278
        %v1281 = vsel %vm1027, %v1273, %v1280
        %v1282 = vrot.slane %v1277, 4
        %v1284 = vshrl.u32 %v1023, 16
        %v1286 = vrot.slane %v1284, 7
        %v1287 = vshll.u32 %v1023, 16
        %v1289 = vor.u32 %v1286, %v1287
        %v1290 = vrot.slane %v1286, 4
        %v1292 = vshrl.u32 %v1024, 16
        %v1294 = vrot.slane %v1292, 7
        %v1295 = vshll.u32 %v1024, 16
        %v1297 = vor.u32 %v1294, %v1295
        %v1298 = vsel %vm1027, %v1290, %v1297
        %v1299 = vrot.slane %v1294, 4
        %s1348 = scalar_lea.vmem [#allocation2], 12
        %vm1349 = vcmask 27648
        %vm1350 = vsmask.f32 7938
        %vm1351 = vmand %vm1349, %vm1350
        %v1352 = vld [vmem:[%s1348] sm:$0xf]
        %v1353 = vsel %vm1351, %v1034, %v1352
        %1354 = vst [vmem:[%s1348] sm:$0xf] %v1353
        %1355 = vst.msk [vmem:[%s1348 + $0x4] sm:$0xf] %vm465, %v1043
        %vm1356 = vcmask 24576
        %vm1357 = vmand %vm1356, %vm1025
        %v1358 = vld [vmem:[%s1348 + $0x8] sm:$0x1]
        %v1359 = vsel %vm1357, %v1044, %v1358
        %1360 = vst [vmem:[%s1348 + $0x8] sm:$0x1] %v1359
        %v1361 = vld [vmem:[%s1348 + $0xc] sm:$0xf]
        %v1362 = vsel %vm1351, %v1051, %v1361
        %1363 = vst [vmem:[%s1348 + $0xc] sm:$0xf] %v1362
        %1364 = vst.msk [vmem:[%s1348 + $0x10] sm:$0xf] %vm465, %v1060
        %v1365 = vld [vmem:[%s1348 + $0x14] sm:$0x1]
        %v1366 = vsel %vm1357, %v1061, %v1365
        %1367 = vst [vmem:[%s1348 + $0x14] sm:$0x1] %v1366
        %v1368 = vld [vmem:[%s1348 + $0x18] sm:$0xf]
        %v1369 = vsel %vm1351, %v1068, %v1368
        %1370 = vst [vmem:[%s1348 + $0x18] sm:$0xf] %v1369
        %1371 = vst.msk [vmem:[%s1348 + $0x1c] sm:$0xf] %vm465, %v1077
        %v1372 = vld [vmem:[%s1348 + $0x20] sm:$0x1]
        %v1373 = vsel %vm1357, %v1078, %v1372
        %1374 = vst [vmem:[%s1348 + $0x20] sm:$0x1] %v1373
        %v1375 = vld [vmem:[%s1348 + $0x24] sm:$0xf]
        %v1376 = vsel %vm1351, %v1085, %v1375
        %1377 = vst [vmem:[%s1348 + $0x24] sm:$0xf] %v1376
        %1378 = vst.msk [vmem:[%s1348 + $0x28] sm:$0xf] %vm465, %v1094
        %v1379 = vld [vmem:[%s1348 + $0x2c] sm:$0x1]
        %v1380 = vsel %vm1357, %v1095, %v1379
        %1381 = vst [vmem:[%s1348 + $0x2c] sm:$0x1] %v1380
        %v1382 = vld [vmem:[%s1348 + $0x30] sm:$0xf]
        %v1383 = vsel %vm1351, %v1102, %v1382
        %1384 = vst [vmem:[%s1348 + $0x30] sm:$0xf] %v1383
        %1385 = vst.msk [vmem:[%s1348 + $0x34] sm:$0xf] %vm465, %v1111
        %v1386 = vld [vmem:[%s1348 + $0x38] sm:$0x1]
        %v1387 = vsel %vm1357, %v1112, %v1386
        %1388 = vst [vmem:[%s1348 + $0x38] sm:$0x1] %v1387
        %v1389 = vld [vmem:[%s1348 + $0x3c] sm:$0xf]
        %v1390 = vsel %vm1351, %v1119, %v1389
        %1391 = vst [vmem:[%s1348 + $0x3c] sm:$0xf] %v1390
        %1392 = vst.msk [vmem:[%s1348 + $0x40] sm:$0xf] %vm465, %v1128
        %v1393 = vld [vmem:[%s1348 + $0x44] sm:$0x1]
        %v1394 = vsel %vm1357, %v1129, %v1393
        %1395 = vst [vmem:[%s1348 + $0x44] sm:$0x1] %v1394
        %v1396 = vld [vmem:[%s1348 + $0x48] sm:$0xf]
        %v1397 = vsel %vm1351, %v1136, %v1396
        %1398 = vst [vmem:[%s1348 + $0x48] sm:$0xf] %v1397
        %1399 = vst.msk [vmem:[%s1348 + $0x4c] sm:$0xf] %vm465, %v1145
        %v1400 = vld [vmem:[%s1348 + $0x50] sm:$0x1]
        %v1401 = vsel %vm1357, %v1146, %v1400
        %1402 = vst [vmem:[%s1348 + $0x50] sm:$0x1] %v1401
        %v1403 = vld [vmem:[%s1348 + $0x54] sm:$0xf]
        %v1404 = vsel %vm1351, %v1153, %v1403
        %1405 = vst [vmem:[%s1348 + $0x54] sm:$0xf] %v1404
        %1406 = vst.msk [vmem:[%s1348 + $0x58] sm:$0xf] %vm465, %v1162
        %v1407 = vld [vmem:[%s1348 + $0x5c] sm:$0x1]
        %v1408 = vsel %vm1357, %v1163, %v1407
        %1409 = vst [vmem:[%s1348 + $0x5c] sm:$0x1] %v1408
        %v1410 = vld [vmem:[%s1348 + $0x60] sm:$0xf]
        %v1411 = vsel %vm1351, %v1170, %v1410
        %1412 = vst [vmem:[%s1348 + $0x60] sm:$0xf] %v1411
        %1413 = vst.msk [vmem:[%s1348 + $0x64] sm:$0xf] %vm465, %v1179
        %v1414 = vld [vmem:[%s1348 + $0x68] sm:$0x1]
        %v1415 = vsel %vm1357, %v1180, %v1414
        %1416 = vst [vmem:[%s1348 + $0x68] sm:$0x1] %v1415
        %v1417 = vld [vmem:[%s1348 + $0x6c] sm:$0xf]
        %v1418 = vsel %vm1351, %v1187, %v1417
        %1419 = vst [vmem:[%s1348 + $0x6c] sm:$0xf] %v1418
        %1420 = vst.msk [vmem:[%s1348 + $0x70] sm:$0xf] %vm465, %v1196
        %v1421 = vld [vmem:[%s1348 + $0x74] sm:$0x1]
        %v1422 = vsel %vm1357, %v1197, %v1421
        %1423 = vst [vmem:[%s1348 + $0x74] sm:$0x1] %v1422
        %v1424 = vld [vmem:[%s1348 + $0x78] sm:$0xf]
        %v1425 = vsel %vm1351, %v1204, %v1424
        %1426 = vst [vmem:[%s1348 + $0x78] sm:$0xf] %v1425
        %1427 = vst.msk [vmem:[%s1348 + $0x7c] sm:$0xf] %vm465, %v1213
        %v1428 = vld [vmem:[%s1348 + $0x80] sm:$0x1]
        %v1429 = vsel %vm1357, %v1214, %v1428
        %1430 = vst [vmem:[%s1348 + $0x80] sm:$0x1] %v1429
        %v1431 = vld [vmem:[%s1348 + $0x84] sm:$0xf]
        %v1432 = vsel %vm1351, %v1221, %v1431
        %1433 = vst [vmem:[%s1348 + $0x84] sm:$0xf] %v1432
        %1434 = vst.msk [vmem:[%s1348 + $0x88] sm:$0xf] %vm465, %v1230
        %v1435 = vld [vmem:[%s1348 + $0x8c] sm:$0x1]
        %v1436 = vsel %vm1357, %v1231, %v1435
        %1437 = vst [vmem:[%s1348 + $0x8c] sm:$0x1] %v1436
        %v1438 = vld [vmem:[%s1348 + $0x90] sm:$0xf]
        %v1439 = vsel %vm1351, %v1238, %v1438
        %1440 = vst [vmem:[%s1348 + $0x90] sm:$0xf] %v1439
        %1441 = vst.msk [vmem:[%s1348 + $0x94] sm:$0xf] %vm465, %v1247
        %v1442 = vld [vmem:[%s1348 + $0x98] sm:$0x1]
        %v1443 = vsel %vm1357, %v1248, %v1442
        %1444 = vst [vmem:[%s1348 + $0x98] sm:$0x1] %v1443
        %v1445 = vld [vmem:[%s1348 + $0x9c] sm:$0xf]
        %v1446 = vsel %vm1351, %v1255, %v1445
        %1447 = vst [vmem:[%s1348 + $0x9c] sm:$0xf] %v1446
        %1448 = vst.msk [vmem:[%s1348 + $0xa0] sm:$0xf] %vm465, %v1264
        %v1449 = vld [vmem:[%s1348 + $0xa4] sm:$0x1]
        %v1450 = vsel %vm1357, %v1265, %v1449
        %1451 = vst [vmem:[%s1348 + $0xa4] sm:$0x1] %v1450
        %v1452 = vld [vmem:[%s1348 + $0xa8] sm:$0xf]
        %v1453 = vsel %vm1351, %v1272, %v1452
        %1454 = vst [vmem:[%s1348 + $0xa8] sm:$0xf] %v1453
        %1455 = vst.msk [vmem:[%s1348 + $0xac] sm:$0xf] %vm465, %v1281
        %v1456 = vld [vmem:[%s1348 + $0xb0] sm:$0x1]
        %v1457 = vsel %vm1357, %v1282, %v1456
        %1458 = vst [vmem:[%s1348 + $0xb0] sm:$0x1] %v1457
        %v1459 = vld [vmem:[%s1348 + $0xb4] sm:$0xf]
        %v1460 = vsel %vm1351, %v1289, %v1459
        %1461 = vst [vmem:[%s1348 + $0xb4] sm:$0xf] %v1460
        %1462 = vst.msk [vmem:[%s1348 + $0xb8] sm:$0xf] %vm465, %v1298
        %v1463 = vld [vmem:[%s1348 + $0xbc] sm:$0x1]
        %v1464 = vsel %vm1357, %v1299, %v1463
        %1465 = vst [vmem:[%s1348 + $0xbc] sm:$0x1] %v1464
        %v1466 = vld [vmem:[#allocation2] sm:$0xf]
        %v1467 = vld [vmem:[#allocation2 + $0x4] sm:$0xf]
        %v1468 = vld [vmem:[#allocation2 + $0xc] sm:$0xf]
        %v1469 = vld [vmem:[#allocation2 + $0x10] sm:$0xf]
        %v1470 = vld [vmem:[#allocation2 + $0x18] sm:$0xf]
        %v1471 = vld [vmem:[#allocation2 + $0x1c] sm:$0xf]
        %v1472 = vld [vmem:[#allocation2 + $0x24] sm:$0xf]
        %v1473 = vld [vmem:[#allocation2 + $0x28] sm:$0xf]
        %v1474 = vld [vmem:[#allocation2 + $0x30] sm:$0xf]
        %v1475 = vld [vmem:[#allocation2 + $0x34] sm:$0xf]
        %v1476 = vld [vmem:[#allocation2 + $0x3c] sm:$0xf]
        %v1477 = vld [vmem:[#allocation2 + $0x40] sm:$0xf]
        %v1478 = vld [vmem:[#allocation2 + $0x48] sm:$0xf]
        %v1479 = vld [vmem:[#allocation2 + $0x4c] sm:$0xf]
        %v1480 = vld [vmem:[#allocation2 + $0x54] sm:$0xf]
        %v1481 = vld [vmem:[#allocation2 + $0x58] sm:$0xf]
        %v1482 = vld [vmem:[#allocation2 + $0x60] sm:$0xf]
        %v1483 = vld [vmem:[#allocation2 + $0x64] sm:$0xf]
        %v1484 = vld [vmem:[#allocation2 + $0x6c] sm:$0xf]
        %v1485 = vld [vmem:[#allocation2 + $0x70] sm:$0xf]
        %v1486 = vld [vmem:[#allocation2 + $0x78] sm:$0xf]
        %v1487 = vld [vmem:[#allocation2 + $0x7c] sm:$0xf]
        %v1488 = vld [vmem:[#allocation2 + $0x84] sm:$0xf]
        %v1489 = vld [vmem:[#allocation2 + $0x88] sm:$0xf]
        %v1490 = vld [vmem:[#allocation2 + $0x90] sm:$0xf]
        %v1491 = vld [vmem:[#allocation2 + $0x94] sm:$0xf]
        %v1492 = vld [vmem:[#allocation2 + $0x9c] sm:$0xf]
        %v1493 = vld [vmem:[#allocation2 + $0xa0] sm:$0xf]
        %v1494 = vld [vmem:[#allocation2 + $0xa8] sm:$0xf]
        %v1495 = vld [vmem:[#allocation2 + $0xac] sm:$0xf]
        %v1496 = vld [vmem:[#allocation2 + $0xb4] sm:$0xf]
        %v1497 = vld [vmem:[#allocation2 + $0xb8] sm:$0xf]
        %v1498 = vld [vmem:[#allocation2 + $0x8] sm:$0x1]
        %v1499 = vld [vmem:[#allocation2 + $0x14] sm:$0x1]
        %v1500 = vld [vmem:[#allocation2 + $0x20] sm:$0x1]
        %v1501 = vld [vmem:[#allocation2 + $0x2c] sm:$0x1]
        %v1502 = vld [vmem:[#allocation2 + $0x38] sm:$0x1]
        %v1503 = vld [vmem:[#allocation2 + $0x44] sm:$0x1]
        %v1504 = vld [vmem:[#allocation2 + $0x50] sm:$0x1]
        %v1505 = vld [vmem:[#allocation2 + $0x5c] sm:$0x1]
        %v1506 = vld [vmem:[#allocation2 + $0x68] sm:$0x1]
        %v1507 = vld [vmem:[#allocation2 + $0x74] sm:$0x1]
        %v1508 = vld [vmem:[#allocation2 + $0x80] sm:$0x1]
        %v1509 = vld [vmem:[#allocation2 + $0x8c] sm:$0x1]
        %v1510 = vld [vmem:[#allocation2 + $0x98] sm:$0x1]
        %v1511 = vld [vmem:[#allocation2 + $0xa4] sm:$0x1]
        %v1512 = vld [vmem:[#allocation2 + $0xb0] sm:$0x1]
        %v1513 = vld [vmem:[#allocation2 + $0xbc] sm:$0x1]
        %vm1514 = vsmask.f32 3328
        %vm1515 = vsmask.f32 7440
        %vm1516 = vmor %vm1514, %vm1515
        %v1518 = vshrl.u32 %v1466, 16
        %v1520 = vrot.slane %v1518, 4
        %v1521 = vshll.u32 %v1466, 16
        %v1523 = vrot.slane %v1521, 5
        %v1524 = vor.u32 %v1520, %v1523
        %v1525 = vrot.slane %v1524, 4
        %v1527 = vshll.u32 %v1467, 16
        %v1529 = vrot.slane %v1527, 5
        %v1530 = vsel %vm1516, %v1525, %v1529
        %v1531 = vshrl.u32 %v1467, 16
        %v1533 = vrot.slane %v1531, 4
        %v1534 = vor.u32 %v1533, %v1529
        %v1535 = vrot.slane %v1534, 4
        %v1537 = vshll.u32 %v1498, 16
        %v1539 = vrot.slane %v1537, 5
        %v1540 = vsel %vm1516, %v1535, %v1539
        %v1542 = vshrl.u32 %v1468, 16
        %v1544 = vrot.slane %v1542, 4
        %v1545 = vshll.u32 %v1468, 16
        %v1547 = vrot.slane %v1545, 5
        %v1548 = vor.u32 %v1544, %v1547
        %v1549 = vrot.slane %v1548, 4
        %v1551 = vshll.u32 %v1469, 16
        %v1553 = vrot.slane %v1551, 5
        %v1554 = vsel %vm1516, %v1549, %v1553
        %v1555 = vshrl.u32 %v1469, 16
        %v1557 = vrot.slane %v1555, 4
        %v1558 = vor.u32 %v1557, %v1553
        %v1559 = vrot.slane %v1558, 4
        %v1561 = vshll.u32 %v1499, 16
        %v1563 = vrot.slane %v1561, 5
        %v1564 = vsel %vm1516, %v1559, %v1563
        %v1566 = vshrl.u32 %v1470, 16
        %v1568 = vrot.slane %v1566, 4
        %v1569 = vshll.u32 %v1470, 16
        %v1571 = vrot.slane %v1569, 5
        %v1572 = vor.u32 %v1568, %v1571
        %v1573 = vrot.slane %v1572, 4
        %v1575 = vshll.u32 %v1471, 16
        %v1577 = vrot.slane %v1575, 5
        %v1578 = vsel %vm1516, %v1573, %v1577
        %v1579 = vshrl.u32 %v1471, 16
        %v1581 = vrot.slane %v1579, 4
        %v1582 = vor.u32 %v1581, %v1577
        %v1583 = vrot.slane %v1582, 4
        %v1585 = vshll.u32 %v1500, 16
        %v1587 = vrot.slane %v1585, 5
        %v1588 = vsel %vm1516, %v1583, %v1587
        %v1590 = vshrl.u32 %v1472, 16
        %v1592 = vrot.slane %v1590, 4
        %v1593 = vshll.u32 %v1472, 16
        %v1595 = vrot.slane %v1593, 5
        %v1596 = vor.u32 %v1592, %v1595
        %v1597 = vrot.slane %v1596, 4
        %v1599 = vshll.u32 %v1473, 16
        %v1601 = vrot.slane %v1599, 5
        %v1602 = vsel %vm1516, %v1597, %v1601
        %v1603 = vshrl.u32 %v1473, 16
        %v1605 = vrot.slane %v1603, 4
        %v1606 = vor.u32 %v1605, %v1601
        %v1607 = vrot.slane %v1606, 4
        %v1609 = vshll.u32 %v1501, 16
        %v1611 = vrot.slane %v1609, 5
        %v1612 = vsel %vm1516, %v1607, %v1611
        %v1614 = vshrl.u32 %v1474, 16
        %v1616 = vrot.slane %v1614, 4
        %v1617 = vshll.u32 %v1474, 16
        %v1619 = vrot.slane %v1617, 5
        %v1620 = vor.u32 %v1616, %v1619
        %v1621 = vrot.slane %v1620, 4
        %v1623 = vshll.u32 %v1475, 16
        %v1625 = vrot.slane %v1623, 5
        %v1626 = vsel %vm1516, %v1621, %v1625
        %v1627 = vshrl.u32 %v1475, 16
        %v1629 = vrot.slane %v1627, 4
        %v1630 = vor.u32 %v1629, %v1625
        %v1631 = vrot.slane %v1630, 4
        %v1633 = vshll.u32 %v1502, 16
        %v1635 = vrot.slane %v1633, 5
        %v1636 = vsel %vm1516, %v1631, %v1635
        %v1638 = vshrl.u32 %v1476, 16
        %v1640 = vrot.slane %v1638, 4
        %v1641 = vshll.u32 %v1476, 16
        %v1643 = vrot.slane %v1641, 5
        %v1644 = vor.u32 %v1640, %v1643
        %v1645 = vrot.slane %v1644, 4
        %v1647 = vshll.u32 %v1477, 16
        %v1649 = vrot.slane %v1647, 5
        %v1650 = vsel %vm1516, %v1645, %v1649
        %v1651 = vshrl.u32 %v1477, 16
        %v1653 = vrot.slane %v1651, 4
        %v1654 = vor.u32 %v1653, %v1649
        %v1655 = vrot.slane %v1654, 4
        %v1657 = vshll.u32 %v1503, 16
        %v1659 = vrot.slane %v1657, 5
        %v1660 = vsel %vm1516, %v1655, %v1659
        %v1662 = vshrl.u32 %v1478, 16
        %v1664 = vrot.slane %v1662, 4
        %v1665 = vshll.u32 %v1478, 16
        %v1667 = vrot.slane %v1665, 5
        %v1668 = vor.u32 %v1664, %v1667
        %v1669 = vrot.slane %v1668, 4
        %v1671 = vshll.u32 %v1479, 16
        %v1673 = vrot.slane %v1671, 5
        %v1674 = vsel %vm1516, %v1669, %v1673
        %v1675 = vshrl.u32 %v1479, 16
        %v1677 = vrot.slane %v1675, 4
        %v1678 = vor.u32 %v1677, %v1673
        %v1679 = vrot.slane %v1678, 4
        %v1681 = vshll.u32 %v1504, 16
        %v1683 = vrot.slane %v1681, 5
        %v1684 = vsel %vm1516, %v1679, %v1683
        %v1686 = vshrl.u32 %v1480, 16
        %v1688 = vrot.slane %v1686, 4
        %v1689 = vshll.u32 %v1480, 16
        %v1691 = vrot.slane %v1689, 5
        %v1692 = vor.u32 %v1688, %v1691
        %v1693 = vrot.slane %v1692, 4
        %v1695 = vshll.u32 %v1481, 16
        %v1697 = vrot.slane %v1695, 5
        %v1698 = vsel %vm1516, %v1693, %v1697
        %v1699 = vshrl.u32 %v1481, 16
        %v1701 = vrot.slane %v1699, 4
        %v1702 = vor.u32 %v1701, %v1697
        %v1703 = vrot.slane %v1702, 4
        %v1705 = vshll.u32 %v1505, 16
        %v1707 = vrot.slane %v1705, 5
        %v1708 = vsel %vm1516, %v1703, %v1707
        %v1710 = vshrl.u32 %v1482, 16
        %v1712 = vrot.slane %v1710, 4
        %v1713 = vshll.u32 %v1482, 16
        %v1715 = vrot.slane %v1713, 5
        %v1716 = vor.u32 %v1712, %v1715
        %v1717 = vrot.slane %v1716, 4
        %v1719 = vshll.u32 %v1483, 16
        %v1721 = vrot.slane %v1719, 5
        %v1722 = vsel %vm1516, %v1717, %v1721
        %v1723 = vshrl.u32 %v1483, 16
        %v1725 = vrot.slane %v1723, 4
        %v1726 = vor.u32 %v1725, %v1721
        %v1727 = vrot.slane %v1726, 4
        %v1729 = vshll.u32 %v1506, 16
        %v1731 = vrot.slane %v1729, 5
        %v1732 = vsel %vm1516, %v1727, %v1731
        %v1734 = vshrl.u32 %v1484, 16
        %v1736 = vrot.slane %v1734, 4
        %v1737 = vshll.u32 %v1484, 16
        %v1739 = vrot.slane %v1737, 5
        %v1740 = vor.u32 %v1736, %v1739
        %v1741 = vrot.slane %v1740, 4
        %v1743 = vshll.u32 %v1485, 16
        %v1745 = vrot.slane %v1743, 5
        %v1746 = vsel %vm1516, %v1741, %v1745
        %v1747 = vshrl.u32 %v1485, 16
        %v1749 = vrot.slane %v1747, 4
        %v1750 = vor.u32 %v1749, %v1745
        %v1751 = vrot.slane %v1750, 4
        %v1753 = vshll.u32 %v1507, 16
        %v1755 = vrot.slane %v1753, 5
        %v1756 = vsel %vm1516, %v1751, %v1755
        %v1758 = vshrl.u32 %v1486, 16
        %v1760 = vrot.slane %v1758, 4
        %v1761 = vshll.u32 %v1486, 16
        %v1763 = vrot.slane %v1761, 5
        %v1764 = vor.u32 %v1760, %v1763
        %v1765 = vrot.slane %v1764, 4
        %v1767 = vshll.u32 %v1487, 16
        %v1769 = vrot.slane %v1767, 5
        %v1770 = vsel %vm1516, %v1765, %v1769
        %v1771 = vshrl.u32 %v1487, 16
        %v1773 = vrot.slane %v1771, 4
        %v1774 = vor.u32 %v1773, %v1769
        %v1775 = vrot.slane %v1774, 4
        %v1777 = vshll.u32 %v1508, 16
        %v1779 = vrot.slane %v1777, 5
        %v1780 = vsel %vm1516, %v1775, %v1779
        %v1782 = vshrl.u32 %v1488, 16
        %v1784 = vrot.slane %v1782, 4
        %v1785 = vshll.u32 %v1488, 16
        %v1787 = vrot.slane %v1785, 5
        %v1788 = vor.u32 %v1784, %v1787
        %v1789 = vrot.slane %v1788, 4
        %v1791 = vshll.u32 %v1489, 16
        %v1793 = vrot.slane %v1791, 5
        %v1794 = vsel %vm1516, %v1789, %v1793
        %v1795 = vshrl.u32 %v1489, 16
        %v1797 = vrot.slane %v1795, 4
        %v1798 = vor.u32 %v1797, %v1793
        %v1799 = vrot.slane %v1798, 4
        %v1801 = vshll.u32 %v1509, 16
        %v1803 = vrot.slane %v1801, 5
        %v1804 = vsel %vm1516, %v1799, %v1803
        %v1806 = vshrl.u32 %v1490, 16
        %v1808 = vrot.slane %v1806, 4
        %v1809 = vshll.u32 %v1490, 16
        %v1811 = vrot.slane %v1809, 5
        %v1812 = vor.u32 %v1808, %v1811
        %v1813 = vrot.slane %v1812, 4
        %v1815 = vshll.u32 %v1491, 16
        %v1817 = vrot.slane %v1815, 5
        %v1818 = vsel %vm1516, %v1813, %v1817
        %v1819 = vshrl.u32 %v1491, 16
        %v1821 = vrot.slane %v1819, 4
        %v1822 = vor.u32 %v1821, %v1817
        %v1823 = vrot.slane %v1822, 4
        %v1825 = vshll.u32 %v1510, 16
        %v1827 = vrot.slane %v1825, 5
        %v1828 = vsel %vm1516, %v1823, %v1827
        %v1830 = vshrl.u32 %v1492, 16
        %v1832 = vrot.slane %v1830, 4
        %v1833 = vshll.u32 %v1492, 16
        %v1835 = vrot.slane %v1833, 5
        %v1836 = vor.u32 %v1832, %v1835
        %v1837 = vrot.slane %v1836, 4
        %v1839 = vshll.u32 %v1493, 16
        %v1841 = vrot.slane %v1839, 5
        %v1842 = vsel %vm1516, %v1837, %v1841
        %v1843 = vshrl.u32 %v1493, 16
        %v1845 = vrot.slane %v1843, 4
        %v1846 = vor.u32 %v1845, %v1841
        %v1847 = vrot.slane %v1846, 4
        %v1849 = vshll.u32 %v1511, 16
        %v1851 = vrot.slane %v1849, 5
        %v1852 = vsel %vm1516, %v1847, %v1851
        %v1854 = vshrl.u32 %v1494, 16
        %v1856 = vrot.slane %v1854, 4
        %v1857 = vshll.u32 %v1494, 16
        %v1859 = vrot.slane %v1857, 5
        %v1860 = vor.u32 %v1856, %v1859
        %v1861 = vrot.slane %v1860, 4
        %v1863 = vshll.u32 %v1495, 16
        %v1865 = vrot.slane %v1863, 5
        %v1866 = vsel %vm1516, %v1861, %v1865
        %v1867 = vshrl.u32 %v1495, 16
        %v1869 = vrot.slane %v1867, 4
        %v1870 = vor.u32 %v1869, %v1865
        %v1871 = vrot.slane %v1870, 4
        %v1873 = vshll.u32 %v1512, 16
        %v1875 = vrot.slane %v1873, 5
        %v1876 = vsel %vm1516, %v1871, %v1875
        %v1878 = vshrl.u32 %v1496, 16
        %v1880 = vrot.slane %v1878, 4
        %v1881 = vshll.u32 %v1496, 16
        %v1883 = vrot.slane %v1881, 5
        %v1884 = vor.u32 %v1880, %v1883
        %v1885 = vrot.slane %v1884, 4
        %v1887 = vshll.u32 %v1497, 16
        %v1889 = vrot.slane %v1887, 5
        %v1890 = vsel %vm1516, %v1885, %v1889
        %v1891 = vshrl.u32 %v1497, 16
        %v1893 = vrot.slane %v1891, 4
        %v1894 = vor.u32 %v1893, %v1889
        %v1895 = vrot.slane %v1894, 4
        %v1897 = vshll.u32 %v1513, 16
        %v1899 = vrot.slane %v1897, 5
        %v1900 = vsel %vm1516, %v1895, %v1899
        %v1901 = vld [vmem:[#allocation2] sm:$0xe]
        %v1902 = vld [vmem:[#allocation2 + $0xc] sm:$0xe]
        %v1903 = vld [vmem:[#allocation2 + $0x18] sm:$0xe]
        %v1904 = vld [vmem:[#allocation2 + $0x24] sm:$0xe]
        %v1905 = vld [vmem:[#allocation2 + $0x30] sm:$0xe]
        %v1906 = vld [vmem:[#allocation2 + $0x3c] sm:$0xe]
        %v1907 = vld [vmem:[#allocation2 + $0x48] sm:$0xe]
        %v1908 = vld [vmem:[#allocation2 + $0x54] sm:$0xe]
        %v1909 = vld [vmem:[#allocation2 + $0x60] sm:$0xe]
        %v1910 = vld [vmem:[#allocation2 + $0x6c] sm:$0xe]
        %v1911 = vld [vmem:[#allocation2 + $0x78] sm:$0xe]
        %v1912 = vld [vmem:[#allocation2 + $0x84] sm:$0xe]
        %v1913 = vld [vmem:[#allocation2 + $0x90] sm:$0xe]
        %v1914 = vld [vmem:[#allocation2 + $0x9c] sm:$0xe]
        %v1915 = vld [vmem:[#allocation2 + $0xa8] sm:$0xe]
        %v1916 = vld [vmem:[#allocation2 + $0xb4] sm:$0xe]
        %vm1965 = vcmask 1042432
        %vm1966 = vcmask 1046532
        %vm1967 = vmor %vm1965, %vm1966
        %v1968 = vrot.slane %v1901, 5
        %v1969 = vrot.slane %v1968, 4
        %v1970 = vrot.slane %v1467, 5
        %v1971 = vsel %vm1967, %v1969, %v1970
        %v1972 = vrot.slane %v1970, 4
        %v1973 = vrot.slane %v1498, 5
        %v1974 = vsel %vm1967, %v1972, %v1973
        %v1975 = vrot.slane %v1902, 5
        %v1976 = vrot.slane %v1975, 4
        %v1977 = vrot.slane %v1469, 5
        %v1978 = vsel %vm1967, %v1976, %v1977
        %v1979 = vrot.slane %v1977, 4
        %v1980 = vrot.slane %v1499, 5
        %v1981 = vsel %vm1967, %v1979, %v1980
        %v1982 = vrot.slane %v1903, 5
        %v1983 = vrot.slane %v1982, 4
        %v1984 = vrot.slane %v1471, 5
        %v1985 = vsel %vm1967, %v1983, %v1984
        %v1986 = vrot.slane %v1984, 4
        %v1987 = vrot.slane %v1500, 5
        %v1988 = vsel %vm1967, %v1986, %v1987
        %v1989 = vrot.slane %v1904, 5
        %v1990 = vrot.slane %v1989, 4
        %v1991 = vrot.slane %v1473, 5
        %v1992 = vsel %vm1967, %v1990, %v1991
        %v1993 = vrot.slane %v1991, 4
        %v1994 = vrot.slane %v1501, 5
        %v1995 = vsel %vm1967, %v1993, %v1994
        %v1996 = vrot.slane %v1905, 5
        %v1997 = vrot.slane %v1996, 4
        %v1998 = vrot.slane %v1475, 5
        %v1999 = vsel %vm1967, %v1997, %v1998
        %v2000 = vrot.slane %v1998, 4
        %v2001 = vrot.slane %v1502, 5
        %v2002 = vsel %vm1967, %v2000, %v2001
        %v2003 = vrot.slane %v1906, 5
        %v2004 = vrot.slane %v2003, 4
        %v2005 = vrot.slane %v1477, 5
        %v2006 = vsel %vm1967, %v2004, %v2005
        %v2007 = vrot.slane %v2005, 4
        %v2008 = vrot.slane %v1503, 5
        %v2009 = vsel %vm1967, %v2007, %v2008
        %v2010 = vrot.slane %v1907, 5
        %v2011 = vrot.slane %v2010, 4
        %v2012 = vrot.slane %v1479, 5
        %v2013 = vsel %vm1967, %v2011, %v2012
        %v2014 = vrot.slane %v2012, 4
        %v2015 = vrot.slane %v1504, 5
        %v2016 = vsel %vm1967, %v2014, %v2015
        %v2017 = vrot.slane %v1908, 5
        %v2018 = vrot.slane %v2017, 4
        %v2019 = vrot.slane %v1481, 5
        %v2020 = vsel %vm1967, %v2018, %v2019
        %v2021 = vrot.slane %v2019, 4
        %v2022 = vrot.slane %v1505, 5
        %v2023 = vsel %vm1967, %v2021, %v2022
        %v2024 = vrot.slane %v1909, 5
        %v2025 = vrot.slane %v2024, 4
        %v2026 = vrot.slane %v1483, 5
        %v2027 = vsel %vm1967, %v2025, %v2026
        %v2028 = vrot.slane %v2026, 4
        %v2029 = vrot.slane %v1506, 5
        %v2030 = vsel %vm1967, %v2028, %v2029
        %v2031 = vrot.slane %v1910, 5
        %v2032 = vrot.slane %v2031, 4
        %v2033 = vrot.slane %v1485, 5
        %v2034 = vsel %vm1967, %v2032, %v2033
        %v2035 = vrot.slane %v2033, 4
        %v2036 = vrot.slane %v1507, 5
        %v2037 = vsel %vm1967, %v2035, %v2036
        %v2038 = vrot.slane %v1911, 5
        %v2039 = vrot.slane %v2038, 4
        %v2040 = vrot.slane %v1487, 5
        %v2041 = vsel %vm1967, %v2039, %v2040
        %v2042 = vrot.slane %v2040, 4
        %v2043 = vrot.slane %v1508, 5
        %v2044 = vsel %vm1967, %v2042, %v2043
        %v2045 = vrot.slane %v1912, 5
        %v2046 = vrot.slane %v2045, 4
        %v2047 = vrot.slane %v1489, 5
        %v2048 = vsel %vm1967, %v2046, %v2047
        %v2049 = vrot.slane %v2047, 4
        %v2050 = vrot.slane %v1509, 5
        %v2051 = vsel %vm1967, %v2049, %v2050
        %v2052 = vrot.slane %v1913, 5
        %v2053 = vrot.slane %v2052, 4
        %v2054 = vrot.slane %v1491, 5
        %v2055 = vsel %vm1967, %v2053, %v2054
        %v2056 = vrot.slane %v2054, 4
        %v2057 = vrot.slane %v1510, 5
        %v2058 = vsel %vm1967, %v2056, %v2057
        %v2059 = vrot.slane %v1914, 5
        %v2060 = vrot.slane %v2059, 4
        %v2061 = vrot.slane %v1493, 5
        %v2062 = vsel %vm1967, %v2060, %v2061
        %v2063 = vrot.slane %v2061, 4
        %v2064 = vrot.slane %v1511, 5
        %v2065 = vsel %vm1967, %v2063, %v2064
        %v2066 = vrot.slane %v1915, 5
        %v2067 = vrot.slane %v2066, 4
        %v2068 = vrot.slane %v1495, 5
        %v2069 = vsel %vm1967, %v2067, %v2068
        %v2070 = vrot.slane %v2068, 4
        %v2071 = vrot.slane %v1512, 5
        %v2072 = vsel %vm1967, %v2070, %v2071
        %v2073 = vrot.slane %v1916, 5
        %v2074 = vrot.slane %v2073, 4
        %v2075 = vrot.slane %v1497, 5
        %v2076 = vsel %vm1967, %v2074, %v2075
        %v2077 = vrot.slane %v2075, 4
        %v2078 = vrot.slane %v1513, 5
        %v2079 = vsel %vm1967, %v2077, %v2078
        %v2080 = vld [vmem:[%s1348] sm:$0xf]
        %v2081 = vld [vmem:[%s1348 + $0x4] sm:$0xf]
        %v2082 = vld [vmem:[%s1348 + $0xc] sm:$0xf]
        %v2083 = vld [vmem:[%s1348 + $0x10] sm:$0xf]
        %v2084 = vld [vmem:[%s1348 + $0x18] sm:$0xf]
        %v2085 = vld [vmem:[%s1348 + $0x1c] sm:$0xf]
        %v2086 = vld [vmem:[%s1348 + $0x24] sm:$0xf]
        %v2087 = vld [vmem:[%s1348 + $0x28] sm:$0xf]
        %v2088 = vld [vmem:[%s1348 + $0x30] sm:$0xf]
        %v2089 = vld [vmem:[%s1348 + $0x34] sm:$0xf]
        %v2090 = vld [vmem:[%s1348 + $0x3c] sm:$0xf]
        %v2091 = vld [vmem:[%s1348 + $0x40] sm:$0xf]
        %v2092 = vld [vmem:[%s1348 + $0x48] sm:$0xf]
        %v2093 = vld [vmem:[%s1348 + $0x4c] sm:$0xf]
        %v2094 = vld [vmem:[%s1348 + $0x54] sm:$0xf]
        %v2095 = vld [vmem:[%s1348 + $0x58] sm:$0xf]
        %v2096 = vld [vmem:[%s1348 + $0x60] sm:$0xf]
        %v2097 = vld [vmem:[%s1348 + $0x64] sm:$0xf]
        %v2098 = vld [vmem:[%s1348 + $0x6c] sm:$0xf]
        %v2099 = vld [vmem:[%s1348 + $0x70] sm:$0xf]
        %v2100 = vld [vmem:[%s1348 + $0x78] sm:$0xf]
        %v2101 = vld [vmem:[%s1348 + $0x7c] sm:$0xf]
        %v2102 = vld [vmem:[%s1348 + $0x84] sm:$0xf]
        %v2103 = vld [vmem:[%s1348 + $0x88] sm:$0xf]
        %v2104 = vld [vmem:[%s1348 + $0x90] sm:$0xf]
        %v2105 = vld [vmem:[%s1348 + $0x94] sm:$0xf]
        %v2106 = vld [vmem:[%s1348 + $0x9c] sm:$0xf]
        %v2107 = vld [vmem:[%s1348 + $0xa0] sm:$0xf]
        %v2108 = vld [vmem:[%s1348 + $0xa8] sm:$0xf]
        %v2109 = vld [vmem:[%s1348 + $0xac] sm:$0xf]
        %v2110 = vld [vmem:[%s1348 + $0xb4] sm:$0xf]
        %v2111 = vld [vmem:[%s1348 + $0xb8] sm:$0xf]
        %v2112 = vld [vmem:[%s1348 + $0x8] sm:$0x1]
        %v2113 = vld [vmem:[%s1348 + $0x14] sm:$0x1]
        %v2114 = vld [vmem:[%s1348 + $0x20] sm:$0x1]
        %v2115 = vld [vmem:[%s1348 + $0x2c] sm:$0x1]
        %v2116 = vld [vmem:[%s1348 + $0x38] sm:$0x1]
        %v2117 = vld [vmem:[%s1348 + $0x44] sm:$0x1]
        %v2118 = vld [vmem:[%s1348 + $0x50] sm:$0x1]
        %v2119 = vld [vmem:[%s1348 + $0x5c] sm:$0x1]
        %v2120 = vld [vmem:[%s1348 + $0x68] sm:$0x1]
        %v2121 = vld [vmem:[%s1348 + $0x74] sm:$0x1]
        %v2122 = vld [vmem:[%s1348 + $0x80] sm:$0x1]
        %v2123 = vld [vmem:[%s1348 + $0x8c] sm:$0x1]
        %v2124 = vld [vmem:[%s1348 + $0x98] sm:$0x1]
        %v2125 = vld [vmem:[%s1348 + $0xa4] sm:$0x1]
        %v2126 = vld [vmem:[%s1348 + $0xb0] sm:$0x1]
        %v2127 = vld [vmem:[%s1348 + $0xbc] sm:$0x1]
        %v2129 = vshrl.u32 %v2080, 16
        %v2131 = vrot.slane %v2129, 4
        %v2132 = vshll.u32 %v2080, 16
        %v2134 = vrot.slane %v2132, 5
        %v2135 = vor.u32 %v2131, %v2134
        %v2136 = vrot.slane %v2135, 4
        %v2138 = vshll.u32 %v2081, 16
        %v2140 = vrot.slane %v2138, 5
        %v2141 = vsel %vm1516, %v2136, %v2140
        %v2142 = vshrl.u32 %v2081, 16
        %v2144 = vrot.slane %v2142, 4
        %v2145 = vor.u32 %v2144, %v2140
        %v2146 = vrot.slane %v2145, 4
        %v2148 = vshll.u32 %v2112, 16
        %v2150 = vrot.slane %v2148, 5
        %v2151 = vsel %vm1516, %v2146, %v2150
        %v2153 = vshrl.u32 %v2082, 16
        %v2155 = vrot.slane %v2153, 4
        %v2156 = vshll.u32 %v2082, 16
        %v2158 = vrot.slane %v2156, 5
        %v2159 = vor.u32 %v2155, %v2158
        %v2160 = vrot.slane %v2159, 4
        %v2162 = vshll.u32 %v2083, 16
        %v2164 = vrot.slane %v2162, 5
        %v2165 = vsel %vm1516, %v2160, %v2164
        %v2166 = vshrl.u32 %v2083, 16
        %v2168 = vrot.slane %v2166, 4
        %v2169 = vor.u32 %v2168, %v2164
        %v2170 = vrot.slane %v2169, 4
        %v2172 = vshll.u32 %v2113, 16
        %v2174 = vrot.slane %v2172, 5
        %v2175 = vsel %vm1516, %v2170, %v2174
        %v2177 = vshrl.u32 %v2084, 16
        %v2179 = vrot.slane %v2177, 4
        %v2180 = vshll.u32 %v2084, 16
        %v2182 = vrot.slane %v2180, 5
        %v2183 = vor.u32 %v2179, %v2182
        %v2184 = vrot.slane %v2183, 4
        %v2186 = vshll.u32 %v2085, 16
        %v2188 = vrot.slane %v2186, 5
        %v2189 = vsel %vm1516, %v2184, %v2188
        %v2190 = vshrl.u32 %v2085, 16
        %v2192 = vrot.slane %v2190, 4
        %v2193 = vor.u32 %v2192, %v2188
        %v2194 = vrot.slane %v2193, 4
        %v2196 = vshll.u32 %v2114, 16
        %v2198 = vrot.slane %v2196, 5
        %v2199 = vsel %vm1516, %v2194, %v2198
        %v2201 = vshrl.u32 %v2086, 16
        %v2203 = vrot.slane %v2201, 4
        %v2204 = vshll.u32 %v2086, 16
        %v2206 = vrot.slane %v2204, 5
        %v2207 = vor.u32 %v2203, %v2206
        %v2208 = vrot.slane %v2207, 4
        %v2210 = vshll.u32 %v2087, 16
        %v2212 = vrot.slane %v2210, 5
        %v2213 = vsel %vm1516, %v2208, %v2212
        %v2214 = vshrl.u32 %v2087, 16
        %v2216 = vrot.slane %v2214, 4
        %v2217 = vor.u32 %v2216, %v2212
        %v2218 = vrot.slane %v2217, 4
        %v2220 = vshll.u32 %v2115, 16
        %v2222 = vrot.slane %v2220, 5
        %v2223 = vsel %vm1516, %v2218, %v2222
        %v2225 = vshrl.u32 %v2088, 16
        %v2227 = vrot.slane %v2225, 4
        %v2228 = vshll.u32 %v2088, 16
        %v2230 = vrot.slane %v2228, 5
        %v2231 = vor.u32 %v2227, %v2230
        %v2232 = vrot.slane %v2231, 4
        %v2234 = vshll.u32 %v2089, 16
        %v2236 = vrot.slane %v2234, 5
        %v2237 = vsel %vm1516, %v2232, %v2236
        %v2238 = vshrl.u32 %v2089, 16
        %v2240 = vrot.slane %v2238, 4
        %v2241 = vor.u32 %v2240, %v2236
        %v2242 = vrot.slane %v2241, 4
        %v2244 = vshll.u32 %v2116, 16
        %v2246 = vrot.slane %v2244, 5
        %v2247 = vsel %vm1516, %v2242, %v2246
        %v2249 = vshrl.u32 %v2090, 16
        %v2251 = vrot.slane %v2249, 4
        %v2252 = vshll.u32 %v2090, 16
        %v2254 = vrot.slane %v2252, 5
        %v2255 = vor.u32 %v2251, %v2254
        %v2256 = vrot.slane %v2255, 4
        %v2258 = vshll.u32 %v2091, 16
        %v2260 = vrot.slane %v2258, 5
        %v2261 = vsel %vm1516, %v2256, %v2260
        %v2262 = vshrl.u32 %v2091, 16
        %v2264 = vrot.slane %v2262, 4
        %v2265 = vor.u32 %v2264, %v2260
        %v2266 = vrot.slane %v2265, 4
        %v2268 = vshll.u32 %v2117, 16
        %v2270 = vrot.slane %v2268, 5
        %v2271 = vsel %vm1516, %v2266, %v2270
        %v2273 = vshrl.u32 %v2092, 16
        %v2275 = vrot.slane %v2273, 4
        %v2276 = vshll.u32 %v2092, 16
        %v2278 = vrot.slane %v2276, 5
        %v2279 = vor.u32 %v2275, %v2278
        %v2280 = vrot.slane %v2279, 4
        %v2282 = vshll.u32 %v2093, 16
        %v2284 = vrot.slane %v2282, 5
        %v2285 = vsel %vm1516, %v2280, %v2284
        %v2286 = vshrl.u32 %v2093, 16
        %v2288 = vrot.slane %v2286, 4
        %v2289 = vor.u32 %v2288, %v2284
        %v2290 = vrot.slane %v2289, 4
        %v2292 = vshll.u32 %v2118, 16
        %v2294 = vrot.slane %v2292, 5
        %v2295 = vsel %vm1516, %v2290, %v2294
        %v2297 = vshrl.u32 %v2094, 16
        %v2299 = vrot.slane %v2297, 4
        %v2300 = vshll.u32 %v2094, 16
        %v2302 = vrot.slane %v2300, 5
        %v2303 = vor.u32 %v2299, %v2302
        %v2304 = vrot.slane %v2303, 4
        %v2306 = vshll.u32 %v2095, 16
        %v2308 = vrot.slane %v2306, 5
        %v2309 = vsel %vm1516, %v2304, %v2308
        %v2310 = vshrl.u32 %v2095, 16
        %v2312 = vrot.slane %v2310, 4
        %v2313 = vor.u32 %v2312, %v2308
        %v2314 = vrot.slane %v2313, 4
        %v2316 = vshll.u32 %v2119, 16
        %v2318 = vrot.slane %v2316, 5
        %v2319 = vsel %vm1516, %v2314, %v2318
        %v2321 = vshrl.u32 %v2096, 16
        %v2323 = vrot.slane %v2321, 4
        %v2324 = vshll.u32 %v2096, 16
        %v2326 = vrot.slane %v2324, 5
        %v2327 = vor.u32 %v2323, %v2326
        %v2328 = vrot.slane %v2327, 4
        %v2330 = vshll.u32 %v2097, 16
        %v2332 = vrot.slane %v2330, 5
        %v2333 = vsel %vm1516, %v2328, %v2332
        %v2334 = vshrl.u32 %v2097, 16
        %v2336 = vrot.slane %v2334, 4
        %v2337 = vor.u32 %v2336, %v2332
        %v2338 = vrot.slane %v2337, 4
        %v2340 = vshll.u32 %v2120, 16
        %v2342 = vrot.slane %v2340, 5
        %v2343 = vsel %vm1516, %v2338, %v2342
        %v2345 = vshrl.u32 %v2098, 16
        %v2347 = vrot.slane %v2345, 4
        %v2348 = vshll.u32 %v2098, 16
        %v2350 = vrot.slane %v2348, 5
        %v2351 = vor.u32 %v2347, %v2350
        %v2352 = vrot.slane %v2351, 4
        %v2354 = vshll.u32 %v2099, 16
        %v2356 = vrot.slane %v2354, 5
        %v2357 = vsel %vm1516, %v2352, %v2356
        %v2358 = vshrl.u32 %v2099, 16
        %v2360 = vrot.slane %v2358, 4
        %v2361 = vor.u32 %v2360, %v2356
        %v2362 = vrot.slane %v2361, 4
        %v2364 = vshll.u32 %v2121, 16
        %v2366 = vrot.slane %v2364, 5
        %v2367 = vsel %vm1516, %v2362, %v2366
        %v2369 = vshrl.u32 %v2100, 16
        %v2371 = vrot.slane %v2369, 4
        %v2372 = vshll.u32 %v2100, 16
        %v2374 = vrot.slane %v2372, 5
        %v2375 = vor.u32 %v2371, %v2374
        %v2376 = vrot.slane %v2375, 4
        %v2378 = vshll.u32 %v2101, 16
        %v2380 = vrot.slane %v2378, 5
        %v2381 = vsel %vm1516, %v2376, %v2380
        %v2382 = vshrl.u32 %v2101, 16
        %v2384 = vrot.slane %v2382, 4
        %v2385 = vor.u32 %v2384, %v2380
        %v2386 = vrot.slane %v2385, 4
        %v2388 = vshll.u32 %v2122, 16
        %v2390 = vrot.slane %v2388, 5
        %v2391 = vsel %vm1516, %v2386, %v2390
        %v2393 = vshrl.u32 %v2102, 16
        %v2395 = vrot.slane %v2393, 4
        %v2396 = vshll.u32 %v2102, 16
        %v2398 = vrot.slane %v2396, 5
        %v2399 = vor.u32 %v2395, %v2398
        %v2400 = vrot.slane %v2399, 4
        %v2402 = vshll.u32 %v2103, 16
        %v2404 = vrot.slane %v2402, 5
        %v2405 = vsel %vm1516, %v2400, %v2404
        %v2406 = vshrl.u32 %v2103, 16
        %v2408 = vrot.slane %v2406, 4
        %v2409 = vor.u32 %v2408, %v2404
        %v2410 = vrot.slane %v2409, 4
        %v2412 = vshll.u32 %v2123, 16
        %v2414 = vrot.slane %v2412, 5
        %v2415 = vsel %vm1516, %v2410, %v2414
        %v2417 = vshrl.u32 %v2104, 16
        %v2419 = vrot.slane %v2417, 4
        %v2420 = vshll.u32 %v2104, 16
        %v2422 = vrot.slane %v2420, 5
        %v2423 = vor.u32 %v2419, %v2422
        %v2424 = vrot.slane %v2423, 4
        %v2426 = vshll.u32 %v2105, 16
        %v2428 = vrot.slane %v2426, 5
        %v2429 = vsel %vm1516, %v2424, %v2428
        %v2430 = vshrl.u32 %v2105, 16
        %v2432 = vrot.slane %v2430, 4
        %v2433 = vor.u32 %v2432, %v2428
        %v2434 = vrot.slane %v2433, 4
        %v2436 = vshll.u32 %v2124, 16
        %v2438 = vrot.slane %v2436, 5
        %v2439 = vsel %vm1516, %v2434, %v2438
        %v2441 = vshrl.u32 %v2106, 16
        %v2443 = vrot.slane %v2441, 4
        %v2444 = vshll.u32 %v2106, 16
        %v2446 = vrot.slane %v2444, 5
        %v2447 = vor.u32 %v2443, %v2446
        %v2448 = vrot.slane %v2447, 4
        %v2450 = vshll.u32 %v2107, 16
        %v2452 = vrot.slane %v2450, 5
        %v2453 = vsel %vm1516, %v2448, %v2452
        %v2454 = vshrl.u32 %v2107, 16
        %v2456 = vrot.slane %v2454, 4
        %v2457 = vor.u32 %v2456, %v2452
        %v2458 = vrot.slane %v2457, 4
        %v2460 = vshll.u32 %v2125, 16
        %v2462 = vrot.slane %v2460, 5
        %v2463 = vsel %vm1516, %v2458, %v2462
        %v2465 = vshrl.u32 %v2108, 16
        %v2467 = vrot.slane %v2465, 4
        %v2468 = vshll.u32 %v2108, 16
        %v2470 = vrot.slane %v2468, 5
        %v2471 = vor.u32 %v2467, %v2470
        %v2472 = vrot.slane %v2471, 4
        %v2474 = vshll.u32 %v2109, 16
        %v2476 = vrot.slane %v2474, 5
        %v2477 = vsel %vm1516, %v2472, %v2476
        %v2478 = vshrl.u32 %v2109, 16
        %v2480 = vrot.slane %v2478, 4
        %v2481 = vor.u32 %v2480, %v2476
        %v2482 = vrot.slane %v2481, 4
        %v2484 = vshll.u32 %v2126, 16
        %v2486 = vrot.slane %v2484, 5
        %v2487 = vsel %vm1516, %v2482, %v2486
        %v2489 = vshrl.u32 %v2110, 16
        %v2491 = vrot.slane %v2489, 4
        %v2492 = vshll.u32 %v2110, 16
        %v2494 = vrot.slane %v2492, 5
        %v2495 = vor.u32 %v2491, %v2494
        %v2496 = vrot.slane %v2495, 4
        %v2498 = vshll.u32 %v2111, 16
        %v2500 = vrot.slane %v2498, 5
        %v2501 = vsel %vm1516, %v2496, %v2500
        %v2502 = vshrl.u32 %v2111, 16
        %v2504 = vrot.slane %v2502, 4
        %v2505 = vor.u32 %v2504, %v2500
        %v2506 = vrot.slane %v2505, 4
        %v2508 = vshll.u32 %v2127, 16
        %v2510 = vrot.slane %v2508, 5
        %v2511 = vsel %vm1516, %v2506, %v2510
        %v2512 = vld [vmem:[%s1348] sm:$0xe]
        %v2513 = vld [vmem:[%s1348 + $0xc] sm:$0xe]
        %v2514 = vld [vmem:[%s1348 + $0x18] sm:$0xe]
        %v2515 = vld [vmem:[%s1348 + $0x24] sm:$0xe]
        %v2516 = vld [vmem:[%s1348 + $0x30] sm:$0xe]
        %v2517 = vld [vmem:[%s1348 + $0x3c] sm:$0xe]
        %v2518 = vld [vmem:[%s1348 + $0x48] sm:$0xe]
        %v2519 = vld [vmem:[%s1348 + $0x54] sm:$0xe]
        %v2520 = vld [vmem:[%s1348 + $0x60] sm:$0xe]
        %v2521 = vld [vmem:[%s1348 + $0x6c] sm:$0xe]
        %v2522 = vld [vmem:[%s1348 + $0x78] sm:$0xe]
        %v2523 = vld [vmem:[%s1348 + $0x84] sm:$0xe]
        %v2524 = vld [vmem:[%s1348 + $0x90] sm:$0xe]
        %v2525 = vld [vmem:[%s1348 + $0x9c] sm:$0xe]
        %v2526 = vld [vmem:[%s1348 + $0xa8] sm:$0xe]
        %v2527 = vld [vmem:[%s1348 + $0xb4] sm:$0xe]
        %v2576 = vrot.slane %v2512, 5
        %v2577 = vrot.slane %v2576, 4
        %v2578 = vrot.slane %v2081, 5
        %v2579 = vsel %vm1967, %v2577, %v2578
        %v2580 = vrot.slane %v2578, 4
        %v2581 = vrot.slane %v2112, 5
        %v2582 = vsel %vm1967, %v2580, %v2581
        %v2583 = vrot.slane %v2513, 5
        %v2584 = vrot.slane %v2583, 4
        %v2585 = vrot.slane %v2083, 5
        %v2586 = vsel %vm1967, %v2584, %v2585
        %v2587 = vrot.slane %v2585, 4
        %v2588 = vrot.slane %v2113, 5
        %v2589 = vsel %vm1967, %v2587, %v2588
        %v2590 = vrot.slane %v2514, 5
        %v2591 = vrot.slane %v2590, 4
        %v2592 = vrot.slane %v2085, 5
        %v2593 = vsel %vm1967, %v2591, %v2592
        %v2594 = vrot.slane %v2592, 4
        %v2595 = vrot.slane %v2114, 5
        %v2596 = vsel %vm1967, %v2594, %v2595
        %v2597 = vrot.slane %v2515, 5
        %v2598 = vrot.slane %v2597, 4
        %v2599 = vrot.slane %v2087, 5
        %v2600 = vsel %vm1967, %v2598, %v2599
        %v2601 = vrot.slane %v2599, 4
        %v2602 = vrot.slane %v2115, 5
        %v2603 = vsel %vm1967, %v2601, %v2602
        %v2604 = vrot.slane %v2516, 5
        %v2605 = vrot.slane %v2604, 4
        %v2606 = vrot.slane %v2089, 5
        %v2607 = vsel %vm1967, %v2605, %v2606
        %v2608 = vrot.slane %v2606, 4
        %v2609 = vrot.slane %v2116, 5
        %v2610 = vsel %vm1967, %v2608, %v2609
        %v2611 = vrot.slane %v2517, 5
        %v2612 = vrot.slane %v2611, 4
        %v2613 = vrot.slane %v2091, 5
        %v2614 = vsel %vm1967, %v2612, %v2613
        %v2615 = vrot.slane %v2613, 4
        %v2616 = vrot.slane %v2117, 5
        %v2617 = vsel %vm1967, %v2615, %v2616
        %v2618 = vrot.slane %v2518, 5
        %v2619 = vrot.slane %v2618, 4
        %v2620 = vrot.slane %v2093, 5
        %v2621 = vsel %vm1967, %v2619, %v2620
        %v2622 = vrot.slane %v2620, 4
        %v2623 = vrot.slane %v2118, 5
        %v2624 = vsel %vm1967, %v2622, %v2623
        %v2625 = vrot.slane %v2519, 5
        %v2626 = vrot.slane %v2625, 4
        %v2627 = vrot.slane %v2095, 5
        %v2628 = vsel %vm1967, %v2626, %v2627
        %v2629 = vrot.slane %v2627, 4
        %v2630 = vrot.slane %v2119, 5
        %v2631 = vsel %vm1967, %v2629, %v2630
        %v2632 = vrot.slane %v2520, 5
        %v2633 = vrot.slane %v2632, 4
        %v2634 = vrot.slane %v2097, 5
        %v2635 = vsel %vm1967, %v2633, %v2634
        %v2636 = vrot.slane %v2634, 4
        %v2637 = vrot.slane %v2120, 5
        %v2638 = vsel %vm1967, %v2636, %v2637
        %v2639 = vrot.slane %v2521, 5
        %v2640 = vrot.slane %v2639, 4
        %v2641 = vrot.slane %v2099, 5
        %v2642 = vsel %vm1967, %v2640, %v2641
        %v2643 = vrot.slane %v2641, 4
        %v2644 = vrot.slane %v2121, 5
        %v2645 = vsel %vm1967, %v2643, %v2644
        %v2646 = vrot.slane %v2522, 5
        %v2647 = vrot.slane %v2646, 4
        %v2648 = vrot.slane %v2101, 5
        %v2649 = vsel %vm1967, %v2647, %v2648
        %v2650 = vrot.slane %v2648, 4
        %v2651 = vrot.slane %v2122, 5
        %v2652 = vsel %vm1967, %v2650, %v2651
        %v2653 = vrot.slane %v2523, 5
        %v2654 = vrot.slane %v2653, 4
        %v2655 = vrot.slane %v2103, 5
        %v2656 = vsel %vm1967, %v2654, %v2655
        %v2657 = vrot.slane %v2655, 4
        %v2658 = vrot.slane %v2123, 5
        %v2659 = vsel %vm1967, %v2657, %v2658
        %v2660 = vrot.slane %v2524, 5
        %v2661 = vrot.slane %v2660, 4
        %v2662 = vrot.slane %v2105, 5
        %v2663 = vsel %vm1967, %v2661, %v2662
        %v2664 = vrot.slane %v2662, 4
        %v2665 = vrot.slane %v2124, 5
        %v2666 = vsel %vm1967, %v2664, %v2665
        %v2667 = vrot.slane %v2525, 5
        %v2668 = vrot.slane %v2667, 4
        %v2669 = vrot.slane %v2107, 5
        %v2670 = vsel %vm1967, %v2668, %v2669
        %v2671 = vrot.slane %v2669, 4
        %v2672 = vrot.slane %v2125, 5
        %v2673 = vsel %vm1967, %v2671, %v2672
        %v2674 = vrot.slane %v2526, 5
        %v2675 = vrot.slane %v2674, 4
        %v2676 = vrot.slane %v2109, 5
        %v2677 = vsel %vm1967, %v2675, %v2676
        %v2678 = vrot.slane %v2676, 4
        %v2679 = vrot.slane %v2126, 5
        %v2680 = vsel %vm1967, %v2678, %v2679
        %v2681 = vrot.slane %v2527, 5
        %v2682 = vrot.slane %v2681, 4
        %v2683 = vrot.slane %v2111, 5
        %v2684 = vsel %vm1967, %v2682, %v2683
        %v2685 = vrot.slane %v2683, 4
        %v2686 = vrot.slane %v2127, 5
        %v2687 = vsel %vm1967, %v2685, %v2686
        %s2688 = scalar_lea.vmem [#allocation2], 24
        %v2689 = vld [vmem:[%s2688] sm:$0xf]
        %v2690 = vld [vmem:[%s2688 + $0x4] sm:$0xf]
        %v2691 = vld [vmem:[%s2688 + $0xc] sm:$0xf]
        %v2692 = vld [vmem:[%s2688 + $0x10] sm:$0xf]
        %v2693 = vld [vmem:[%s2688 + $0x18] sm:$0xf]
        %v2694 = vld [vmem:[%s2688 + $0x1c] sm:$0xf]
        %v2695 = vld [vmem:[%s2688 + $0x24] sm:$0xf]
        %v2696 = vld [vmem:[%s2688 + $0x28] sm:$0xf]
        %v2697 = vld [vmem:[%s2688 + $0x30] sm:$0xf]
        %v2698 = vld [vmem:[%s2688 + $0x34] sm:$0xf]
        %v2699 = vld [vmem:[%s2688 + $0x3c] sm:$0xf]
        %v2700 = vld [vmem:[%s2688 + $0x40] sm:$0xf]
        %v2701 = vld [vmem:[%s2688 + $0x48] sm:$0xf]
        %v2702 = vld [vmem:[%s2688 + $0x4c] sm:$0xf]
        %v2703 = vld [vmem:[%s2688 + $0x54] sm:$0xf]
        %v2704 = vld [vmem:[%s2688 + $0x58] sm:$0xf]
        %v2705 = vld [vmem:[%s2688 + $0x60] sm:$0xf]
        %v2706 = vld [vmem:[%s2688 + $0x64] sm:$0xf]
        %v2707 = vld [vmem:[%s2688 + $0x6c] sm:$0xf]
        %v2708 = vld [vmem:[%s2688 + $0x70] sm:$0xf]
        %v2709 = vld [vmem:[%s2688 + $0x78] sm:$0xf]
        %v2710 = vld [vmem:[%s2688 + $0x7c] sm:$0xf]
        %v2711 = vld [vmem:[%s2688 + $0x84] sm:$0xf]
        %v2712 = vld [vmem:[%s2688 + $0x88] sm:$0xf]
        %v2713 = vld [vmem:[%s2688 + $0x90] sm:$0xf]
        %v2714 = vld [vmem:[%s2688 + $0x94] sm:$0xf]
        %v2715 = vld [vmem:[%s2688 + $0x9c] sm:$0xf]
        %v2716 = vld [vmem:[%s2688 + $0xa0] sm:$0xf]
        %v2717 = vld [vmem:[%s2688 + $0xa8] sm:$0xf]
        %v2718 = vld [vmem:[%s2688 + $0xac] sm:$0xf]
        %v2719 = vld [vmem:[%s2688 + $0xb4] sm:$0xf]
        %v2720 = vld [vmem:[%s2688 + $0xb8] sm:$0xf]
        %v2721 = vld [vmem:[%s2688 + $0x8] sm:$0x1]
        %v2722 = vld [vmem:[%s2688 + $0x14] sm:$0x1]
        %v2723 = vld [vmem:[%s2688 + $0x20] sm:$0x1]
        %v2724 = vld [vmem:[%s2688 + $0x2c] sm:$0x1]
        %v2725 = vld [vmem:[%s2688 + $0x38] sm:$0x1]
        %v2726 = vld [vmem:[%s2688 + $0x44] sm:$0x1]
        %v2727 = vld [vmem:[%s2688 + $0x50] sm:$0x1]
        %v2728 = vld [vmem:[%s2688 + $0x5c] sm:$0x1]
        %v2729 = vld [vmem:[%s2688 + $0x68] sm:$0x1]
        %v2730 = vld [vmem:[%s2688 + $0x74] sm:$0x1]
        %v2731 = vld [vmem:[%s2688 + $0x80] sm:$0x1]
        %v2732 = vld [vmem:[%s2688 + $0x8c] sm:$0x1]
        %v2733 = vld [vmem:[%s2688 + $0x98] sm:$0x1]
        %v2734 = vld [vmem:[%s2688 + $0xa4] sm:$0x1]
        %v2735 = vld [vmem:[%s2688 + $0xb0] sm:$0x1]
        %v2736 = vld [vmem:[%s2688 + $0xbc] sm:$0x1]
        %v2738 = vshrl.u32 %v2689, 16
        %v2740 = vrot.slane %v2738, 4
        %v2741 = vshll.u32 %v2689, 16
        %v2743 = vrot.slane %v2741, 5
        %v2744 = vor.u32 %v2740, %v2743
        %v2745 = vrot.slane %v2744, 4
        %v2747 = vshll.u32 %v2690, 16
        %v2749 = vrot.slane %v2747, 5
        %v2750 = vsel %vm1516, %v2745, %v2749
        %v2751 = vshrl.u32 %v2690, 16
        %v2753 = vrot.slane %v2751, 4
        %v2754 = vor.u32 %v2753, %v2749
        %v2755 = vrot.slane %v2754, 4
        %v2757 = vshll.u32 %v2721, 16
        %v2759 = vrot.slane %v2757, 5
        %v2760 = vsel %vm1516, %v2755, %v2759
        %v2762 = vshrl.u32 %v2691, 16
        %v2764 = vrot.slane %v2762, 4
        %v2765 = vshll.u32 %v2691, 16
        %v2767 = vrot.slane %v2765, 5
        %v2768 = vor.u32 %v2764, %v2767
        %v2769 = vrot.slane %v2768, 4
        %v2771 = vshll.u32 %v2692, 16
        %v2773 = vrot.slane %v2771, 5
        %v2774 = vsel %vm1516, %v2769, %v2773
        %v2775 = vshrl.u32 %v2692, 16
        %v2777 = vrot.slane %v2775, 4
        %v2778 = vor.u32 %v2777, %v2773
        %v2779 = vrot.slane %v2778, 4
        %v2781 = vshll.u32 %v2722, 16
        %v2783 = vrot.slane %v2781, 5
        %v2784 = vsel %vm1516, %v2779, %v2783
        %v2786 = vshrl.u32 %v2693, 16
        %v2788 = vrot.slane %v2786, 4
        %v2789 = vshll.u32 %v2693, 16
        %v2791 = vrot.slane %v2789, 5
        %v2792 = vor.u32 %v2788, %v2791
        %v2793 = vrot.slane %v2792, 4
        %v2795 = vshll.u32 %v2694, 16
        %v2797 = vrot.slane %v2795, 5
        %v2798 = vsel %vm1516, %v2793, %v2797
        %v2799 = vshrl.u32 %v2694, 16
        %v2801 = vrot.slane %v2799, 4
        %v2802 = vor.u32 %v2801, %v2797
        %v2803 = vrot.slane %v2802, 4
        %v2805 = vshll.u32 %v2723, 16
        %v2807 = vrot.slane %v2805, 5
        %v2808 = vsel %vm1516, %v2803, %v2807
        %v2810 = vshrl.u32 %v2695, 16
        %v2812 = vrot.slane %v2810, 4
        %v2813 = vshll.u32 %v2695, 16
        %v2815 = vrot.slane %v2813, 5
        %v2816 = vor.u32 %v2812, %v2815
        %v2817 = vrot.slane %v2816, 4
        %v2819 = vshll.u32 %v2696, 16
        %v2821 = vrot.slane %v2819, 5
        %v2822 = vsel %vm1516, %v2817, %v2821
        %v2823 = vshrl.u32 %v2696, 16
        %v2825 = vrot.slane %v2823, 4
        %v2826 = vor.u32 %v2825, %v2821
        %v2827 = vrot.slane %v2826, 4
        %v2829 = vshll.u32 %v2724, 16
        %v2831 = vrot.slane %v2829, 5
        %v2832 = vsel %vm1516, %v2827, %v2831
        %v2834 = vshrl.u32 %v2697, 16
        %v2836 = vrot.slane %v2834, 4
        %v2837 = vshll.u32 %v2697, 16
        %v2839 = vrot.slane %v2837, 5
        %v2840 = vor.u32 %v2836, %v2839
        %v2841 = vrot.slane %v2840, 4
        %v2843 = vshll.u32 %v2698, 16
        %v2845 = vrot.slane %v2843, 5
        %v2846 = vsel %vm1516, %v2841, %v2845
        %v2847 = vshrl.u32 %v2698, 16
        %v2849 = vrot.slane %v2847, 4
        %v2850 = vor.u32 %v2849, %v2845
        %v2851 = vrot.slane %v2850, 4
        %v2853 = vshll.u32 %v2725, 16
        %v2855 = vrot.slane %v2853, 5
        %v2856 = vsel %vm1516, %v2851, %v2855
        %v2858 = vshrl.u32 %v2699, 16
        %v2860 = vrot.slane %v2858, 4
        %v2861 = vshll.u32 %v2699, 16
        %v2863 = vrot.slane %v2861, 5
        %v2864 = vor.u32 %v2860, %v2863
        %v2865 = vrot.slane %v2864, 4
        %v2867 = vshll.u32 %v2700, 16
        %v2869 = vrot.slane %v2867, 5
        %v2870 = vsel %vm1516, %v2865, %v2869
        %v2871 = vshrl.u32 %v2700, 16
        %v2873 = vrot.slane %v2871, 4
        %v2874 = vor.u32 %v2873, %v2869
        %v2875 = vrot.slane %v2874, 4
        %v2877 = vshll.u32 %v2726, 16
        %v2879 = vrot.slane %v2877, 5
        %v2880 = vsel %vm1516, %v2875, %v2879
        %v2882 = vshrl.u32 %v2701, 16
        %v2884 = vrot.slane %v2882, 4
        %v2885 = vshll.u32 %v2701, 16
        %v2887 = vrot.slane %v2885, 5
        %v2888 = vor.u32 %v2884, %v2887
        %v2889 = vrot.slane %v2888, 4
        %v2891 = vshll.u32 %v2702, 16
        %v2893 = vrot.slane %v2891, 5
        %v2894 = vsel %vm1516, %v2889, %v2893
        %v2895 = vshrl.u32 %v2702, 16
        %v2897 = vrot.slane %v2895, 4
        %v2898 = vor.u32 %v2897, %v2893
        %v2899 = vrot.slane %v2898, 4
        %v2901 = vshll.u32 %v2727, 16
        %v2903 = vrot.slane %v2901, 5
        %v2904 = vsel %vm1516, %v2899, %v2903
        %v2906 = vshrl.u32 %v2703, 16
        %v2908 = vrot.slane %v2906, 4
        %v2909 = vshll.u32 %v2703, 16
        %v2911 = vrot.slane %v2909, 5
        %v2912 = vor.u32 %v2908, %v2911
        %v2913 = vrot.slane %v2912, 4
        %v2915 = vshll.u32 %v2704, 16
        %v2917 = vrot.slane %v2915, 5
        %v2918 = vsel %vm1516, %v2913, %v2917
        %v2919 = vshrl.u32 %v2704, 16
        %v2921 = vrot.slane %v2919, 4
        %v2922 = vor.u32 %v2921, %v2917
        %v2923 = vrot.slane %v2922, 4
        %v2925 = vshll.u32 %v2728, 16
        %v2927 = vrot.slane %v2925, 5
        %v2928 = vsel %vm1516, %v2923, %v2927
        %v2930 = vshrl.u32 %v2705, 16
        %v2932 = vrot.slane %v2930, 4
        %v2933 = vshll.u32 %v2705, 16
        %v2935 = vrot.slane %v2933, 5
        %v2936 = vor.u32 %v2932, %v2935
        %v2937 = vrot.slane %v2936, 4
        %v2939 = vshll.u32 %v2706, 16
        %v2941 = vrot.slane %v2939, 5
        %v2942 = vsel %vm1516, %v2937, %v2941
        %v2943 = vshrl.u32 %v2706, 16
        %v2945 = vrot.slane %v2943, 4
        %v2946 = vor.u32 %v2945, %v2941
        %v2947 = vrot.slane %v2946, 4
        %v2949 = vshll.u32 %v2729, 16
        %v2951 = vrot.slane %v2949, 5
        %v2952 = vsel %vm1516, %v2947, %v2951
        %v2954 = vshrl.u32 %v2707, 16
        %v2956 = vrot.slane %v2954, 4
        %v2957 = vshll.u32 %v2707, 16
        %v2959 = vrot.slane %v2957, 5
        %v2960 = vor.u32 %v2956, %v2959
        %v2961 = vrot.slane %v2960, 4
        %v2963 = vshll.u32 %v2708, 16
        %v2965 = vrot.slane %v2963, 5
        %v2966 = vsel %vm1516, %v2961, %v2965
        %v2967 = vshrl.u32 %v2708, 16
        %v2969 = vrot.slane %v2967, 4
        %v2970 = vor.u32 %v2969, %v2965
        %v2971 = vrot.slane %v2970, 4
        %v2973 = vshll.u32 %v2730, 16
        %v2975 = vrot.slane %v2973, 5
        %v2976 = vsel %vm1516, %v2971, %v2975
        %v2978 = vshrl.u32 %v2709, 16
        %v2980 = vrot.slane %v2978, 4
        %v2981 = vshll.u32 %v2709, 16
        %v2983 = vrot.slane %v2981, 5
        %v2984 = vor.u32 %v2980, %v2983
        %v2985 = vrot.slane %v2984, 4
        %v2987 = vshll.u32 %v2710, 16
        %v2989 = vrot.slane %v2987, 5
        %v2990 = vsel %vm1516, %v2985, %v2989
        %v2991 = vshrl.u32 %v2710, 16
        %v2993 = vrot.slane %v2991, 4
        %v2994 = vor.u32 %v2993, %v2989
        %v2995 = vrot.slane %v2994, 4
        %v2997 = vshll.u32 %v2731, 16
        %v2999 = vrot.slane %v2997, 5
        %v3000 = vsel %vm1516, %v2995, %v2999
        %v3002 = vshrl.u32 %v2711, 16
        %v3004 = vrot.slane %v3002, 4
        %v3005 = vshll.u32 %v2711, 16
        %v3007 = vrot.slane %v3005, 5
        %v3008 = vor.u32 %v3004, %v3007
        %v3009 = vrot.slane %v3008, 4
        %v3011 = vshll.u32 %v2712, 16
        %v3013 = vrot.slane %v3011, 5
        %v3014 = vsel %vm1516, %v3009, %v3013
        %v3015 = vshrl.u32 %v2712, 16
        %v3017 = vrot.slane %v3015, 4
        %v3018 = vor.u32 %v3017, %v3013
        %v3019 = vrot.slane %v3018, 4
        %v3021 = vshll.u32 %v2732, 16
        %v3023 = vrot.slane %v3021, 5
        %v3024 = vsel %vm1516, %v3019, %v3023
        %v3026 = vshrl.u32 %v2713, 16
        %v3028 = vrot.slane %v3026, 4
        %v3029 = vshll.u32 %v2713, 16
        %v3031 = vrot.slane %v3029, 5
        %v3032 = vor.u32 %v3028, %v3031
        %v3033 = vrot.slane %v3032, 4
        %v3035 = vshll.u32 %v2714, 16
        %v3037 = vrot.slane %v3035, 5
        %v3038 = vsel %vm1516, %v3033, %v3037
        %v3039 = vshrl.u32 %v2714, 16
        %v3041 = vrot.slane %v3039, 4
        %v3042 = vor.u32 %v3041, %v3037
        %v3043 = vrot.slane %v3042, 4
        %v3045 = vshll.u32 %v2733, 16
        %v3047 = vrot.slane %v3045, 5
        %v3048 = vsel %vm1516, %v3043, %v3047
        %v3050 = vshrl.u32 %v2715, 16
        %v3052 = vrot.slane %v3050, 4
        %v3053 = vshll.u32 %v2715, 16
        %v3055 = vrot.slane %v3053, 5
        %v3056 = vor.u32 %v3052, %v3055
        %v3057 = vrot.slane %v3056, 4
        %v3059 = vshll.u32 %v2716, 16
        %v3061 = vrot.slane %v3059, 5
        %v3062 = vsel %vm1516, %v3057, %v3061
        %v3063 = vshrl.u32 %v2716, 16
        %v3065 = vrot.slane %v3063, 4
        %v3066 = vor.u32 %v3065, %v3061
        %v3067 = vrot.slane %v3066, 4
        %v3069 = vshll.u32 %v2734, 16
        %v3071 = vrot.slane %v3069, 5
        %v3072 = vsel %vm1516, %v3067, %v3071
        %v3074 = vshrl.u32 %v2717, 16
        %v3076 = vrot.slane %v3074, 4
        %v3077 = vshll.u32 %v2717, 16
        %v3079 = vrot.slane %v3077, 5
        %v3080 = vor.u32 %v3076, %v3079
        %v3081 = vrot.slane %v3080, 4
        %v3083 = vshll.u32 %v2718, 16
        %v3085 = vrot.slane %v3083, 5
        %v3086 = vsel %vm1516, %v3081, %v3085
        %v3087 = vshrl.u32 %v2718, 16
        %v3089 = vrot.slane %v3087, 4
        %v3090 = vor.u32 %v3089, %v3085
        %v3091 = vrot.slane %v3090, 4
        %v3093 = vshll.u32 %v2735, 16
        %v3095 = vrot.slane %v3093, 5
        %v3096 = vsel %vm1516, %v3091, %v3095
        %v3098 = vshrl.u32 %v2719, 16
        %v3100 = vrot.slane %v3098, 4
        %v3101 = vshll.u32 %v2719, 16
        %v3103 = vrot.slane %v3101, 5
        %v3104 = vor.u32 %v3100, %v3103
        %v3105 = vrot.slane %v3104, 4
        %v3107 = vshll.u32 %v2720, 16
        %v3109 = vrot.slane %v3107, 5
        %v3110 = vsel %vm1516, %v3105, %v3109
        %v3111 = vshrl.u32 %v2720, 16
        %v3113 = vrot.slane %v3111, 4
        %v3114 = vor.u32 %v3113, %v3109
        %v3115 = vrot.slane %v3114, 4
        %v3117 = vshll.u32 %v2736, 16
        %v3119 = vrot.slane %v3117, 5
        %v3120 = vsel %vm1516, %v3115, %v3119
        %v3121 = vld [vmem:[%s2688] sm:$0xe]
        %v3122 = vld [vmem:[%s2688 + $0xc] sm:$0xe]
        %v3123 = vld [vmem:[%s2688 + $0x18] sm:$0xe]
        %v3124 = vld [vmem:[%s2688 + $0x24] sm:$0xe]
        %v3125 = vld [vmem:[%s2688 + $0x30] sm:$0xe]
        %v3126 = vld [vmem:[%s2688 + $0x3c] sm:$0xe]
        %v3127 = vld [vmem:[%s2688 + $0x48] sm:$0xe]
        %v3128 = vld [vmem:[%s2688 + $0x54] sm:$0xe]
        %v3129 = vld [vmem:[%s2688 + $0x60] sm:$0xe]
        %v3130 = vld [vmem:[%s2688 + $0x6c] sm:$0xe]
        %v3131 = vld [vmem:[%s2688 + $0x78] sm:$0xe]
        %v3132 = vld [vmem:[%s2688 + $0x84] sm:$0xe]
        %v3133 = vld [vmem:[%s2688 + $0x90] sm:$0xe]
        %v3134 = vld [vmem:[%s2688 + $0x9c] sm:$0xe]
        %v3135 = vld [vmem:[%s2688 + $0xa8] sm:$0xe]
        %v3136 = vld [vmem:[%s2688 + $0xb4] sm:$0xe]
        %v3185 = vrot.slane %v3121, 5
        %v3186 = vrot.slane %v3185, 4
        %v3187 = vrot.slane %v2690, 5
        %v3188 = vsel %vm1967, %v3186, %v3187
        %v3189 = vrot.slane %v3187, 4
        %v3190 = vrot.slane %v2721, 5
        %v3191 = vsel %vm1967, %v3189, %v3190
        %v3192 = vrot.slane %v3122, 5
        %v3193 = vrot.slane %v3192, 4
        %v3194 = vrot.slane %v2692, 5
        %v3195 = vsel %vm1967, %v3193, %v3194
        %v3196 = vrot.slane %v3194, 4
        %v3197 = vrot.slane %v2722, 5
        %v3198 = vsel %vm1967, %v3196, %v3197
        %v3199 = vrot.slane %v3123, 5
        %v3200 = vrot.slane %v3199, 4
        %v3201 = vrot.slane %v2694, 5
        %v3202 = vsel %vm1967, %v3200, %v3201
        %v3203 = vrot.slane %v3201, 4
        %v3204 = vrot.slane %v2723, 5
        %v3205 = vsel %vm1967, %v3203, %v3204
        %v3206 = vrot.slane %v3124, 5
        %v3207 = vrot.slane %v3206, 4
        %v3208 = vrot.slane %v2696, 5
        %v3209 = vsel %vm1967, %v3207, %v3208
        %v3210 = vrot.slane %v3208, 4
        %v3211 = vrot.slane %v2724, 5
        %v3212 = vsel %vm1967, %v3210, %v3211
        %v3213 = vrot.slane %v3125, 5
        %v3214 = vrot.slane %v3213, 4
        %v3215 = vrot.slane %v2698, 5
        %v3216 = vsel %vm1967, %v3214, %v3215
        %v3217 = vrot.slane %v3215, 4
        %v3218 = vrot.slane %v2725, 5
        %v3219 = vsel %vm1967, %v3217, %v3218
        %v3220 = vrot.slane %v3126, 5
        %v3221 = vrot.slane %v3220, 4
        %v3222 = vrot.slane %v2700, 5
        %v3223 = vsel %vm1967, %v3221, %v3222
        %v3224 = vrot.slane %v3222, 4
        %v3225 = vrot.slane %v2726, 5
        %v3226 = vsel %vm1967, %v3224, %v3225
        %v3227 = vrot.slane %v3127, 5
        %v3228 = vrot.slane %v3227, 4
        %v3229 = vrot.slane %v2702, 5
        %v3230 = vsel %vm1967, %v3228, %v3229
        %v3231 = vrot.slane %v3229, 4
        %v3232 = vrot.slane %v2727, 5
        %v3233 = vsel %vm1967, %v3231, %v3232
        %v3234 = vrot.slane %v3128, 5
        %v3235 = vrot.slane %v3234, 4
        %v3236 = vrot.slane %v2704, 5
        %v3237 = vsel %vm1967, %v3235, %v3236
        %v3238 = vrot.slane %v3236, 4
        %v3239 = vrot.slane %v2728, 5
        %v3240 = vsel %vm1967, %v3238, %v3239
        %v3241 = vrot.slane %v3129, 5
        %v3242 = vrot.slane %v3241, 4
        %v3243 = vrot.slane %v2706, 5
        %v3244 = vsel %vm1967, %v3242, %v3243
        %v3245 = vrot.slane %v3243, 4
        %v3246 = vrot.slane %v2729, 5
        %v3247 = vsel %vm1967, %v3245, %v3246
        %v3248 = vrot.slane %v3130, 5
        %v3249 = vrot.slane %v3248, 4
        %v3250 = vrot.slane %v2708, 5
        %v3251 = vsel %vm1967, %v3249, %v3250
        %v3252 = vrot.slane %v3250, 4
        %v3253 = vrot.slane %v2730, 5
        %v3254 = vsel %vm1967, %v3252, %v3253
        %v3255 = vrot.slane %v3131, 5
        %v3256 = vrot.slane %v3255, 4
        %v3257 = vrot.slane %v2710, 5
        %v3258 = vsel %vm1967, %v3256, %v3257
        %v3259 = vrot.slane %v3257, 4
        %v3260 = vrot.slane %v2731, 5
        %v3261 = vsel %vm1967, %v3259, %v3260
        %v3262 = vrot.slane %v3132, 5
        %v3263 = vrot.slane %v3262, 4
        %v3264 = vrot.slane %v2712, 5
        %v3265 = vsel %vm1967, %v3263, %v3264
        %v3266 = vrot.slane %v3264, 4
        %v3267 = vrot.slane %v2732, 5
        %v3268 = vsel %vm1967, %v3266, %v3267
        %v3269 = vrot.slane %v3133, 5
        %v3270 = vrot.slane %v3269, 4
        %v3271 = vrot.slane %v2714, 5
        %v3272 = vsel %vm1967, %v3270, %v3271
        %v3273 = vrot.slane %v3271, 4
        %v3274 = vrot.slane %v2733, 5
        %v3275 = vsel %vm1967, %v3273, %v3274
        %v3276 = vrot.slane %v3134, 5
        %v3277 = vrot.slane %v3276, 4
        %v3278 = vrot.slane %v2716, 5
        %v3279 = vsel %vm1967, %v3277, %v3278
        %v3280 = vrot.slane %v3278, 4
        %v3281 = vrot.slane %v2734, 5
        %v3282 = vsel %vm1967, %v3280, %v3281
        %v3283 = vrot.slane %v3135, 5
        %v3284 = vrot.slane %v3283, 4
        %v3285 = vrot.slane %v2718, 5
        %v3286 = vsel %vm1967, %v3284, %v3285
        %v3287 = vrot.slane %v3285, 4
        %v3288 = vrot.slane %v2735, 5
        %v3289 = vsel %vm1967, %v3287, %v3288
        %v3290 = vrot.slane %v3136, 5
        %v3291 = vrot.slane %v3290, 4
        %v3292 = vrot.slane %v2720, 5
        %v3293 = vsel %vm1967, %v3291, %v3292
        %v3294 = vrot.slane %v3292, 4
        %v3295 = vrot.slane %v2736, 5
        %v3296 = vsel %vm1967, %v3294, %v3295
        %v3313 = vunpack.c.l.b16 %v1466
        %v3314 = vunpack.c.l.b16 %v1467
        %v3315 = vunpack.c.l.b16 %v1468
        %v3316 = vunpack.c.l.b16 %v1469
        %v3317 = vunpack.c.l.b16 %v1470
        %v3318 = vunpack.c.l.b16 %v1471
        %v3319 = vunpack.c.l.b16 %v1472
        %v3320 = vunpack.c.l.b16 %v1473
        %v3321 = vunpack.c.l.b16 %v1474
        %v3322 = vunpack.c.l.b16 %v1475
        %v3323 = vunpack.c.l.b16 %v1476
        %v3324 = vunpack.c.l.b16 %v1477
        %v3325 = vunpack.c.l.b16 %v1478
        %v3326 = vunpack.c.l.b16 %v1479
        %v3327 = vunpack.c.l.b16 %v1480
        %v3328 = vunpack.c.l.b16 %v1481
        %v3329 = vunpack.c.l.b16 %v1482
        %v3330 = vunpack.c.l.b16 %v1483
        %v3331 = vunpack.c.l.b16 %v1484
        %v3332 = vunpack.c.l.b16 %v1485
        %v3333 = vunpack.c.l.b16 %v1486
        %v3334 = vunpack.c.l.b16 %v1487
        %v3335 = vunpack.c.l.b16 %v1488
        %v3336 = vunpack.c.l.b16 %v1489
        %v3337 = vunpack.c.l.b16 %v1490
        %v3338 = vunpack.c.l.b16 %v1491
        %v3339 = vunpack.c.l.b16 %v1492
        %v3340 = vunpack.c.l.b16 %v1493
        %v3341 = vunpack.c.l.b16 %v1494
        %v3342 = vunpack.c.l.b16 %v1495
        %v3343 = vunpack.c.l.b16 %v1496
        %v3344 = vunpack.c.l.b16 %v1497
        %v3345 = vpack.c.b16 %v3314, %v3313
        %v3346 = vpack.c.b16 %v3316, %v3315
        %v3347 = vpack.c.b16 %v3318, %v3317
        %v3348 = vpack.c.b16 %v3320, %v3319
        %v3349 = vpack.c.b16 %v3322, %v3321
        %v3350 = vpack.c.b16 %v3324, %v3323
        %v3351 = vpack.c.b16 %v3326, %v3325
        %v3352 = vpack.c.b16 %v3328, %v3327
        %v3353 = vpack.c.b16 %v3330, %v3329
        %v3354 = vpack.c.b16 %v3332, %v3331
        %v3355 = vpack.c.b16 %v3334, %v3333
        %v3356 = vpack.c.b16 %v3336, %v3335
        %v3357 = vpack.c.b16 %v3338, %v3337
        %v3358 = vpack.c.b16 %v3340, %v3339
        %v3359 = vpack.c.b16 %v3342, %v3341
        %v3360 = vpack.c.b16 %v3344, %v3343
        %v3361 = vunpack.c.l.b16 %v1530
        %v3362 = vunpack.c.l.b16 %v1540
        %v3363 = vunpack.c.l.b16 %v1554
        %v3364 = vunpack.c.l.b16 %v1564
        %v3365 = vunpack.c.l.b16 %v1578
        %v3366 = vunpack.c.l.b16 %v1588
        %v3367 = vunpack.c.l.b16 %v1602
        %v3368 = vunpack.c.l.b16 %v1612
        %v3369 = vunpack.c.l.b16 %v1626
        %v3370 = vunpack.c.l.b16 %v1636
        %v3371 = vunpack.c.l.b16 %v1650
        %v3372 = vunpack.c.l.b16 %v1660
        %v3373 = vunpack.c.l.b16 %v1674
        %v3374 = vunpack.c.l.b16 %v1684
        %v3375 = vunpack.c.l.b16 %v1698
        %v3376 = vunpack.c.l.b16 %v1708
        %v3377 = vunpack.c.l.b16 %v1722
        %v3378 = vunpack.c.l.b16 %v1732
        %v3379 = vunpack.c.l.b16 %v1746
        %v3380 = vunpack.c.l.b16 %v1756
        %v3381 = vunpack.c.l.b16 %v1770
        %v3382 = vunpack.c.l.b16 %v1780
        %v3383 = vunpack.c.l.b16 %v1794
        %v3384 = vunpack.c.l.b16 %v1804
        %v3385 = vunpack.c.l.b16 %v1818
        %v3386 = vunpack.c.l.b16 %v1828
        %v3387 = vunpack.c.l.b16 %v1842
        %v3388 = vunpack.c.l.b16 %v1852
        %v3389 = vunpack.c.l.b16 %v1866
        %v3390 = vunpack.c.l.b16 %v1876
        %v3391 = vunpack.c.l.b16 %v1890
        %v3392 = vunpack.c.l.b16 %v1900
        %v3393 = vpack.c.b16 %v3362, %v3361
        %v3394 = vpack.c.b16 %v3364, %v3363
        %v3395 = vpack.c.b16 %v3366, %v3365
        %v3396 = vpack.c.b16 %v3368, %v3367
        %v3397 = vpack.c.b16 %v3370, %v3369
        %v3398 = vpack.c.b16 %v3372, %v3371
        %v3399 = vpack.c.b16 %v3374, %v3373
        %v3400 = vpack.c.b16 %v3376, %v3375
        %v3401 = vpack.c.b16 %v3378, %v3377
        %v3402 = vpack.c.b16 %v3380, %v3379
        %v3403 = vpack.c.b16 %v3382, %v3381
        %v3404 = vpack.c.b16 %v3384, %v3383
        %v3405 = vpack.c.b16 %v3386, %v3385
        %v3406 = vpack.c.b16 %v3388, %v3387
        %v3407 = vpack.c.b16 %v3390, %v3389
        %v3408 = vpack.c.b16 %v3392, %v3391
        %3409 = vrot.lane.b32.xlu0 %v3393, 4
        %v3410 = vpop.permute.xlu0 %3409
        %3411 = vrot.lane.b32.xlu0 %v3394, 4
        %v3412 = vpop.permute.xlu0 %3411
        %3413 = vrot.lane.b32.xlu0 %v3395, 4
        %v3414 = vpop.permute.xlu0 %3413
        %3415 = vrot.lane.b32.xlu0 %v3396, 4
        %v3416 = vpop.permute.xlu0 %3415
        %3417 = vrot.lane.b32.xlu0 %v3397, 4
        %v3418 = vpop.permute.xlu0 %3417
        %3419 = vrot.lane.b32.xlu0 %v3398, 4
        %v3420 = vpop.permute.xlu0 %3419
        %3421 = vrot.lane.b32.xlu0 %v3399, 4
        %v3422 = vpop.permute.xlu0 %3421
        %3423 = vrot.lane.b32.xlu0 %v3400, 4
        %v3424 = vpop.permute.xlu0 %3423
        %3425 = vrot.lane.b32.xlu0 %v3401, 4
        %v3426 = vpop.permute.xlu0 %3425
        %3427 = vrot.lane.b32.xlu0 %v3402, 4
        %v3428 = vpop.permute.xlu0 %3427
        %3429 = vrot.lane.b32.xlu0 %v3403, 4
        %v3430 = vpop.permute.xlu0 %3429
        %3431 = vrot.lane.b32.xlu0 %v3404, 4
        %v3432 = vpop.permute.xlu0 %3431
        %3433 = vrot.lane.b32.xlu0 %v3405, 4
        %v3434 = vpop.permute.xlu0 %3433
        %3435 = vrot.lane.b32.xlu0 %v3406, 4
        %v3436 = vpop.permute.xlu0 %3435
        %3437 = vrot.lane.b32.xlu0 %v3407, 4
        %v3438 = vpop.permute.xlu0 %3437
        %3439 = vrot.lane.b32.xlu0 %v3408, 4
        %v3440 = vpop.permute.xlu0 %3439
        %v3441 = vunpack.c.l.b16 %v1971
        %v3442 = vunpack.c.l.b16 %v1974
        %v3443 = vunpack.c.l.b16 %v1978
        %v3444 = vunpack.c.l.b16 %v1981
        %v3445 = vunpack.c.l.b16 %v1985
        %v3446 = vunpack.c.l.b16 %v1988
        %v3447 = vunpack.c.l.b16 %v1992
        %v3448 = vunpack.c.l.b16 %v1995
        %v3449 = vunpack.c.l.b16 %v1999
        %v3450 = vunpack.c.l.b16 %v2002
        %v3451 = vunpack.c.l.b16 %v2006
        %v3452 = vunpack.c.l.b16 %v2009
        %v3453 = vunpack.c.l.b16 %v2013
        %v3454 = vunpack.c.l.b16 %v2016
        %v3455 = vunpack.c.l.b16 %v2020
        %v3456 = vunpack.c.l.b16 %v2023
        %v3457 = vunpack.c.l.b16 %v2027
        %v3458 = vunpack.c.l.b16 %v2030
        %v3459 = vunpack.c.l.b16 %v2034
        %v3460 = vunpack.c.l.b16 %v2037
        %v3461 = vunpack.c.l.b16 %v2041
        %v3462 = vunpack.c.l.b16 %v2044
        %v3463 = vunpack.c.l.b16 %v2048
        %v3464 = vunpack.c.l.b16 %v2051
        %v3465 = vunpack.c.l.b16 %v2055
        %v3466 = vunpack.c.l.b16 %v2058
        %v3467 = vunpack.c.l.b16 %v2062
        %v3468 = vunpack.c.l.b16 %v2065
        %v3469 = vunpack.c.l.b16 %v2069
        %v3470 = vunpack.c.l.b16 %v2072
        %v3471 = vunpack.c.l.b16 %v2076
        %v3472 = vunpack.c.l.b16 %v2079
        %v3473 = vpack.c.b16 %v3442, %v3441
        %v3474 = vpack.c.b16 %v3444, %v3443
        %v3475 = vpack.c.b16 %v3446, %v3445
        %v3476 = vpack.c.b16 %v3448, %v3447
        %v3477 = vpack.c.b16 %v3450, %v3449
        %v3478 = vpack.c.b16 %v3452, %v3451
        %v3479 = vpack.c.b16 %v3454, %v3453
        %v3480 = vpack.c.b16 %v3456, %v3455
        %v3481 = vpack.c.b16 %v3458, %v3457
        %v3482 = vpack.c.b16 %v3460, %v3459
        %v3483 = vpack.c.b16 %v3462, %v3461
        %v3484 = vpack.c.b16 %v3464, %v3463
        %v3485 = vpack.c.b16 %v3466, %v3465
        %v3486 = vpack.c.b16 %v3468, %v3467
        %v3487 = vpack.c.b16 %v3470, %v3469
        %v3488 = vpack.c.b16 %v3472, %v3471
        %3489 = vrot.lane.b32.xlu0 %v3473, 8
        %v3490 = vpop.permute.xlu0 %3489
        %3491 = vrot.lane.b32.xlu0 %v3474, 8
        %v3492 = vpop.permute.xlu0 %3491
        %3493 = vrot.lane.b32.xlu0 %v3475, 8
        %v3494 = vpop.permute.xlu0 %3493
        %3495 = vrot.lane.b32.xlu0 %v3476, 8
        %v3496 = vpop.permute.xlu0 %3495
        %3497 = vrot.lane.b32.xlu0 %v3477, 8
        %v3498 = vpop.permute.xlu0 %3497
        %3499 = vrot.lane.b32.xlu0 %v3478, 8
        %v3500 = vpop.permute.xlu0 %3499
        %3501 = vrot.lane.b32.xlu0 %v3479, 8
        %v3502 = vpop.permute.xlu0 %3501
        %3503 = vrot.lane.b32.xlu0 %v3480, 8
        %v3504 = vpop.permute.xlu0 %3503
        %3505 = vrot.lane.b32.xlu0 %v3481, 8
        %v3506 = vpop.permute.xlu0 %3505
        %3507 = vrot.lane.b32.xlu0 %v3482, 8
        %v3508 = vpop.permute.xlu0 %3507
        %3509 = vrot.lane.b32.xlu0 %v3483, 8
        %v3510 = vpop.permute.xlu0 %3509
        %3511 = vrot.lane.b32.xlu0 %v3484, 8
        %v3512 = vpop.permute.xlu0 %3511
        %3513 = vrot.lane.b32.xlu0 %v3485, 8
        %v3514 = vpop.permute.xlu0 %3513
        %3515 = vrot.lane.b32.xlu0 %v3486, 8
        %v3516 = vpop.permute.xlu0 %3515
        %3517 = vrot.lane.b32.xlu0 %v3487, 8
        %v3518 = vpop.permute.xlu0 %3517
        %3519 = vrot.lane.b32.xlu0 %v3488, 8
        %v3520 = vpop.permute.xlu0 %3519
        %v3537 = vunpack.c.l.b16 %v2080
        %v3538 = vunpack.c.l.b16 %v2081
        %v3539 = vunpack.c.l.b16 %v2082
        %v3540 = vunpack.c.l.b16 %v2083
        %v3541 = vunpack.c.l.b16 %v2084
        %v3542 = vunpack.c.l.b16 %v2085
        %v3543 = vunpack.c.l.b16 %v2086
        %v3544 = vunpack.c.l.b16 %v2087
        %v3545 = vunpack.c.l.b16 %v2088
        %v3546 = vunpack.c.l.b16 %v2089
        %v3547 = vunpack.c.l.b16 %v2090
        %v3548 = vunpack.c.l.b16 %v2091
        %v3549 = vunpack.c.l.b16 %v2092
        %v3550 = vunpack.c.l.b16 %v2093
        %v3551 = vunpack.c.l.b16 %v2094
        %v3552 = vunpack.c.l.b16 %v2095
        %v3553 = vunpack.c.l.b16 %v2096
        %v3554 = vunpack.c.l.b16 %v2097
        %v3555 = vunpack.c.l.b16 %v2098
        %v3556 = vunpack.c.l.b16 %v2099
        %v3557 = vunpack.c.l.b16 %v2100
        %v3558 = vunpack.c.l.b16 %v2101
        %v3559 = vunpack.c.l.b16 %v2102
        %v3560 = vunpack.c.l.b16 %v2103
        %v3561 = vunpack.c.l.b16 %v2104
        %v3562 = vunpack.c.l.b16 %v2105
        %v3563 = vunpack.c.l.b16 %v2106
        %v3564 = vunpack.c.l.b16 %v2107
        %v3565 = vunpack.c.l.b16 %v2108
        %v3566 = vunpack.c.l.b16 %v2109
        %v3567 = vunpack.c.l.b16 %v2110
        %v3568 = vunpack.c.l.b16 %v2111
        %v3569 = vpack.c.b16 %v3538, %v3537
        %v3570 = vpack.c.b16 %v3540, %v3539
        %v3571 = vpack.c.b16 %v3542, %v3541
        %v3572 = vpack.c.b16 %v3544, %v3543
        %v3573 = vpack.c.b16 %v3546, %v3545
        %v3574 = vpack.c.b16 %v3548, %v3547
        %v3575 = vpack.c.b16 %v3550, %v3549
        %v3576 = vpack.c.b16 %v3552, %v3551
        %v3577 = vpack.c.b16 %v3554, %v3553
        %v3578 = vpack.c.b16 %v3556, %v3555
        %v3579 = vpack.c.b16 %v3558, %v3557
        %v3580 = vpack.c.b16 %v3560, %v3559
        %v3581 = vpack.c.b16 %v3562, %v3561
        %v3582 = vpack.c.b16 %v3564, %v3563
        %v3583 = vpack.c.b16 %v3566, %v3565
        %v3584 = vpack.c.b16 %v3568, %v3567
        %3585 = vrot.lane.b32.xlu0 %v3569, 12
        %v3586 = vpop.permute.xlu0 %3585
        %3587 = vrot.lane.b32.xlu0 %v3570, 12
        %v3588 = vpop.permute.xlu0 %3587
        %3589 = vrot.lane.b32.xlu0 %v3571, 12
        %v3590 = vpop.permute.xlu0 %3589
        %3591 = vrot.lane.b32.xlu0 %v3572, 12
        %v3592 = vpop.permute.xlu0 %3591
        %3593 = vrot.lane.b32.xlu0 %v3573, 12
        %v3594 = vpop.permute.xlu0 %3593
        %3595 = vrot.lane.b32.xlu0 %v3574, 12
        %v3596 = vpop.permute.xlu0 %3595
        %3597 = vrot.lane.b32.xlu0 %v3575, 12
        %v3598 = vpop.permute.xlu0 %3597
        %3599 = vrot.lane.b32.xlu0 %v3576, 12
        %v3600 = vpop.permute.xlu0 %3599
        %3601 = vrot.lane.b32.xlu0 %v3577, 12
        %v3602 = vpop.permute.xlu0 %3601
        %3603 = vrot.lane.b32.xlu0 %v3578, 12
        %v3604 = vpop.permute.xlu0 %3603
        %3605 = vrot.lane.b32.xlu0 %v3579, 12
        %v3606 = vpop.permute.xlu0 %3605
        %3607 = vrot.lane.b32.xlu0 %v3580, 12
        %v3608 = vpop.permute.xlu0 %3607
        %3609 = vrot.lane.b32.xlu0 %v3581, 12
        %v3610 = vpop.permute.xlu0 %3609
        %3611 = vrot.lane.b32.xlu0 %v3582, 12
        %v3612 = vpop.permute.xlu0 %3611
        %3613 = vrot.lane.b32.xlu0 %v3583, 12
        %v3614 = vpop.permute.xlu0 %3613
        %3615 = vrot.lane.b32.xlu0 %v3584, 12
        %v3616 = vpop.permute.xlu0 %3615
        %v3617 = vunpack.c.l.b16 %v2141
        %v3618 = vunpack.c.l.b16 %v2151
        %v3619 = vunpack.c.l.b16 %v2165
        %v3620 = vunpack.c.l.b16 %v2175
        %v3621 = vunpack.c.l.b16 %v2189
        %v3622 = vunpack.c.l.b16 %v2199
        %v3623 = vunpack.c.l.b16 %v2213
        %v3624 = vunpack.c.l.b16 %v2223
        %v3625 = vunpack.c.l.b16 %v2237
        %v3626 = vunpack.c.l.b16 %v2247
        %v3627 = vunpack.c.l.b16 %v2261
        %v3628 = vunpack.c.l.b16 %v2271
        %v3629 = vunpack.c.l.b16 %v2285
        %v3630 = vunpack.c.l.b16 %v2295
        %v3631 = vunpack.c.l.b16 %v2309
        %v3632 = vunpack.c.l.b16 %v2319
        %v3633 = vunpack.c.l.b16 %v2333
        %v3634 = vunpack.c.l.b16 %v2343
        %v3635 = vunpack.c.l.b16 %v2357
        %v3636 = vunpack.c.l.b16 %v2367
        %v3637 = vunpack.c.l.b16 %v2381
        %v3638 = vunpack.c.l.b16 %v2391
        %v3639 = vunpack.c.l.b16 %v2405
        %v3640 = vunpack.c.l.b16 %v2415
        %v3641 = vunpack.c.l.b16 %v2429
        %v3642 = vunpack.c.l.b16 %v2439
        %v3643 = vunpack.c.l.b16 %v2453
        %v3644 = vunpack.c.l.b16 %v2463
        %v3645 = vunpack.c.l.b16 %v2477
        %v3646 = vunpack.c.l.b16 %v2487
        %v3647 = vunpack.c.l.b16 %v2501
        %v3648 = vunpack.c.l.b16 %v2511
        %v3649 = vpack.c.b16 %v3618, %v3617
        %v3650 = vpack.c.b16 %v3620, %v3619
        %v3651 = vpack.c.b16 %v3622, %v3621
        %v3652 = vpack.c.b16 %v3624, %v3623
        %v3653 = vpack.c.b16 %v3626, %v3625
        %v3654 = vpack.c.b16 %v3628, %v3627
        %v3655 = vpack.c.b16 %v3630, %v3629
        %v3656 = vpack.c.b16 %v3632, %v3631
        %v3657 = vpack.c.b16 %v3634, %v3633
        %v3658 = vpack.c.b16 %v3636, %v3635
        %v3659 = vpack.c.b16 %v3638, %v3637
        %v3660 = vpack.c.b16 %v3640, %v3639
        %v3661 = vpack.c.b16 %v3642, %v3641
        %v3662 = vpack.c.b16 %v3644, %v3643
        %v3663 = vpack.c.b16 %v3646, %v3645
        %v3664 = vpack.c.b16 %v3648, %v3647
        %3665 = vrot.lane.b32.xlu0 %v3649, 16
        %v3666 = vpop.permute.xlu0 %3665
        %3667 = vrot.lane.b32.xlu0 %v3650, 16
        %v3668 = vpop.permute.xlu0 %3667
        %3669 = vrot.lane.b32.xlu0 %v3651, 16
        %v3670 = vpop.permute.xlu0 %3669
        %3671 = vrot.lane.b32.xlu0 %v3652, 16
        %v3672 = vpop.permute.xlu0 %3671
        %3673 = vrot.lane.b32.xlu0 %v3653, 16
        %v3674 = vpop.permute.xlu0 %3673
        %3675 = vrot.lane.b32.xlu0 %v3654, 16
        %v3676 = vpop.permute.xlu0 %3675
        %3677 = vrot.lane.b32.xlu0 %v3655, 16
        %v3678 = vpop.permute.xlu0 %3677
        %3679 = vrot.lane.b32.xlu0 %v3656, 16
        %v3680 = vpop.permute.xlu0 %3679
        %3681 = vrot.lane.b32.xlu0 %v3657, 16
        %v3682 = vpop.permute.xlu0 %3681
        %3683 = vrot.lane.b32.xlu0 %v3658, 16
        %v3684 = vpop.permute.xlu0 %3683
        %3685 = vrot.lane.b32.xlu0 %v3659, 16
        %v3686 = vpop.permute.xlu0 %3685
        %3687 = vrot.lane.b32.xlu0 %v3660, 16
        %v3688 = vpop.permute.xlu0 %3687
        %3689 = vrot.lane.b32.xlu0 %v3661, 16
        %v3690 = vpop.permute.xlu0 %3689
        %3691 = vrot.lane.b32.xlu0 %v3662, 16
        %v3692 = vpop.permute.xlu0 %3691
        %3693 = vrot.lane.b32.xlu0 %v3663, 16
        %v3694 = vpop.permute.xlu0 %3693
        %3695 = vrot.lane.b32.xlu0 %v3664, 16
        %v3696 = vpop.permute.xlu0 %3695
        %v3697 = vunpack.c.l.b16 %v2579
        %v3698 = vunpack.c.l.b16 %v2582
        %v3699 = vunpack.c.l.b16 %v2586
        %v3700 = vunpack.c.l.b16 %v2589
        %v3701 = vunpack.c.l.b16 %v2593
        %v3702 = vunpack.c.l.b16 %v2596
        %v3703 = vunpack.c.l.b16 %v2600
        %v3704 = vunpack.c.l.b16 %v2603
        %v3705 = vunpack.c.l.b16 %v2607
        %v3706 = vunpack.c.l.b16 %v2610
        %v3707 = vunpack.c.l.b16 %v2614
        %v3708 = vunpack.c.l.b16 %v2617
        %v3709 = vunpack.c.l.b16 %v2621
        %v3710 = vunpack.c.l.b16 %v2624
        %v3711 = vunpack.c.l.b16 %v2628
        %v3712 = vunpack.c.l.b16 %v2631
        %v3713 = vunpack.c.l.b16 %v2635
        %v3714 = vunpack.c.l.b16 %v2638
        %v3715 = vunpack.c.l.b16 %v2642
        %v3716 = vunpack.c.l.b16 %v2645
        %v3717 = vunpack.c.l.b16 %v2649
        %v3718 = vunpack.c.l.b16 %v2652
        %v3719 = vunpack.c.l.b16 %v2656
        %v3720 = vunpack.c.l.b16 %v2659
        %v3721 = vunpack.c.l.b16 %v2663
        %v3722 = vunpack.c.l.b16 %v2666
        %v3723 = vunpack.c.l.b16 %v2670
        %v3724 = vunpack.c.l.b16 %v2673
        %v3725 = vunpack.c.l.b16 %v2677
        %v3726 = vunpack.c.l.b16 %v2680
        %v3727 = vunpack.c.l.b16 %v2684
        %v3728 = vunpack.c.l.b16 %v2687
        %v3729 = vpack.c.b16 %v3698, %v3697
        %v3730 = vpack.c.b16 %v3700, %v3699
        %v3731 = vpack.c.b16 %v3702, %v3701
        %v3732 = vpack.c.b16 %v3704, %v3703
        %v3733 = vpack.c.b16 %v3706, %v3705
        %v3734 = vpack.c.b16 %v3708, %v3707
        %v3735 = vpack.c.b16 %v3710, %v3709
        %v3736 = vpack.c.b16 %v3712, %v3711
        %v3737 = vpack.c.b16 %v3714, %v3713
        %v3738 = vpack.c.b16 %v3716, %v3715
        %v3739 = vpack.c.b16 %v3718, %v3717
        %v3740 = vpack.c.b16 %v3720, %v3719
        %v3741 = vpack.c.b16 %v3722, %v3721
        %v3742 = vpack.c.b16 %v3724, %v3723
        %v3743 = vpack.c.b16 %v3726, %v3725
        %v3744 = vpack.c.b16 %v3728, %v3727
        %3745 = vrot.lane.b32.xlu0 %v3729, 20
        %v3746 = vpop.permute.xlu0 %3745
        %3747 = vrot.lane.b32.xlu0 %v3730, 20
        %v3748 = vpop.permute.xlu0 %3747
        %3749 = vrot.lane.b32.xlu0 %v3731, 20
        %v3750 = vpop.permute.xlu0 %3749
        %3751 = vrot.lane.b32.xlu0 %v3732, 20
        %v3752 = vpop.permute.xlu0 %3751
        %3753 = vrot.lane.b32.xlu0 %v3733, 20
        %v3754 = vpop.permute.xlu0 %3753
        %3755 = vrot.lane.b32.xlu0 %v3734, 20
        %v3756 = vpop.permute.xlu0 %3755
        %3757 = vrot.lane.b32.xlu0 %v3735, 20
        %v3758 = vpop.permute.xlu0 %3757
        %3759 = vrot.lane.b32.xlu0 %v3736, 20
        %v3760 = vpop.permute.xlu0 %3759
        %3761 = vrot.lane.b32.xlu0 %v3737, 20
        %v3762 = vpop.permute.xlu0 %3761
        %3763 = vrot.lane.b32.xlu0 %v3738, 20
        %v3764 = vpop.permute.xlu0 %3763
        %3765 = vrot.lane.b32.xlu0 %v3739, 20
        %v3766 = vpop.permute.xlu0 %3765
        %3767 = vrot.lane.b32.xlu0 %v3740, 20
        %v3768 = vpop.permute.xlu0 %3767
        %3769 = vrot.lane.b32.xlu0 %v3741, 20
        %v3770 = vpop.permute.xlu0 %3769
        %3771 = vrot.lane.b32.xlu0 %v3742, 20
        %v3772 = vpop.permute.xlu0 %3771
        %3773 = vrot.lane.b32.xlu0 %v3743, 20
        %v3774 = vpop.permute.xlu0 %3773
        %3775 = vrot.lane.b32.xlu0 %v3744, 20
        %v3776 = vpop.permute.xlu0 %3775
        %v3793 = vunpack.c.l.b16 %v2689
        %v3794 = vunpack.c.l.b16 %v2690
        %v3795 = vunpack.c.l.b16 %v2691
        %v3796 = vunpack.c.l.b16 %v2692
        %v3797 = vunpack.c.l.b16 %v2693
        %v3798 = vunpack.c.l.b16 %v2694
        %v3799 = vunpack.c.l.b16 %v2695
        %v3800 = vunpack.c.l.b16 %v2696
        %v3801 = vunpack.c.l.b16 %v2697
        %v3802 = vunpack.c.l.b16 %v2698
        %v3803 = vunpack.c.l.b16 %v2699
        %v3804 = vunpack.c.l.b16 %v2700
        %v3805 = vunpack.c.l.b16 %v2701
        %v3806 = vunpack.c.l.b16 %v2702
        %v3807 = vunpack.c.l.b16 %v2703
        %v3808 = vunpack.c.l.b16 %v2704
        %v3809 = vunpack.c.l.b16 %v2705
        %v3810 = vunpack.c.l.b16 %v2706
        %v3811 = vunpack.c.l.b16 %v2707
        %v3812 = vunpack.c.l.b16 %v2708
        %v3813 = vunpack.c.l.b16 %v2709
        %v3814 = vunpack.c.l.b16 %v2710
        %v3815 = vunpack.c.l.b16 %v2711
        %v3816 = vunpack.c.l.b16 %v2712
        %v3817 = vunpack.c.l.b16 %v2713
        %v3818 = vunpack.c.l.b16 %v2714
        %v3819 = vunpack.c.l.b16 %v2715
        %v3820 = vunpack.c.l.b16 %v2716
        %v3821 = vunpack.c.l.b16 %v2717
        %v3822 = vunpack.c.l.b16 %v2718
        %v3823 = vunpack.c.l.b16 %v2719
        %v3824 = vunpack.c.l.b16 %v2720
        %v3825 = vpack.c.b16 %v3794, %v3793
        %v3826 = vpack.c.b16 %v3796, %v3795
        %v3827 = vpack.c.b16 %v3798, %v3797
        %v3828 = vpack.c.b16 %v3800, %v3799
        %v3829 = vpack.c.b16 %v3802, %v3801
        %v3830 = vpack.c.b16 %v3804, %v3803
        %v3831 = vpack.c.b16 %v3806, %v3805
        %v3832 = vpack.c.b16 %v3808, %v3807
        %v3833 = vpack.c.b16 %v3810, %v3809
        %v3834 = vpack.c.b16 %v3812, %v3811
        %v3835 = vpack.c.b16 %v3814, %v3813
        %v3836 = vpack.c.b16 %v3816, %v3815
        %v3837 = vpack.c.b16 %v3818, %v3817
        %v3838 = vpack.c.b16 %v3820, %v3819
        %v3839 = vpack.c.b16 %v3822, %v3821
        %v3840 = vpack.c.b16 %v3824, %v3823
        %3841 = vrot.lane.b32.xlu0 %v3825, 24
        %v3842 = vpop.permute.xlu0 %3841
        %3843 = vrot.lane.b32.xlu0 %v3826, 24
        %v3844 = vpop.permute.xlu0 %3843
        %3845 = vrot.lane.b32.xlu0 %v3827, 24
        %v3846 = vpop.permute.xlu0 %3845
        %3847 = vrot.lane.b32.xlu0 %v3828, 24
        %v3848 = vpop.permute.xlu0 %3847
        %3849 = vrot.lane.b32.xlu0 %v3829, 24
        %v3850 = vpop.permute.xlu0 %3849
        %3851 = vrot.lane.b32.xlu0 %v3830, 24
        %v3852 = vpop.permute.xlu0 %3851
        %3853 = vrot.lane.b32.xlu0 %v3831, 24
        %v3854 = vpop.permute.xlu0 %3853
        %3855 = vrot.lane.b32.xlu0 %v3832, 24
        %v3856 = vpop.permute.xlu0 %3855
        %3857 = vrot.lane.b32.xlu0 %v3833, 24
        %v3858 = vpop.permute.xlu0 %3857
        %3859 = vrot.lane.b32.xlu0 %v3834, 24
        %v3860 = vpop.permute.xlu0 %3859
        %3861 = vrot.lane.b32.xlu0 %v3835, 24
        %v3862 = vpop.permute.xlu0 %3861
        %3863 = vrot.lane.b32.xlu0 %v3836, 24
        %v3864 = vpop.permute.xlu0 %3863
        %3865 = vrot.lane.b32.xlu0 %v3837, 24
        %v3866 = vpop.permute.xlu0 %3865
        %3867 = vrot.lane.b32.xlu0 %v3838, 24
        %v3868 = vpop.permute.xlu0 %3867
        %3869 = vrot.lane.b32.xlu0 %v3839, 24
        %v3870 = vpop.permute.xlu0 %3869
        %3871 = vrot.lane.b32.xlu0 %v3840, 24
        %v3872 = vpop.permute.xlu0 %3871
        %v3873 = vunpack.c.l.b16 %v2750
        %v3874 = vunpack.c.l.b16 %v2760
        %v3875 = vunpack.c.l.b16 %v2774
        %v3876 = vunpack.c.l.b16 %v2784
        %v3877 = vunpack.c.l.b16 %v2798
        %v3878 = vunpack.c.l.b16 %v2808
        %v3879 = vunpack.c.l.b16 %v2822
        %v3880 = vunpack.c.l.b16 %v2832
        %v3881 = vunpack.c.l.b16 %v2846
        %v3882 = vunpack.c.l.b16 %v2856
        %v3883 = vunpack.c.l.b16 %v2870
        %v3884 = vunpack.c.l.b16 %v2880
        %v3885 = vunpack.c.l.b16 %v2894
        %v3886 = vunpack.c.l.b16 %v2904
        %v3887 = vunpack.c.l.b16 %v2918
        %v3888 = vunpack.c.l.b16 %v2928
        %v3889 = vunpack.c.l.b16 %v2942
        %v3890 = vunpack.c.l.b16 %v2952
        %v3891 = vunpack.c.l.b16 %v2966
        %v3892 = vunpack.c.l.b16 %v2976
        %v3893 = vunpack.c.l.b16 %v2990
        %v3894 = vunpack.c.l.b16 %v3000
        %v3895 = vunpack.c.l.b16 %v3014
        %v3896 = vunpack.c.l.b16 %v3024
        %v3897 = vunpack.c.l.b16 %v3038
        %v3898 = vunpack.c.l.b16 %v3048
        %v3899 = vunpack.c.l.b16 %v3062
        %v3900 = vunpack.c.l.b16 %v3072
        %v3901 = vunpack.c.l.b16 %v3086
        %v3902 = vunpack.c.l.b16 %v3096
        %v3903 = vunpack.c.l.b16 %v3110
        %v3904 = vunpack.c.l.b16 %v3120
        %v3905 = vpack.c.b16 %v3874, %v3873
        %v3906 = vpack.c.b16 %v3876, %v3875
        %v3907 = vpack.c.b16 %v3878, %v3877
        %v3908 = vpack.c.b16 %v3880, %v3879
        %v3909 = vpack.c.b16 %v3882, %v3881
        %v3910 = vpack.c.b16 %v3884, %v3883
        %v3911 = vpack.c.b16 %v3886, %v3885
        %v3912 = vpack.c.b16 %v3888, %v3887
        %v3913 = vpack.c.b16 %v3890, %v3889
        %v3914 = vpack.c.b16 %v3892, %v3891
        %v3915 = vpack.c.b16 %v3894, %v3893
        %v3916 = vpack.c.b16 %v3896, %v3895
        %v3917 = vpack.c.b16 %v3898, %v3897
        %v3918 = vpack.c.b16 %v3900, %v3899
        %v3919 = vpack.c.b16 %v3902, %v3901
        %v3920 = vpack.c.b16 %v3904, %v3903
        %3921 = vrot.lane.b32.xlu0 %v3905, 28
        %v3922 = vpop.permute.xlu0 %3921
        %3923 = vrot.lane.b32.xlu0 %v3906, 28
        %v3924 = vpop.permute.xlu0 %3923
        %3925 = vrot.lane.b32.xlu0 %v3907, 28
        %v3926 = vpop.permute.xlu0 %3925
        %3927 = vrot.lane.b32.xlu0 %v3908, 28
        %v3928 = vpop.permute.xlu0 %3927
        %3929 = vrot.lane.b32.xlu0 %v3909, 28
        %v3930 = vpop.permute.xlu0 %3929
        %3931 = vrot.lane.b32.xlu0 %v3910, 28
        %v3932 = vpop.permute.xlu0 %3931
        %3933 = vrot.lane.b32.xlu0 %v3911, 28
        %v3934 = vpop.permute.xlu0 %3933
        %3935 = vrot.lane.b32.xlu0 %v3912, 28
        %v3936 = vpop.permute.xlu0 %3935
        %3937 = vrot.lane.b32.xlu0 %v3913, 28
        %v3938 = vpop.permute.xlu0 %3937
        %3939 = vrot.lane.b32.xlu0 %v3914, 28
        %v3940 = vpop.permute.xlu0 %3939
        %3941 = vrot.lane.b32.xlu0 %v3915, 28
        %v3942 = vpop.permute.xlu0 %3941
        %3943 = vrot.lane.b32.xlu0 %v3916, 28
        %v3944 = vpop.permute.xlu0 %3943
        %3945 = vrot.lane.b32.xlu0 %v3917, 28
        %v3946 = vpop.permute.xlu0 %3945
        %3947 = vrot.lane.b32.xlu0 %v3918, 28
        %v3948 = vpop.permute.xlu0 %3947
        %3949 = vrot.lane.b32.xlu0 %v3919, 28
        %v3950 = vpop.permute.xlu0 %3949
        %3951 = vrot.lane.b32.xlu0 %v3920, 28
        %v3952 = vpop.permute.xlu0 %3951
        %v3953 = vunpack.c.l.b16 %v3188
        %v3954 = vunpack.c.l.b16 %v3191
        %v3955 = vunpack.c.l.b16 %v3195
        %v3956 = vunpack.c.l.b16 %v3198
        %v3957 = vunpack.c.l.b16 %v3202
        %v3958 = vunpack.c.l.b16 %v3205
        %v3959 = vunpack.c.l.b16 %v3209
        %v3960 = vunpack.c.l.b16 %v3212
        %v3961 = vunpack.c.l.b16 %v3216
        %v3962 = vunpack.c.l.b16 %v3219
        %v3963 = vunpack.c.l.b16 %v3223
        %v3964 = vunpack.c.l.b16 %v3226
        %v3965 = vunpack.c.l.b16 %v3230
        %v3966 = vunpack.c.l.b16 %v3233
        %v3967 = vunpack.c.l.b16 %v3237
        %v3968 = vunpack.c.l.b16 %v3240
        %v3969 = vunpack.c.l.b16 %v3244
        %v3970 = vunpack.c.l.b16 %v3247
        %v3971 = vunpack.c.l.b16 %v3251
        %v3972 = vunpack.c.l.b16 %v3254
        %v3973 = vunpack.c.l.b16 %v3258
        %v3974 = vunpack.c.l.b16 %v3261
        %v3975 = vunpack.c.l.b16 %v3265
        %v3976 = vunpack.c.l.b16 %v3268
        %v3977 = vunpack.c.l.b16 %v3272
        %v3978 = vunpack.c.l.b16 %v3275
        %v3979 = vunpack.c.l.b16 %v3279
        %v3980 = vunpack.c.l.b16 %v3282
        %v3981 = vunpack.c.l.b16 %v3286
        %v3982 = vunpack.c.l.b16 %v3289
        %v3983 = vunpack.c.l.b16 %v3293
        %v3984 = vunpack.c.l.b16 %v3296
        %v3985 = vpack.c.b16 %v3954, %v3953
        %v3986 = vpack.c.b16 %v3956, %v3955
        %v3987 = vpack.c.b16 %v3958, %v3957
        %v3988 = vpack.c.b16 %v3960, %v3959
        %v3989 = vpack.c.b16 %v3962, %v3961
        %v3990 = vpack.c.b16 %v3964, %v3963
        %v3991 = vpack.c.b16 %v3966, %v3965
        %v3992 = vpack.c.b16 %v3968, %v3967
        %v3993 = vpack.c.b16 %v3970, %v3969
        %v3994 = vpack.c.b16 %v3972, %v3971
        %v3995 = vpack.c.b16 %v3974, %v3973
        %v3996 = vpack.c.b16 %v3976, %v3975
        %v3997 = vpack.c.b16 %v3978, %v3977
        %v3998 = vpack.c.b16 %v3980, %v3979
        %v3999 = vpack.c.b16 %v3982, %v3981
        %v4000 = vpack.c.b16 %v3984, %v3983
        %4001 = vrot.lane.b32.xlu0 %v3985, 32
        %v4002 = vpop.permute.xlu0 %4001
        %4003 = vrot.lane.b32.xlu0 %v3986, 32
        %v4004 = vpop.permute.xlu0 %4003
        %4005 = vrot.lane.b32.xlu0 %v3987, 32
        %v4006 = vpop.permute.xlu0 %4005
        %4007 = vrot.lane.b32.xlu0 %v3988, 32
        %v4008 = vpop.permute.xlu0 %4007
        %4009 = vrot.lane.b32.xlu0 %v3989, 32
        %v4010 = vpop.permute.xlu0 %4009
        %4011 = vrot.lane.b32.xlu0 %v3990, 32
        %v4012 = vpop.permute.xlu0 %4011
        %4013 = vrot.lane.b32.xlu0 %v3991, 32
        %v4014 = vpop.permute.xlu0 %4013
        %4015 = vrot.lane.b32.xlu0 %v3992, 32
        %v4016 = vpop.permute.xlu0 %4015
        %4017 = vrot.lane.b32.xlu0 %v3993, 32
        %v4018 = vpop.permute.xlu0 %4017
        %4019 = vrot.lane.b32.xlu0 %v3994, 32
        %v4020 = vpop.permute.xlu0 %4019
        %4021 = vrot.lane.b32.xlu0 %v3995, 32
        %v4022 = vpop.permute.xlu0 %4021
        %4023 = vrot.lane.b32.xlu0 %v3996, 32
        %v4024 = vpop.permute.xlu0 %4023
        %4025 = vrot.lane.b32.xlu0 %v3997, 32
        %v4026 = vpop.permute.xlu0 %4025
        %4027 = vrot.lane.b32.xlu0 %v3998, 32
        %v4028 = vpop.permute.xlu0 %4027
        %4029 = vrot.lane.b32.xlu0 %v3999, 32
        %v4030 = vpop.permute.xlu0 %4029
        %4031 = vrot.lane.b32.xlu0 %v4000, 32
        %v4032 = vpop.permute.xlu0 %4031
        %v4035 = vsel %vm609, %v3345, %v3410
        %v4038 = vsel %vm609, %v3346, %v3412
        %v4041 = vsel %vm609, %v3347, %v3414
        %v4044 = vsel %vm609, %v3348, %v3416
        %v4047 = vsel %vm609, %v3349, %v3418
        %v4050 = vsel %vm609, %v3350, %v3420
        %v4053 = vsel %vm609, %v3351, %v3422
        %v4056 = vsel %vm609, %v3352, %v3424
        %v4059 = vsel %vm609, %v3353, %v3426
        %v4062 = vsel %vm609, %v3354, %v3428
        %v4065 = vsel %vm609, %v3355, %v3430
        %v4068 = vsel %vm609, %v3356, %v3432
        %v4071 = vsel %vm609, %v3357, %v3434
        %v4074 = vsel %vm609, %v3358, %v3436
        %v4077 = vsel %vm609, %v3359, %v3438
        %v4080 = vsel %vm609, %v3360, %v3440
        %vm4081 = vcmask 64512
        %v4083 = vsel %vm4081, %v4035, %v3490
        %v4085 = vsel %vm4081, %v4038, %v3492
        %v4087 = vsel %vm4081, %v4041, %v3494
        %v4089 = vsel %vm4081, %v4044, %v3496
        %v4091 = vsel %vm4081, %v4047, %v3498
        %v4093 = vsel %vm4081, %v4050, %v3500
        %v4095 = vsel %vm4081, %v4053, %v3502
        %v4097 = vsel %vm4081, %v4056, %v3504
        %v4099 = vsel %vm4081, %v4059, %v3506
        %v4101 = vsel %vm4081, %v4062, %v3508
        %v4103 = vsel %vm4081, %v4065, %v3510
        %v4105 = vsel %vm4081, %v4068, %v3512
        %v4107 = vsel %vm4081, %v4071, %v3514
        %v4109 = vsel %vm4081, %v4074, %v3516
        %v4111 = vsel %vm4081, %v4077, %v3518
        %v4113 = vsel %vm4081, %v4080, %v3520
        %vm4114 = vcmask 97280
        %v4116 = vsel %vm4114, %v4083, %v3586
        %v4118 = vsel %vm4114, %v4085, %v3588
        %v4120 = vsel %vm4114, %v4087, %v3590
        %v4122 = vsel %vm4114, %v4089, %v3592
        %v4124 = vsel %vm4114, %v4091, %v3594
        %v4126 = vsel %vm4114, %v4093, %v3596
        %v4128 = vsel %vm4114, %v4095, %v3598
        %v4130 = vsel %vm4114, %v4097, %v3600
        %v4132 = vsel %vm4114, %v4099, %v3602
        %v4134 = vsel %vm4114, %v4101, %v3604
        %v4136 = vsel %vm4114, %v4103, %v3606
        %v4138 = vsel %vm4114, %v4105, %v3608
        %v4140 = vsel %vm4114, %v4107, %v3610
        %v4142 = vsel %vm4114, %v4109, %v3612
        %v4144 = vsel %vm4114, %v4111, %v3614
        %v4146 = vsel %vm4114, %v4113, %v3616
        %vm4147 = vcmask 130048
        %v4149 = vsel %vm4147, %v4116, %v3666
        %v4151 = vsel %vm4147, %v4118, %v3668
        %v4153 = vsel %vm4147, %v4120, %v3670
        %v4155 = vsel %vm4147, %v4122, %v3672
        %v4157 = vsel %vm4147, %v4124, %v3674
        %v4159 = vsel %vm4147, %v4126, %v3676
        %v4161 = vsel %vm4147, %v4128, %v3678
        %v4163 = vsel %vm4147, %v4130, %v3680
        %v4165 = vsel %vm4147, %v4132, %v3682
        %v4167 = vsel %vm4147, %v4134, %v3684
        %v4169 = vsel %vm4147, %v4136, %v3686
        %v4171 = vsel %vm4147, %v4138, %v3688
        %v4173 = vsel %vm4147, %v4140, %v3690
        %v4175 = vsel %vm4147, %v4142, %v3692
        %v4177 = vsel %vm4147, %v4144, %v3694
        %v4179 = vsel %vm4147, %v4146, %v3696
        %vm4180 = vcmask 162816
        %v4182 = vsel %vm4180, %v4149, %v3746
        %v4184 = vsel %vm4180, %v4151, %v3748
        %v4186 = vsel %vm4180, %v4153, %v3750
        %v4188 = vsel %vm4180, %v4155, %v3752
        %v4190 = vsel %vm4180, %v4157, %v3754
        %v4192 = vsel %vm4180, %v4159, %v3756
        %v4194 = vsel %vm4180, %v4161, %v3758
        %v4196 = vsel %vm4180, %v4163, %v3760
        %v4198 = vsel %vm4180, %v4165, %v3762
        %v4200 = vsel %vm4180, %v4167, %v3764
        %v4202 = vsel %vm4180, %v4169, %v3766
        %v4204 = vsel %vm4180, %v4171, %v3768
        %v4206 = vsel %vm4180, %v4173, %v3770
        %v4208 = vsel %vm4180, %v4175, %v3772
        %v4210 = vsel %vm4180, %v4177, %v3774
        %v4212 = vsel %vm4180, %v4179, %v3776
        %vm4213 = vcmask 195584
        %v4215 = vsel %vm4213, %v4182, %v3842
        %v4217 = vsel %vm4213, %v4184, %v3844
        %v4219 = vsel %vm4213, %v4186, %v3846
        %v4221 = vsel %vm4213, %v4188, %v3848
        %v4223 = vsel %vm4213, %v4190, %v3850
        %v4225 = vsel %vm4213, %v4192, %v3852
        %v4227 = vsel %vm4213, %v4194, %v3854
        %v4229 = vsel %vm4213, %v4196, %v3856
        %v4231 = vsel %vm4213, %v4198, %v3858
        %v4233 = vsel %vm4213, %v4200, %v3860
        %v4235 = vsel %vm4213, %v4202, %v3862
        %v4237 = vsel %vm4213, %v4204, %v3864
        %v4239 = vsel %vm4213, %v4206, %v3866
        %v4241 = vsel %vm4213, %v4208, %v3868
        %v4243 = vsel %vm4213, %v4210, %v3870
        %v4245 = vsel %vm4213, %v4212, %v3872
        %vm4246 = vcmask 228352
        %v4248 = vsel %vm4246, %v4215, %v3922
        %v4250 = vsel %vm4246, %v4217, %v3924
        %v4252 = vsel %vm4246, %v4219, %v3926
        %v4254 = vsel %vm4246, %v4221, %v3928
        %v4256 = vsel %vm4246, %v4223, %v3930
        %v4258 = vsel %vm4246, %v4225, %v3932
        %v4260 = vsel %vm4246, %v4227, %v3934
        %v4262 = vsel %vm4246, %v4229, %v3936
        %v4264 = vsel %vm4246, %v4231, %v3938
        %v4266 = vsel %vm4246, %v4233, %v3940
        %v4268 = vsel %vm4246, %v4235, %v3942
        %v4270 = vsel %vm4246, %v4237, %v3944
        %v4272 = vsel %vm4246, %v4239, %v3946
        %v4274 = vsel %vm4246, %v4241, %v3948
        %v4276 = vsel %vm4246, %v4243, %v3950
        %v4278 = vsel %vm4246, %v4245, %v3952
        %vm4279 = vcmask 261120
        %v4281 = vsel %vm4279, %v4248, %v4002
        %v4283 = vsel %vm4279, %v4250, %v4004
        %v4285 = vsel %vm4279, %v4252, %v4006
        %v4287 = vsel %vm4279, %v4254, %v4008
        %v4289 = vsel %vm4279, %v4256, %v4010
        %v4291 = vsel %vm4279, %v4258, %v4012
        %v4293 = vsel %vm4279, %v4260, %v4014
        %v4295 = vsel %vm4279, %v4262, %v4016
        %v4297 = vsel %vm4279, %v4264, %v4018
        %v4299 = vsel %vm4279, %v4266, %v4020
        %v4301 = vsel %vm4279, %v4268, %v4022
        %v4303 = vsel %vm4279, %v4270, %v4024
        %v4305 = vsel %vm4279, %v4272, %v4026
        %v4307 = vsel %vm4279, %v4274, %v4028
        %v4309 = vsel %vm4279, %v4276, %v4030
        %v4311 = vsel %vm4279, %v4278, %v4032
        %v4312 = vld [vmem:[%s5] sm:$0xf]
        %v4313 = vld [vmem:[%s5 + $0x4] sm:$0xf]
        %v4314 = vld [vmem:[%s5 + $0x8] sm:$0xf]
        %v4315 = vld [vmem:[%s5 + $0xc] sm:$0xf]
        %v4316 = vld [vmem:[%s5 + $0x10] sm:$0x3]
        %v4317 = vld [vmem:[%s6] sm:$0x1]
        %v4319 = vlaneseq
        %v4320 = vshrl.u32 %v4319, 7
        %v4321 = vsub.s32 0, %v4320
        %v4322 = vrot.slane %v4317, %v4321
        %v4329 = vunpack.c.l.b16 %v4312
        %v4330 = vunpack.c.l.b16 %v4313
        %v4331 = vunpack.c.l.b16 %v4314
        %v4332 = vunpack.c.l.b16 %v4315
        %v4333 = vunpack.c.l.b16 %v4316
        %v4334 = vpack.c.b16 %v4330, %v4329
        %v4335 = vpack.c.b16 %v4332, %v4331
        %v4336 = vpack.c.b16 %v4333, %v4333
        %vm4339 = vcmask 293888
        %v4340 = vsel %vm4339, %v4281, 0
        %v4342 = vsel %vm4339, %v4283, 0
        %v4344 = vsel %vm4339, %v4285, 0
        %v4346 = vsel %vm4339, %v4287, 0
        %v4348 = vsel %vm4339, %v4289, 0
        %v4350 = vsel %vm4339, %v4291, 0
        %v4352 = vsel %vm4339, %v4293, 0
        %v4354 = vsel %vm4339, %v4295, 0
        %v4356 = vsel %vm4339, %v4297, 0
        %v4358 = vsel %vm4339, %v4299, 0
        %v4360 = vsel %vm4339, %v4301, 0
        %v4362 = vsel %vm4339, %v4303, 0
        %v4364 = vsel %vm4339, %v4305, 0
        %v4366 = vsel %vm4339, %v4307, 0
        %v4368 = vsel %vm4339, %v4309, 0
        %v4370 = vsel %vm4339, %v4311, 0
        %vm4372 = vcmask 1041408
        %v4374 = vsel %vm4372, %v4336, 0
        %4376 = vmatprep.subr.bf16.mxu0 0
        %4377 = vmatpush1.bf16.msra.mxu0 %v4334
        %4378 = vmatprep.subr.bf16.mxu0 0
        %4379 = vmatpush1.bf16.msra.mxu0 %v4335
        %4380 = vmatprep.subr.bf16.mxu0 0
        %4381 = vmatpush1.bf16.msra.mxu0 %v4374
        %4382 = vmatprep.subr.bf16.mxu0 0
        %4383 = vmatpush1.bf16.msra.mxu0 0
        %4384 = vmatprep.subr.bf16.mxu0 0
        %4385 = vmatpush1.bf16.msra.mxu0 0
        %4386 = vmatprep.subr.bf16.mxu0 0
        %4387 = vmatpush1.bf16.msra.mxu0 0
        %4388 = vmatprep.subr.bf16.mxu0 0
        %4389 = vmatpush1.bf16.msra.mxu0 0
        %4390 = vmatprep.subr.bf16.mxu0 0
        %4391 = vmatpush1.bf16.msra.mxu0 0
        %4392 = vmatprep.subr.bf16.mxu0 0
        %4393 = vmatpush1.bf16.msra.mxu0 0
        %4394 = vmatprep.subr.bf16.mxu0 0
        %4395 = vmatpush1.bf16.msra.mxu0 0
        %4396 = vmatprep.subr.bf16.mxu0 0
        %4397 = vmatpush1.bf16.msra.mxu0 0
        %4398 = vmatprep.subr.bf16.mxu0 0
        %4399 = vmatpush1.bf16.msra.mxu0 0
        %4400 = vmatprep.subr.bf16.mxu0 0
        %4401 = vmatpush1.bf16.msra.mxu0 0
        %4402 = vmatprep.subr.bf16.mxu0 0
        %4403 = vmatpush1.bf16.msra.mxu0 0
        %4404 = vmatprep.subr.bf16.mxu0 0
        %4405 = vmatpush1.bf16.msra.mxu0 0
        %4406 = vmatprep.subr.bf16.mxu0 0
        %4407 = vmatpush1.bf16.msra.mxu0 0
        %4408 = vmatprep.mubr.bf16.mxu0 0
        %4409 = vmatmul.mubr.bf16.gmra.mrb[0].mxu0 %v4340
        %v4410 = vpop.f32.mrb[0].mxu0
        %v4411 = vadd.f32 %v4322, %v4410
        %v4412 = vpop.f32.mrb[0].mxu0
        %v4413 = vpop.f32.mrb[0].mxu0
        %v4414 = vadd.f32 %v4322, %v4413
        %v4415 = vpop.f32.mrb[0].mxu0
        %4416 = vmatprep.mubr.bf16.mxu0 0
        %4417 = vmatmul.mubr.bf16.gmra.mrb[0].mxu0 %v4342
        %v4418 = vpop.f32.mrb[0].mxu0
        %v4419 = vadd.f32 %v4322, %v4418
        %v4420 = vpop.f32.mrb[0].mxu0
        %v4421 = vpop.f32.mrb[0].mxu0
        %v4422 = vadd.f32 %v4322, %v4421
        %v4423 = vpop.f32.mrb[0].mxu0
        %4424 = vmatprep.mubr.bf16.mxu0 0
        %4425 = vmatmul.mubr.bf16.gmra.mrb[0].mxu0 %v4344
        %v4426 = vpop.f32.mrb[0].mxu0
        %v4427 = vadd.f32 %v4322, %v4426
        %v4428 = vpop.f32.mrb[0].mxu0
        %v4429 = vpop.f32.mrb[0].mxu0
        %v4430 = vadd.f32 %v4322, %v4429
        %v4431 = vpop.f32.mrb[0].mxu0
        %4432 = vmatprep.mubr.bf16.mxu0 0
        %4433 = vmatmul.mubr.bf16.gmra.mrb[0].mxu0 %v4346
        %v4434 = vpop.f32.mrb[0].mxu0
        %v4435 = vadd.f32 %v4322, %v4434
        %v4436 = vpop.f32.mrb[0].mxu0
        %v4437 = vpop.f32.mrb[0].mxu0
        %v4438 = vadd.f32 %v4322, %v4437
        %v4439 = vpop.f32.mrb[0].mxu0
        %4440 = vmatprep.mubr.bf16.mxu0 0
        %4441 = vmatmul.mubr.bf16.gmra.mrb[0].mxu0 %v4348
        %v4442 = vpop.f32.mrb[0].mxu0
        %v4443 = vadd.f32 %v4322, %v4442
        %v4444 = vpop.f32.mrb[0].mxu0
        %v4445 = vpop.f32.mrb[0].mxu0
        %v4446 = vadd.f32 %v4322, %v4445
        %v4447 = vpop.f32.mrb[0].mxu0
        %4448 = vmatprep.mubr.bf16.mxu0 0
        %4449 = vmatmul.mubr.bf16.gmra.mrb[0].mxu0 %v4350
        %v4450 = vpop.f32.mrb[0].mxu0
        %v4451 = vadd.f32 %v4322, %v4450
        %v4452 = vpop.f32.mrb[0].mxu0
        %v4453 = vpop.f32.mrb[0].mxu0
        %v4454 = vadd.f32 %v4322, %v4453
        %v4455 = vpop.f32.mrb[0].mxu0
        %4456 = vmatprep.mubr.bf16.mxu0 0
        %4457 = vmatmul.mubr.bf16.gmra.mrb[0].mxu0 %v4352
        %v4458 = vpop.f32.mrb[0].mxu0
        %v4459 = vadd.f32 %v4322, %v4458
        %v4460 = vpop.f32.mrb[0].mxu0
        %v4461 = vpop.f32.mrb[0].mxu0
        %v4462 = vadd.f32 %v4322, %v4461
        %v4463 = vpop.f32.mrb[0].mxu0
        %4464 = vmatprep.mubr.bf16.mxu0 0
        %4465 = vmatmul.mubr.bf16.gmra.mrb[0].mxu0 %v4354
        %v4466 = vpop.f32.mrb[0].mxu0
        %v4467 = vadd.f32 %v4322, %v4466
        %v4468 = vpop.f32.mrb[0].mxu0
        %v4469 = vpop.f32.mrb[0].mxu0
        %v4470 = vadd.f32 %v4322, %v4469
        %v4471 = vpop.f32.mrb[0].mxu0
        %4472 = vmatprep.mubr.bf16.mxu0 0
        %4473 = vmatmul.mubr.bf16.gmra.mrb[0].mxu0 %v4356
        %v4474 = vpop.f32.mrb[0].mxu0
        %v4475 = vadd.f32 %v4322, %v4474
        %v4476 = vpop.f32.mrb[0].mxu0
        %v4477 = vpop.f32.mrb[0].mxu0
        %v4478 = vadd.f32 %v4322, %v4477
        %v4479 = vpop.f32.mrb[0].mxu0
        %4480 = vmatprep.mubr.bf16.mxu0 0
        %4481 = vmatmul.mubr.bf16.gmra.mrb[0].mxu0 %v4358
        %v4482 = vpop.f32.mrb[0].mxu0
        %v4483 = vadd.f32 %v4322, %v4482
        %v4484 = vpop.f32.mrb[0].mxu0
        %v4485 = vpop.f32.mrb[0].mxu0
        %v4486 = vadd.f32 %v4322, %v4485
        %v4487 = vpop.f32.mrb[0].mxu0
        %4488 = vmatprep.mubr.bf16.mxu0 0
        %4489 = vmatmul.mubr.bf16.gmra.mrb[0].mxu0 %v4360
        %v4490 = vpop.f32.mrb[0].mxu0
        %v4491 = vadd.f32 %v4322, %v4490
        %v4492 = vpop.f32.mrb[0].mxu0
        %v4493 = vpop.f32.mrb[0].mxu0
        %v4494 = vadd.f32 %v4322, %v4493
        %v4495 = vpop.f32.mrb[0].mxu0
        %4496 = vmatprep.mubr.bf16.mxu0 0
        %4497 = vmatmul.mubr.bf16.gmra.mrb[0].mxu0 %v4362
        %v4498 = vpop.f32.mrb[0].mxu0
        %v4499 = vadd.f32 %v4322, %v4498
        %v4500 = vpop.f32.mrb[0].mxu0
        %v4501 = vpop.f32.mrb[0].mxu0
        %v4502 = vadd.f32 %v4322, %v4501
        %v4503 = vpop.f32.mrb[0].mxu0
        %4504 = vmatprep.mubr.bf16.mxu0 0
        %4505 = vmatmul.mubr.bf16.gmra.mrb[0].mxu0 %v4364
        %v4506 = vpop.f32.mrb[0].mxu0
        %v4507 = vadd.f32 %v4322, %v4506
        %v4508 = vpop.f32.mrb[0].mxu0
        %v4509 = vpop.f32.mrb[0].mxu0
        %v4510 = vadd.f32 %v4322, %v4509
        %v4511 = vpop.f32.mrb[0].mxu0
        %4512 = vmatprep.mubr.bf16.mxu0 0
        %4513 = vmatmul.mubr.bf16.gmra.mrb[0].mxu0 %v4366
        %v4514 = vpop.f32.mrb[0].mxu0
        %v4515 = vadd.f32 %v4322, %v4514
        %v4516 = vpop.f32.mrb[0].mxu0
        %v4517 = vpop.f32.mrb[0].mxu0
        %v4518 = vadd.f32 %v4322, %v4517
        %v4519 = vpop.f32.mrb[0].mxu0
        %4520 = vmatprep.mubr.bf16.mxu0 0
        %4521 = vmatmul.mubr.bf16.gmra.mrb[0].mxu0 %v4368
        %v4522 = vpop.f32.mrb[0].mxu0
        %v4523 = vadd.f32 %v4322, %v4522
        %v4524 = vpop.f32.mrb[0].mxu0
        %v4525 = vpop.f32.mrb[0].mxu0
        %v4526 = vadd.f32 %v4322, %v4525
        %v4527 = vpop.f32.mrb[0].mxu0
        %4528 = vmatprep.mubr.bf16.mxu0 0
        %4529 = vmatmul.mubr.bf16.gmra.mrb[0].mxu0 %v4370
        %v4530 = vpop.f32.mrb[0].mxu0
        %v4531 = vadd.f32 %v4322, %v4530
        %v4532 = vpop.f32.mrb[0].mxu0
        %v4533 = vpop.f32.mrb[0].mxu0
        %v4534 = vadd.f32 %v4322, %v4533
        %v4535 = vpop.f32.mrb[0].mxu0
        %4536 = vdwg.mxu0
        %v4537 = vld [vmem:[%s463] sm:$0x1]
        %v4539 = vlaneseq
        %v4540 = vshrl.u32 %v4539, 7
        %v4541 = vsub.s32 0, %v4540
        %v4542 = vrot.slane %v4537, %v4541
        %v4544 = vadd.f32 %v4411, %v4542
        %v4545 = vadd.f32 %v4414, %v4542
        %v4546 = vadd.f32 %v4419, %v4542
        %v4547 = vadd.f32 %v4422, %v4542
        %v4548 = vadd.f32 %v4427, %v4542
        %v4549 = vadd.f32 %v4430, %v4542
        %v4550 = vadd.f32 %v4435, %v4542
        %v4551 = vadd.f32 %v4438, %v4542
        %v4552 = vadd.f32 %v4443, %v4542
        %v4553 = vadd.f32 %v4446, %v4542
        %v4554 = vadd.f32 %v4451, %v4542
        %v4555 = vadd.f32 %v4454, %v4542
        %v4556 = vadd.f32 %v4459, %v4542
        %v4557 = vadd.f32 %v4462, %v4542
        %v4558 = vadd.f32 %v4467, %v4542
        %v4559 = vadd.f32 %v4470, %v4542
        %v4560 = vadd.f32 %v4475, %v4542
        %v4561 = vadd.f32 %v4478, %v4542
        %v4562 = vadd.f32 %v4483, %v4542
        %v4563 = vadd.f32 %v4486, %v4542
        %v4564 = vadd.f32 %v4491, %v4542
        %v4565 = vadd.f32 %v4494, %v4542
        %v4566 = vadd.f32 %v4499, %v4542
        %v4567 = vadd.f32 %v4502, %v4542
        %v4568 = vadd.f32 %v4507, %v4542
        %v4569 = vadd.f32 %v4510, %v4542
        %v4570 = vadd.f32 %v4515, %v4542
        %v4571 = vadd.f32 %v4518, %v4542
        %v4572 = vadd.f32 %v4523, %v4542
        %v4573 = vadd.f32 %v4526, %v4542
        %v4574 = vadd.f32 %v4531, %v4542
        %v4575 = vadd.f32 %v4534, %v4542
        %v4576 = vsel %vm4279, %v4544, 0.0
        %v4577 = vsel %vm4279, %v4545, 0.0
        %v4578 = vadd.f32 %v4576, %v4577
        %v4579 = vsel %vm4279, %v4546, 0.0
        %v4580 = vadd.f32 %v4578, %v4579
        %v4581 = vsel %vm4279, %v4547, 0.0
        %v4582 = vadd.f32 %v4580, %v4581
        %v4583 = vsel %vm4279, %v4548, 0.0
        %v4584 = vadd.f32 %v4582, %v4583
        %v4585 = vsel %vm4279, %v4549, 0.0
        %v4586 = vadd.f32 %v4584, %v4585
        %v4587 = vsel %vm4279, %v4550, 0.0
        %v4588 = vadd.f32 %v4586, %v4587
        %v4589 = vsel %vm4279, %v4551, 0.0
        %v4590 = vadd.f32 %v4588, %v4589
        %v4591 = vsel %vm4279, %v4552, 0.0
        %v4592 = vadd.f32 %v4590, %v4591
        %v4593 = vsel %vm4279, %v4553, 0.0
        %v4594 = vadd.f32 %v4592, %v4593
        %v4595 = vsel %vm4279, %v4554, 0.0
        %v4596 = vadd.f32 %v4594, %v4595
        %v4597 = vsel %vm4279, %v4555, 0.0
        %v4598 = vadd.f32 %v4596, %v4597
        %v4599 = vsel %vm4279, %v4556, 0.0
        %v4600 = vadd.f32 %v4598, %v4599
        %v4601 = vsel %vm4279, %v4557, 0.0
        %v4602 = vadd.f32 %v4600, %v4601
        %v4603 = vsel %vm4279, %v4558, 0.0
        %v4604 = vadd.f32 %v4602, %v4603
        %v4605 = vsel %vm4279, %v4559, 0.0
        %v4606 = vadd.f32 %v4604, %v4605
        %v4607 = vsel %vm4279, %v4560, 0.0
        %v4608 = vadd.f32 %v4606, %v4607
        %v4609 = vsel %vm4279, %v4561, 0.0
        %v4610 = vadd.f32 %v4608, %v4609
        %v4611 = vsel %vm4279, %v4562, 0.0
        %v4612 = vadd.f32 %v4610, %v4611
        %v4613 = vsel %vm4279, %v4563, 0.0
        %v4614 = vadd.f32 %v4612, %v4613
        %v4615 = vsel %vm4279, %v4564, 0.0
        %v4616 = vadd.f32 %v4614, %v4615
        %v4617 = vsel %vm4279, %v4565, 0.0
        %v4618 = vadd.f32 %v4616, %v4617
        %v4619 = vsel %vm4279, %v4566, 0.0
        %v4620 = vadd.f32 %v4618, %v4619
        %v4621 = vsel %vm4279, %v4567, 0.0
        %v4622 = vadd.f32 %v4620, %v4621
        %v4623 = vsel %vm4279, %v4568, 0.0
        %v4624 = vadd.f32 %v4622, %v4623
        %v4625 = vsel %vm4279, %v4569, 0.0
        %v4626 = vadd.f32 %v4624, %v4625
        %v4627 = vsel %vm4279, %v4570, 0.0
        %v4628 = vadd.f32 %v4626, %v4627
        %v4629 = vsel %vm4279, %v4571, 0.0
        %v4630 = vadd.f32 %v4628, %v4629
        %v4631 = vsel %vm4279, %v4572, 0.0
        %v4632 = vadd.f32 %v4630, %v4631
        %v4633 = vsel %vm4279, %v4573, 0.0
        %v4634 = vadd.f32 %v4632, %v4633
        %v4635 = vsel %vm4279, %v4574, 0.0
        %v4636 = vadd.f32 %v4634, %v4635
        %v4637 = vsel %vm4279, %v4575, 0.0
        %v4638 = vadd.f32 %v4636, %v4637
        %v4639 = vrot.slane %v4638, 4
        %v4640 = vadd.f32 %v4638, %v4639
        %v4641 = vrot.slane %v4640, 2
        %v4642 = vadd.f32 %v4640, %v4641
        %v4643 = vrot.slane %v4642, 1
        %v4644 = vadd.f32 %v4642, %v4643
        %v4645 = vmul.f32 %v4544, %v4544
        %v4646 = vmul.f32 %v4545, %v4545
        %v4647 = vmul.f32 %v4546, %v4546
        %v4648 = vmul.f32 %v4547, %v4547
        %v4649 = vmul.f32 %v4548, %v4548
        %v4650 = vmul.f32 %v4549, %v4549
        %v4651 = vmul.f32 %v4550, %v4550
        %v4652 = vmul.f32 %v4551, %v4551
        %v4653 = vmul.f32 %v4552, %v4552
        %v4654 = vmul.f32 %v4553, %v4553
        %v4655 = vmul.f32 %v4554, %v4554
        %v4656 = vmul.f32 %v4555, %v4555
        %v4657 = vmul.f32 %v4556, %v4556
        %v4658 = vmul.f32 %v4557, %v4557
        %v4659 = vmul.f32 %v4558, %v4558
        %v4660 = vmul.f32 %v4559, %v4559
        %v4661 = vmul.f32 %v4560, %v4560
        %v4662 = vmul.f32 %v4561, %v4561
        %v4663 = vmul.f32 %v4562, %v4562
        %v4664 = vmul.f32 %v4563, %v4563
        %v4665 = vmul.f32 %v4564, %v4564
        %v4666 = vmul.f32 %v4565, %v4565
        %v4667 = vmul.f32 %v4566, %v4566
        %v4668 = vmul.f32 %v4567, %v4567
        %v4669 = vmul.f32 %v4568, %v4568
        %v4670 = vmul.f32 %v4569, %v4569
        %v4671 = vmul.f32 %v4570, %v4570
        %v4672 = vmul.f32 %v4571, %v4571
        %v4673 = vmul.f32 %v4572, %v4572
        %v4674 = vmul.f32 %v4573, %v4573
        %v4675 = vmul.f32 %v4574, %v4574
        %v4676 = vmul.f32 %v4575, %v4575
        %v4677 = vsel %vm4279, %v4645, 0.0
        %v4678 = vsel %vm4279, %v4646, 0.0
        %v4679 = vadd.f32 %v4677, %v4678
        %v4680 = vsel %vm4279, %v4647, 0.0
        %v4681 = vadd.f32 %v4679, %v4680
        %v4682 = vsel %vm4279, %v4648, 0.0
        %v4683 = vadd.f32 %v4681, %v4682
        %v4684 = vsel %vm4279, %v4649, 0.0
        %v4685 = vadd.f32 %v4683, %v4684
        %v4686 = vsel %vm4279, %v4650, 0.0
        %v4687 = vadd.f32 %v4685, %v4686
        %v4688 = vsel %vm4279, %v4651, 0.0
        %v4689 = vadd.f32 %v4687, %v4688
        %v4690 = vsel %vm4279, %v4652, 0.0
        %v4691 = vadd.f32 %v4689, %v4690
        %v4692 = vsel %vm4279, %v4653, 0.0
        %v4693 = vadd.f32 %v4691, %v4692
        %v4694 = vsel %vm4279, %v4654, 0.0
        %v4695 = vadd.f32 %v4693, %v4694
        %v4696 = vsel %vm4279, %v4655, 0.0
        %v4697 = vadd.f32 %v4695, %v4696
        %v4698 = vsel %vm4279, %v4656, 0.0
        %v4699 = vadd.f32 %v4697, %v4698
        %v4700 = vsel %vm4279, %v4657, 0.0
        %v4701 = vadd.f32 %v4699, %v4700
        %v4702 = vsel %vm4279, %v4658, 0.0
        %v4703 = vadd.f32 %v4701, %v4702
        %v4704 = vsel %vm4279, %v4659, 0.0
        %v4705 = vadd.f32 %v4703, %v4704
        %v4706 = vsel %vm4279, %v4660, 0.0
        %v4707 = vadd.f32 %v4705, %v4706
        %v4708 = vsel %vm4279, %v4661, 0.0
        %v4709 = vadd.f32 %v4707, %v4708
        %v4710 = vsel %vm4279, %v4662, 0.0
        %v4711 = vadd.f32 %v4709, %v4710
        %v4712 = vsel %vm4279, %v4663, 0.0
        %v4713 = vadd.f32 %v4711, %v4712
        %v4714 = vsel %vm4279, %v4664, 0.0
        %v4715 = vadd.f32 %v4713, %v4714
        %v4716 = vsel %vm4279, %v4665, 0.0
        %v4717 = vadd.f32 %v4715, %v4716
        %v4718 = vsel %vm4279, %v4666, 0.0
        %v4719 = vadd.f32 %v4717, %v4718
        %v4720 = vsel %vm4279, %v4667, 0.0
        %v4721 = vadd.f32 %v4719, %v4720
        %v4722 = vsel %vm4279, %v4668, 0.0
        %v4723 = vadd.f32 %v4721, %v4722
        %v4724 = vsel %vm4279, %v4669, 0.0
        %v4725 = vadd.f32 %v4723, %v4724
        %v4726 = vsel %vm4279, %v4670, 0.0
        %v4727 = vadd.f32 %v4725, %v4726
        %v4728 = vsel %vm4279, %v4671, 0.0
        %v4729 = vadd.f32 %v4727, %v4728
        %v4730 = vsel %vm4279, %v4672, 0.0
        %v4731 = vadd.f32 %v4729, %v4730
        %v4732 = vsel %vm4279, %v4673, 0.0
        %v4733 = vadd.f32 %v4731, %v4732
        %v4734 = vsel %vm4279, %v4674, 0.0
        %v4735 = vadd.f32 %v4733, %v4734
        %v4736 = vsel %vm4279, %v4675, 0.0
        %v4737 = vadd.f32 %v4735, %v4736
        %v4738 = vsel %vm4279, %v4676, 0.0
        %v4739 = vadd.f32 %v4737, %v4738
        %v4740 = vrot.slane %v4739, 4
        %v4741 = vadd.f32 %v4739, %v4740
        %v4742 = vrot.slane %v4741, 2
        %v4743 = vadd.f32 %v4741, %v4742
        %v4744 = vrot.slane %v4743, 1
        %v4745 = vadd.f32 %v4743, %v4744
        %vm4746 = vcmask 1040384
        %v4747 = vsel %vm4746, %v4644, %v4745
        %v4748 = vld [vmem:[%s7] sm:$0xff]
        %v4749 = vld [vmem:[%s7 + $0x8] sm:$0xff]
        %v4750 = vld [vmem:[%s7 + $0x10] sm:$0xff]
        %v4751 = vld [vmem:[%s7 + $0x18] sm:$0xff]
        %v4753 = vsel %vm4279, %v4747, 0
        %4755 = vmatprep.subr.mxu0 0.0
        %4756 = vmatpush1.msra.mxu0 %v4748
        %4757 = vmatprep.subr.mxu0 0.0
        %4758 = vmatpush1.msra.mxu0 %v4749
        %4759 = vmatprep.subr.mxu0 0.0
        %4760 = vmatpush1.msra.mxu0 %v4750
        %4761 = vmatprep.subr.mxu0 0.0
        %4762 = vmatpush1.msra.mxu0 %v4751
        %4763 = vmatprep.subr.mxu0 0.0
        %4764 = vmatpush1.msra.mxu0 0.0
        %4765 = vmatprep.subr.mxu0 0.0
        %4766 = vmatpush1.msra.mxu0 0.0
        %4767 = vmatprep.subr.mxu0 0.0
        %4768 = vmatpush1.msra.mxu0 0.0
        %4769 = vmatprep.subr.mxu0 0.0
        %4770 = vmatpush1.msra.mxu0 0.0
        %4771 = vmatprep.subr.mxu0 0.0
        %4772 = vmatpush1.msra.mxu0 0.0
        %4773 = vmatprep.subr.mxu0 0.0
        %4774 = vmatpush1.msra.mxu0 0.0
        %4775 = vmatprep.subr.mxu0 0.0
        %4776 = vmatpush1.msra.mxu0 0.0
        %4777 = vmatprep.subr.mxu0 0.0
        %4778 = vmatpush1.msra.mxu0 0.0
        %4779 = vmatprep.subr.mxu0 0.0
        %4780 = vmatpush1.msra.mxu0 0.0
        %4781 = vmatprep.subr.mxu0 0.0
        %4782 = vmatpush1.msra.mxu0 0.0
        %4783 = vmatprep.subr.mxu0 0.0
        %4784 = vmatpush1.msra.mxu0 0.0
        %4785 = vmatprep.subr.mxu0 0.0
        %4786 = vmatpush1.msra.mxu0 0.0
        %4787 = vmatprep.subr.mxu0 0.0
        %4788 = vmatpush1.msra.mxu0 0.0
        %4789 = vmatprep.subr.mxu0 0.0
        %4790 = vmatpush1.msra.mxu0 0.0
        %4791 = vmatprep.subr.mxu0 0.0
        %4792 = vmatpush1.msra.mxu0 0.0
        %4793 = vmatprep.subr.mxu0 0.0
        %4794 = vmatpush1.msra.mxu0 0.0
        %4795 = vmatprep.subr.mxu0 0.0
        %4796 = vmatpush1.msra.mxu0 0.0
        %4797 = vmatprep.subr.mxu0 0.0
        %4798 = vmatpush1.msra.mxu0 0.0
        %4799 = vmatprep.subr.mxu0 0.0
        %4800 = vmatpush1.msra.mxu0 0.0
        %4801 = vmatprep.subr.mxu0 0.0
        %4802 = vmatpush1.msra.mxu0 0.0
        %4803 = vmatprep.subr.mxu0 0.0
        %4804 = vmatpush1.msra.mxu0 0.0
        %4805 = vmatprep.subr.mxu0 0.0
        %4806 = vmatpush1.msra.mxu0 0.0
        %4807 = vmatprep.subr.mxu0 0.0
        %4808 = vmatpush1.msra.mxu0 0.0
        %4809 = vmatprep.subr.mxu0 0.0
        %4810 = vmatpush1.msra.mxu0 0.0
        %4811 = vmatprep.subr.mxu0 0.0
        %4812 = vmatpush1.msra.mxu0 0.0
        %4813 = vmatprep.subr.mxu0 0.0
        %4814 = vmatpush1.msra.mxu0 0.0
        %4815 = vmatprep.subr.mxu0 0.0
        %4816 = vmatpush1.msra.mxu0 0.0
        %4817 = vmatprep.subr.mxu0 0.0
        %4818 = vmatpush1.msra.mxu0 0.0
        %4819 = vmatprep.mubr.f32.mxu0 0.0
        %4820 = vmatmul.mubr.f32.gmra.mrb[0].mxu0 %v4753
        %v4821 = vpop.f32.mrb[0].mxu0
        %v4822 = vadd.f32 0.0, %v4821
        %v4823 = vpop.f32.mrb[0].mxu0
        %4824 = vdwg.mxu0
        %v4825 = vmul.f32 %v4822, 0.001953125
        %v4826 = vmul.f32 %v4825, %v4825
        %v4828 = vrot.slane %v4826, 7
        %v4830 = vsub.f32 %v4825, %v4828
        %v4831 = vmax.f32 %v4830, 0.0
        %v4832 = vadd.f32 %v4831, 1e-05
        %v4833 = vrsqrt.pop %v4832
        %v4834 = vlaneseq
        %v4835 = vshrl.u32 %v4834, 7
        %v4836 = vsub.s32 0, %v4835
        %v4837 = vrot.slane %v4825, %v4836
        %v4838 = vsub.f32 %v4544, %v4837
        %v4839 = vsub.f32 %v4545, %v4837
        %v4840 = vsub.f32 %v4546, %v4837
        %v4841 = vsub.f32 %v4547, %v4837
        %v4842 = vsub.f32 %v4548, %v4837
        %v4843 = vsub.f32 %v4549, %v4837
        %v4844 = vsub.f32 %v4550, %v4837
        %v4845 = vsub.f32 %v4551, %v4837
        %v4846 = vsub.f32 %v4552, %v4837
        %v4847 = vsub.f32 %v4553, %v4837
        %v4848 = vsub.f32 %v4554, %v4837
        %v4849 = vsub.f32 %v4555, %v4837
        %v4850 = vsub.f32 %v4556, %v4837
        %v4851 = vsub.f32 %v4557, %v4837
        %v4852 = vsub.f32 %v4558, %v4837
        %v4853 = vsub.f32 %v4559, %v4837
        %v4854 = vsub.f32 %v4560, %v4837
        %v4855 = vsub.f32 %v4561, %v4837
        %v4856 = vsub.f32 %v4562, %v4837
        %v4857 = vsub.f32 %v4563, %v4837
        %v4858 = vsub.f32 %v4564, %v4837
        %v4859 = vsub.f32 %v4565, %v4837
        %v4860 = vsub.f32 %v4566, %v4837
        %v4861 = vsub.f32 %v4567, %v4837
        %v4862 = vsub.f32 %v4568, %v4837
        %v4863 = vsub.f32 %v4569, %v4837
        %v4864 = vsub.f32 %v4570, %v4837
        %v4865 = vsub.f32 %v4571, %v4837
        %v4866 = vsub.f32 %v4572, %v4837
        %v4867 = vsub.f32 %v4573, %v4837
        %v4868 = vsub.f32 %v4574, %v4837
        %v4869 = vsub.f32 %v4575, %v4837
        %v4870 = vlaneseq
        %v4871 = vshrl.u32 %v4870, 7
        %v4872 = vsub.s32 1, %v4871
        %v4873 = vrot.slane %v4833, %v4872
        %v4874 = vmul.f32 %v4838, %v4873
        %v4875 = vmul.f32 %v4839, %v4873
        %v4876 = vmul.f32 %v4840, %v4873
        %v4877 = vmul.f32 %v4841, %v4873
        %v4878 = vmul.f32 %v4842, %v4873
        %v4879 = vmul.f32 %v4843, %v4873
        %v4880 = vmul.f32 %v4844, %v4873
        %v4881 = vmul.f32 %v4845, %v4873
        %v4882 = vmul.f32 %v4846, %v4873
        %v4883 = vmul.f32 %v4847, %v4873
        %v4884 = vmul.f32 %v4848, %v4873
        %v4885 = vmul.f32 %v4849, %v4873
        %v4886 = vmul.f32 %v4850, %v4873
        %v4887 = vmul.f32 %v4851, %v4873
        %v4888 = vmul.f32 %v4852, %v4873
        %v4889 = vmul.f32 %v4853, %v4873
        %v4890 = vmul.f32 %v4854, %v4873
        %v4891 = vmul.f32 %v4855, %v4873
        %v4892 = vmul.f32 %v4856, %v4873
        %v4893 = vmul.f32 %v4857, %v4873
        %v4894 = vmul.f32 %v4858, %v4873
        %v4895 = vmul.f32 %v4859, %v4873
        %v4896 = vmul.f32 %v4860, %v4873
        %v4897 = vmul.f32 %v4861, %v4873
        %v4898 = vmul.f32 %v4862, %v4873
        %v4899 = vmul.f32 %v4863, %v4873
        %v4900 = vmul.f32 %v4864, %v4873
        %v4901 = vmul.f32 %v4865, %v4873
        %v4902 = vmul.f32 %v4866, %v4873
        %v4903 = vmul.f32 %v4867, %v4873
        %v4904 = vmul.f32 %v4868, %v4873
        %v4905 = vmul.f32 %v4869, %v4873
        %v4906 = vld [vmem:[%s8] sm:$0x1]
        %v4908 = vlaneseq
        %v4909 = vshrl.u32 %v4908, 7
        %v4910 = vsub.s32 0, %v4909
        %v4911 = vrot.slane %v4906, %v4910
        %v4913 = vmul.f32 %v4874, %v4911
        %v4914 = vmul.f32 %v4875, %v4911
        %v4915 = vmul.f32 %v4876, %v4911
        %v4916 = vmul.f32 %v4877, %v4911
        %v4917 = vmul.f32 %v4878, %v4911
        %v4918 = vmul.f32 %v4879, %v4911
        %v4919 = vmul.f32 %v4880, %v4911
        %v4920 = vmul.f32 %v4881, %v4911
        %v4921 = vmul.f32 %v4882, %v4911
        %v4922 = vmul.f32 %v4883, %v4911
        %v4923 = vmul.f32 %v4884, %v4911
        %v4924 = vmul.f32 %v4885, %v4911
        %v4925 = vmul.f32 %v4886, %v4911
        %v4926 = vmul.f32 %v4887, %v4911
        %v4927 = vmul.f32 %v4888, %v4911
        %v4928 = vmul.f32 %v4889, %v4911
        %v4929 = vmul.f32 %v4890, %v4911
        %v4930 = vmul.f32 %v4891, %v4911
        %v4931 = vmul.f32 %v4892, %v4911
        %v4932 = vmul.f32 %v4893, %v4911
        %v4933 = vmul.f32 %v4894, %v4911
        %v4934 = vmul.f32 %v4895, %v4911
        %v4935 = vmul.f32 %v4896, %v4911
        %v4936 = vmul.f32 %v4897, %v4911
        %v4937 = vmul.f32 %v4898, %v4911
        %v4938 = vmul.f32 %v4899, %v4911
        %v4939 = vmul.f32 %v4900, %v4911
        %v4940 = vmul.f32 %v4901, %v4911
        %v4941 = vmul.f32 %v4902, %v4911
        %v4942 = vmul.f32 %v4903, %v4911
        %v4943 = vmul.f32 %v4904, %v4911
        %v4944 = vmul.f32 %v4905, %v4911
        %v4945 = vld [vmem:[%s9] sm:$0x1]
        %v4947 = vlaneseq
        %v4948 = vshrl.u32 %v4947, 7
        %v4949 = vsub.s32 0, %v4948
        %v4950 = vrot.slane %v4945, %v4949
        %v4952 = vadd.f32 %v4913, %v4950
        %v4953 = vadd.f32 %v4914, %v4950
        %v4954 = vadd.f32 %v4915, %v4950
        %v4955 = vadd.f32 %v4916, %v4950
        %v4956 = vadd.f32 %v4917, %v4950
        %v4957 = vadd.f32 %v4918, %v4950
        %v4958 = vadd.f32 %v4919, %v4950
        %v4959 = vadd.f32 %v4920, %v4950
        %v4960 = vadd.f32 %v4921, %v4950
        %v4961 = vadd.f32 %v4922, %v4950
        %v4962 = vadd.f32 %v4923, %v4950
        %v4963 = vadd.f32 %v4924, %v4950
        %v4964 = vadd.f32 %v4925, %v4950
        %v4965 = vadd.f32 %v4926, %v4950
        %v4966 = vadd.f32 %v4927, %v4950
        %v4967 = vadd.f32 %v4928, %v4950
        %v4968 = vadd.f32 %v4929, %v4950
        %v4969 = vadd.f32 %v4930, %v4950
        %v4970 = vadd.f32 %v4931, %v4950
        %v4971 = vadd.f32 %v4932, %v4950
        %v4972 = vadd.f32 %v4933, %v4950
        %v4973 = vadd.f32 %v4934, %v4950
        %v4974 = vadd.f32 %v4935, %v4950
        %v4975 = vadd.f32 %v4936, %v4950
        %v4976 = vadd.f32 %v4937, %v4950
        %v4977 = vadd.f32 %v4938, %v4950
        %v4978 = vadd.f32 %v4939, %v4950
        %v4979 = vadd.f32 %v4940, %v4950
        %v4980 = vadd.f32 %v4941, %v4950
        %v4981 = vadd.f32 %v4942, %v4950
        %v4982 = vadd.f32 %v4943, %v4950
        %v4983 = vadd.f32 %v4944, %v4950
        %v4984 = vpack.c.bf16 %v4953, %v4952
        %v4985 = vpack.c.bf16 %v4955, %v4954
        %v4986 = vpack.c.bf16 %v4957, %v4956
        %v4987 = vpack.c.bf16 %v4959, %v4958
        %v4988 = vpack.c.bf16 %v4961, %v4960
        %v4989 = vpack.c.bf16 %v4963, %v4962
        %v4990 = vpack.c.bf16 %v4965, %v4964
        %v4991 = vpack.c.bf16 %v4967, %v4966
        %v4992 = vpack.c.bf16 %v4969, %v4968
        %v4993 = vpack.c.bf16 %v4971, %v4970
        %v4994 = vpack.c.bf16 %v4973, %v4972
        %v4995 = vpack.c.bf16 %v4975, %v4974
        %v4996 = vpack.c.bf16 %v4977, %v4976
        %v4997 = vpack.c.bf16 %v4979, %v4978
        %v4998 = vpack.c.bf16 %v4981, %v4980
        %v4999 = vpack.c.bf16 %v4983, %v4982
        %v5016 = vunpack.c.l.b16 %v4984
        %v5017 = vunpack.c.h.b16 %v4984
        %v5018 = vunpack.c.l.b16 %v4985
        %v5019 = vunpack.c.h.b16 %v4985
        %v5020 = vunpack.c.l.b16 %v4986
        %v5021 = vunpack.c.h.b16 %v4986
        %v5022 = vunpack.c.l.b16 %v4987
        %v5023 = vunpack.c.h.b16 %v4987
        %v5024 = vunpack.c.l.b16 %v4988
        %v5025 = vunpack.c.h.b16 %v4988
        %v5026 = vunpack.c.l.b16 %v4989
        %v5027 = vunpack.c.h.b16 %v4989
        %v5028 = vunpack.c.l.b16 %v4990
        %v5029 = vunpack.c.h.b16 %v4990
        %v5030 = vunpack.c.l.b16 %v4991
        %v5031 = vunpack.c.h.b16 %v4991
        %v5032 = vunpack.c.l.b16 %v4992
        %v5033 = vunpack.c.h.b16 %v4992
        %v5034 = vunpack.c.l.b16 %v4993
        %v5035 = vunpack.c.h.b16 %v4993
        %v5036 = vunpack.c.l.b16 %v4994
        %v5037 = vunpack.c.h.b16 %v4994
        %v5038 = vunpack.c.l.b16 %v4995
        %v5039 = vunpack.c.h.b16 %v4995
        %v5040 = vunpack.c.l.b16 %v4996
        %v5041 = vunpack.c.h.b16 %v4996
        %v5042 = vunpack.c.l.b16 %v4997
        %v5043 = vunpack.c.h.b16 %v4997
        %v5044 = vunpack.c.l.b16 %v4998
        %v5045 = vunpack.c.h.b16 %v4998
        %v5046 = vunpack.c.l.b16 %v4999
        %v5047 = vunpack.c.h.b16 %v4999
        %v5048 = vpack.c.b16 %v5016, %v5016
        %v5049 = vpack.c.b16 %v5017, %v5017
        %v5050 = vpack.c.b16 %v5018, %v5018
        %v5051 = vpack.c.b16 %v5019, %v5019
        %v5052 = vpack.c.b16 %v5020, %v5020
        %v5053 = vpack.c.b16 %v5021, %v5021
        %v5054 = vpack.c.b16 %v5022, %v5022
        %v5055 = vpack.c.b16 %v5023, %v5023
        %v5056 = vpack.c.b16 %v5024, %v5024
        %v5057 = vpack.c.b16 %v5025, %v5025
        %v5058 = vpack.c.b16 %v5026, %v5026
        %v5059 = vpack.c.b16 %v5027, %v5027
        %v5060 = vpack.c.b16 %v5028, %v5028
        %v5061 = vpack.c.b16 %v5029, %v5029
        %v5062 = vpack.c.b16 %v5030, %v5030
        %v5063 = vpack.c.b16 %v5031, %v5031
        %v5064 = vpack.c.b16 %v5032, %v5032
        %v5065 = vpack.c.b16 %v5033, %v5033
        %v5066 = vpack.c.b16 %v5034, %v5034
        %v5067 = vpack.c.b16 %v5035, %v5035
        %v5068 = vpack.c.b16 %v5036, %v5036
        %v5069 = vpack.c.b16 %v5037, %v5037
        %v5070 = vpack.c.b16 %v5038, %v5038
        %v5071 = vpack.c.b16 %v5039, %v5039
        %v5072 = vpack.c.b16 %v5040, %v5040
        %v5073 = vpack.c.b16 %v5041, %v5041
        %v5074 = vpack.c.b16 %v5042, %v5042
        %v5075 = vpack.c.b16 %v5043, %v5043
        %v5076 = vpack.c.b16 %v5044, %v5044
        %v5077 = vpack.c.b16 %v5045, %v5045
        %v5078 = vpack.c.b16 %v5046, %v5046
        %v5079 = vpack.c.b16 %v5047, %v5047
        %v5081 = vshrl.u32 %v5048, 16
        %v5083 = vrot.slane %v5081, 7
        %v5084 = vshll.u32 %v5048, 16
        %v5086 = vor.u32 %v5083, %v5084
        %v5087 = vrot.slane %v5083, 4
        %v5089 = vshrl.u32 %v5049, 16
        %v5091 = vrot.slane %v5089, 7
        %v5092 = vshll.u32 %v5049, 16
        %v5094 = vor.u32 %v5091, %v5092
        %v5095 = vsel %vm1027, %v5087, %v5094
        %v5096 = vrot.slane %v5091, 4
        %v5098 = vshrl.u32 %v5050, 16
        %v5100 = vrot.slane %v5098, 7
        %v5101 = vshll.u32 %v5050, 16
        %v5103 = vor.u32 %v5100, %v5101
        %v5104 = vrot.slane %v5100, 4
        %v5106 = vshrl.u32 %v5051, 16
        %v5108 = vrot.slane %v5106, 7
        %v5109 = vshll.u32 %v5051, 16
        %v5111 = vor.u32 %v5108, %v5109
        %v5112 = vsel %vm1027, %v5104, %v5111
        %v5113 = vrot.slane %v5108, 4
        %v5115 = vshrl.u32 %v5052, 16
        %v5117 = vrot.slane %v5115, 7
        %v5118 = vshll.u32 %v5052, 16
        %v5120 = vor.u32 %v5117, %v5118
        %v5121 = vrot.slane %v5117, 4
        %v5123 = vshrl.u32 %v5053, 16
        %v5125 = vrot.slane %v5123, 7
        %v5126 = vshll.u32 %v5053, 16
        %v5128 = vor.u32 %v5125, %v5126
        %v5129 = vsel %vm1027, %v5121, %v5128
        %v5130 = vrot.slane %v5125, 4
        %v5132 = vshrl.u32 %v5054, 16
        %v5134 = vrot.slane %v5132, 7
        %v5135 = vshll.u32 %v5054, 16
        %v5137 = vor.u32 %v5134, %v5135
        %v5138 = vrot.slane %v5134, 4
        %v5140 = vshrl.u32 %v5055, 16
        %v5142 = vrot.slane %v5140, 7
        %v5143 = vshll.u32 %v5055, 16
        %v5145 = vor.u32 %v5142, %v5143
        %v5146 = vsel %vm1027, %v5138, %v5145
        %v5147 = vrot.slane %v5142, 4
        %v5149 = vshrl.u32 %v5056, 16
        %v5151 = vrot.slane %v5149, 7
        %v5152 = vshll.u32 %v5056, 16
        %v5154 = vor.u32 %v5151, %v5152
        %v5155 = vrot.slane %v5151, 4
        %v5157 = vshrl.u32 %v5057, 16
        %v5159 = vrot.slane %v5157, 7
        %v5160 = vshll.u32 %v5057, 16
        %v5162 = vor.u32 %v5159, %v5160
        %v5163 = vsel %vm1027, %v5155, %v5162
        %v5164 = vrot.slane %v5159, 4
        %v5166 = vshrl.u32 %v5058, 16
        %v5168 = vrot.slane %v5166, 7
        %v5169 = vshll.u32 %v5058, 16
        %v5171 = vor.u32 %v5168, %v5169
        %v5172 = vrot.slane %v5168, 4
        %v5174 = vshrl.u32 %v5059, 16
        %v5176 = vrot.slane %v5174, 7
        %v5177 = vshll.u32 %v5059, 16
        %v5179 = vor.u32 %v5176, %v5177
        %v5180 = vsel %vm1027, %v5172, %v5179
        %v5181 = vrot.slane %v5176, 4
        %v5183 = vshrl.u32 %v5060, 16
        %v5185 = vrot.slane %v5183, 7
        %v5186 = vshll.u32 %v5060, 16
        %v5188 = vor.u32 %v5185, %v5186
        %v5189 = vrot.slane %v5185, 4
        %v5191 = vshrl.u32 %v5061, 16
        %v5193 = vrot.slane %v5191, 7
        %v5194 = vshll.u32 %v5061, 16
        %v5196 = vor.u32 %v5193, %v5194
        %v5197 = vsel %vm1027, %v5189, %v5196
        %v5198 = vrot.slane %v5193, 4
        %v5200 = vshrl.u32 %v5062, 16
        %v5202 = vrot.slane %v5200, 7
        %v5203 = vshll.u32 %v5062, 16
        %v5205 = vor.u32 %v5202, %v5203
        %v5206 = vrot.slane %v5202, 4
        %v5208 = vshrl.u32 %v5063, 16
        %v5210 = vrot.slane %v5208, 7
        %v5211 = vshll.u32 %v5063, 16
        %v5213 = vor.u32 %v5210, %v5211
        %v5214 = vsel %vm1027, %v5206, %v5213
        %v5215 = vrot.slane %v5210, 4
        %v5217 = vshrl.u32 %v5064, 16
        %v5219 = vrot.slane %v5217, 7
        %v5220 = vshll.u32 %v5064, 16
        %v5222 = vor.u32 %v5219, %v5220
        %v5223 = vrot.slane %v5219, 4
        %v5225 = vshrl.u32 %v5065, 16
        %v5227 = vrot.slane %v5225, 7
        %v5228 = vshll.u32 %v5065, 16
        %v5230 = vor.u32 %v5227, %v5228
        %v5231 = vsel %vm1027, %v5223, %v5230
        %v5232 = vrot.slane %v5227, 4
        %v5234 = vshrl.u32 %v5066, 16
        %v5236 = vrot.slane %v5234, 7
        %v5237 = vshll.u32 %v5066, 16
        %v5239 = vor.u32 %v5236, %v5237
        %v5240 = vrot.slane %v5236, 4
        %v5242 = vshrl.u32 %v5067, 16
        %v5244 = vrot.slane %v5242, 7
        %v5245 = vshll.u32 %v5067, 16
        %v5247 = vor.u32 %v5244, %v5245
        %v5248 = vsel %vm1027, %v5240, %v5247
        %v5249 = vrot.slane %v5244, 4
        %v5251 = vshrl.u32 %v5068, 16
        %v5253 = vrot.slane %v5251, 7
        %v5254 = vshll.u32 %v5068, 16
        %v5256 = vor.u32 %v5253, %v5254
        %v5257 = vrot.slane %v5253, 4
        %v5259 = vshrl.u32 %v5069, 16
        %v5261 = vrot.slane %v5259, 7
        %v5262 = vshll.u32 %v5069, 16
        %v5264 = vor.u32 %v5261, %v5262
        %v5265 = vsel %vm1027, %v5257, %v5264
        %v5266 = vrot.slane %v5261, 4
        %v5268 = vshrl.u32 %v5070, 16
        %v5270 = vrot.slane %v5268, 7
        %v5271 = vshll.u32 %v5070, 16
        %v5273 = vor.u32 %v5270, %v5271
        %v5274 = vrot.slane %v5270, 4
        %v5276 = vshrl.u32 %v5071, 16
        %v5278 = vrot.slane %v5276, 7
        %v5279 = vshll.u32 %v5071, 16
        %v5281 = vor.u32 %v5278, %v5279
        %v5282 = vsel %vm1027, %v5274, %v5281
        %v5283 = vrot.slane %v5278, 4
        %v5285 = vshrl.u32 %v5072, 16
        %v5287 = vrot.slane %v5285, 7
        %v5288 = vshll.u32 %v5072, 16
        %v5290 = vor.u32 %v5287, %v5288
        %v5291 = vrot.slane %v5287, 4
        %v5293 = vshrl.u32 %v5073, 16
        %v5295 = vrot.slane %v5293, 7
        %v5296 = vshll.u32 %v5073, 16
        %v5298 = vor.u32 %v5295, %v5296
        %v5299 = vsel %vm1027, %v5291, %v5298
        %v5300 = vrot.slane %v5295, 4
        %v5302 = vshrl.u32 %v5074, 16
        %v5304 = vrot.slane %v5302, 7
        %v5305 = vshll.u32 %v5074, 16
        %v5307 = vor.u32 %v5304, %v5305
        %v5308 = vrot.slane %v5304, 4
        %v5310 = vshrl.u32 %v5075, 16
        %v5312 = vrot.slane %v5310, 7
        %v5313 = vshll.u32 %v5075, 16
        %v5315 = vor.u32 %v5312, %v5313
        %v5316 = vsel %vm1027, %v5308, %v5315
        %v5317 = vrot.slane %v5312, 4
        %v5319 = vshrl.u32 %v5076, 16
        %v5321 = vrot.slane %v5319, 7
        %v5322 = vshll.u32 %v5076, 16
        %v5324 = vor.u32 %v5321, %v5322
        %v5325 = vrot.slane %v5321, 4
        %v5327 = vshrl.u32 %v5077, 16
        %v5329 = vrot.slane %v5327, 7
        %v5330 = vshll.u32 %v5077, 16
        %v5332 = vor.u32 %v5329, %v5330
        %v5333 = vsel %vm1027, %v5325, %v5332
        %v5334 = vrot.slane %v5329, 4
        %v5336 = vshrl.u32 %v5078, 16
        %v5338 = vrot.slane %v5336, 7
        %v5339 = vshll.u32 %v5078, 16
        %v5341 = vor.u32 %v5338, %v5339
        %v5342 = vrot.slane %v5338, 4
        %v5344 = vshrl.u32 %v5079, 16
        %v5346 = vrot.slane %v5344, 7
        %v5347 = vshll.u32 %v5079, 16
        %v5349 = vor.u32 %v5346, %v5347
        %v5350 = vsel %vm1027, %v5342, %v5349
        %v5351 = vrot.slane %v5346, 4
        %s5400 = scalar_lea.vmem [#allocation3], 12
        %vm5401 = vcmask 257024
        %vm5402 = vmand %vm5401, %vm1350
        %v5403 = vld [vmem:[%s5400] sm:$0xf]
        %v5404 = vsel %vm5402, %v5086, %v5403
        %5405 = vst [vmem:[%s5400] sm:$0xf] %v5404
        %5406 = vst.msk [vmem:[%s5400 + $0x4] sm:$0xf] %vm521, %v5095
        %vm5407 = vcmask 253952
        %vm5408 = vmand %vm5407, %vm1025
        %v5409 = vld [vmem:[%s5400 + $0x8] sm:$0x1]
        %v5410 = vsel %vm5408, %v5096, %v5409
        %5411 = vst [vmem:[%s5400 + $0x8] sm:$0x1] %v5410
        %v5412 = vld [vmem:[%s5400 + $0xc] sm:$0xf]
        %v5413 = vsel %vm5402, %v5103, %v5412
        %5414 = vst [vmem:[%s5400 + $0xc] sm:$0xf] %v5413
        %5415 = vst.msk [vmem:[%s5400 + $0x10] sm:$0xf] %vm521, %v5112
        %v5416 = vld [vmem:[%s5400 + $0x14] sm:$0x1]
        %v5417 = vsel %vm5408, %v5113, %v5416
        %5418 = vst [vmem:[%s5400 + $0x14] sm:$0x1] %v5417
        %v5419 = vld [vmem:[%s5400 + $0x18] sm:$0xf]
        %v5420 = vsel %vm5402, %v5120, %v5419
        %5421 = vst [vmem:[%s5400 + $0x18] sm:$0xf] %v5420
        %5422 = vst.msk [vmem:[%s5400 + $0x1c] sm:$0xf] %vm521, %v5129
        %v5423 = vld [vmem:[%s5400 + $0x20] sm:$0x1]
        %v5424 = vsel %vm5408, %v5130, %v5423
        %5425 = vst [vmem:[%s5400 + $0x20] sm:$0x1] %v5424
        %v5426 = vld [vmem:[%s5400 + $0x24] sm:$0xf]
        %v5427 = vsel %vm5402, %v5137, %v5426
        %5428 = vst [vmem:[%s5400 + $0x24] sm:$0xf] %v5427
        %5429 = vst.msk [vmem:[%s5400 + $0x28] sm:$0xf] %vm521, %v5146
        %v5430 = vld [vmem:[%s5400 + $0x2c] sm:$0x1]
        %v5431 = vsel %vm5408, %v5147, %v5430
        %5432 = vst [vmem:[%s5400 + $0x2c] sm:$0x1] %v5431
        %v5433 = vld [vmem:[%s5400 + $0x30] sm:$0xf]
        %v5434 = vsel %vm5402, %v5154, %v5433
        %5435 = vst [vmem:[%s5400 + $0x30] sm:$0xf] %v5434
        %5436 = vst.msk [vmem:[%s5400 + $0x34] sm:$0xf] %vm521, %v5163
        %v5437 = vld [vmem:[%s5400 + $0x38] sm:$0x1]
        %v5438 = vsel %vm5408, %v5164, %v5437
        %5439 = vst [vmem:[%s5400 + $0x38] sm:$0x1] %v5438
        %v5440 = vld [vmem:[%s5400 + $0x3c] sm:$0xf]
        %v5441 = vsel %vm5402, %v5171, %v5440
        %5442 = vst [vmem:[%s5400 + $0x3c] sm:$0xf] %v5441
        %5443 = vst.msk [vmem:[%s5400 + $0x40] sm:$0xf] %vm521, %v5180
        %v5444 = vld [vmem:[%s5400 + $0x44] sm:$0x1]
        %v5445 = vsel %vm5408, %v5181, %v5444
        %5446 = vst [vmem:[%s5400 + $0x44] sm:$0x1] %v5445
        %v5447 = vld [vmem:[%s5400 + $0x48] sm:$0xf]
        %v5448 = vsel %vm5402, %v5188, %v5447
        %5449 = vst [vmem:[%s5400 + $0x48] sm:$0xf] %v5448
        %5450 = vst.msk [vmem:[%s5400 + $0x4c] sm:$0xf] %vm521, %v5197
        %v5451 = vld [vmem:[%s5400 + $0x50] sm:$0x1]
        %v5452 = vsel %vm5408, %v5198, %v5451
        %5453 = vst [vmem:[%s5400 + $0x50] sm:$0x1] %v5452
        %v5454 = vld [vmem:[%s5400 + $0x54] sm:$0xf]
        %v5455 = vsel %vm5402, %v5205, %v5454
        %5456 = vst [vmem:[%s5400 + $0x54] sm:$0xf] %v5455
        %5457 = vst.msk [vmem:[%s5400 + $0x58] sm:$0xf] %vm521, %v5214
        %v5458 = vld [vmem:[%s5400 + $0x5c] sm:$0x1]
        %v5459 = vsel %vm5408, %v5215, %v5458
        %5460 = vst [vmem:[%s5400 + $0x5c] sm:$0x1] %v5459
        %v5461 = vld [vmem:[%s5400 + $0x60] sm:$0xf]
        %v5462 = vsel %vm5402, %v5222, %v5461
        %5463 = vst [vmem:[%s5400 + $0x60] sm:$0xf] %v5462
        %5464 = vst.msk [vmem:[%s5400 + $0x64] sm:$0xf] %vm521, %v5231
        %v5465 = vld [vmem:[%s5400 + $0x68] sm:$0x1]
        %v5466 = vsel %vm5408, %v5232, %v5465
        %5467 = vst [vmem:[%s5400 + $0x68] sm:$0x1] %v5466
        %v5468 = vld [vmem:[%s5400 + $0x6c] sm:$0xf]
        %v5469 = vsel %vm5402, %v5239, %v5468
        %5470 = vst [vmem:[%s5400 + $0x6c] sm:$0xf] %v5469
        %5471 = vst.msk [vmem:[%s5400 + $0x70] sm:$0xf] %vm521, %v5248
        %v5472 = vld [vmem:[%s5400 + $0x74] sm:$0x1]
        %v5473 = vsel %vm5408, %v5249, %v5472
        %5474 = vst [vmem:[%s5400 + $0x74] sm:$0x1] %v5473
        %v5475 = vld [vmem:[%s5400 + $0x78] sm:$0xf]
        %v5476 = vsel %vm5402, %v5256, %v5475
        %5477 = vst [vmem:[%s5400 + $0x78] sm:$0xf] %v5476
        %5478 = vst.msk [vmem:[%s5400 + $0x7c] sm:$0xf] %vm521, %v5265
        %v5479 = vld [vmem:[%s5400 + $0x80] sm:$0x1]
        %v5480 = vsel %vm5408, %v5266, %v5479
        %5481 = vst [vmem:[%s5400 + $0x80] sm:$0x1] %v5480
        %v5482 = vld [vmem:[%s5400 + $0x84] sm:$0xf]
        %v5483 = vsel %vm5402, %v5273, %v5482
        %5484 = vst [vmem:[%s5400 + $0x84] sm:$0xf] %v5483
        %5485 = vst.msk [vmem:[%s5400 + $0x88] sm:$0xf] %vm521, %v5282
        %v5486 = vld [vmem:[%s5400 + $0x8c] sm:$0x1]
        %v5487 = vsel %vm5408, %v5283, %v5486
        %5488 = vst [vmem:[%s5400 + $0x8c] sm:$0x1] %v5487
        %v5489 = vld [vmem:[%s5400 + $0x90] sm:$0xf]
        %v5490 = vsel %vm5402, %v5290, %v5489
        %5491 = vst [vmem:[%s5400 + $0x90] sm:$0xf] %v5490
        %5492 = vst.msk [vmem:[%s5400 + $0x94] sm:$0xf] %vm521, %v5299
        %v5493 = vld [vmem:[%s5400 + $0x98] sm:$0x1]
        %v5494 = vsel %vm5408, %v5300, %v5493
        %5495 = vst [vmem:[%s5400 + $0x98] sm:$0x1] %v5494
        %v5496 = vld [vmem:[%s5400 + $0x9c] sm:$0xf]
        %v5497 = vsel %vm5402, %v5307, %v5496
        %5498 = vst [vmem:[%s5400 + $0x9c] sm:$0xf] %v5497
        %5499 = vst.msk [vmem:[%s5400 + $0xa0] sm:$0xf] %vm521, %v5316
        %v5500 = vld [vmem:[%s5400 + $0xa4] sm:$0x1]
        %v5501 = vsel %vm5408, %v5317, %v5500
        %5502 = vst [vmem:[%s5400 + $0xa4] sm:$0x1] %v5501
        %v5503 = vld [vmem:[%s5400 + $0xa8] sm:$0xf]
        %v5504 = vsel %vm5402, %v5324, %v5503
        %5505 = vst [vmem:[%s5400 + $0xa8] sm:$0xf] %v5504
        %5506 = vst.msk [vmem:[%s5400 + $0xac] sm:$0xf] %vm521, %v5333
        %v5507 = vld [vmem:[%s5400 + $0xb0] sm:$0x1]
        %v5508 = vsel %vm5408, %v5334, %v5507
        %5509 = vst [vmem:[%s5400 + $0xb0] sm:$0x1] %v5508
        %v5510 = vld [vmem:[%s5400 + $0xb4] sm:$0xf]
        %v5511 = vsel %vm5402, %v5341, %v5510
        %5512 = vst [vmem:[%s5400 + $0xb4] sm:$0xf] %v5511
        %5513 = vst.msk [vmem:[%s5400 + $0xb8] sm:$0xf] %vm521, %v5350
        %v5514 = vld [vmem:[%s5400 + $0xbc] sm:$0x1]
        %v5515 = vsel %vm5408, %v5351, %v5514
        %5516 = vst [vmem:[%s5400 + $0xbc] sm:$0x1] %v5515
        %v5517 = vld [vmem:[#allocation3] sm:$0xf]
        %v5518 = vld [vmem:[#allocation3 + $0x4] sm:$0xf]
        %v5519 = vld [vmem:[#allocation3 + $0xc] sm:$0xf]
        %v5520 = vld [vmem:[#allocation3 + $0x10] sm:$0xf]
        %v5521 = vld [vmem:[#allocation3 + $0x18] sm:$0xf]
        %v5522 = vld [vmem:[#allocation3 + $0x1c] sm:$0xf]
        %v5523 = vld [vmem:[#allocation3 + $0x24] sm:$0xf]
        %v5524 = vld [vmem:[#allocation3 + $0x28] sm:$0xf]
        %v5525 = vld [vmem:[#allocation3 + $0x30] sm:$0xf]
        %v5526 = vld [vmem:[#allocation3 + $0x34] sm:$0xf]
        %v5527 = vld [vmem:[#allocation3 + $0x3c] sm:$0xf]
        %v5528 = vld [vmem:[#allocation3 + $0x40] sm:$0xf]
        %v5529 = vld [vmem:[#allocation3 + $0x48] sm:$0xf]
        %v5530 = vld [vmem:[#allocation3 + $0x4c] sm:$0xf]
        %v5531 = vld [vmem:[#allocation3 + $0x54] sm:$0xf]
        %v5532 = vld [vmem:[#allocation3 + $0x58] sm:$0xf]
        %v5533 = vld [vmem:[#allocation3 + $0x60] sm:$0xf]
        %v5534 = vld [vmem:[#allocation3 + $0x64] sm:$0xf]
        %v5535 = vld [vmem:[#allocation3 + $0x6c] sm:$0xf]
        %v5536 = vld [vmem:[#allocation3 + $0x70] sm:$0xf]
        %v5537 = vld [vmem:[#allocation3 + $0x78] sm:$0xf]
        %v5538 = vld [vmem:[#allocation3 + $0x7c] sm:$0xf]
        %v5539 = vld [vmem:[#allocation3 + $0x84] sm:$0xf]
        %v5540 = vld [vmem:[#allocation3 + $0x88] sm:$0xf]
        %v5541 = vld [vmem:[#allocation3 + $0x90] sm:$0xf]
        %v5542 = vld [vmem:[#allocation3 + $0x94] sm:$0xf]
        %v5543 = vld [vmem:[#allocation3 + $0x9c] sm:$0xf]
        %v5544 = vld [vmem:[#allocation3 + $0xa0] sm:$0xf]
        %v5545 = vld [vmem:[#allocation3 + $0xa8] sm:$0xf]
        %v5546 = vld [vmem:[#allocation3 + $0xac] sm:$0xf]
        %v5547 = vld [vmem:[#allocation3 + $0xb4] sm:$0xf]
        %v5548 = vld [vmem:[#allocation3 + $0xb8] sm:$0xf]
        %v5549 = vld [vmem:[#allocation3 + $0x8] sm:$0x1]
        %v5550 = vld [vmem:[#allocation3 + $0x14] sm:$0x1]
        %v5551 = vld [vmem:[#allocation3 + $0x20] sm:$0x1]
        %v5552 = vld [vmem:[#allocation3 + $0x2c] sm:$0x1]
        %v5553 = vld [vmem:[#allocation3 + $0x38] sm:$0x1]
        %v5554 = vld [vmem:[#allocation3 + $0x44] sm:$0x1]
        %v5555 = vld [vmem:[#allocation3 + $0x50] sm:$0x1]
        %v5556 = vld [vmem:[#allocation3 + $0x5c] sm:$0x1]
        %v5557 = vld [vmem:[#allocation3 + $0x68] sm:$0x1]
        %v5558 = vld [vmem:[#allocation3 + $0x74] sm:$0x1]
        %v5559 = vld [vmem:[#allocation3 + $0x80] sm:$0x1]
        %v5560 = vld [vmem:[#allocation3 + $0x8c] sm:$0x1]
        %v5561 = vld [vmem:[#allocation3 + $0x98] sm:$0x1]
        %v5562 = vld [vmem:[#allocation3 + $0xa4] sm:$0x1]
        %v5563 = vld [vmem:[#allocation3 + $0xb0] sm:$0x1]
        %v5564 = vld [vmem:[#allocation3 + $0xbc] sm:$0x1]
        %v5566 = vshrl.u32 %v5517, 16
        %v5568 = vrot.slane %v5566, 4
        %v5569 = vshll.u32 %v5517, 16
        %v5571 = vrot.slane %v5569, 5
        %v5572 = vor.u32 %v5568, %v5571
        %v5573 = vrot.slane %v5572, 4
        %v5575 = vshll.u32 %v5518, 16
        %v5577 = vrot.slane %v5575, 5
        %v5578 = vsel %vm1516, %v5573, %v5577
        %v5579 = vshrl.u32 %v5518, 16
        %v5581 = vrot.slane %v5579, 4
        %v5582 = vor.u32 %v5581, %v5577
        %v5583 = vrot.slane %v5582, 4
        %v5585 = vshll.u32 %v5549, 16
        %v5587 = vrot.slane %v5585, 5
        %v5588 = vsel %vm1516, %v5583, %v5587
        %v5590 = vshrl.u32 %v5519, 16
        %v5592 = vrot.slane %v5590, 4
        %v5593 = vshll.u32 %v5519, 16
        %v5595 = vrot.slane %v5593, 5
        %v5596 = vor.u32 %v5592, %v5595
        %v5597 = vrot.slane %v5596, 4
        %v5599 = vshll.u32 %v5520, 16
        %v5601 = vrot.slane %v5599, 5
        %v5602 = vsel %vm1516, %v5597, %v5601
        %v5603 = vshrl.u32 %v5520, 16
        %v5605 = vrot.slane %v5603, 4
        %v5606 = vor.u32 %v5605, %v5601
        %v5607 = vrot.slane %v5606, 4
        %v5609 = vshll.u32 %v5550, 16
        %v5611 = vrot.slane %v5609, 5
        %v5612 = vsel %vm1516, %v5607, %v5611
        %v5614 = vshrl.u32 %v5521, 16
        %v5616 = vrot.slane %v5614, 4
        %v5617 = vshll.u32 %v5521, 16
        %v5619 = vrot.slane %v5617, 5
        %v5620 = vor.u32 %v5616, %v5619
        %v5621 = vrot.slane %v5620, 4
        %v5623 = vshll.u32 %v5522, 16
        %v5625 = vrot.slane %v5623, 5
        %v5626 = vsel %vm1516, %v5621, %v5625
        %v5627 = vshrl.u32 %v5522, 16
        %v5629 = vrot.slane %v5627, 4
        %v5630 = vor.u32 %v5629, %v5625
        %v5631 = vrot.slane %v5630, 4
        %v5633 = vshll.u32 %v5551, 16
        %v5635 = vrot.slane %v5633, 5
        %v5636 = vsel %vm1516, %v5631, %v5635
        %v5638 = vshrl.u32 %v5523, 16
        %v5640 = vrot.slane %v5638, 4
        %v5641 = vshll.u32 %v5523, 16
        %v5643 = vrot.slane %v5641, 5
        %v5644 = vor.u32 %v5640, %v5643
        %v5645 = vrot.slane %v5644, 4
        %v5647 = vshll.u32 %v5524, 16
        %v5649 = vrot.slane %v5647, 5
        %v5650 = vsel %vm1516, %v5645, %v5649
        %v5651 = vshrl.u32 %v5524, 16
        %v5653 = vrot.slane %v5651, 4
        %v5654 = vor.u32 %v5653, %v5649
        %v5655 = vrot.slane %v5654, 4
        %v5657 = vshll.u32 %v5552, 16
        %v5659 = vrot.slane %v5657, 5
        %v5660 = vsel %vm1516, %v5655, %v5659
        %v5662 = vshrl.u32 %v5525, 16
        %v5664 = vrot.slane %v5662, 4
        %v5665 = vshll.u32 %v5525, 16
        %v5667 = vrot.slane %v5665, 5
        %v5668 = vor.u32 %v5664, %v5667
        %v5669 = vrot.slane %v5668, 4
        %v5671 = vshll.u32 %v5526, 16
        %v5673 = vrot.slane %v5671, 5
        %v5674 = vsel %vm1516, %v5669, %v5673
        %v5675 = vshrl.u32 %v5526, 16
        %v5677 = vrot.slane %v5675, 4
        %v5678 = vor.u32 %v5677, %v5673
        %v5679 = vrot.slane %v5678, 4
        %v5681 = vshll.u32 %v5553, 16
        %v5683 = vrot.slane %v5681, 5
        %v5684 = vsel %vm1516, %v5679, %v5683
        %v5686 = vshrl.u32 %v5527, 16
        %v5688 = vrot.slane %v5686, 4
        %v5689 = vshll.u32 %v5527, 16
        %v5691 = vrot.slane %v5689, 5
        %v5692 = vor.u32 %v5688, %v5691
        %v5693 = vrot.slane %v5692, 4
        %v5695 = vshll.u32 %v5528, 16
        %v5697 = vrot.slane %v5695, 5
        %v5698 = vsel %vm1516, %v5693, %v5697
        %v5699 = vshrl.u32 %v5528, 16
        %v5701 = vrot.slane %v5699, 4
        %v5702 = vor.u32 %v5701, %v5697
        %v5703 = vrot.slane %v5702, 4
        %v5705 = vshll.u32 %v5554, 16
        %v5707 = vrot.slane %v5705, 5
        %v5708 = vsel %vm1516, %v5703, %v5707
        %v5710 = vshrl.u32 %v5529, 16
        %v5712 = vrot.slane %v5710, 4
        %v5713 = vshll.u32 %v5529, 16
        %v5715 = vrot.slane %v5713, 5
        %v5716 = vor.u32 %v5712, %v5715
        %v5717 = vrot.slane %v5716, 4
        %v5719 = vshll.u32 %v5530, 16
        %v5721 = vrot.slane %v5719, 5
        %v5722 = vsel %vm1516, %v5717, %v5721
        %v5723 = vshrl.u32 %v5530, 16
        %v5725 = vrot.slane %v5723, 4
        %v5726 = vor.u32 %v5725, %v5721
        %v5727 = vrot.slane %v5726, 4
        %v5729 = vshll.u32 %v5555, 16
        %v5731 = vrot.slane %v5729, 5
        %v5732 = vsel %vm1516, %v5727, %v5731
        %v5734 = vshrl.u32 %v5531, 16
        %v5736 = vrot.slane %v5734, 4
        %v5737 = vshll.u32 %v5531, 16
        %v5739 = vrot.slane %v5737, 5
        %v5740 = vor.u32 %v5736, %v5739
        %v5741 = vrot.slane %v5740, 4
        %v5743 = vshll.u32 %v5532, 16
        %v5745 = vrot.slane %v5743, 5
        %v5746 = vsel %vm1516, %v5741, %v5745
        %v5747 = vshrl.u32 %v5532, 16
        %v5749 = vrot.slane %v5747, 4
        %v5750 = vor.u32 %v5749, %v5745
        %v5751 = vrot.slane %v5750, 4
        %v5753 = vshll.u32 %v5556, 16
        %v5755 = vrot.slane %v5753, 5
        %v5756 = vsel %vm1516, %v5751, %v5755
        %v5758 = vshrl.u32 %v5533, 16
        %v5760 = vrot.slane %v5758, 4
        %v5761 = vshll.u32 %v5533, 16
        %v5763 = vrot.slane %v5761, 5
        %v5764 = vor.u32 %v5760, %v5763
        %v5765 = vrot.slane %v5764, 4
        %v5767 = vshll.u32 %v5534, 16
        %v5769 = vrot.slane %v5767, 5
        %v5770 = vsel %vm1516, %v5765, %v5769
        %v5771 = vshrl.u32 %v5534, 16
        %v5773 = vrot.slane %v5771, 4
        %v5774 = vor.u32 %v5773, %v5769
        %v5775 = vrot.slane %v5774, 4
        %v5777 = vshll.u32 %v5557, 16
        %v5779 = vrot.slane %v5777, 5
        %v5780 = vsel %vm1516, %v5775, %v5779
        %v5782 = vshrl.u32 %v5535, 16
        %v5784 = vrot.slane %v5782, 4
        %v5785 = vshll.u32 %v5535, 16
        %v5787 = vrot.slane %v5785, 5
        %v5788 = vor.u32 %v5784, %v5787
        %v5789 = vrot.slane %v5788, 4
        %v5791 = vshll.u32 %v5536, 16
        %v5793 = vrot.slane %v5791, 5
        %v5794 = vsel %vm1516, %v5789, %v5793
        %v5795 = vshrl.u32 %v5536, 16
        %v5797 = vrot.slane %v5795, 4
        %v5798 = vor.u32 %v5797, %v5793
        %v5799 = vrot.slane %v5798, 4
        %v5801 = vshll.u32 %v5558, 16
        %v5803 = vrot.slane %v5801, 5
        %v5804 = vsel %vm1516, %v5799, %v5803
        %v5806 = vshrl.u32 %v5537, 16
        %v5808 = vrot.slane %v5806, 4
        %v5809 = vshll.u32 %v5537, 16
        %v5811 = vrot.slane %v5809, 5
        %v5812 = vor.u32 %v5808, %v5811
        %v5813 = vrot.slane %v5812, 4
        %v5815 = vshll.u32 %v5538, 16
        %v5817 = vrot.slane %v5815, 5
        %v5818 = vsel %vm1516, %v5813, %v5817
        %v5819 = vshrl.u32 %v5538, 16
        %v5821 = vrot.slane %v5819, 4
        %v5822 = vor.u32 %v5821, %v5817
        %v5823 = vrot.slane %v5822, 4
        %v5825 = vshll.u32 %v5559, 16
        %v5827 = vrot.slane %v5825, 5
        %v5828 = vsel %vm1516, %v5823, %v5827
        %v5830 = vshrl.u32 %v5539, 16
        %v5832 = vrot.slane %v5830, 4
        %v5833 = vshll.u32 %v5539, 16
        %v5835 = vrot.slane %v5833, 5
        %v5836 = vor.u32 %v5832, %v5835
        %v5837 = vrot.slane %v5836, 4
        %v5839 = vshll.u32 %v5540, 16
        %v5841 = vrot.slane %v5839, 5
        %v5842 = vsel %vm1516, %v5837, %v5841
        %v5843 = vshrl.u32 %v5540, 16
        %v5845 = vrot.slane %v5843, 4
        %v5846 = vor.u32 %v5845, %v5841
        %v5847 = vrot.slane %v5846, 4
        %v5849 = vshll.u32 %v5560, 16
        %v5851 = vrot.slane %v5849, 5
        %v5852 = vsel %vm1516, %v5847, %v5851
        %v5854 = vshrl.u32 %v5541, 16
        %v5856 = vrot.slane %v5854, 4
        %v5857 = vshll.u32 %v5541, 16
        %v5859 = vrot.slane %v5857, 5
        %v5860 = vor.u32 %v5856, %v5859
        %v5861 = vrot.slane %v5860, 4
        %v5863 = vshll.u32 %v5542, 16
        %v5865 = vrot.slane %v5863, 5
        %v5866 = vsel %vm1516, %v5861, %v5865
        %v5867 = vshrl.u32 %v5542, 16
        %v5869 = vrot.slane %v5867, 4
        %v5870 = vor.u32 %v5869, %v5865
        %v5871 = vrot.slane %v5870, 4
        %v5873 = vshll.u32 %v5561, 16
        %v5875 = vrot.slane %v5873, 5
        %v5876 = vsel %vm1516, %v5871, %v5875
        %v5878 = vshrl.u32 %v5543, 16
        %v5880 = vrot.slane %v5878, 4
        %v5881 = vshll.u32 %v5543, 16
        %v5883 = vrot.slane %v5881, 5
        %v5884 = vor.u32 %v5880, %v5883
        %v5885 = vrot.slane %v5884, 4
        %v5887 = vshll.u32 %v5544, 16
        %v5889 = vrot.slane %v5887, 5
        %v5890 = vsel %vm1516, %v5885, %v5889
        %v5891 = vshrl.u32 %v5544, 16
        %v5893 = vrot.slane %v5891, 4
        %v5894 = vor.u32 %v5893, %v5889
        %v5895 = vrot.slane %v5894, 4
        %v5897 = vshll.u32 %v5562, 16
        %v5899 = vrot.slane %v5897, 5
        %v5900 = vsel %vm1516, %v5895, %v5899
        %v5902 = vshrl.u32 %v5545, 16
        %v5904 = vrot.slane %v5902, 4
        %v5905 = vshll.u32 %v5545, 16
        %v5907 = vrot.slane %v5905, 5
        %v5908 = vor.u32 %v5904, %v5907
        %v5909 = vrot.slane %v5908, 4
        %v5911 = vshll.u32 %v5546, 16
        %v5913 = vrot.slane %v5911, 5
        %v5914 = vsel %vm1516, %v5909, %v5913
        %v5915 = vshrl.u32 %v5546, 16
        %v5917 = vrot.slane %v5915, 4
        %v5918 = vor.u32 %v5917, %v5913
        %v5919 = vrot.slane %v5918, 4
        %v5921 = vshll.u32 %v5563, 16
        %v5923 = vrot.slane %v5921, 5
        %v5924 = vsel %vm1516, %v5919, %v5923
        %v5926 = vshrl.u32 %v5547, 16
        %v5928 = vrot.slane %v5926, 4
        %v5929 = vshll.u32 %v5547, 16
        %v5931 = vrot.slane %v5929, 5
        %v5932 = vor.u32 %v5928, %v5931
        %v5933 = vrot.slane %v5932, 4
        %v5935 = vshll.u32 %v5548, 16
        %v5937 = vrot.slane %v5935, 5
        %v5938 = vsel %vm1516, %v5933, %v5937
        %v5939 = vshrl.u32 %v5548, 16
        %v5941 = vrot.slane %v5939, 4
        %v5942 = vor.u32 %v5941, %v5937
        %v5943 = vrot.slane %v5942, 4
        %v5945 = vshll.u32 %v5564, 16
        %v5947 = vrot.slane %v5945, 5
        %v5948 = vsel %vm1516, %v5943, %v5947
        %v5949 = vld [vmem:[#allocation3] sm:$0xe]
        %v5950 = vld [vmem:[#allocation3 + $0xc] sm:$0xe]
        %v5951 = vld [vmem:[#allocation3 + $0x18] sm:$0xe]
        %v5952 = vld [vmem:[#allocation3 + $0x24] sm:$0xe]
        %v5953 = vld [vmem:[#allocation3 + $0x30] sm:$0xe]
        %v5954 = vld [vmem:[#allocation3 + $0x3c] sm:$0xe]
        %v5955 = vld [vmem:[#allocation3 + $0x48] sm:$0xe]
        %v5956 = vld [vmem:[#allocation3 + $0x54] sm:$0xe]
        %v5957 = vld [vmem:[#allocation3 + $0x60] sm:$0xe]
        %v5958 = vld [vmem:[#allocation3 + $0x6c] sm:$0xe]
        %v5959 = vld [vmem:[#allocation3 + $0x78] sm:$0xe]
        %v5960 = vld [vmem:[#allocation3 + $0x84] sm:$0xe]
        %v5961 = vld [vmem:[#allocation3 + $0x90] sm:$0xe]
        %v5962 = vld [vmem:[#allocation3 + $0x9c] sm:$0xe]
        %v5963 = vld [vmem:[#allocation3 + $0xa8] sm:$0xe]
        %v5964 = vld [vmem:[#allocation3 + $0xb4] sm:$0xe]
        %v6013 = vrot.slane %v5949, 5
        %v6014 = vrot.slane %v6013, 4
        %v6015 = vrot.slane %v5518, 5
        %v6016 = vsel %vm1967, %v6014, %v6015
        %v6017 = vrot.slane %v6015, 4
        %v6018 = vrot.slane %v5549, 5
        %v6019 = vsel %vm1967, %v6017, %v6018
        %v6020 = vrot.slane %v5950, 5
        %v6021 = vrot.slane %v6020, 4
        %v6022 = vrot.slane %v5520, 5
        %v6023 = vsel %vm1967, %v6021, %v6022
        %v6024 = vrot.slane %v6022, 4
        %v6025 = vrot.slane %v5550, 5
        %v6026 = vsel %vm1967, %v6024, %v6025
        %v6027 = vrot.slane %v5951, 5
        %v6028 = vrot.slane %v6027, 4
        %v6029 = vrot.slane %v5522, 5
        %v6030 = vsel %vm1967, %v6028, %v6029
        %v6031 = vrot.slane %v6029, 4
        %v6032 = vrot.slane %v5551, 5
        %v6033 = vsel %vm1967, %v6031, %v6032
        %v6034 = vrot.slane %v5952, 5
        %v6035 = vrot.slane %v6034, 4
        %v6036 = vrot.slane %v5524, 5
        %v6037 = vsel %vm1967, %v6035, %v6036
        %v6038 = vrot.slane %v6036, 4
        %v6039 = vrot.slane %v5552, 5
        %v6040 = vsel %vm1967, %v6038, %v6039
        %v6041 = vrot.slane %v5953, 5
        %v6042 = vrot.slane %v6041, 4
        %v6043 = vrot.slane %v5526, 5
        %v6044 = vsel %vm1967, %v6042, %v6043
        %v6045 = vrot.slane %v6043, 4
        %v6046 = vrot.slane %v5553, 5
        %v6047 = vsel %vm1967, %v6045, %v6046
        %v6048 = vrot.slane %v5954, 5
        %v6049 = vrot.slane %v6048, 4
        %v6050 = vrot.slane %v5528, 5
        %v6051 = vsel %vm1967, %v6049, %v6050
        %v6052 = vrot.slane %v6050, 4
        %v6053 = vrot.slane %v5554, 5
        %v6054 = vsel %vm1967, %v6052, %v6053
        %v6055 = vrot.slane %v5955, 5
        %v6056 = vrot.slane %v6055, 4
        %v6057 = vrot.slane %v5530, 5
        %v6058 = vsel %vm1967, %v6056, %v6057
        %v6059 = vrot.slane %v6057, 4
        %v6060 = vrot.slane %v5555, 5
        %v6061 = vsel %vm1967, %v6059, %v6060
        %v6062 = vrot.slane %v5956, 5
        %v6063 = vrot.slane %v6062, 4
        %v6064 = vrot.slane %v5532, 5
        %v6065 = vsel %vm1967, %v6063, %v6064
        %v6066 = vrot.slane %v6064, 4
        %v6067 = vrot.slane %v5556, 5
        %v6068 = vsel %vm1967, %v6066, %v6067
        %v6069 = vrot.slane %v5957, 5
        %v6070 = vrot.slane %v6069, 4
        %v6071 = vrot.slane %v5534, 5
        %v6072 = vsel %vm1967, %v6070, %v6071
        %v6073 = vrot.slane %v6071, 4
        %v6074 = vrot.slane %v5557, 5
        %v6075 = vsel %vm1967, %v6073, %v6074
        %v6076 = vrot.slane %v5958, 5
        %v6077 = vrot.slane %v6076, 4
        %v6078 = vrot.slane %v5536, 5
        %v6079 = vsel %vm1967, %v6077, %v6078
        %v6080 = vrot.slane %v6078, 4
        %v6081 = vrot.slane %v5558, 5
        %v6082 = vsel %vm1967, %v6080, %v6081
        %v6083 = vrot.slane %v5959, 5
        %v6084 = vrot.slane %v6083, 4
        %v6085 = vrot.slane %v5538, 5
        %v6086 = vsel %vm1967, %v6084, %v6085
        %v6087 = vrot.slane %v6085, 4
        %v6088 = vrot.slane %v5559, 5
        %v6089 = vsel %vm1967, %v6087, %v6088
        %v6090 = vrot.slane %v5960, 5
        %v6091 = vrot.slane %v6090, 4
        %v6092 = vrot.slane %v5540, 5
        %v6093 = vsel %vm1967, %v6091, %v6092
        %v6094 = vrot.slane %v6092, 4
        %v6095 = vrot.slane %v5560, 5
        %v6096 = vsel %vm1967, %v6094, %v6095
        %v6097 = vrot.slane %v5961, 5
        %v6098 = vrot.slane %v6097, 4
        %v6099 = vrot.slane %v5542, 5
        %v6100 = vsel %vm1967, %v6098, %v6099
        %v6101 = vrot.slane %v6099, 4
        %v6102 = vrot.slane %v5561, 5
        %v6103 = vsel %vm1967, %v6101, %v6102
        %v6104 = vrot.slane %v5962, 5
        %v6105 = vrot.slane %v6104, 4
        %v6106 = vrot.slane %v5544, 5
        %v6107 = vsel %vm1967, %v6105, %v6106
        %v6108 = vrot.slane %v6106, 4
        %v6109 = vrot.slane %v5562, 5
        %v6110 = vsel %vm1967, %v6108, %v6109
        %v6111 = vrot.slane %v5963, 5
        %v6112 = vrot.slane %v6111, 4
        %v6113 = vrot.slane %v5546, 5
        %v6114 = vsel %vm1967, %v6112, %v6113
        %v6115 = vrot.slane %v6113, 4
        %v6116 = vrot.slane %v5563, 5
        %v6117 = vsel %vm1967, %v6115, %v6116
        %v6118 = vrot.slane %v5964, 5
        %v6119 = vrot.slane %v6118, 4
        %v6120 = vrot.slane %v5548, 5
        %v6121 = vsel %vm1967, %v6119, %v6120
        %v6122 = vrot.slane %v6120, 4
        %v6123 = vrot.slane %v5564, 5
        %v6124 = vsel %vm1967, %v6122, %v6123
        %v6125 = vld [vmem:[%s5400] sm:$0xf]
        %v6126 = vld [vmem:[%s5400 + $0x4] sm:$0xf]
        %v6127 = vld [vmem:[%s5400 + $0xc] sm:$0xf]
        %v6128 = vld [vmem:[%s5400 + $0x10] sm:$0xf]
        %v6129 = vld [vmem:[%s5400 + $0x18] sm:$0xf]
        %v6130 = vld [vmem:[%s5400 + $0x1c] sm:$0xf]
        %v6131 = vld [vmem:[%s5400 + $0x24] sm:$0xf]
        %v6132 = vld [vmem:[%s5400 + $0x28] sm:$0xf]
        %v6133 = vld [vmem:[%s5400 + $0x30] sm:$0xf]
        %v6134 = vld [vmem:[%s5400 + $0x34] sm:$0xf]
        %v6135 = vld [vmem:[%s5400 + $0x3c] sm:$0xf]
        %v6136 = vld [vmem:[%s5400 + $0x40] sm:$0xf]
        %v6137 = vld [vmem:[%s5400 + $0x48] sm:$0xf]
        %v6138 = vld [vmem:[%s5400 + $0x4c] sm:$0xf]
        %v6139 = vld [vmem:[%s5400 + $0x54] sm:$0xf]
        %v6140 = vld [vmem:[%s5400 + $0x58] sm:$0xf]
        %v6141 = vld [vmem:[%s5400 + $0x60] sm:$0xf]
        %v6142 = vld [vmem:[%s5400 + $0x64] sm:$0xf]
        %v6143 = vld [vmem:[%s5400 + $0x6c] sm:$0xf]
        %v6144 = vld [vmem:[%s5400 + $0x70] sm:$0xf]
        %v6145 = vld [vmem:[%s5400 + $0x78] sm:$0xf]
        %v6146 = vld [vmem:[%s5400 + $0x7c] sm:$0xf]
        %v6147 = vld [vmem:[%s5400 + $0x84] sm:$0xf]
        %v6148 = vld [vmem:[%s5400 + $0x88] sm:$0xf]
        %v6149 = vld [vmem:[%s5400 + $0x90] sm:$0xf]
        %v6150 = vld [vmem:[%s5400 + $0x94] sm:$0xf]
        %v6151 = vld [vmem:[%s5400 + $0x9c] sm:$0xf]
        %v6152 = vld [vmem:[%s5400 + $0xa0] sm:$0xf]
        %v6153 = vld [vmem:[%s5400 + $0xa8] sm:$0xf]
        %v6154 = vld [vmem:[%s5400 + $0xac] sm:$0xf]
        %v6155 = vld [vmem:[%s5400 + $0xb4] sm:$0xf]
        %v6156 = vld [vmem:[%s5400 + $0xb8] sm:$0xf]
        %v6157 = vld [vmem:[%s5400 + $0x8] sm:$0x1]
        %v6158 = vld [vmem:[%s5400 + $0x14] sm:$0x1]
        %v6159 = vld [vmem:[%s5400 + $0x20] sm:$0x1]
        %v6160 = vld [vmem:[%s5400 + $0x2c] sm:$0x1]
        %v6161 = vld [vmem:[%s5400 + $0x38] sm:$0x1]
        %v6162 = vld [vmem:[%s5400 + $0x44] sm:$0x1]
        %v6163 = vld [vmem:[%s5400 + $0x50] sm:$0x1]
        %v6164 = vld [vmem:[%s5400 + $0x5c] sm:$0x1]
        %v6165 = vld [vmem:[%s5400 + $0x68] sm:$0x1]
        %v6166 = vld [vmem:[%s5400 + $0x74] sm:$0x1]
        %v6167 = vld [vmem:[%s5400 + $0x80] sm:$0x1]
        %v6168 = vld [vmem:[%s5400 + $0x8c] sm:$0x1]
        %v6169 = vld [vmem:[%s5400 + $0x98] sm:$0x1]
        %v6170 = vld [vmem:[%s5400 + $0xa4] sm:$0x1]
        %v6171 = vld [vmem:[%s5400 + $0xb0] sm:$0x1]
        %v6172 = vld [vmem:[%s5400 + $0xbc] sm:$0x1]
        %v6174 = vshrl.u32 %v6125, 16
        %v6176 = vrot.slane %v6174, 4
        %v6177 = vshll.u32 %v6125, 16
        %v6179 = vrot.slane %v6177, 5
        %v6180 = vor.u32 %v6176, %v6179
        %v6181 = vrot.slane %v6180, 4
        %v6183 = vshll.u32 %v6126, 16
        %v6185 = vrot.slane %v6183, 5
        %v6186 = vsel %vm1516, %v6181, %v6185
        %v6187 = vshrl.u32 %v6126, 16
        %v6189 = vrot.slane %v6187, 4
        %v6190 = vor.u32 %v6189, %v6185
        %v6191 = vrot.slane %v6190, 4
        %v6193 = vshll.u32 %v6157, 16
        %v6195 = vrot.slane %v6193, 5
        %v6196 = vsel %vm1516, %v6191, %v6195
        %v6198 = vshrl.u32 %v6127, 16
        %v6200 = vrot.slane %v6198, 4
        %v6201 = vshll.u32 %v6127, 16
        %v6203 = vrot.slane %v6201, 5
        %v6204 = vor.u32 %v6200, %v6203
        %v6205 = vrot.slane %v6204, 4
        %v6207 = vshll.u32 %v6128, 16
        %v6209 = vrot.slane %v6207, 5
        %v6210 = vsel %vm1516, %v6205, %v6209
        %v6211 = vshrl.u32 %v6128, 16
        %v6213 = vrot.slane %v6211, 4
        %v6214 = vor.u32 %v6213, %v6209
        %v6215 = vrot.slane %v6214, 4
        %v6217 = vshll.u32 %v6158, 16
        %v6219 = vrot.slane %v6217, 5
        %v6220 = vsel %vm1516, %v6215, %v6219
        %v6222 = vshrl.u32 %v6129, 16
        %v6224 = vrot.slane %v6222, 4
        %v6225 = vshll.u32 %v6129, 16
        %v6227 = vrot.slane %v6225, 5
        %v6228 = vor.u32 %v6224, %v6227
        %v6229 = vrot.slane %v6228, 4
        %v6231 = vshll.u32 %v6130, 16
        %v6233 = vrot.slane %v6231, 5
        %v6234 = vsel %vm1516, %v6229, %v6233
        %v6235 = vshrl.u32 %v6130, 16
        %v6237 = vrot.slane %v6235, 4
        %v6238 = vor.u32 %v6237, %v6233
        %v6239 = vrot.slane %v6238, 4
        %v6241 = vshll.u32 %v6159, 16
        %v6243 = vrot.slane %v6241, 5
        %v6244 = vsel %vm1516, %v6239, %v6243
        %v6246 = vshrl.u32 %v6131, 16
        %v6248 = vrot.slane %v6246, 4
        %v6249 = vshll.u32 %v6131, 16
        %v6251 = vrot.slane %v6249, 5
        %v6252 = vor.u32 %v6248, %v6251
        %v6253 = vrot.slane %v6252, 4
        %v6255 = vshll.u32 %v6132, 16
        %v6257 = vrot.slane %v6255, 5
        %v6258 = vsel %vm1516, %v6253, %v6257
        %v6259 = vshrl.u32 %v6132, 16
        %v6261 = vrot.slane %v6259, 4
        %v6262 = vor.u32 %v6261, %v6257
        %v6263 = vrot.slane %v6262, 4
        %v6265 = vshll.u32 %v6160, 16
        %v6267 = vrot.slane %v6265, 5
        %v6268 = vsel %vm1516, %v6263, %v6267
        %v6270 = vshrl.u32 %v6133, 16
        %v6272 = vrot.slane %v6270, 4
        %v6273 = vshll.u32 %v6133, 16
        %v6275 = vrot.slane %v6273, 5
        %v6276 = vor.u32 %v6272, %v6275
        %v6277 = vrot.slane %v6276, 4
        %v6279 = vshll.u32 %v6134, 16
        %v6281 = vrot.slane %v6279, 5
        %v6282 = vsel %vm1516, %v6277, %v6281
        %v6283 = vshrl.u32 %v6134, 16
        %v6285 = vrot.slane %v6283, 4
        %v6286 = vor.u32 %v6285, %v6281
        %v6287 = vrot.slane %v6286, 4
        %v6289 = vshll.u32 %v6161, 16
        %v6291 = vrot.slane %v6289, 5
        %v6292 = vsel %vm1516, %v6287, %v6291
        %v6294 = vshrl.u32 %v6135, 16
        %v6296 = vrot.slane %v6294, 4
        %v6297 = vshll.u32 %v6135, 16
        %v6299 = vrot.slane %v6297, 5
        %v6300 = vor.u32 %v6296, %v6299
        %v6301 = vrot.slane %v6300, 4
        %v6303 = vshll.u32 %v6136, 16
        %v6305 = vrot.slane %v6303, 5
        %v6306 = vsel %vm1516, %v6301, %v6305
        %v6307 = vshrl.u32 %v6136, 16
        %v6309 = vrot.slane %v6307, 4
        %v6310 = vor.u32 %v6309, %v6305
        %v6311 = vrot.slane %v6310, 4
        %v6313 = vshll.u32 %v6162, 16
        %v6315 = vrot.slane %v6313, 5
        %v6316 = vsel %vm1516, %v6311, %v6315
        %v6318 = vshrl.u32 %v6137, 16
        %v6320 = vrot.slane %v6318, 4
        %v6321 = vshll.u32 %v6137, 16
        %v6323 = vrot.slane %v6321, 5
        %v6324 = vor.u32 %v6320, %v6323
        %v6325 = vrot.slane %v6324, 4
        %v6327 = vshll.u32 %v6138, 16
        %v6329 = vrot.slane %v6327, 5
        %v6330 = vsel %vm1516, %v6325, %v6329
        %v6331 = vshrl.u32 %v6138, 16
        %v6333 = vrot.slane %v6331, 4
        %v6334 = vor.u32 %v6333, %v6329
        %v6335 = vrot.slane %v6334, 4
        %v6337 = vshll.u32 %v6163, 16
        %v6339 = vrot.slane %v6337, 5
        %v6340 = vsel %vm1516, %v6335, %v6339
        %v6342 = vshrl.u32 %v6139, 16
        %v6344 = vrot.slane %v6342, 4
        %v6345 = vshll.u32 %v6139, 16
        %v6347 = vrot.slane %v6345, 5
        %v6348 = vor.u32 %v6344, %v6347
        %v6349 = vrot.slane %v6348, 4
        %v6351 = vshll.u32 %v6140, 16
        %v6353 = vrot.slane %v6351, 5
        %v6354 = vsel %vm1516, %v6349, %v6353
        %v6355 = vshrl.u32 %v6140, 16
        %v6357 = vrot.slane %v6355, 4
        %v6358 = vor.u32 %v6357, %v6353
        %v6359 = vrot.slane %v6358, 4
        %v6361 = vshll.u32 %v6164, 16
        %v6363 = vrot.slane %v6361, 5
        %v6364 = vsel %vm1516, %v6359, %v6363
        %v6366 = vshrl.u32 %v6141, 16
        %v6368 = vrot.slane %v6366, 4
        %v6369 = vshll.u32 %v6141, 16
        %v6371 = vrot.slane %v6369, 5
        %v6372 = vor.u32 %v6368, %v6371
        %v6373 = vrot.slane %v6372, 4
        %v6375 = vshll.u32 %v6142, 16
        %v6377 = vrot.slane %v6375, 5
        %v6378 = vsel %vm1516, %v6373, %v6377
        %v6379 = vshrl.u32 %v6142, 16
        %v6381 = vrot.slane %v6379, 4
        %v6382 = vor.u32 %v6381, %v6377
        %v6383 = vrot.slane %v6382, 4
        %v6385 = vshll.u32 %v6165, 16
        %v6387 = vrot.slane %v6385, 5
        %v6388 = vsel %vm1516, %v6383, %v6387
        %v6390 = vshrl.u32 %v6143, 16
        %v6392 = vrot.slane %v6390, 4
        %v6393 = vshll.u32 %v6143, 16
        %v6395 = vrot.slane %v6393, 5
        %v6396 = vor.u32 %v6392, %v6395
        %v6397 = vrot.slane %v6396, 4
        %v6399 = vshll.u32 %v6144, 16
        %v6401 = vrot.slane %v6399, 5
        %v6402 = vsel %vm1516, %v6397, %v6401
        %v6403 = vshrl.u32 %v6144, 16
        %v6405 = vrot.slane %v6403, 4
        %v6406 = vor.u32 %v6405, %v6401
        %v6407 = vrot.slane %v6406, 4
        %v6409 = vshll.u32 %v6166, 16
        %v6411 = vrot.slane %v6409, 5
        %v6412 = vsel %vm1516, %v6407, %v6411
        %v6414 = vshrl.u32 %v6145, 16
        %v6416 = vrot.slane %v6414, 4
        %v6417 = vshll.u32 %v6145, 16
        %v6419 = vrot.slane %v6417, 5
        %v6420 = vor.u32 %v6416, %v6419
        %v6421 = vrot.slane %v6420, 4
        %v6423 = vshll.u32 %v6146, 16
        %v6425 = vrot.slane %v6423, 5
        %v6426 = vsel %vm1516, %v6421, %v6425
        %v6427 = vshrl.u32 %v6146, 16
        %v6429 = vrot.slane %v6427, 4
        %v6430 = vor.u32 %v6429, %v6425
        %v6431 = vrot.slane %v6430, 4
        %v6433 = vshll.u32 %v6167, 16
        %v6435 = vrot.slane %v6433, 5
        %v6436 = vsel %vm1516, %v6431, %v6435
        %v6438 = vshrl.u32 %v6147, 16
        %v6440 = vrot.slane %v6438, 4
        %v6441 = vshll.u32 %v6147, 16
        %v6443 = vrot.slane %v6441, 5
        %v6444 = vor.u32 %v6440, %v6443
        %v6445 = vrot.slane %v6444, 4
        %v6447 = vshll.u32 %v6148, 16
        %v6449 = vrot.slane %v6447, 5
        %v6450 = vsel %vm1516, %v6445, %v6449
        %v6451 = vshrl.u32 %v6148, 16
        %v6453 = vrot.slane %v6451, 4
        %v6454 = vor.u32 %v6453, %v6449
        %v6455 = vrot.slane %v6454, 4
        %v6457 = vshll.u32 %v6168, 16
        %v6459 = vrot.slane %v6457, 5
        %v6460 = vsel %vm1516, %v6455, %v6459
        %v6462 = vshrl.u32 %v6149, 16
        %v6464 = vrot.slane %v6462, 4
        %v6465 = vshll.u32 %v6149, 16
        %v6467 = vrot.slane %v6465, 5
        %v6468 = vor.u32 %v6464, %v6467
        %v6469 = vrot.slane %v6468, 4
        %v6471 = vshll.u32 %v6150, 16
        %v6473 = vrot.slane %v6471, 5
        %v6474 = vsel %vm1516, %v6469, %v6473
        %v6475 = vshrl.u32 %v6150, 16
        %v6477 = vrot.slane %v6475, 4
        %v6478 = vor.u32 %v6477, %v6473
        %v6479 = vrot.slane %v6478, 4
        %v6481 = vshll.u32 %v6169, 16
        %v6483 = vrot.slane %v6481, 5
        %v6484 = vsel %vm1516, %v6479, %v6483
        %v6486 = vshrl.u32 %v6151, 16
        %v6488 = vrot.slane %v6486, 4
        %v6489 = vshll.u32 %v6151, 16
        %v6491 = vrot.slane %v6489, 5
        %v6492 = vor.u32 %v6488, %v6491
        %v6493 = vrot.slane %v6492, 4
        %v6495 = vshll.u32 %v6152, 16
        %v6497 = vrot.slane %v6495, 5
        %v6498 = vsel %vm1516, %v6493, %v6497
        %v6499 = vshrl.u32 %v6152, 16
        %v6501 = vrot.slane %v6499, 4
        %v6502 = vor.u32 %v6501, %v6497
        %v6503 = vrot.slane %v6502, 4
        %v6505 = vshll.u32 %v6170, 16
        %v6507 = vrot.slane %v6505, 5
        %v6508 = vsel %vm1516, %v6503, %v6507
        %v6510 = vshrl.u32 %v6153, 16
        %v6512 = vrot.slane %v6510, 4
        %v6513 = vshll.u32 %v6153, 16
        %v6515 = vrot.slane %v6513, 5
        %v6516 = vor.u32 %v6512, %v6515
        %v6517 = vrot.slane %v6516, 4
        %v6519 = vshll.u32 %v6154, 16
        %v6521 = vrot.slane %v6519, 5
        %v6522 = vsel %vm1516, %v6517, %v6521
        %v6523 = vshrl.u32 %v6154, 16
        %v6525 = vrot.slane %v6523, 4
        %v6526 = vor.u32 %v6525, %v6521
        %v6527 = vrot.slane %v6526, 4
        %v6529 = vshll.u32 %v6171, 16
        %v6531 = vrot.slane %v6529, 5
        %v6532 = vsel %vm1516, %v6527, %v6531
        %v6534 = vshrl.u32 %v6155, 16
        %v6536 = vrot.slane %v6534, 4
        %v6537 = vshll.u32 %v6155, 16
        %v6539 = vrot.slane %v6537, 5
        %v6540 = vor.u32 %v6536, %v6539
        %v6541 = vrot.slane %v6540, 4
        %v6543 = vshll.u32 %v6156, 16
        %v6545 = vrot.slane %v6543, 5
        %v6546 = vsel %vm1516, %v6541, %v6545
        %v6547 = vshrl.u32 %v6156, 16
        %v6549 = vrot.slane %v6547, 4
        %v6550 = vor.u32 %v6549, %v6545
        %v6551 = vrot.slane %v6550, 4
        %v6553 = vshll.u32 %v6172, 16
        %v6555 = vrot.slane %v6553, 5
        %v6556 = vsel %vm1516, %v6551, %v6555
        %v6557 = vld [vmem:[%s5400] sm:$0xe]
        %v6558 = vld [vmem:[%s5400 + $0xc] sm:$0xe]
        %v6559 = vld [vmem:[%s5400 + $0x18] sm:$0xe]
        %v6560 = vld [vmem:[%s5400 + $0x24] sm:$0xe]
        %v6561 = vld [vmem:[%s5400 + $0x30] sm:$0xe]
        %v6562 = vld [vmem:[%s5400 + $0x3c] sm:$0xe]
        %v6563 = vld [vmem:[%s5400 + $0x48] sm:$0xe]
        %v6564 = vld [vmem:[%s5400 + $0x54] sm:$0xe]
        %v6565 = vld [vmem:[%s5400 + $0x60] sm:$0xe]
        %v6566 = vld [vmem:[%s5400 + $0x6c] sm:$0xe]
        %v6567 = vld [vmem:[%s5400 + $0x78] sm:$0xe]
        %v6568 = vld [vmem:[%s5400 + $0x84] sm:$0xe]
        %v6569 = vld [vmem:[%s5400 + $0x90] sm:$0xe]
        %v6570 = vld [vmem:[%s5400 + $0x9c] sm:$0xe]
        %v6571 = vld [vmem:[%s5400 + $0xa8] sm:$0xe]
        %v6572 = vld [vmem:[%s5400 + $0xb4] sm:$0xe]
        %v6621 = vrot.slane %v6557, 5
        %v6622 = vrot.slane %v6621, 4
        %v6623 = vrot.slane %v6126, 5
        %v6624 = vsel %vm1967, %v6622, %v6623
        %v6625 = vrot.slane %v6623, 4
        %v6626 = vrot.slane %v6157, 5
        %v6627 = vsel %vm1967, %v6625, %v6626
        %v6628 = vrot.slane %v6558, 5
        %v6629 = vrot.slane %v6628, 4
        %v6630 = vrot.slane %v6128, 5
        %v6631 = vsel %vm1967, %v6629, %v6630
        %v6632 = vrot.slane %v6630, 4
        %v6633 = vrot.slane %v6158, 5
        %v6634 = vsel %vm1967, %v6632, %v6633
        %v6635 = vrot.slane %v6559, 5
        %v6636 = vrot.slane %v6635, 4
        %v6637 = vrot.slane %v6130, 5
        %v6638 = vsel %vm1967, %v6636, %v6637
        %v6639 = vrot.slane %v6637, 4
        %v6640 = vrot.slane %v6159, 5
        %v6641 = vsel %vm1967, %v6639, %v6640
        %v6642 = vrot.slane %v6560, 5
        %v6643 = vrot.slane %v6642, 4
        %v6644 = vrot.slane %v6132, 5
        %v6645 = vsel %vm1967, %v6643, %v6644
        %v6646 = vrot.slane %v6644, 4
        %v6647 = vrot.slane %v6160, 5
        %v6648 = vsel %vm1967, %v6646, %v6647
        %v6649 = vrot.slane %v6561, 5
        %v6650 = vrot.slane %v6649, 4
        %v6651 = vrot.slane %v6134, 5
        %v6652 = vsel %vm1967, %v6650, %v6651
        %v6653 = vrot.slane %v6651, 4
        %v6654 = vrot.slane %v6161, 5
        %v6655 = vsel %vm1967, %v6653, %v6654
        %v6656 = vrot.slane %v6562, 5
        %v6657 = vrot.slane %v6656, 4
        %v6658 = vrot.slane %v6136, 5
        %v6659 = vsel %vm1967, %v6657, %v6658
        %v6660 = vrot.slane %v6658, 4
        %v6661 = vrot.slane %v6162, 5
        %v6662 = vsel %vm1967, %v6660, %v6661
        %v6663 = vrot.slane %v6563, 5
        %v6664 = vrot.slane %v6663, 4
        %v6665 = vrot.slane %v6138, 5
        %v6666 = vsel %vm1967, %v6664, %v6665
        %v6667 = vrot.slane %v6665, 4
        %v6668 = vrot.slane %v6163, 5
        %v6669 = vsel %vm1967, %v6667, %v6668
        %v6670 = vrot.slane %v6564, 5
        %v6671 = vrot.slane %v6670, 4
        %v6672 = vrot.slane %v6140, 5
        %v6673 = vsel %vm1967, %v6671, %v6672
        %v6674 = vrot.slane %v6672, 4
        %v6675 = vrot.slane %v6164, 5
        %v6676 = vsel %vm1967, %v6674, %v6675
        %v6677 = vrot.slane %v6565, 5
        %v6678 = vrot.slane %v6677, 4
        %v6679 = vrot.slane %v6142, 5
        %v6680 = vsel %vm1967, %v6678, %v6679
        %v6681 = vrot.slane %v6679, 4
        %v6682 = vrot.slane %v6165, 5
        %v6683 = vsel %vm1967, %v6681, %v6682
        %v6684 = vrot.slane %v6566, 5
        %v6685 = vrot.slane %v6684, 4
        %v6686 = vrot.slane %v6144, 5
        %v6687 = vsel %vm1967, %v6685, %v6686
        %v6688 = vrot.slane %v6686, 4
        %v6689 = vrot.slane %v6166, 5
        %v6690 = vsel %vm1967, %v6688, %v6689
        %v6691 = vrot.slane %v6567, 5
        %v6692 = vrot.slane %v6691, 4
        %v6693 = vrot.slane %v6146, 5
        %v6694 = vsel %vm1967, %v6692, %v6693
        %v6695 = vrot.slane %v6693, 4
        %v6696 = vrot.slane %v6167, 5
        %v6697 = vsel %vm1967, %v6695, %v6696
        %v6698 = vrot.slane %v6568, 5
        %v6699 = vrot.slane %v6698, 4
        %v6700 = vrot.slane %v6148, 5
        %v6701 = vsel %vm1967, %v6699, %v6700
        %v6702 = vrot.slane %v6700, 4
        %v6703 = vrot.slane %v6168, 5
        %v6704 = vsel %vm1967, %v6702, %v6703
        %v6705 = vrot.slane %v6569, 5
        %v6706 = vrot.slane %v6705, 4
        %v6707 = vrot.slane %v6150, 5
        %v6708 = vsel %vm1967, %v6706, %v6707
        %v6709 = vrot.slane %v6707, 4
        %v6710 = vrot.slane %v6169, 5
        %v6711 = vsel %vm1967, %v6709, %v6710
        %v6712 = vrot.slane %v6570, 5
        %v6713 = vrot.slane %v6712, 4
        %v6714 = vrot.slane %v6152, 5
        %v6715 = vsel %vm1967, %v6713, %v6714
        %v6716 = vrot.slane %v6714, 4
        %v6717 = vrot.slane %v6170, 5
        %v6718 = vsel %vm1967, %v6716, %v6717
        %v6719 = vrot.slane %v6571, 5
        %v6720 = vrot.slane %v6719, 4
        %v6721 = vrot.slane %v6154, 5
        %v6722 = vsel %vm1967, %v6720, %v6721
        %v6723 = vrot.slane %v6721, 4
        %v6724 = vrot.slane %v6171, 5
        %v6725 = vsel %vm1967, %v6723, %v6724
        %v6726 = vrot.slane %v6572, 5
        %v6727 = vrot.slane %v6726, 4
        %v6728 = vrot.slane %v6156, 5
        %v6729 = vsel %vm1967, %v6727, %v6728
        %v6730 = vrot.slane %v6728, 4
        %v6731 = vrot.slane %v6172, 5
        %v6732 = vsel %vm1967, %v6730, %v6731
        %s6733 = scalar_lea.vmem [#allocation3], 24
        %v6734 = vld [vmem:[%s6733] sm:$0xf]
        %v6735 = vld [vmem:[%s6733 + $0x4] sm:$0xf]
        %v6736 = vld [vmem:[%s6733 + $0xc] sm:$0xf]
        %v6737 = vld [vmem:[%s6733 + $0x10] sm:$0xf]
        %v6738 = vld [vmem:[%s6733 + $0x18] sm:$0xf]
        %v6739 = vld [vmem:[%s6733 + $0x1c] sm:$0xf]
        %v6740 = vld [vmem:[%s6733 + $0x24] sm:$0xf]
        %v6741 = vld [vmem:[%s6733 + $0x28] sm:$0xf]
        %v6742 = vld [vmem:[%s6733 + $0x30] sm:$0xf]
        %v6743 = vld [vmem:[%s6733 + $0x34] sm:$0xf]
        %v6744 = vld [vmem:[%s6733 + $0x3c] sm:$0xf]
        %v6745 = vld [vmem:[%s6733 + $0x40] sm:$0xf]
        %v6746 = vld [vmem:[%s6733 + $0x48] sm:$0xf]
        %v6747 = vld [vmem:[%s6733 + $0x4c] sm:$0xf]
        %v6748 = vld [vmem:[%s6733 + $0x54] sm:$0xf]
        %v6749 = vld [vmem:[%s6733 + $0x58] sm:$0xf]
        %v6750 = vld [vmem:[%s6733 + $0x60] sm:$0xf]
        %v6751 = vld [vmem:[%s6733 + $0x64] sm:$0xf]
        %v6752 = vld [vmem:[%s6733 + $0x6c] sm:$0xf]
        %v6753 = vld [vmem:[%s6733 + $0x70] sm:$0xf]
        %v6754 = vld [vmem:[%s6733 + $0x78] sm:$0xf]
        %v6755 = vld [vmem:[%s6733 + $0x7c] sm:$0xf]
        %v6756 = vld [vmem:[%s6733 + $0x84] sm:$0xf]
        %v6757 = vld [vmem:[%s6733 + $0x88] sm:$0xf]
        %v6758 = vld [vmem:[%s6733 + $0x90] sm:$0xf]
        %v6759 = vld [vmem:[%s6733 + $0x94] sm:$0xf]
        %v6760 = vld [vmem:[%s6733 + $0x9c] sm:$0xf]
        %v6761 = vld [vmem:[%s6733 + $0xa0] sm:$0xf]
        %v6762 = vld [vmem:[%s6733 + $0xa8] sm:$0xf]
        %v6763 = vld [vmem:[%s6733 + $0xac] sm:$0xf]
        %v6764 = vld [vmem:[%s6733 + $0xb4] sm:$0xf]
        %v6765 = vld [vmem:[%s6733 + $0xb8] sm:$0xf]
        %v6766 = vld [vmem:[%s6733 + $0x8] sm:$0x1]
        %v6767 = vld [vmem:[%s6733 + $0x14] sm:$0x1]
        %v6768 = vld [vmem:[%s6733 + $0x20] sm:$0x1]
        %v6769 = vld [vmem:[%s6733 + $0x2c] sm:$0x1]
        %v6770 = vld [vmem:[%s6733 + $0x38] sm:$0x1]
        %v6771 = vld [vmem:[%s6733 + $0x44] sm:$0x1]
        %v6772 = vld [vmem:[%s6733 + $0x50] sm:$0x1]
        %v6773 = vld [vmem:[%s6733 + $0x5c] sm:$0x1]
        %v6774 = vld [vmem:[%s6733 + $0x68] sm:$0x1]
        %v6775 = vld [vmem:[%s6733 + $0x74] sm:$0x1]
        %v6776 = vld [vmem:[%s6733 + $0x80] sm:$0x1]
        %v6777 = vld [vmem:[%s6733 + $0x8c] sm:$0x1]
        %v6778 = vld [vmem:[%s6733 + $0x98] sm:$0x1]
        %v6779 = vld [vmem:[%s6733 + $0xa4] sm:$0x1]
        %v6780 = vld [vmem:[%s6733 + $0xb0] sm:$0x1]
        %v6781 = vld [vmem:[%s6733 + $0xbc] sm:$0x1]
        %v6783 = vshrl.u32 %v6734, 16
        %v6785 = vrot.slane %v6783, 4
        %v6786 = vshll.u32 %v6734, 16
        %v6788 = vrot.slane %v6786, 5
        %v6789 = vor.u32 %v6785, %v6788
        %v6790 = vrot.slane %v6789, 4
        %v6792 = vshll.u32 %v6735, 16
        %v6794 = vrot.slane %v6792, 5
        %v6795 = vsel %vm1516, %v6790, %v6794
        %v6796 = vshrl.u32 %v6735, 16
        %v6798 = vrot.slane %v6796, 4
        %v6799 = vor.u32 %v6798, %v6794
        %v6800 = vrot.slane %v6799, 4
        %v6802 = vshll.u32 %v6766, 16
        %v6804 = vrot.slane %v6802, 5
        %v6805 = vsel %vm1516, %v6800, %v6804
        %v6807 = vshrl.u32 %v6736, 16
        %v6809 = vrot.slane %v6807, 4
        %v6810 = vshll.u32 %v6736, 16
        %v6812 = vrot.slane %v6810, 5
        %v6813 = vor.u32 %v6809, %v6812
        %v6814 = vrot.slane %v6813, 4
        %v6816 = vshll.u32 %v6737, 16
        %v6818 = vrot.slane %v6816, 5
        %v6819 = vsel %vm1516, %v6814, %v6818
        %v6820 = vshrl.u32 %v6737, 16
        %v6822 = vrot.slane %v6820, 4
        %v6823 = vor.u32 %v6822, %v6818
        %v6824 = vrot.slane %v6823, 4
        %v6826 = vshll.u32 %v6767, 16
        %v6828 = vrot.slane %v6826, 5
        %v6829 = vsel %vm1516, %v6824, %v6828
        %v6831 = vshrl.u32 %v6738, 16
        %v6833 = vrot.slane %v6831, 4
        %v6834 = vshll.u32 %v6738, 16
        %v6836 = vrot.slane %v6834, 5
        %v6837 = vor.u32 %v6833, %v6836
        %v6838 = vrot.slane %v6837, 4
        %v6840 = vshll.u32 %v6739, 16
        %v6842 = vrot.slane %v6840, 5
        %v6843 = vsel %vm1516, %v6838, %v6842
        %v6844 = vshrl.u32 %v6739, 16
        %v6846 = vrot.slane %v6844, 4
        %v6847 = vor.u32 %v6846, %v6842
        %v6848 = vrot.slane %v6847, 4
        %v6850 = vshll.u32 %v6768, 16
        %v6852 = vrot.slane %v6850, 5
        %v6853 = vsel %vm1516, %v6848, %v6852
        %v6855 = vshrl.u32 %v6740, 16
        %v6857 = vrot.slane %v6855, 4
        %v6858 = vshll.u32 %v6740, 16
        %v6860 = vrot.slane %v6858, 5
        %v6861 = vor.u32 %v6857, %v6860
        %v6862 = vrot.slane %v6861, 4
        %v6864 = vshll.u32 %v6741, 16
        %v6866 = vrot.slane %v6864, 5
        %v6867 = vsel %vm1516, %v6862, %v6866
        %v6868 = vshrl.u32 %v6741, 16
        %v6870 = vrot.slane %v6868, 4
        %v6871 = vor.u32 %v6870, %v6866
        %v6872 = vrot.slane %v6871, 4
        %v6874 = vshll.u32 %v6769, 16
        %v6876 = vrot.slane %v6874, 5
        %v6877 = vsel %vm1516, %v6872, %v6876
        %v6879 = vshrl.u32 %v6742, 16
        %v6881 = vrot.slane %v6879, 4
        %v6882 = vshll.u32 %v6742, 16
        %v6884 = vrot.slane %v6882, 5
        %v6885 = vor.u32 %v6881, %v6884
        %v6886 = vrot.slane %v6885, 4
        %v6888 = vshll.u32 %v6743, 16
        %v6890 = vrot.slane %v6888, 5
        %v6891 = vsel %vm1516, %v6886, %v6890
        %v6892 = vshrl.u32 %v6743, 16
        %v6894 = vrot.slane %v6892, 4
        %v6895 = vor.u32 %v6894, %v6890
        %v6896 = vrot.slane %v6895, 4
        %v6898 = vshll.u32 %v6770, 16
        %v6900 = vrot.slane %v6898, 5
        %v6901 = vsel %vm1516, %v6896, %v6900
        %v6903 = vshrl.u32 %v6744, 16
        %v6905 = vrot.slane %v6903, 4
        %v6906 = vshll.u32 %v6744, 16
        %v6908 = vrot.slane %v6906, 5
        %v6909 = vor.u32 %v6905, %v6908
        %v6910 = vrot.slane %v6909, 4
        %v6912 = vshll.u32 %v6745, 16
        %v6914 = vrot.slane %v6912, 5
        %v6915 = vsel %vm1516, %v6910, %v6914
        %v6916 = vshrl.u32 %v6745, 16
        %v6918 = vrot.slane %v6916, 4
        %v6919 = vor.u32 %v6918, %v6914
        %v6920 = vrot.slane %v6919, 4
        %v6922 = vshll.u32 %v6771, 16
        %v6924 = vrot.slane %v6922, 5
        %v6925 = vsel %vm1516, %v6920, %v6924
        %v6927 = vshrl.u32 %v6746, 16
        %v6929 = vrot.slane %v6927, 4
        %v6930 = vshll.u32 %v6746, 16
        %v6932 = vrot.slane %v6930, 5
        %v6933 = vor.u32 %v6929, %v6932
        %v6934 = vrot.slane %v6933, 4
        %v6936 = vshll.u32 %v6747, 16
        %v6938 = vrot.slane %v6936, 5
        %v6939 = vsel %vm1516, %v6934, %v6938
        %v6940 = vshrl.u32 %v6747, 16
        %v6942 = vrot.slane %v6940, 4
        %v6943 = vor.u32 %v6942, %v6938
        %v6944 = vrot.slane %v6943, 4
        %v6946 = vshll.u32 %v6772, 16
        %v6948 = vrot.slane %v6946, 5
        %v6949 = vsel %vm1516, %v6944, %v6948
        %v6951 = vshrl.u32 %v6748, 16
        %v6953 = vrot.slane %v6951, 4
        %v6954 = vshll.u32 %v6748, 16
        %v6956 = vrot.slane %v6954, 5
        %v6957 = vor.u32 %v6953, %v6956
        %v6958 = vrot.slane %v6957, 4
        %v6960 = vshll.u32 %v6749, 16
        %v6962 = vrot.slane %v6960, 5
        %v6963 = vsel %vm1516, %v6958, %v6962
        %v6964 = vshrl.u32 %v6749, 16
        %v6966 = vrot.slane %v6964, 4
        %v6967 = vor.u32 %v6966, %v6962
        %v6968 = vrot.slane %v6967, 4
        %v6970 = vshll.u32 %v6773, 16
        %v6972 = vrot.slane %v6970, 5
        %v6973 = vsel %vm1516, %v6968, %v6972
        %v6975 = vshrl.u32 %v6750, 16
        %v6977 = vrot.slane %v6975, 4
        %v6978 = vshll.u32 %v6750, 16
        %v6980 = vrot.slane %v6978, 5
        %v6981 = vor.u32 %v6977, %v6980
        %v6982 = vrot.slane %v6981, 4
        %v6984 = vshll.u32 %v6751, 16
        %v6986 = vrot.slane %v6984, 5
        %v6987 = vsel %vm1516, %v6982, %v6986
        %v6988 = vshrl.u32 %v6751, 16
        %v6990 = vrot.slane %v6988, 4
        %v6991 = vor.u32 %v6990, %v6986
        %v6992 = vrot.slane %v6991, 4
        %v6994 = vshll.u32 %v6774, 16
        %v6996 = vrot.slane %v6994, 5
        %v6997 = vsel %vm1516, %v6992, %v6996
        %v6999 = vshrl.u32 %v6752, 16
        %v7001 = vrot.slane %v6999, 4
        %v7002 = vshll.u32 %v6752, 16
        %v7004 = vrot.slane %v7002, 5
        %v7005 = vor.u32 %v7001, %v7004
        %v7006 = vrot.slane %v7005, 4
        %v7008 = vshll.u32 %v6753, 16
        %v7010 = vrot.slane %v7008, 5
        %v7011 = vsel %vm1516, %v7006, %v7010
        %v7012 = vshrl.u32 %v6753, 16
        %v7014 = vrot.slane %v7012, 4
        %v7015 = vor.u32 %v7014, %v7010
        %v7016 = vrot.slane %v7015, 4
        %v7018 = vshll.u32 %v6775, 16
        %v7020 = vrot.slane %v7018, 5
        %v7021 = vsel %vm1516, %v7016, %v7020
        %v7023 = vshrl.u32 %v6754, 16
        %v7025 = vrot.slane %v7023, 4
        %v7026 = vshll.u32 %v6754, 16
        %v7028 = vrot.slane %v7026, 5
        %v7029 = vor.u32 %v7025, %v7028
        %v7030 = vrot.slane %v7029, 4
        %v7032 = vshll.u32 %v6755, 16
        %v7034 = vrot.slane %v7032, 5
        %v7035 = vsel %vm1516, %v7030, %v7034
        %v7036 = vshrl.u32 %v6755, 16
        %v7038 = vrot.slane %v7036, 4
        %v7039 = vor.u32 %v7038, %v7034
        %v7040 = vrot.slane %v7039, 4
        %v7042 = vshll.u32 %v6776, 16
        %v7044 = vrot.slane %v7042, 5
        %v7045 = vsel %vm1516, %v7040, %v7044
        %v7047 = vshrl.u32 %v6756, 16
        %v7049 = vrot.slane %v7047, 4
        %v7050 = vshll.u32 %v6756, 16
        %v7052 = vrot.slane %v7050, 5
        %v7053 = vor.u32 %v7049, %v7052
        %v7054 = vrot.slane %v7053, 4
        %v7056 = vshll.u32 %v6757, 16
        %v7058 = vrot.slane %v7056, 5
        %v7059 = vsel %vm1516, %v7054, %v7058
        %v7060 = vshrl.u32 %v6757, 16
        %v7062 = vrot.slane %v7060, 4
        %v7063 = vor.u32 %v7062, %v7058
        %v7064 = vrot.slane %v7063, 4
        %v7066 = vshll.u32 %v6777, 16
        %v7068 = vrot.slane %v7066, 5
        %v7069 = vsel %vm1516, %v7064, %v7068
        %v7071 = vshrl.u32 %v6758, 16
        %v7073 = vrot.slane %v7071, 4
        %v7074 = vshll.u32 %v6758, 16
        %v7076 = vrot.slane %v7074, 5
        %v7077 = vor.u32 %v7073, %v7076
        %v7078 = vrot.slane %v7077, 4
        %v7080 = vshll.u32 %v6759, 16
        %v7082 = vrot.slane %v7080, 5
        %v7083 = vsel %vm1516, %v7078, %v7082
        %v7084 = vshrl.u32 %v6759, 16
        %v7086 = vrot.slane %v7084, 4
        %v7087 = vor.u32 %v7086, %v7082
        %v7088 = vrot.slane %v7087, 4
        %v7090 = vshll.u32 %v6778, 16
        %v7092 = vrot.slane %v7090, 5
        %v7093 = vsel %vm1516, %v7088, %v7092
        %v7095 = vshrl.u32 %v6760, 16
        %v7097 = vrot.slane %v7095, 4
        %v7098 = vshll.u32 %v6760, 16
        %v7100 = vrot.slane %v7098, 5
        %v7101 = vor.u32 %v7097, %v7100
        %v7102 = vrot.slane %v7101, 4
        %v7104 = vshll.u32 %v6761, 16
        %v7106 = vrot.slane %v7104, 5
        %v7107 = vsel %vm1516, %v7102, %v7106
        %v7108 = vshrl.u32 %v6761, 16
        %v7110 = vrot.slane %v7108, 4
        %v7111 = vor.u32 %v7110, %v7106
        %v7112 = vrot.slane %v7111, 4
        %v7114 = vshll.u32 %v6779, 16
        %v7116 = vrot.slane %v7114, 5
        %v7117 = vsel %vm1516, %v7112, %v7116
        %v7119 = vshrl.u32 %v6762, 16
        %v7121 = vrot.slane %v7119, 4
        %v7122 = vshll.u32 %v6762, 16
        %v7124 = vrot.slane %v7122, 5
        %v7125 = vor.u32 %v7121, %v7124
        %v7126 = vrot.slane %v7125, 4
        %v7128 = vshll.u32 %v6763, 16
        %v7130 = vrot.slane %v7128, 5
        %v7131 = vsel %vm1516, %v7126, %v7130
        %v7132 = vshrl.u32 %v6763, 16
        %v7134 = vrot.slane %v7132, 4
        %v7135 = vor.u32 %v7134, %v7130
        %v7136 = vrot.slane %v7135, 4
        %v7138 = vshll.u32 %v6780, 16
        %v7140 = vrot.slane %v7138, 5
        %v7141 = vsel %vm1516, %v7136, %v7140
        %v7143 = vshrl.u32 %v6764, 16
        %v7145 = vrot.slane %v7143, 4
        %v7146 = vshll.u32 %v6764, 16
        %v7148 = vrot.slane %v7146, 5
        %v7149 = vor.u32 %v7145, %v7148
        %v7150 = vrot.slane %v7149, 4
        %v7152 = vshll.u32 %v6765, 16
        %v7154 = vrot.slane %v7152, 5
        %v7155 = vsel %vm1516, %v7150, %v7154
        %v7156 = vshrl.u32 %v6765, 16
        %v7158 = vrot.slane %v7156, 4
        %v7159 = vor.u32 %v7158, %v7154
        %v7160 = vrot.slane %v7159, 4
        %v7162 = vshll.u32 %v6781, 16
        %v7164 = vrot.slane %v7162, 5
        %v7165 = vsel %vm1516, %v7160, %v7164
        %v7166 = vld [vmem:[%s6733] sm:$0xe]
        %v7167 = vld [vmem:[%s6733 + $0xc] sm:$0xe]
        %v7168 = vld [vmem:[%s6733 + $0x18] sm:$0xe]
        %v7169 = vld [vmem:[%s6733 + $0x24] sm:$0xe]
        %v7170 = vld [vmem:[%s6733 + $0x30] sm:$0xe]
        %v7171 = vld [vmem:[%s6733 + $0x3c] sm:$0xe]
        %v7172 = vld [vmem:[%s6733 + $0x48] sm:$0xe]
        %v7173 = vld [vmem:[%s6733 + $0x54] sm:$0xe]
        %v7174 = vld [vmem:[%s6733 + $0x60] sm:$0xe]
        %v7175 = vld [vmem:[%s6733 + $0x6c] sm:$0xe]
        %v7176 = vld [vmem:[%s6733 + $0x78] sm:$0xe]
        %v7177 = vld [vmem:[%s6733 + $0x84] sm:$0xe]
        %v7178 = vld [vmem:[%s6733 + $0x90] sm:$0xe]
        %v7179 = vld [vmem:[%s6733 + $0x9c] sm:$0xe]
        %v7180 = vld [vmem:[%s6733 + $0xa8] sm:$0xe]
        %v7181 = vld [vmem:[%s6733 + $0xb4] sm:$0xe]
        %v7230 = vrot.slane %v7166, 5
        %v7231 = vrot.slane %v7230, 4
        %v7232 = vrot.slane %v6735, 5
        %v7233 = vsel %vm1967, %v7231, %v7232
        %v7234 = vrot.slane %v7232, 4
        %v7235 = vrot.slane %v6766, 5
        %v7236 = vsel %vm1967, %v7234, %v7235
        %v7237 = vrot.slane %v7167, 5
        %v7238 = vrot.slane %v7237, 4
        %v7239 = vrot.slane %v6737, 5
        %v7240 = vsel %vm1967, %v7238, %v7239
        %v7241 = vrot.slane %v7239, 4
        %v7242 = vrot.slane %v6767, 5
        %v7243 = vsel %vm1967, %v7241, %v7242
        %v7244 = vrot.slane %v7168, 5
        %v7245 = vrot.slane %v7244, 4
        %v7246 = vrot.slane %v6739, 5
        %v7247 = vsel %vm1967, %v7245, %v7246
        %v7248 = vrot.slane %v7246, 4
        %v7249 = vrot.slane %v6768, 5
        %v7250 = vsel %vm1967, %v7248, %v7249
        %v7251 = vrot.slane %v7169, 5
        %v7252 = vrot.slane %v7251, 4
        %v7253 = vrot.slane %v6741, 5
        %v7254 = vsel %vm1967, %v7252, %v7253
        %v7255 = vrot.slane %v7253, 4
        %v7256 = vrot.slane %v6769, 5
        %v7257 = vsel %vm1967, %v7255, %v7256
        %v7258 = vrot.slane %v7170, 5
        %v7259 = vrot.slane %v7258, 4
        %v7260 = vrot.slane %v6743, 5
        %v7261 = vsel %vm1967, %v7259, %v7260
        %v7262 = vrot.slane %v7260, 4
        %v7263 = vrot.slane %v6770, 5
        %v7264 = vsel %vm1967, %v7262, %v7263
        %v7265 = vrot.slane %v7171, 5
        %v7266 = vrot.slane %v7265, 4
        %v7267 = vrot.slane %v6745, 5
        %v7268 = vsel %vm1967, %v7266, %v7267
        %v7269 = vrot.slane %v7267, 4
        %v7270 = vrot.slane %v6771, 5
        %v7271 = vsel %vm1967, %v7269, %v7270
        %v7272 = vrot.slane %v7172, 5
        %v7273 = vrot.slane %v7272, 4
        %v7274 = vrot.slane %v6747, 5
        %v7275 = vsel %vm1967, %v7273, %v7274
        %v7276 = vrot.slane %v7274, 4
        %v7277 = vrot.slane %v6772, 5
        %v7278 = vsel %vm1967, %v7276, %v7277
        %v7279 = vrot.slane %v7173, 5
        %v7280 = vrot.slane %v7279, 4
        %v7281 = vrot.slane %v6749, 5
        %v7282 = vsel %vm1967, %v7280, %v7281
        %v7283 = vrot.slane %v7281, 4
        %v7284 = vrot.slane %v6773, 5
        %v7285 = vsel %vm1967, %v7283, %v7284
        %v7286 = vrot.slane %v7174, 5
        %v7287 = vrot.slane %v7286, 4
        %v7288 = vrot.slane %v6751, 5
        %v7289 = vsel %vm1967, %v7287, %v7288
        %v7290 = vrot.slane %v7288, 4
        %v7291 = vrot.slane %v6774, 5
        %v7292 = vsel %vm1967, %v7290, %v7291
        %v7293 = vrot.slane %v7175, 5
        %v7294 = vrot.slane %v7293, 4
        %v7295 = vrot.slane %v6753, 5
        %v7296 = vsel %vm1967, %v7294, %v7295
        %v7297 = vrot.slane %v7295, 4
        %v7298 = vrot.slane %v6775, 5
        %v7299 = vsel %vm1967, %v7297, %v7298
        %v7300 = vrot.slane %v7176, 5
        %v7301 = vrot.slane %v7300, 4
        %v7302 = vrot.slane %v6755, 5
        %v7303 = vsel %vm1967, %v7301, %v7302
        %v7304 = vrot.slane %v7302, 4
        %v7305 = vrot.slane %v6776, 5
        %v7306 = vsel %vm1967, %v7304, %v7305
        %v7307 = vrot.slane %v7177, 5
        %v7308 = vrot.slane %v7307, 4
        %v7309 = vrot.slane %v6757, 5
        %v7310 = vsel %vm1967, %v7308, %v7309
        %v7311 = vrot.slane %v7309, 4
        %v7312 = vrot.slane %v6777, 5
        %v7313 = vsel %vm1967, %v7311, %v7312
        %v7314 = vrot.slane %v7178, 5
        %v7315 = vrot.slane %v7314, 4
        %v7316 = vrot.slane %v6759, 5
        %v7317 = vsel %vm1967, %v7315, %v7316
        %v7318 = vrot.slane %v7316, 4
        %v7319 = vrot.slane %v6778, 5
        %v7320 = vsel %vm1967, %v7318, %v7319
        %v7321 = vrot.slane %v7179, 5
        %v7322 = vrot.slane %v7321, 4
        %v7323 = vrot.slane %v6761, 5
        %v7324 = vsel %vm1967, %v7322, %v7323
        %v7325 = vrot.slane %v7323, 4
        %v7326 = vrot.slane %v6779, 5
        %v7327 = vsel %vm1967, %v7325, %v7326
        %v7328 = vrot.slane %v7180, 5
        %v7329 = vrot.slane %v7328, 4
        %v7330 = vrot.slane %v6763, 5
        %v7331 = vsel %vm1967, %v7329, %v7330
        %v7332 = vrot.slane %v7330, 4
        %v7333 = vrot.slane %v6780, 5
        %v7334 = vsel %vm1967, %v7332, %v7333
        %v7335 = vrot.slane %v7181, 5
        %v7336 = vrot.slane %v7335, 4
        %v7337 = vrot.slane %v6765, 5
        %v7338 = vsel %vm1967, %v7336, %v7337
        %v7339 = vrot.slane %v7337, 4
        %v7340 = vrot.slane %v6781, 5
        %v7341 = vsel %vm1967, %v7339, %v7340
        %v7358 = vunpack.c.l.b16 %v5517
        %v7359 = vunpack.c.l.b16 %v5518
        %v7360 = vunpack.c.l.b16 %v5519
        %v7361 = vunpack.c.l.b16 %v5520
        %v7362 = vunpack.c.l.b16 %v5521
        %v7363 = vunpack.c.l.b16 %v5522
        %v7364 = vunpack.c.l.b16 %v5523
        %v7365 = vunpack.c.l.b16 %v5524
        %v7366 = vunpack.c.l.b16 %v5525
        %v7367 = vunpack.c.l.b16 %v5526
        %v7368 = vunpack.c.l.b16 %v5527
        %v7369 = vunpack.c.l.b16 %v5528
        %v7370 = vunpack.c.l.b16 %v5529
        %v7371 = vunpack.c.l.b16 %v5530
        %v7372 = vunpack.c.l.b16 %v5531
        %v7373 = vunpack.c.l.b16 %v5532
        %v7374 = vunpack.c.l.b16 %v5533
        %v7375 = vunpack.c.l.b16 %v5534
        %v7376 = vunpack.c.l.b16 %v5535
        %v7377 = vunpack.c.l.b16 %v5536
        %v7378 = vunpack.c.l.b16 %v5537
        %v7379 = vunpack.c.l.b16 %v5538
        %v7380 = vunpack.c.l.b16 %v5539
        %v7381 = vunpack.c.l.b16 %v5540
        %v7382 = vunpack.c.l.b16 %v5541
        %v7383 = vunpack.c.l.b16 %v5542
        %v7384 = vunpack.c.l.b16 %v5543
        %v7385 = vunpack.c.l.b16 %v5544
        %v7386 = vunpack.c.l.b16 %v5545
        %v7387 = vunpack.c.l.b16 %v5546
        %v7388 = vunpack.c.l.b16 %v5547
        %v7389 = vunpack.c.l.b16 %v5548
        %v7390 = vpack.c.b16 %v7359, %v7358
        %v7391 = vpack.c.b16 %v7361, %v7360
        %v7392 = vpack.c.b16 %v7363, %v7362
        %v7393 = vpack.c.b16 %v7365, %v7364
        %v7394 = vpack.c.b16 %v7367, %v7366
        %v7395 = vpack.c.b16 %v7369, %v7368
        %v7396 = vpack.c.b16 %v7371, %v7370
        %v7397 = vpack.c.b16 %v7373, %v7372
        %v7398 = vpack.c.b16 %v7375, %v7374
        %v7399 = vpack.c.b16 %v7377, %v7376
        %v7400 = vpack.c.b16 %v7379, %v7378
        %v7401 = vpack.c.b16 %v7381, %v7380
        %v7402 = vpack.c.b16 %v7383, %v7382
        %v7403 = vpack.c.b16 %v7385, %v7384
        %v7404 = vpack.c.b16 %v7387, %v7386
        %v7405 = vpack.c.b16 %v7389, %v7388
        %v7406 = vunpack.c.l.b16 %v5578
        %v7407 = vunpack.c.l.b16 %v5588
        %v7408 = vunpack.c.l.b16 %v5602
        %v7409 = vunpack.c.l.b16 %v5612
        %v7410 = vunpack.c.l.b16 %v5626
        %v7411 = vunpack.c.l.b16 %v5636
        %v7412 = vunpack.c.l.b16 %v5650
        %v7413 = vunpack.c.l.b16 %v5660
        %v7414 = vunpack.c.l.b16 %v5674
        %v7415 = vunpack.c.l.b16 %v5684
        %v7416 = vunpack.c.l.b16 %v5698
        %v7417 = vunpack.c.l.b16 %v5708
        %v7418 = vunpack.c.l.b16 %v5722
        %v7419 = vunpack.c.l.b16 %v5732
        %v7420 = vunpack.c.l.b16 %v5746
        %v7421 = vunpack.c.l.b16 %v5756
        %v7422 = vunpack.c.l.b16 %v5770
        %v7423 = vunpack.c.l.b16 %v5780
        %v7424 = vunpack.c.l.b16 %v5794
        %v7425 = vunpack.c.l.b16 %v5804
        %v7426 = vunpack.c.l.b16 %v5818
        %v7427 = vunpack.c.l.b16 %v5828
        %v7428 = vunpack.c.l.b16 %v5842
        %v7429 = vunpack.c.l.b16 %v5852
        %v7430 = vunpack.c.l.b16 %v5866
        %v7431 = vunpack.c.l.b16 %v5876
        %v7432 = vunpack.c.l.b16 %v5890
        %v7433 = vunpack.c.l.b16 %v5900
        %v7434 = vunpack.c.l.b16 %v5914
        %v7435 = vunpack.c.l.b16 %v5924
        %v7436 = vunpack.c.l.b16 %v5938
        %v7437 = vunpack.c.l.b16 %v5948
        %v7438 = vpack.c.b16 %v7407, %v7406
        %v7439 = vpack.c.b16 %v7409, %v7408
        %v7440 = vpack.c.b16 %v7411, %v7410
        %v7441 = vpack.c.b16 %v7413, %v7412
        %v7442 = vpack.c.b16 %v7415, %v7414
        %v7443 = vpack.c.b16 %v7417, %v7416
        %v7444 = vpack.c.b16 %v7419, %v7418
        %v7445 = vpack.c.b16 %v7421, %v7420
        %v7446 = vpack.c.b16 %v7423, %v7422
        %v7447 = vpack.c.b16 %v7425, %v7424
        %v7448 = vpack.c.b16 %v7427, %v7426
        %v7449 = vpack.c.b16 %v7429, %v7428
        %v7450 = vpack.c.b16 %v7431, %v7430
        %v7451 = vpack.c.b16 %v7433, %v7432
        %v7452 = vpack.c.b16 %v7435, %v7434
        %v7453 = vpack.c.b16 %v7437, %v7436
        %7454 = vrot.lane.b32.xlu0 %v7438, 32
        %v7455 = vpop.permute.xlu0 %7454
        %7456 = vrot.lane.b32.xlu0 %v7439, 32
        %v7457 = vpop.permute.xlu0 %7456
        %7458 = vrot.lane.b32.xlu0 %v7440, 32
        %v7459 = vpop.permute.xlu0 %7458
        %7460 = vrot.lane.b32.xlu0 %v7441, 32
        %v7461 = vpop.permute.xlu0 %7460
        %7462 = vrot.lane.b32.xlu0 %v7442, 32
        %v7463 = vpop.permute.xlu0 %7462
        %7464 = vrot.lane.b32.xlu0 %v7443, 32
        %v7465 = vpop.permute.xlu0 %7464
        %7466 = vrot.lane.b32.xlu0 %v7444, 32
        %v7467 = vpop.permute.xlu0 %7466
        %7468 = vrot.lane.b32.xlu0 %v7445, 32
        %v7469 = vpop.permute.xlu0 %7468
        %7470 = vrot.lane.b32.xlu0 %v7446, 32
        %v7471 = vpop.permute.xlu0 %7470
        %7472 = vrot.lane.b32.xlu0 %v7447, 32
        %v7473 = vpop.permute.xlu0 %7472
        %7474 = vrot.lane.b32.xlu0 %v7448, 32
        %v7475 = vpop.permute.xlu0 %7474
        %7476 = vrot.lane.b32.xlu0 %v7449, 32
        %v7477 = vpop.permute.xlu0 %7476
        %7478 = vrot.lane.b32.xlu0 %v7450, 32
        %v7479 = vpop.permute.xlu0 %7478
        %7480 = vrot.lane.b32.xlu0 %v7451, 32
        %v7481 = vpop.permute.xlu0 %7480
        %7482 = vrot.lane.b32.xlu0 %v7452, 32
        %v7483 = vpop.permute.xlu0 %7482
        %7484 = vrot.lane.b32.xlu0 %v7453, 32
        %v7485 = vpop.permute.xlu0 %7484
        %v7486 = vunpack.c.l.b16 %v6016
        %v7487 = vunpack.c.l.b16 %v6019
        %v7488 = vunpack.c.l.b16 %v6023
        %v7489 = vunpack.c.l.b16 %v6026
        %v7490 = vunpack.c.l.b16 %v6030
        %v7491 = vunpack.c.l.b16 %v6033
        %v7492 = vunpack.c.l.b16 %v6037
        %v7493 = vunpack.c.l.b16 %v6040
        %v7494 = vunpack.c.l.b16 %v6044
        %v7495 = vunpack.c.l.b16 %v6047
        %v7496 = vunpack.c.l.b16 %v6051
        %v7497 = vunpack.c.l.b16 %v6054
        %v7498 = vunpack.c.l.b16 %v6058
        %v7499 = vunpack.c.l.b16 %v6061
        %v7500 = vunpack.c.l.b16 %v6065
        %v7501 = vunpack.c.l.b16 %v6068
        %v7502 = vunpack.c.l.b16 %v6072
        %v7503 = vunpack.c.l.b16 %v6075
        %v7504 = vunpack.c.l.b16 %v6079
        %v7505 = vunpack.c.l.b16 %v6082
        %v7506 = vunpack.c.l.b16 %v6086
        %v7507 = vunpack.c.l.b16 %v6089
        %v7508 = vunpack.c.l.b16 %v6093
        %v7509 = vunpack.c.l.b16 %v6096
        %v7510 = vunpack.c.l.b16 %v6100
        %v7511 = vunpack.c.l.b16 %v6103
        %v7512 = vunpack.c.l.b16 %v6107
        %v7513 = vunpack.c.l.b16 %v6110
        %v7514 = vunpack.c.l.b16 %v6114
        %v7515 = vunpack.c.l.b16 %v6117
        %v7516 = vunpack.c.l.b16 %v6121
        %v7517 = vunpack.c.l.b16 %v6124
        %v7518 = vpack.c.b16 %v7487, %v7486
        %v7519 = vpack.c.b16 %v7489, %v7488
        %v7520 = vpack.c.b16 %v7491, %v7490
        %v7521 = vpack.c.b16 %v7493, %v7492
        %v7522 = vpack.c.b16 %v7495, %v7494
        %v7523 = vpack.c.b16 %v7497, %v7496
        %v7524 = vpack.c.b16 %v7499, %v7498
        %v7525 = vpack.c.b16 %v7501, %v7500
        %v7526 = vpack.c.b16 %v7503, %v7502
        %v7527 = vpack.c.b16 %v7505, %v7504
        %v7528 = vpack.c.b16 %v7507, %v7506
        %v7529 = vpack.c.b16 %v7509, %v7508
        %v7530 = vpack.c.b16 %v7511, %v7510
        %v7531 = vpack.c.b16 %v7513, %v7512
        %v7532 = vpack.c.b16 %v7515, %v7514
        %v7533 = vpack.c.b16 %v7517, %v7516
        %7534 = vrot.lane.b32.xlu0 %v7518, 64
        %v7535 = vpop.permute.xlu0 %7534
        %7536 = vrot.lane.b32.xlu0 %v7519, 64
        %v7537 = vpop.permute.xlu0 %7536
        %7538 = vrot.lane.b32.xlu0 %v7520, 64
        %v7539 = vpop.permute.xlu0 %7538
        %7540 = vrot.lane.b32.xlu0 %v7521, 64
        %v7541 = vpop.permute.xlu0 %7540
        %7542 = vrot.lane.b32.xlu0 %v7522, 64
        %v7543 = vpop.permute.xlu0 %7542
        %7544 = vrot.lane.b32.xlu0 %v7523, 64
        %v7545 = vpop.permute.xlu0 %7544
        %7546 = vrot.lane.b32.xlu0 %v7524, 64
        %v7547 = vpop.permute.xlu0 %7546
        %7548 = vrot.lane.b32.xlu0 %v7525, 64
        %v7549 = vpop.permute.xlu0 %7548
        %7550 = vrot.lane.b32.xlu0 %v7526, 64
        %v7551 = vpop.permute.xlu0 %7550
        %7552 = vrot.lane.b32.xlu0 %v7527, 64
        %v7553 = vpop.permute.xlu0 %7552
        %7554 = vrot.lane.b32.xlu0 %v7528, 64
        %v7555 = vpop.permute.xlu0 %7554
        %7556 = vrot.lane.b32.xlu0 %v7529, 64
        %v7557 = vpop.permute.xlu0 %7556
        %7558 = vrot.lane.b32.xlu0 %v7530, 64
        %v7559 = vpop.permute.xlu0 %7558
        %7560 = vrot.lane.b32.xlu0 %v7531, 64
        %v7561 = vpop.permute.xlu0 %7560
        %7562 = vrot.lane.b32.xlu0 %v7532, 64
        %v7563 = vpop.permute.xlu0 %7562
        %7564 = vrot.lane.b32.xlu0 %v7533, 64
        %v7565 = vpop.permute.xlu0 %7564
        %v7582 = vunpack.c.l.b16 %v6125
        %v7583 = vunpack.c.l.b16 %v6126
        %v7584 = vunpack.c.l.b16 %v6127
        %v7585 = vunpack.c.l.b16 %v6128
        %v7586 = vunpack.c.l.b16 %v6129
        %v7587 = vunpack.c.l.b16 %v6130
        %v7588 = vunpack.c.l.b16 %v6131
        %v7589 = vunpack.c.l.b16 %v6132
        %v7590 = vunpack.c.l.b16 %v6133
        %v7591 = vunpack.c.l.b16 %v6134
        %v7592 = vunpack.c.l.b16 %v6135
        %v7593 = vunpack.c.l.b16 %v6136
        %v7594 = vunpack.c.l.b16 %v6137
        %v7595 = vunpack.c.l.b16 %v6138
        %v7596 = vunpack.c.l.b16 %v6139
        %v7597 = vunpack.c.l.b16 %v6140
        %v7598 = vunpack.c.l.b16 %v6141
        %v7599 = vunpack.c.l.b16 %v6142
        %v7600 = vunpack.c.l.b16 %v6143
        %v7601 = vunpack.c.l.b16 %v6144
        %v7602 = vunpack.c.l.b16 %v6145
        %v7603 = vunpack.c.l.b16 %v6146
        %v7604 = vunpack.c.l.b16 %v6147
        %v7605 = vunpack.c.l.b16 %v6148
        %v7606 = vunpack.c.l.b16 %v6149
        %v7607 = vunpack.c.l.b16 %v6150
        %v7608 = vunpack.c.l.b16 %v6151
        %v7609 = vunpack.c.l.b16 %v6152
        %v7610 = vunpack.c.l.b16 %v6153
        %v7611 = vunpack.c.l.b16 %v6154
        %v7612 = vunpack.c.l.b16 %v6155
        %v7613 = vunpack.c.l.b16 %v6156
        %v7614 = vpack.c.b16 %v7583, %v7582
        %v7615 = vpack.c.b16 %v7585, %v7584
        %v7616 = vpack.c.b16 %v7587, %v7586
        %v7617 = vpack.c.b16 %v7589, %v7588
        %v7618 = vpack.c.b16 %v7591, %v7590
        %v7619 = vpack.c.b16 %v7593, %v7592
        %v7620 = vpack.c.b16 %v7595, %v7594
        %v7621 = vpack.c.b16 %v7597, %v7596
        %v7622 = vpack.c.b16 %v7599, %v7598
        %v7623 = vpack.c.b16 %v7601, %v7600
        %v7624 = vpack.c.b16 %v7603, %v7602
        %v7625 = vpack.c.b16 %v7605, %v7604
        %v7626 = vpack.c.b16 %v7607, %v7606
        %v7627 = vpack.c.b16 %v7609, %v7608
        %v7628 = vpack.c.b16 %v7611, %v7610
        %v7629 = vpack.c.b16 %v7613, %v7612
        %7630 = vrot.lane.b32.xlu0 %v7614, 96
        %v7631 = vpop.permute.xlu0 %7630
        %7632 = vrot.lane.b32.xlu0 %v7615, 96
        %v7633 = vpop.permute.xlu0 %7632
        %7634 = vrot.lane.b32.xlu0 %v7616, 96
        %v7635 = vpop.permute.xlu0 %7634
        %7636 = vrot.lane.b32.xlu0 %v7617, 96
        %v7637 = vpop.permute.xlu0 %7636
        %7638 = vrot.lane.b32.xlu0 %v7618, 96
        %v7639 = vpop.permute.xlu0 %7638
        %7640 = vrot.lane.b32.xlu0 %v7619, 96
        %v7641 = vpop.permute.xlu0 %7640
        %7642 = vrot.lane.b32.xlu0 %v7620, 96
        %v7643 = vpop.permute.xlu0 %7642
        %7644 = vrot.lane.b32.xlu0 %v7621, 96
        %v7645 = vpop.permute.xlu0 %7644
        %7646 = vrot.lane.b32.xlu0 %v7622, 96
        %v7647 = vpop.permute.xlu0 %7646
        %7648 = vrot.lane.b32.xlu0 %v7623, 96
        %v7649 = vpop.permute.xlu0 %7648
        %7650 = vrot.lane.b32.xlu0 %v7624, 96
        %v7651 = vpop.permute.xlu0 %7650
        %7652 = vrot.lane.b32.xlu0 %v7625, 96
        %v7653 = vpop.permute.xlu0 %7652
        %7654 = vrot.lane.b32.xlu0 %v7626, 96
        %v7655 = vpop.permute.xlu0 %7654
        %7656 = vrot.lane.b32.xlu0 %v7627, 96
        %v7657 = vpop.permute.xlu0 %7656
        %7658 = vrot.lane.b32.xlu0 %v7628, 96
        %v7659 = vpop.permute.xlu0 %7658
        %7660 = vrot.lane.b32.xlu0 %v7629, 96
        %v7661 = vpop.permute.xlu0 %7660
        %v7662 = vunpack.c.l.b16 %v6186
        %v7663 = vunpack.c.l.b16 %v6196
        %v7664 = vunpack.c.l.b16 %v6210
        %v7665 = vunpack.c.l.b16 %v6220
        %v7666 = vunpack.c.l.b16 %v6234
        %v7667 = vunpack.c.l.b16 %v6244
        %v7668 = vunpack.c.l.b16 %v6258
        %v7669 = vunpack.c.l.b16 %v6268
        %v7670 = vunpack.c.l.b16 %v6282
        %v7671 = vunpack.c.l.b16 %v6292
        %v7672 = vunpack.c.l.b16 %v6306
        %v7673 = vunpack.c.l.b16 %v6316
        %v7674 = vunpack.c.l.b16 %v6330
        %v7675 = vunpack.c.l.b16 %v6340
        %v7676 = vunpack.c.l.b16 %v6354
        %v7677 = vunpack.c.l.b16 %v6364
        %v7678 = vunpack.c.l.b16 %v6378
        %v7679 = vunpack.c.l.b16 %v6388
        %v7680 = vunpack.c.l.b16 %v6402
        %v7681 = vunpack.c.l.b16 %v6412
        %v7682 = vunpack.c.l.b16 %v6426
        %v7683 = vunpack.c.l.b16 %v6436
        %v7684 = vunpack.c.l.b16 %v6450
        %v7685 = vunpack.c.l.b16 %v6460
        %v7686 = vunpack.c.l.b16 %v6474
        %v7687 = vunpack.c.l.b16 %v6484
        %v7688 = vunpack.c.l.b16 %v6498
        %v7689 = vunpack.c.l.b16 %v6508
        %v7690 = vunpack.c.l.b16 %v6522
        %v7691 = vunpack.c.l.b16 %v6532
        %v7692 = vunpack.c.l.b16 %v6546
        %v7693 = vunpack.c.l.b16 %v6556
        %v7694 = vpack.c.b16 %v7663, %v7662
        %v7695 = vpack.c.b16 %v7665, %v7664
        %v7696 = vpack.c.b16 %v7667, %v7666
        %v7697 = vpack.c.b16 %v7669, %v7668
        %v7698 = vpack.c.b16 %v7671, %v7670
        %v7699 = vpack.c.b16 %v7673, %v7672
        %v7700 = vpack.c.b16 %v7675, %v7674
        %v7701 = vpack.c.b16 %v7677, %v7676
        %v7702 = vpack.c.b16 %v7679, %v7678
        %v7703 = vpack.c.b16 %v7681, %v7680
        %v7704 = vpack.c.b16 %v7683, %v7682
        %v7705 = vpack.c.b16 %v7685, %v7684
        %v7706 = vpack.c.b16 %v7687, %v7686
        %v7707 = vpack.c.b16 %v7689, %v7688
        %v7708 = vpack.c.b16 %v7691, %v7690
        %v7709 = vpack.c.b16 %v7693, %v7692
        %v7710 = vunpack.c.l.b16 %v6624
        %v7711 = vunpack.c.l.b16 %v6627
        %v7712 = vunpack.c.l.b16 %v6631
        %v7713 = vunpack.c.l.b16 %v6634
        %v7714 = vunpack.c.l.b16 %v6638
        %v7715 = vunpack.c.l.b16 %v6641
        %v7716 = vunpack.c.l.b16 %v6645
        %v7717 = vunpack.c.l.b16 %v6648
        %v7718 = vunpack.c.l.b16 %v6652
        %v7719 = vunpack.c.l.b16 %v6655
        %v7720 = vunpack.c.l.b16 %v6659
        %v7721 = vunpack.c.l.b16 %v6662
        %v7722 = vunpack.c.l.b16 %v6666
        %v7723 = vunpack.c.l.b16 %v6669
        %v7724 = vunpack.c.l.b16 %v6673
        %v7725 = vunpack.c.l.b16 %v6676
        %v7726 = vunpack.c.l.b16 %v6680
        %v7727 = vunpack.c.l.b16 %v6683
        %v7728 = vunpack.c.l.b16 %v6687
        %v7729 = vunpack.c.l.b16 %v6690
        %v7730 = vunpack.c.l.b16 %v6694
        %v7731 = vunpack.c.l.b16 %v6697
        %v7732 = vunpack.c.l.b16 %v6701
        %v7733 = vunpack.c.l.b16 %v6704
        %v7734 = vunpack.c.l.b16 %v6708
        %v7735 = vunpack.c.l.b16 %v6711
        %v7736 = vunpack.c.l.b16 %v6715
        %v7737 = vunpack.c.l.b16 %v6718
        %v7738 = vunpack.c.l.b16 %v6722
        %v7739 = vunpack.c.l.b16 %v6725
        %v7740 = vunpack.c.l.b16 %v6729
        %v7741 = vunpack.c.l.b16 %v6732
        %v7742 = vpack.c.b16 %v7711, %v7710
        %v7743 = vpack.c.b16 %v7713, %v7712
        %v7744 = vpack.c.b16 %v7715, %v7714
        %v7745 = vpack.c.b16 %v7717, %v7716
        %v7746 = vpack.c.b16 %v7719, %v7718
        %v7747 = vpack.c.b16 %v7721, %v7720
        %v7748 = vpack.c.b16 %v7723, %v7722
        %v7749 = vpack.c.b16 %v7725, %v7724
        %v7750 = vpack.c.b16 %v7727, %v7726
        %v7751 = vpack.c.b16 %v7729, %v7728
        %v7752 = vpack.c.b16 %v7731, %v7730
        %v7753 = vpack.c.b16 %v7733, %v7732
        %v7754 = vpack.c.b16 %v7735, %v7734
        %v7755 = vpack.c.b16 %v7737, %v7736
        %v7756 = vpack.c.b16 %v7739, %v7738
        %v7757 = vpack.c.b16 %v7741, %v7740
        %7758 = vrot.lane.b32.xlu0 %v7742, 32
        %v7759 = vpop.permute.xlu0 %7758
        %7760 = vrot.lane.b32.xlu0 %v7743, 32
        %v7761 = vpop.permute.xlu0 %7760
        %7762 = vrot.lane.b32.xlu0 %v7744, 32
        %v7763 = vpop.permute.xlu0 %7762
        %7764 = vrot.lane.b32.xlu0 %v7745, 32
        %v7765 = vpop.permute.xlu0 %7764
        %7766 = vrot.lane.b32.xlu0 %v7746, 32
        %v7767 = vpop.permute.xlu0 %7766
        %7768 = vrot.lane.b32.xlu0 %v7747, 32
        %v7769 = vpop.permute.xlu0 %7768
        %7770 = vrot.lane.b32.xlu0 %v7748, 32
        %v7771 = vpop.permute.xlu0 %7770
        %7772 = vrot.lane.b32.xlu0 %v7749, 32
        %v7773 = vpop.permute.xlu0 %7772
        %7774 = vrot.lane.b32.xlu0 %v7750, 32
        %v7775 = vpop.permute.xlu0 %7774
        %7776 = vrot.lane.b32.xlu0 %v7751, 32
        %v7777 = vpop.permute.xlu0 %7776
        %7778 = vrot.lane.b32.xlu0 %v7752, 32
        %v7779 = vpop.permute.xlu0 %7778
        %7780 = vrot.lane.b32.xlu0 %v7753, 32
        %v7781 = vpop.permute.xlu0 %7780
        %7782 = vrot.lane.b32.xlu0 %v7754, 32
        %v7783 = vpop.permute.xlu0 %7782
        %7784 = vrot.lane.b32.xlu0 %v7755, 32
        %v7785 = vpop.permute.xlu0 %7784
        %7786 = vrot.lane.b32.xlu0 %v7756, 32
        %v7787 = vpop.permute.xlu0 %7786
        %7788 = vrot.lane.b32.xlu0 %v7757, 32
        %v7789 = vpop.permute.xlu0 %7788
        %v7806 = vunpack.c.l.b16 %v6734
        %v7807 = vunpack.c.l.b16 %v6735
        %v7808 = vunpack.c.l.b16 %v6736
        %v7809 = vunpack.c.l.b16 %v6737
        %v7810 = vunpack.c.l.b16 %v6738
        %v7811 = vunpack.c.l.b16 %v6739
        %v7812 = vunpack.c.l.b16 %v6740
        %v7813 = vunpack.c.l.b16 %v6741
        %v7814 = vunpack.c.l.b16 %v6742
        %v7815 = vunpack.c.l.b16 %v6743
        %v7816 = vunpack.c.l.b16 %v6744
        %v7817 = vunpack.c.l.b16 %v6745
        %v7818 = vunpack.c.l.b16 %v6746
        %v7819 = vunpack.c.l.b16 %v6747
        %v7820 = vunpack.c.l.b16 %v6748
        %v7821 = vunpack.c.l.b16 %v6749
        %v7822 = vunpack.c.l.b16 %v6750
        %v7823 = vunpack.c.l.b16 %v6751
        %v7824 = vunpack.c.l.b16 %v6752
        %v7825 = vunpack.c.l.b16 %v6753
        %v7826 = vunpack.c.l.b16 %v6754
        %v7827 = vunpack.c.l.b16 %v6755
        %v7828 = vunpack.c.l.b16 %v6756
        %v7829 = vunpack.c.l.b16 %v6757
        %v7830 = vunpack.c.l.b16 %v6758
        %v7831 = vunpack.c.l.b16 %v6759
        %v7832 = vunpack.c.l.b16 %v6760
        %v7833 = vunpack.c.l.b16 %v6761
        %v7834 = vunpack.c.l.b16 %v6762
        %v7835 = vunpack.c.l.b16 %v6763
        %v7836 = vunpack.c.l.b16 %v6764
        %v7837 = vunpack.c.l.b16 %v6765
        %v7838 = vpack.c.b16 %v7807, %v7806
        %v7839 = vpack.c.b16 %v7809, %v7808
        %v7840 = vpack.c.b16 %v7811, %v7810
        %v7841 = vpack.c.b16 %v7813, %v7812
        %v7842 = vpack.c.b16 %v7815, %v7814
        %v7843 = vpack.c.b16 %v7817, %v7816
        %v7844 = vpack.c.b16 %v7819, %v7818
        %v7845 = vpack.c.b16 %v7821, %v7820
        %v7846 = vpack.c.b16 %v7823, %v7822
        %v7847 = vpack.c.b16 %v7825, %v7824
        %v7848 = vpack.c.b16 %v7827, %v7826
        %v7849 = vpack.c.b16 %v7829, %v7828
        %v7850 = vpack.c.b16 %v7831, %v7830
        %v7851 = vpack.c.b16 %v7833, %v7832
        %v7852 = vpack.c.b16 %v7835, %v7834
        %v7853 = vpack.c.b16 %v7837, %v7836
        %7854 = vrot.lane.b32.xlu0 %v7838, 64
        %v7855 = vpop.permute.xlu0 %7854
        %7856 = vrot.lane.b32.xlu0 %v7839, 64
        %v7857 = vpop.permute.xlu0 %7856
        %7858 = vrot.lane.b32.xlu0 %v7840, 64
        %v7859 = vpop.permute.xlu0 %7858
        %7860 = vrot.lane.b32.xlu0 %v7841, 64
        %v7861 = vpop.permute.xlu0 %7860
        %7862 = vrot.lane.b32.xlu0 %v7842, 64
        %v7863 = vpop.permute.xlu0 %7862
        %7864 = vrot.lane.b32.xlu0 %v7843, 64
        %v7865 = vpop.permute.xlu0 %7864
        %7866 = vrot.lane.b32.xlu0 %v7844, 64
        %v7867 = vpop.permute.xlu0 %7866
        %7868 = vrot.lane.b32.xlu0 %v7845, 64
        %v7869 = vpop.permute.xlu0 %7868
        %7870 = vrot.lane.b32.xlu0 %v7846, 64
        %v7871 = vpop.permute.xlu0 %7870
        %7872 = vrot.lane.b32.xlu0 %v7847, 64
        %v7873 = vpop.permute.xlu0 %7872
        %7874 = vrot.lane.b32.xlu0 %v7848, 64
        %v7875 = vpop.permute.xlu0 %7874
        %7876 = vrot.lane.b32.xlu0 %v7849, 64
        %v7877 = vpop.permute.xlu0 %7876
        %7878 = vrot.lane.b32.xlu0 %v7850, 64
        %v7879 = vpop.permute.xlu0 %7878
        %7880 = vrot.lane.b32.xlu0 %v7851, 64
        %v7881 = vpop.permute.xlu0 %7880
        %7882 = vrot.lane.b32.xlu0 %v7852, 64
        %v7883 = vpop.permute.xlu0 %7882
        %7884 = vrot.lane.b32.xlu0 %v7853, 64
        %v7885 = vpop.permute.xlu0 %7884
        %v7886 = vunpack.c.l.b16 %v6795
        %v7887 = vunpack.c.l.b16 %v6805
        %v7888 = vunpack.c.l.b16 %v6819
        %v7889 = vunpack.c.l.b16 %v6829
        %v7890 = vunpack.c.l.b16 %v6843
        %v7891 = vunpack.c.l.b16 %v6853
        %v7892 = vunpack.c.l.b16 %v6867
        %v7893 = vunpack.c.l.b16 %v6877
        %v7894 = vunpack.c.l.b16 %v6891
        %v7895 = vunpack.c.l.b16 %v6901
        %v7896 = vunpack.c.l.b16 %v6915
        %v7897 = vunpack.c.l.b16 %v6925
        %v7898 = vunpack.c.l.b16 %v6939
        %v7899 = vunpack.c.l.b16 %v6949
        %v7900 = vunpack.c.l.b16 %v6963
        %v7901 = vunpack.c.l.b16 %v6973
        %v7902 = vunpack.c.l.b16 %v6987
        %v7903 = vunpack.c.l.b16 %v6997
        %v7904 = vunpack.c.l.b16 %v7011
        %v7905 = vunpack.c.l.b16 %v7021
        %v7906 = vunpack.c.l.b16 %v7035
        %v7907 = vunpack.c.l.b16 %v7045
        %v7908 = vunpack.c.l.b16 %v7059
        %v7909 = vunpack.c.l.b16 %v7069
        %v7910 = vunpack.c.l.b16 %v7083
        %v7911 = vunpack.c.l.b16 %v7093
        %v7912 = vunpack.c.l.b16 %v7107
        %v7913 = vunpack.c.l.b16 %v7117
        %v7914 = vunpack.c.l.b16 %v7131
        %v7915 = vunpack.c.l.b16 %v7141
        %v7916 = vunpack.c.l.b16 %v7155
        %v7917 = vunpack.c.l.b16 %v7165
        %v7918 = vpack.c.b16 %v7887, %v7886
        %v7919 = vpack.c.b16 %v7889, %v7888
        %v7920 = vpack.c.b16 %v7891, %v7890
        %v7921 = vpack.c.b16 %v7893, %v7892
        %v7922 = vpack.c.b16 %v7895, %v7894
        %v7923 = vpack.c.b16 %v7897, %v7896
        %v7924 = vpack.c.b16 %v7899, %v7898
        %v7925 = vpack.c.b16 %v7901, %v7900
        %v7926 = vpack.c.b16 %v7903, %v7902
        %v7927 = vpack.c.b16 %v7905, %v7904
        %v7928 = vpack.c.b16 %v7907, %v7906
        %v7929 = vpack.c.b16 %v7909, %v7908
        %v7930 = vpack.c.b16 %v7911, %v7910
        %v7931 = vpack.c.b16 %v7913, %v7912
        %v7932 = vpack.c.b16 %v7915, %v7914
        %v7933 = vpack.c.b16 %v7917, %v7916
        %7934 = vrot.lane.b32.xlu0 %v7918, 96
        %v7935 = vpop.permute.xlu0 %7934
        %7936 = vrot.lane.b32.xlu0 %v7919, 96
        %v7937 = vpop.permute.xlu0 %7936
        %7938 = vrot.lane.b32.xlu0 %v7920, 96
        %v7939 = vpop.permute.xlu0 %7938
        %7940 = vrot.lane.b32.xlu0 %v7921, 96
        %v7941 = vpop.permute.xlu0 %7940
        %7942 = vrot.lane.b32.xlu0 %v7922, 96
        %v7943 = vpop.permute.xlu0 %7942
        %7944 = vrot.lane.b32.xlu0 %v7923, 96
        %v7945 = vpop.permute.xlu0 %7944
        %7946 = vrot.lane.b32.xlu0 %v7924, 96
        %v7947 = vpop.permute.xlu0 %7946
        %7948 = vrot.lane.b32.xlu0 %v7925, 96
        %v7949 = vpop.permute.xlu0 %7948
        %7950 = vrot.lane.b32.xlu0 %v7926, 96
        %v7951 = vpop.permute.xlu0 %7950
        %7952 = vrot.lane.b32.xlu0 %v7927, 96
        %v7953 = vpop.permute.xlu0 %7952
        %7954 = vrot.lane.b32.xlu0 %v7928, 96
        %v7955 = vpop.permute.xlu0 %7954
        %7956 = vrot.lane.b32.xlu0 %v7929, 96
        %v7957 = vpop.permute.xlu0 %7956
        %7958 = vrot.lane.b32.xlu0 %v7930, 96
        %v7959 = vpop.permute.xlu0 %7958
        %7960 = vrot.lane.b32.xlu0 %v7931, 96
        %v7961 = vpop.permute.xlu0 %7960
        %7962 = vrot.lane.b32.xlu0 %v7932, 96
        %v7963 = vpop.permute.xlu0 %7962
        %7964 = vrot.lane.b32.xlu0 %v7933, 96
        %v7965 = vpop.permute.xlu0 %7964
        %v7966 = vunpack.c.l.b16 %v7233
        %v7967 = vunpack.c.l.b16 %v7236
        %v7968 = vunpack.c.l.b16 %v7240
        %v7969 = vunpack.c.l.b16 %v7243
        %v7970 = vunpack.c.l.b16 %v7247
        %v7971 = vunpack.c.l.b16 %v7250
        %v7972 = vunpack.c.l.b16 %v7254
        %v7973 = vunpack.c.l.b16 %v7257
        %v7974 = vunpack.c.l.b16 %v7261
        %v7975 = vunpack.c.l.b16 %v7264
        %v7976 = vunpack.c.l.b16 %v7268
        %v7977 = vunpack.c.l.b16 %v7271
        %v7978 = vunpack.c.l.b16 %v7275
        %v7979 = vunpack.c.l.b16 %v7278
        %v7980 = vunpack.c.l.b16 %v7282
        %v7981 = vunpack.c.l.b16 %v7285
        %v7982 = vunpack.c.l.b16 %v7289
        %v7983 = vunpack.c.l.b16 %v7292
        %v7984 = vunpack.c.l.b16 %v7296
        %v7985 = vunpack.c.l.b16 %v7299
        %v7986 = vunpack.c.l.b16 %v7303
        %v7987 = vunpack.c.l.b16 %v7306
        %v7988 = vunpack.c.l.b16 %v7310
        %v7989 = vunpack.c.l.b16 %v7313
        %v7990 = vunpack.c.l.b16 %v7317
        %v7991 = vunpack.c.l.b16 %v7320
        %v7992 = vunpack.c.l.b16 %v7324
        %v7993 = vunpack.c.l.b16 %v7327
        %v7994 = vunpack.c.l.b16 %v7331
        %v7995 = vunpack.c.l.b16 %v7334
        %v7996 = vunpack.c.l.b16 %v7338
        %v7997 = vunpack.c.l.b16 %v7341
        %v7998 = vpack.c.b16 %v7967, %v7966
        %v7999 = vpack.c.b16 %v7969, %v7968
        %v8000 = vpack.c.b16 %v7971, %v7970
        %v8001 = vpack.c.b16 %v7973, %v7972
        %v8002 = vpack.c.b16 %v7975, %v7974
        %v8003 = vpack.c.b16 %v7977, %v7976
        %v8004 = vpack.c.b16 %v7979, %v7978
        %v8005 = vpack.c.b16 %v7981, %v7980
        %v8006 = vpack.c.b16 %v7983, %v7982
        %v8007 = vpack.c.b16 %v7985, %v7984
        %v8008 = vpack.c.b16 %v7987, %v7986
        %v8009 = vpack.c.b16 %v7989, %v7988
        %v8010 = vpack.c.b16 %v7991, %v7990
        %v8011 = vpack.c.b16 %v7993, %v7992
        %v8012 = vpack.c.b16 %v7995, %v7994
        %v8013 = vpack.c.b16 %v7997, %v7996
        %v8016 = vsel %vm4279, %v7390, %v7455
        %v8019 = vsel %vm4279, %v7391, %v7457
        %v8022 = vsel %vm4279, %v7392, %v7459
        %v8025 = vsel %vm4279, %v7393, %v7461
        %v8028 = vsel %vm4279, %v7394, %v7463
        %v8031 = vsel %vm4279, %v7395, %v7465
        %v8034 = vsel %vm4279, %v7396, %v7467
        %v8037 = vsel %vm4279, %v7397, %v7469
        %v8040 = vsel %vm4279, %v7398, %v7471
        %v8043 = vsel %vm4279, %v7399, %v7473
        %v8046 = vsel %vm4279, %v7400, %v7475
        %v8049 = vsel %vm4279, %v7401, %v7477
        %v8052 = vsel %vm4279, %v7402, %v7479
        %v8055 = vsel %vm4279, %v7403, %v7481
        %v8058 = vsel %vm4279, %v7404, %v7483
        %v8061 = vsel %vm4279, %v7405, %v7485
        %vm8062 = vcmask 523264
        %v8064 = vsel %vm8062, %v8016, %v7535
        %v8066 = vsel %vm8062, %v8019, %v7537
        %v8068 = vsel %vm8062, %v8022, %v7539
        %v8070 = vsel %vm8062, %v8025, %v7541
        %v8072 = vsel %vm8062, %v8028, %v7543
        %v8074 = vsel %vm8062, %v8031, %v7545
        %v8076 = vsel %vm8062, %v8034, %v7547
        %v8078 = vsel %vm8062, %v8037, %v7549
        %v8080 = vsel %vm8062, %v8040, %v7551
        %v8082 = vsel %vm8062, %v8043, %v7553
        %v8084 = vsel %vm8062, %v8046, %v7555
        %v8086 = vsel %vm8062, %v8049, %v7557
        %v8088 = vsel %vm8062, %v8052, %v7559
        %v8090 = vsel %vm8062, %v8055, %v7561
        %v8092 = vsel %vm8062, %v8058, %v7563
        %v8094 = vsel %vm8062, %v8061, %v7565
        %vm8095 = vcmask 785408
        %v8097 = vsel %vm8095, %v8064, %v7631
        %v8100 = vsel %vm8095, %v8066, %v7633
        %v8103 = vsel %vm8095, %v8068, %v7635
        %v8106 = vsel %vm8095, %v8070, %v7637
        %v8109 = vsel %vm8095, %v8072, %v7639
        %v8112 = vsel %vm8095, %v8074, %v7641
        %v8115 = vsel %vm8095, %v8076, %v7643
        %v8118 = vsel %vm8095, %v8078, %v7645
        %v8121 = vsel %vm8095, %v8080, %v7647
        %v8124 = vsel %vm8095, %v8082, %v7649
        %v8127 = vsel %vm8095, %v8084, %v7651
        %v8130 = vsel %vm8095, %v8086, %v7653
        %v8133 = vsel %vm8095, %v8088, %v7655
        %v8136 = vsel %vm8095, %v8090, %v7657
        %v8139 = vsel %vm8095, %v8092, %v7659
        %v8142 = vsel %vm8095, %v8094, %v7661
        %v8146 = vsel %vm4279, %v7694, %v7759
        %v8149 = vsel %vm4279, %v7695, %v7761
        %v8152 = vsel %vm4279, %v7696, %v7763
        %v8155 = vsel %vm4279, %v7697, %v7765
        %v8158 = vsel %vm4279, %v7698, %v7767
        %v8161 = vsel %vm4279, %v7699, %v7769
        %v8164 = vsel %vm4279, %v7700, %v7771
        %v8167 = vsel %vm4279, %v7701, %v7773
        %v8170 = vsel %vm4279, %v7702, %v7775
        %v8173 = vsel %vm4279, %v7703, %v7777
        %v8176 = vsel %vm4279, %v7704, %v7779
        %v8179 = vsel %vm4279, %v7705, %v7781
        %v8182 = vsel %vm4279, %v7706, %v7783
        %v8185 = vsel %vm4279, %v7707, %v7785
        %v8188 = vsel %vm4279, %v7708, %v7787
        %v8191 = vsel %vm4279, %v7709, %v7789
        %v8193 = vsel %vm8062, %v8146, %v7855
        %v8195 = vsel %vm8062, %v8149, %v7857
        %v8197 = vsel %vm8062, %v8152, %v7859
        %v8199 = vsel %vm8062, %v8155, %v7861
        %v8201 = vsel %vm8062, %v8158, %v7863
        %v8203 = vsel %vm8062, %v8161, %v7865
        %v8205 = vsel %vm8062, %v8164, %v7867
        %v8207 = vsel %vm8062, %v8167, %v7869
        %v8209 = vsel %vm8062, %v8170, %v7871
        %v8211 = vsel %vm8062, %v8173, %v7873
        %v8213 = vsel %vm8062, %v8176, %v7875
        %v8215 = vsel %vm8062, %v8179, %v7877
        %v8217 = vsel %vm8062, %v8182, %v7879
        %v8219 = vsel %vm8062, %v8185, %v7881
        %v8221 = vsel %vm8062, %v8188, %v7883
        %v8223 = vsel %vm8062, %v8191, %v7885
        %v8225 = vsel %vm8095, %v8193, %v7935
        %v8228 = vsel %vm8095, %v8195, %v7937
        %v8231 = vsel %vm8095, %v8197, %v7939
        %v8234 = vsel %vm8095, %v8199, %v7941
        %v8237 = vsel %vm8095, %v8201, %v7943
        %v8240 = vsel %vm8095, %v8203, %v7945
        %v8243 = vsel %vm8095, %v8205, %v7947
        %v8246 = vsel %vm8095, %v8207, %v7949
        %v8249 = vsel %vm8095, %v8209, %v7951
        %v8252 = vsel %vm8095, %v8211, %v7953
        %v8255 = vsel %vm8095, %v8213, %v7955
        %v8258 = vsel %vm8095, %v8215, %v7957
        %v8261 = vsel %vm8095, %v8217, %v7959
        %v8264 = vsel %vm8095, %v8219, %v7961
        %v8267 = vsel %vm8095, %v8221, %v7963
        %v8270 = vsel %vm8095, %v8223, %v7965
        %v8272 = vld [vmem:[%s10] sm:$0xf]
        %v8273 = vld [vmem:[%s10 + $0x4] sm:$0xf]
        %v8274 = vld [vmem:[%s10 + $0x8] sm:$0xf]
        %v8275 = vld [vmem:[%s10 + $0xc] sm:$0xf]
        %v8276 = vld [vmem:[%s10 + $0x10] sm:$0xf]
        %v8277 = vld [vmem:[%s10 + $0x14] sm:$0xf]
        %v8278 = vld [vmem:[%s10 + $0x18] sm:$0xf]
        %v8279 = vld [vmem:[%s10 + $0x1c] sm:$0xf]
        %v8280 = vld [vmem:[%s10 + $0x20] sm:$0xf]
        %v8281 = vld [vmem:[%s10 + $0x24] sm:$0xf]
        %v8282 = vld [vmem:[%s10 + $0x28] sm:$0xf]
        %v8283 = vld [vmem:[%s10 + $0x2c] sm:$0xf]
        %v8284 = vld [vmem:[%s10 + $0x30] sm:$0xf]
        %v8285 = vld [vmem:[%s10 + $0x34] sm:$0xf]
        %v8286 = vld [vmem:[%s10 + $0x38] sm:$0xf]
        %v8287 = vld [vmem:[%s10 + $0x3c] sm:$0xf]
        %v8288 = vld [vmem:[%s10 + $0x40] sm:$0xf]
        %v8289 = vld [vmem:[%s10 + $0x44] sm:$0xf]
        %v8290 = vld [vmem:[%s10 + $0x48] sm:$0xf]
        %v8291 = vld [vmem:[%s10 + $0x4c] sm:$0xf]
        %v8292 = vld [vmem:[%s10 + $0x50] sm:$0xf]
        %v8293 = vld [vmem:[%s10 + $0x54] sm:$0xf]
        %v8294 = vld [vmem:[%s10 + $0x58] sm:$0xf]
        %v8295 = vld [vmem:[%s10 + $0x5c] sm:$0xf]
        %v8296 = vld [vmem:[%s10 + $0x60] sm:$0xf]
        %v8297 = vld [vmem:[%s10 + $0x64] sm:$0xf]
        %v8298 = vld [vmem:[%s10 + $0x68] sm:$0xf]
        %v8299 = vld [vmem:[%s10 + $0x6c] sm:$0xf]
        %v8300 = vld [vmem:[%s10 + $0x70] sm:$0xf]
        %v8301 = vld [vmem:[%s10 + $0x74] sm:$0xf]
        %v8302 = vld [vmem:[%s10 + $0x78] sm:$0xf]
        %v8303 = vld [vmem:[%s10 + $0x7c] sm:$0xf]
        %v8304 = vld [vmem:[%s10 + $0x80] sm:$0xf]
        %v8305 = vld [vmem:[%s10 + $0x84] sm:$0xf]
        %v8306 = vld [vmem:[%s10 + $0x88] sm:$0xf]
        %v8307 = vld [vmem:[%s10 + $0x8c] sm:$0xf]
        %v8308 = vld [vmem:[%s11] sm:$0x1]
        %v8310 = vlaneseq
        %v8311 = vshrl.u32 %v8310, 7
        %v8312 = vsub.s32 0, %v8311
        %v8313 = vrot.slane %v8308, %v8312
        %v8351 = vunpack.c.l.b16 %v8272
        %v8352 = vunpack.c.l.b16 %v8273
        %v8353 = vunpack.c.l.b16 %v8274
        %v8354 = vunpack.c.l.b16 %v8275
        %v8355 = vunpack.c.l.b16 %v8276
        %v8356 = vunpack.c.l.b16 %v8277
        %v8357 = vunpack.c.l.b16 %v8278
        %v8358 = vunpack.c.l.b16 %v8279
        %v8359 = vunpack.c.l.b16 %v8280
        %v8360 = vunpack.c.l.b16 %v8281
        %v8361 = vunpack.c.l.b16 %v8282
        %v8362 = vunpack.c.l.b16 %v8283
        %v8363 = vunpack.c.l.b16 %v8284
        %v8364 = vunpack.c.l.b16 %v8285
        %v8365 = vunpack.c.l.b16 %v8286
        %v8366 = vunpack.c.l.b16 %v8287
        %v8367 = vunpack.c.l.b16 %v8288
        %v8368 = vunpack.c.l.b16 %v8289
        %v8369 = vunpack.c.l.b16 %v8290
        %v8370 = vunpack.c.l.b16 %v8291
        %v8371 = vunpack.c.l.b16 %v8292
        %v8372 = vunpack.c.l.b16 %v8293
        %v8373 = vunpack.c.l.b16 %v8294
        %v8374 = vunpack.c.l.b16 %v8295
        %v8375 = vunpack.c.l.b16 %v8296
        %v8376 = vunpack.c.l.b16 %v8297
        %v8377 = vunpack.c.l.b16 %v8298
        %v8378 = vunpack.c.l.b16 %v8299
        %v8379 = vunpack.c.l.b16 %v8300
        %v8380 = vunpack.c.l.b16 %v8301
        %v8381 = vunpack.c.l.b16 %v8302
        %v8382 = vunpack.c.l.b16 %v8303
        %v8383 = vunpack.c.l.b16 %v8304
        %v8384 = vunpack.c.l.b16 %v8305
        %v8385 = vunpack.c.l.b16 %v8306
        %v8386 = vunpack.c.l.b16 %v8307
        %v8387 = vpack.c.b16 %v8352, %v8351
        %v8388 = vpack.c.b16 %v8354, %v8353
        %v8389 = vpack.c.b16 %v8356, %v8355
        %v8390 = vpack.c.b16 %v8358, %v8357
        %v8391 = vpack.c.b16 %v8360, %v8359
        %v8392 = vpack.c.b16 %v8362, %v8361
        %v8393 = vpack.c.b16 %v8364, %v8363
        %v8394 = vpack.c.b16 %v8366, %v8365
        %v8395 = vpack.c.b16 %v8368, %v8367
        %v8396 = vpack.c.b16 %v8370, %v8369
        %v8397 = vpack.c.b16 %v8372, %v8371
        %v8398 = vpack.c.b16 %v8374, %v8373
        %v8399 = vpack.c.b16 %v8376, %v8375
        %v8400 = vpack.c.b16 %v8378, %v8377
        %v8401 = vpack.c.b16 %v8380, %v8379
        %v8402 = vpack.c.b16 %v8382, %v8381
        %v8403 = vpack.c.b16 %v8384, %v8383
        %v8404 = vpack.c.b16 %v8386, %v8385
        %v8424 = vsel %vm4279, %v7998, 0
        %v8427 = vsel %vm4279, %v7999, 0
        %v8430 = vsel %vm4279, %v8000, 0
        %v8433 = vsel %vm4279, %v8001, 0
        %v8436 = vsel %vm4279, %v8002, 0
        %v8439 = vsel %vm4279, %v8003, 0
        %v8442 = vsel %vm4279, %v8004, 0
        %v8445 = vsel %vm4279, %v8005, 0
        %v8448 = vsel %vm4279, %v8006, 0
        %v8451 = vsel %vm4279, %v8007, 0
        %v8454 = vsel %vm4279, %v8008, 0
        %v8457 = vsel %vm4279, %v8009, 0
        %v8460 = vsel %vm4279, %v8010, 0
        %v8463 = vsel %vm4279, %v8011, 0
        %v8466 = vsel %vm4279, %v8012, 0
        %v8469 = vsel %vm4279, %v8013, 0
        %8471 = vmatprep.subr.bf16.mxu0 0
        %8472 = vmatpush1.bf16.msra.mxu0 %v8387
        %8473 = vmatprep.subr.bf16.mxu0 0
        %8474 = vmatpush1.bf16.msra.mxu0 %v8388
        %8475 = vmatprep.subr.bf16.mxu0 0
        %8476 = vmatpush1.bf16.msra.mxu0 %v8389
        %8477 = vmatprep.subr.bf16.mxu0 0
        %8478 = vmatpush1.bf16.msra.mxu0 %v8390
        %8479 = vmatprep.subr.bf16.mxu0 0
        %8480 = vmatpush1.bf16.msra.mxu0 %v8391
        %8481 = vmatprep.subr.bf16.mxu0 0
        %8482 = vmatpush1.bf16.msra.mxu0 %v8392
        %8483 = vmatprep.subr.bf16.mxu0 0
        %8484 = vmatpush1.bf16.msra.mxu0 %v8393
        %8485 = vmatprep.subr.bf16.mxu0 0
        %8486 = vmatpush1.bf16.msra.mxu0 %v8394
        %8487 = vmatprep.subr.bf16.mxu0 0
        %8488 = vmatpush1.bf16.msra.mxu0 %v8395
        %8489 = vmatprep.subr.bf16.mxu0 0
        %8490 = vmatpush1.bf16.msra.mxu0 %v8396
        %8491 = vmatprep.subr.bf16.mxu0 0
        %8492 = vmatpush1.bf16.msra.mxu0 %v8397
        %8493 = vmatprep.subr.bf16.mxu0 0
        %8494 = vmatpush1.bf16.msra.mxu0 %v8398
        %8495 = vmatprep.subr.bf16.mxu0 0
        %8496 = vmatpush1.bf16.msra.mxu0 %v8399
        %8497 = vmatprep.subr.bf16.mxu0 0
        %8498 = vmatpush1.bf16.msra.mxu0 %v8400
        %8499 = vmatprep.subr.bf16.mxu0 0
        %8500 = vmatpush1.bf16.msra.mxu0 %v8401
        %8501 = vmatprep.subr.bf16.mxu0 0
        %8502 = vmatpush1.bf16.msra.mxu0 %v8402
        %8503 = vmatprep.mubr.bf16.mxu0 %v8225
        %8504 = vmatmul.mubr.bf16.gmra.mrb[0].mxu0 %v8097
        %v8505 = vpop.f32.mrb[0].mxu0
        %v8506 = vadd.f32 %v8313, %v8505
        %v8507 = vpop.f32.mrb[0].mxu0
        %v8508 = vpop.f32.mrb[0].mxu0
        %v8509 = vadd.f32 %v8313, %v8508
        %v8510 = vpop.f32.mrb[0].mxu0
        %8511 = vmatprep.mubr.bf16.mxu0 %v8228
        %8512 = vmatmul.mubr.bf16.gmra.mrb[0].mxu0 %v8100
        %v8513 = vpop.f32.mrb[0].mxu0
        %v8514 = vadd.f32 %v8313, %v8513
        %v8515 = vpop.f32.mrb[0].mxu0
        %v8516 = vpop.f32.mrb[0].mxu0
        %v8517 = vadd.f32 %v8313, %v8516
        %v8518 = vpop.f32.mrb[0].mxu0
        %8519 = vmatprep.mubr.bf16.mxu0 %v8231
        %8520 = vmatmul.mubr.bf16.gmra.mrb[0].mxu0 %v8103
        %v8521 = vpop.f32.mrb[0].mxu0
        %v8522 = vadd.f32 %v8313, %v8521
        %v8523 = vpop.f32.mrb[0].mxu0
        %v8524 = vpop.f32.mrb[0].mxu0
        %v8525 = vadd.f32 %v8313, %v8524
        %v8526 = vpop.f32.mrb[0].mxu0
        %8527 = vmatprep.mubr.bf16.mxu0 %v8234
        %8528 = vmatmul.mubr.bf16.gmra.mrb[0].mxu0 %v8106
        %v8529 = vpop.f32.mrb[0].mxu0
        %v8530 = vadd.f32 %v8313, %v8529
        %v8531 = vpop.f32.mrb[0].mxu0
        %v8532 = vpop.f32.mrb[0].mxu0
        %v8533 = vadd.f32 %v8313, %v8532
        %v8534 = vpop.f32.mrb[0].mxu0
        %8535 = vmatprep.mubr.bf16.mxu0 %v8237
        %8536 = vmatmul.mubr.bf16.gmra.mrb[0].mxu0 %v8109
        %v8537 = vpop.f32.mrb[0].mxu0
        %v8538 = vadd.f32 %v8313, %v8537
        %v8539 = vpop.f32.mrb[0].mxu0
        %v8540 = vpop.f32.mrb[0].mxu0
        %v8541 = vadd.f32 %v8313, %v8540
        %v8542 = vpop.f32.mrb[0].mxu0
        %8543 = vmatprep.mubr.bf16.mxu0 %v8240
        %8544 = vmatmul.mubr.bf16.gmra.mrb[0].mxu0 %v8112
        %v8545 = vpop.f32.mrb[0].mxu0
        %v8546 = vadd.f32 %v8313, %v8545
        %v8547 = vpop.f32.mrb[0].mxu0
        %v8548 = vpop.f32.mrb[0].mxu0
        %v8549 = vadd.f32 %v8313, %v8548
        %v8550 = vpop.f32.mrb[0].mxu0
        %8551 = vmatprep.mubr.bf16.mxu0 %v8243
        %8552 = vmatmul.mubr.bf16.gmra.mrb[0].mxu0 %v8115
        %v8553 = vpop.f32.mrb[0].mxu0
        %v8554 = vadd.f32 %v8313, %v8553
        %v8555 = vpop.f32.mrb[0].mxu0
        %v8556 = vpop.f32.mrb[0].mxu0
        %v8557 = vadd.f32 %v8313, %v8556
        %v8558 = vpop.f32.mrb[0].mxu0
        %8559 = vmatprep.mubr.bf16.mxu0 %v8246
        %8560 = vmatmul.mubr.bf16.gmra.mrb[0].mxu0 %v8118
        %v8561 = vpop.f32.mrb[0].mxu0
        %v8562 = vadd.f32 %v8313, %v8561
        %v8563 = vpop.f32.mrb[0].mxu0
        %v8564 = vpop.f32.mrb[0].mxu0
        %v8565 = vadd.f32 %v8313, %v8564
        %v8566 = vpop.f32.mrb[0].mxu0
        %8567 = vmatprep.mubr.bf16.mxu0 %v8249
        %8568 = vmatmul.mubr.bf16.gmra.mrb[0].mxu0 %v8121
        %v8569 = vpop.f32.mrb[0].mxu0
        %v8570 = vadd.f32 %v8313, %v8569
        %v8571 = vpop.f32.mrb[0].mxu0
        %v8572 = vpop.f32.mrb[0].mxu0
        %v8573 = vadd.f32 %v8313, %v8572
        %v8574 = vpop.f32.mrb[0].mxu0
        %8575 = vmatprep.mubr.bf16.mxu0 %v8252
        %8576 = vmatmul.mubr.bf16.gmra.mrb[0].mxu0 %v8124
        %v8577 = vpop.f32.mrb[0].mxu0
        %v8578 = vadd.f32 %v8313, %v8577
        %v8579 = vpop.f32.mrb[0].mxu0
        %v8580 = vpop.f32.mrb[0].mxu0
        %v8581 = vadd.f32 %v8313, %v8580
        %v8582 = vpop.f32.mrb[0].mxu0
        %8583 = vmatprep.mubr.bf16.mxu0 %v8255
        %8584 = vmatmul.mubr.bf16.gmra.mrb[0].mxu0 %v8127
        %v8585 = vpop.f32.mrb[0].mxu0
        %v8586 = vadd.f32 %v8313, %v8585
        %v8587 = vpop.f32.mrb[0].mxu0
        %v8588 = vpop.f32.mrb[0].mxu0
        %v8589 = vadd.f32 %v8313, %v8588
        %v8590 = vpop.f32.mrb[0].mxu0
        %8591 = vmatprep.mubr.bf16.mxu0 %v8258
        %8592 = vmatmul.mubr.bf16.gmra.mrb[0].mxu0 %v8130
        %v8593 = vpop.f32.mrb[0].mxu0
        %v8594 = vadd.f32 %v8313, %v8593
        %v8595 = vpop.f32.mrb[0].mxu0
        %v8596 = vpop.f32.mrb[0].mxu0
        %v8597 = vadd.f32 %v8313, %v8596
        %v8598 = vpop.f32.mrb[0].mxu0
        %8599 = vmatprep.mubr.bf16.mxu0 %v8261
        %8600 = vmatmul.mubr.bf16.gmra.mrb[0].mxu0 %v8133
        %v8601 = vpop.f32.mrb[0].mxu0
        %v8602 = vadd.f32 %v8313, %v8601
        %v8603 = vpop.f32.mrb[0].mxu0
        %v8604 = vpop.f32.mrb[0].mxu0
        %v8605 = vadd.f32 %v8313, %v8604
        %v8606 = vpop.f32.mrb[0].mxu0
        %8607 = vmatprep.mubr.bf16.mxu0 %v8264
        %8608 = vmatmul.mubr.bf16.gmra.mrb[0].mxu0 %v8136
        %v8609 = vpop.f32.mrb[0].mxu0
        %v8610 = vadd.f32 %v8313, %v8609
        %v8611 = vpop.f32.mrb[0].mxu0
        %v8612 = vpop.f32.mrb[0].mxu0
        %v8613 = vadd.f32 %v8313, %v8612
        %v8614 = vpop.f32.mrb[0].mxu0
        %8615 = vmatprep.mubr.bf16.mxu0 %v8267
        %8616 = vmatmul.mubr.bf16.gmra.mrb[0].mxu0 %v8139
        %v8617 = vpop.f32.mrb[0].mxu0
        %v8618 = vadd.f32 %v8313, %v8617
        %v8619 = vpop.f32.mrb[0].mxu0
        %v8620 = vpop.f32.mrb[0].mxu0
        %v8621 = vadd.f32 %v8313, %v8620
        %v8622 = vpop.f32.mrb[0].mxu0
        %8623 = vmatprep.mubr.bf16.mxu0 %v8270
        %8624 = vmatmul.mubr.bf16.gmra.mrb[0].mxu0 %v8142
        %v8625 = vpop.f32.mrb[0].mxu0
        %v8626 = vadd.f32 %v8313, %v8625
        %v8627 = vpop.f32.mrb[0].mxu0
        %v8628 = vpop.f32.mrb[0].mxu0
        %v8629 = vadd.f32 %v8313, %v8628
        %v8630 = vpop.f32.mrb[0].mxu0
        %8631 = vdwg.mxu0
        %8632 = vmatprep.subr.bf16.mxu0 0
        %8633 = vmatpush1.bf16.msra.mxu0 %v8403
        %8634 = vmatprep.subr.bf16.mxu0 0
        %8635 = vmatpush1.bf16.msra.mxu0 %v8404
        %8636 = vmatprep.subr.bf16.mxu0 0
        %8637 = vmatpush1.bf16.msra.mxu0 0
        %8638 = vmatprep.subr.bf16.mxu0 0
        %8639 = vmatpush1.bf16.msra.mxu0 0
        %8640 = vmatprep.subr.bf16.mxu0 0
        %8641 = vmatpush1.bf16.msra.mxu0 0
        %8642 = vmatprep.subr.bf16.mxu0 0
        %8643 = vmatpush1.bf16.msra.mxu0 0
        %8644 = vmatprep.subr.bf16.mxu0 0
        %8645 = vmatpush1.bf16.msra.mxu0 0
        %8646 = vmatprep.subr.bf16.mxu0 0
        %8647 = vmatpush1.bf16.msra.mxu0 0
        %8648 = vmatprep.subr.bf16.mxu0 0
        %8649 = vmatpush1.bf16.msra.mxu0 0
        %8650 = vmatprep.subr.bf16.mxu0 0
        %8651 = vmatpush1.bf16.msra.mxu0 0
        %8652 = vmatprep.subr.bf16.mxu0 0
        %8653 = vmatpush1.bf16.msra.mxu0 0
        %8654 = vmatprep.subr.bf16.mxu0 0
        %8655 = vmatpush1.bf16.msra.mxu0 0
        %8656 = vmatprep.subr.bf16.mxu0 0
        %8657 = vmatpush1.bf16.msra.mxu0 0
        %8658 = vmatprep.subr.bf16.mxu0 0
        %8659 = vmatpush1.bf16.msra.mxu0 0
        %8660 = vmatprep.subr.bf16.mxu0 0
        %8661 = vmatpush1.bf16.msra.mxu0 0
        %8662 = vmatprep.subr.bf16.mxu0 0
        %8663 = vmatpush1.bf16.msra.mxu0 0
        %8664 = vmatprep.mubr.bf16.mxu0 0
        %8665 = vmatmul.mubr.bf16.gmra.mrb[0].mxu0 %v8424
        %v8666 = vpop.f32.mrb[0].mxu0
        %v8667 = vadd.f32 %v8506, %v8666
        %v8668 = vpop.f32.mrb[0].mxu0
        %v8669 = vpop.f32.mrb[0].mxu0
        %v8670 = vadd.f32 %v8509, %v8669
        %v8671 = vpop.f32.mrb[0].mxu0
        %8672 = vmatprep.mubr.bf16.mxu0 0
        %8673 = vmatmul.mubr.bf16.gmra.mrb[0].mxu0 %v8427
        %v8674 = vpop.f32.mrb[0].mxu0
        %v8675 = vadd.f32 %v8514, %v8674
        %v8676 = vpop.f32.mrb[0].mxu0
        %v8677 = vpop.f32.mrb[0].mxu0
        %v8678 = vadd.f32 %v8517, %v8677
        %v8679 = vpop.f32.mrb[0].mxu0
        %8680 = vmatprep.mubr.bf16.mxu0 0
        %8681 = vmatmul.mubr.bf16.gmra.mrb[0].mxu0 %v8430
        %v8682 = vpop.f32.mrb[0].mxu0
        %v8683 = vadd.f32 %v8522, %v8682
        %v8684 = vpop.f32.mrb[0].mxu0
        %v8685 = vpop.f32.mrb[0].mxu0
        %v8686 = vadd.f32 %v8525, %v8685
        %v8687 = vpop.f32.mrb[0].mxu0
        %8688 = vmatprep.mubr.bf16.mxu0 0
        %8689 = vmatmul.mubr.bf16.gmra.mrb[0].mxu0 %v8433
        %v8690 = vpop.f32.mrb[0].mxu0
        %v8691 = vadd.f32 %v8530, %v8690
        %v8692 = vpop.f32.mrb[0].mxu0
        %v8693 = vpop.f32.mrb[0].mxu0
        %v8694 = vadd.f32 %v8533, %v8693
        %v8695 = vpop.f32.mrb[0].mxu0
        %8696 = vmatprep.mubr.bf16.mxu0 0
        %8697 = vmatmul.mubr.bf16.gmra.mrb[0].mxu0 %v8436
        %v8698 = vpop.f32.mrb[0].mxu0
        %v8699 = vadd.f32 %v8538, %v8698
        %v8700 = vpop.f32.mrb[0].mxu0
        %v8701 = vpop.f32.mrb[0].mxu0
        %v8702 = vadd.f32 %v8541, %v8701
        %v8703 = vpop.f32.mrb[0].mxu0
        %8704 = vmatprep.mubr.bf16.mxu0 0
        %8705 = vmatmul.mubr.bf16.gmra.mrb[0].mxu0 %v8439
        %v8706 = vpop.f32.mrb[0].mxu0
        %v8707 = vadd.f32 %v8546, %v8706
        %v8708 = vpop.f32.mrb[0].mxu0
        %v8709 = vpop.f32.mrb[0].mxu0
        %v8710 = vadd.f32 %v8549, %v8709
        %v8711 = vpop.f32.mrb[0].mxu0
        %8712 = vmatprep.mubr.bf16.mxu0 0
        %8713 = vmatmul.mubr.bf16.gmra.mrb[0].mxu0 %v8442
        %v8714 = vpop.f32.mrb[0].mxu0
        %v8715 = vadd.f32 %v8554, %v8714
        %v8716 = vpop.f32.mrb[0].mxu0
        %v8717 = vpop.f32.mrb[0].mxu0
        %v8718 = vadd.f32 %v8557, %v8717
        %v8719 = vpop.f32.mrb[0].mxu0
        %8720 = vmatprep.mubr.bf16.mxu0 0
        %8721 = vmatmul.mubr.bf16.gmra.mrb[0].mxu0 %v8445
        %v8722 = vpop.f32.mrb[0].mxu0
        %v8723 = vadd.f32 %v8562, %v8722
        %v8724 = vpop.f32.mrb[0].mxu0
        %v8725 = vpop.f32.mrb[0].mxu0
        %v8726 = vadd.f32 %v8565, %v8725
        %v8727 = vpop.f32.mrb[0].mxu0
        %8728 = vmatprep.mubr.bf16.mxu0 0
        %8729 = vmatmul.mubr.bf16.gmra.mrb[0].mxu0 %v8448
        %v8730 = vpop.f32.mrb[0].mxu0
        %v8731 = vadd.f32 %v8570, %v8730
        %v8732 = vpop.f32.mrb[0].mxu0
        %v8733 = vpop.f32.mrb[0].mxu0
        %v8734 = vadd.f32 %v8573, %v8733
        %v8735 = vpop.f32.mrb[0].mxu0
        %8736 = vmatprep.mubr.bf16.mxu0 0
        %8737 = vmatmul.mubr.bf16.gmra.mrb[0].mxu0 %v8451
        %v8738 = vpop.f32.mrb[0].mxu0
        %v8739 = vadd.f32 %v8578, %v8738
        %v8740 = vpop.f32.mrb[0].mxu0
        %v8741 = vpop.f32.mrb[0].mxu0
        %v8742 = vadd.f32 %v8581, %v8741
        %v8743 = vpop.f32.mrb[0].mxu0
        %8744 = vmatprep.mubr.bf16.mxu0 0
        %8745 = vmatmul.mubr.bf16.gmra.mrb[0].mxu0 %v8454
        %v8746 = vpop.f32.mrb[0].mxu0
        %v8747 = vadd.f32 %v8586, %v8746
        %v8748 = vpop.f32.mrb[0].mxu0
        %v8749 = vpop.f32.mrb[0].mxu0
        %v8750 = vadd.f32 %v8589, %v8749
        %v8751 = vpop.f32.mrb[0].mxu0
        %8752 = vmatprep.mubr.bf16.mxu0 0
        %8753 = vmatmul.mubr.bf16.gmra.mrb[0].mxu0 %v8457
        %v8754 = vpop.f32.mrb[0].mxu0
        %v8755 = vadd.f32 %v8594, %v8754
        %v8756 = vpop.f32.mrb[0].mxu0
        %v8757 = vpop.f32.mrb[0].mxu0
        %v8758 = vadd.f32 %v8597, %v8757
        %v8759 = vpop.f32.mrb[0].mxu0
        %8760 = vmatprep.mubr.bf16.mxu0 0
        %8761 = vmatmul.mubr.bf16.gmra.mrb[0].mxu0 %v8460
        %v8762 = vpop.f32.mrb[0].mxu0
        %v8763 = vadd.f32 %v8602, %v8762
        %v8764 = vpop.f32.mrb[0].mxu0
        %v8765 = vpop.f32.mrb[0].mxu0
        %v8766 = vadd.f32 %v8605, %v8765
        %v8767 = vpop.f32.mrb[0].mxu0
        %8768 = vmatprep.mubr.bf16.mxu0 0
        %8769 = vmatmul.mubr.bf16.gmra.mrb[0].mxu0 %v8463
        %v8770 = vpop.f32.mrb[0].mxu0
        %v8771 = vadd.f32 %v8610, %v8770
        %v8772 = vpop.f32.mrb[0].mxu0
        %v8773 = vpop.f32.mrb[0].mxu0
        %v8774 = vadd.f32 %v8613, %v8773
        %v8775 = vpop.f32.mrb[0].mxu0
        %8776 = vmatprep.mubr.bf16.mxu0 0
        %8777 = vmatmul.mubr.bf16.gmra.mrb[0].mxu0 %v8466
        %v8778 = vpop.f32.mrb[0].mxu0
        %v8779 = vadd.f32 %v8618, %v8778
        %v8780 = vpop.f32.mrb[0].mxu0
        %v8781 = vpop.f32.mrb[0].mxu0
        %v8782 = vadd.f32 %v8621, %v8781
        %v8783 = vpop.f32.mrb[0].mxu0
        %8784 = vmatprep.mubr.bf16.mxu0 0
        %8785 = vmatmul.mubr.bf16.gmra.mrb[0].mxu0 %v8469
        %v8786 = vpop.f32.mrb[0].mxu0
        %v8787 = vadd.f32 %v8626, %v8786
        %v8788 = vpop.f32.mrb[0].mxu0
        %v8789 = vpop.f32.mrb[0].mxu0
        %v8790 = vadd.f32 %v8629, %v8789
        %v8791 = vpop.f32.mrb[0].mxu0
        %8792 = vdwg.mxu0
        %v8793 = vsub.f32 0.0, %v8667
        %v8794 = vsub.f32 0.0, %v8670
        %v8795 = vsub.f32 0.0, %v8675
        %v8796 = vsub.f32 0.0, %v8678
        %v8797 = vsub.f32 0.0, %v8683
        %v8798 = vsub.f32 0.0, %v8686
        %v8799 = vsub.f32 0.0, %v8691
        %v8800 = vsub.f32 0.0, %v8694
        %v8801 = vsub.f32 0.0, %v8699
        %v8802 = vsub.f32 0.0, %v8702
        %v8803 = vsub.f32 0.0, %v8707
        %v8804 = vsub.f32 0.0, %v8710
        %v8805 = vsub.f32 0.0, %v8715
        %v8806 = vsub.f32 0.0, %v8718
        %v8807 = vsub.f32 0.0, %v8723
        %v8808 = vsub.f32 0.0, %v8726
        %v8809 = vsub.f32 0.0, %v8731
        %v8810 = vsub.f32 0.0, %v8734
        %v8811 = vsub.f32 0.0, %v8739
        %v8812 = vsub.f32 0.0, %v8742
        %v8813 = vsub.f32 0.0, %v8747
        %v8814 = vsub.f32 0.0, %v8750
        %v8815 = vsub.f32 0.0, %v8755
        %v8816 = vsub.f32 0.0, %v8758
        %v8817 = vsub.f32 0.0, %v8763
        %v8818 = vsub.f32 0.0, %v8766
        %v8819 = vsub.f32 0.0, %v8771
        %v8820 = vsub.f32 0.0, %v8774
        %v8821 = vsub.f32 0.0, %v8779
        %v8822 = vsub.f32 0.0, %v8782
        %v8823 = vsub.f32 0.0, %v8787
        %v8824 = vsub.f32 0.0, %v8790
        %v8825 = vmul.f32 %v8793, 1.442695
        %v8826 = vpow.pop %v8825
        %v8827 = vmul.f32 %v8794, 1.442695
        %v8828 = vpow.pop %v8827
        %v8829 = vmul.f32 %v8795, 1.442695
        %v8830 = vpow.pop %v8829
        %v8831 = vmul.f32 %v8796, 1.442695
        %v8832 = vpow.pop %v8831
        %v8833 = vmul.f32 %v8797, 1.442695
        %v8834 = vpow.pop %v8833
        %v8835 = vmul.f32 %v8798, 1.442695
        %v8836 = vpow.pop %v8835
        %v8837 = vmul.f32 %v8799, 1.442695
        %v8838 = vpow.pop %v8837
        %v8839 = vmul.f32 %v8800, 1.442695
        %v8840 = vpow.pop %v8839
        %v8841 = vmul.f32 %v8801, 1.442695
        %v8842 = vpow.pop %v8841
        %v8843 = vmul.f32 %v8802, 1.442695
        %v8844 = vpow.pop %v8843
        %v8845 = vmul.f32 %v8803, 1.442695
        %v8846 = vpow.pop %v8845
        %v8847 = vmul.f32 %v8804, 1.442695
        %v8848 = vpow.pop %v8847
        %v8849 = vmul.f32 %v8805, 1.442695
        %v8850 = vpow.pop %v8849
        %v8851 = vmul.f32 %v8806, 1.442695
        %v8852 = vpow.pop %v8851
        %v8853 = vmul.f32 %v8807, 1.442695
        %v8854 = vpow.pop %v8853
        %v8855 = vmul.f32 %v8808, 1.442695
        %v8856 = vpow.pop %v8855
        %v8857 = vmul.f32 %v8809, 1.442695
        %v8858 = vpow.pop %v8857
        %v8859 = vmul.f32 %v8810, 1.442695
        %v8860 = vpow.pop %v8859
        %v8861 = vmul.f32 %v8811, 1.442695
        %v8862 = vpow.pop %v8861
        %v8863 = vmul.f32 %v8812, 1.442695
        %v8864 = vpow.pop %v8863
        %v8865 = vmul.f32 %v8813, 1.442695
        %v8866 = vpow.pop %v8865
        %v8867 = vmul.f32 %v8814, 1.442695
        %v8868 = vpow.pop %v8867
        %v8869 = vmul.f32 %v8815, 1.442695
        %v8870 = vpow.pop %v8869
        %v8871 = vmul.f32 %v8816, 1.442695
        %v8872 = vpow.pop %v8871
        %v8873 = vmul.f32 %v8817, 1.442695
        %v8874 = vpow.pop %v8873
        %v8875 = vmul.f32 %v8818, 1.442695
        %v8876 = vpow.pop %v8875
        %v8877 = vmul.f32 %v8819, 1.442695
        %v8878 = vpow.pop %v8877
        %v8879 = vmul.f32 %v8820, 1.442695
        %v8880 = vpow.pop %v8879
        %v8881 = vmul.f32 %v8821, 1.442695
        %v8882 = vpow.pop %v8881
        %v8883 = vmul.f32 %v8822, 1.442695
        %v8884 = vpow.pop %v8883
        %v8885 = vmul.f32 %v8823, 1.442695
        %v8886 = vpow.pop %v8885
        %v8887 = vmul.f32 %v8824, 1.442695
        %v8888 = vpow.pop %v8887
        %v8889 = vadd.f32 %v8826, 1.0
        %v8890 = vadd.f32 %v8828, 1.0
        %v8891 = vadd.f32 %v8830, 1.0
        %v8892 = vadd.f32 %v8832, 1.0
        %v8893 = vadd.f32 %v8834, 1.0
        %v8894 = vadd.f32 %v8836, 1.0
        %v8895 = vadd.f32 %v8838, 1.0
        %v8896 = vadd.f32 %v8840, 1.0
        %v8897 = vadd.f32 %v8842, 1.0
        %v8898 = vadd.f32 %v8844, 1.0
        %v8899 = vadd.f32 %v8846, 1.0
        %v8900 = vadd.f32 %v8848, 1.0
        %v8901 = vadd.f32 %v8850, 1.0
        %v8902 = vadd.f32 %v8852, 1.0
        %v8903 = vadd.f32 %v8854, 1.0
        %v8904 = vadd.f32 %v8856, 1.0
        %v8905 = vadd.f32 %v8858, 1.0
        %v8906 = vadd.f32 %v8860, 1.0
        %v8907 = vadd.f32 %v8862, 1.0
        %v8908 = vadd.f32 %v8864, 1.0
        %v8909 = vadd.f32 %v8866, 1.0
        %v8910 = vadd.f32 %v8868, 1.0
        %v8911 = vadd.f32 %v8870, 1.0
        %v8912 = vadd.f32 %v8872, 1.0
        %v8913 = vadd.f32 %v8874, 1.0
        %v8914 = vadd.f32 %v8876, 1.0
        %v8915 = vadd.f32 %v8878, 1.0
        %v8916 = vadd.f32 %v8880, 1.0
        %v8917 = vadd.f32 %v8882, 1.0
        %v8918 = vadd.f32 %v8884, 1.0
        %v8919 = vadd.f32 %v8886, 1.0
        %v8920 = vadd.f32 %v8888, 1.0
        %v8921 = vrcp.pop %v8889
        %v8922 = vmul.f32 1.0, %v8921
        %v8923 = vrcp.pop %v8890
        %v8924 = vmul.f32 1.0, %v8923
        %v8925 = vrcp.pop %v8891
        %v8926 = vmul.f32 1.0, %v8925
        %v8927 = vrcp.pop %v8892
        %v8928 = vmul.f32 1.0, %v8927
        %v8929 = vrcp.pop %v8893
        %v8930 = vmul.f32 1.0, %v8929
        %v8931 = vrcp.pop %v8894
        %v8932 = vmul.f32 1.0, %v8931
        %v8933 = vrcp.pop %v8895
        %v8934 = vmul.f32 1.0, %v8933
        %v8935 = vrcp.pop %v8896
        %v8936 = vmul.f32 1.0, %v8935
        %v8937 = vrcp.pop %v8897
        %v8938 = vmul.f32 1.0, %v8937
        %v8939 = vrcp.pop %v8898
        %v8940 = vmul.f32 1.0, %v8939
        %v8941 = vrcp.pop %v8899
        %v8942 = vmul.f32 1.0, %v8941
        %v8943 = vrcp.pop %v8900
        %v8944 = vmul.f32 1.0, %v8943
        %v8945 = vrcp.pop %v8901
        %v8946 = vmul.f32 1.0, %v8945
        %v8947 = vrcp.pop %v8902
        %v8948 = vmul.f32 1.0, %v8947
        %v8949 = vrcp.pop %v8903
        %v8950 = vmul.f32 1.0, %v8949
        %v8951 = vrcp.pop %v8904
        %v8952 = vmul.f32 1.0, %v8951
        %v8953 = vrcp.pop %v8905
        %v8954 = vmul.f32 1.0, %v8953
        %v8955 = vrcp.pop %v8906
        %v8956 = vmul.f32 1.0, %v8955
        %v8957 = vrcp.pop %v8907
        %v8958 = vmul.f32 1.0, %v8957
        %v8959 = vrcp.pop %v8908
        %v8960 = vmul.f32 1.0, %v8959
        %v8961 = vrcp.pop %v8909
        %v8962 = vmul.f32 1.0, %v8961
        %v8963 = vrcp.pop %v8910
        %v8964 = vmul.f32 1.0, %v8963
        %v8965 = vrcp.pop %v8911
        %v8966 = vmul.f32 1.0, %v8965
        %v8967 = vrcp.pop %v8912
        %v8968 = vmul.f32 1.0, %v8967
        %v8969 = vrcp.pop %v8913
        %v8970 = vmul.f32 1.0, %v8969
        %v8971 = vrcp.pop %v8914
        %v8972 = vmul.f32 1.0, %v8971
        %v8973 = vrcp.pop %v8915
        %v8974 = vmul.f32 1.0, %v8973
        %v8975 = vrcp.pop %v8916
        %v8976 = vmul.f32 1.0, %v8975
        %v8977 = vrcp.pop %v8917
        %v8978 = vmul.f32 1.0, %v8977
        %v8979 = vrcp.pop %v8918
        %v8980 = vmul.f32 1.0, %v8979
        %v8981 = vrcp.pop %v8919
        %v8982 = vmul.f32 1.0, %v8981
        %v8983 = vrcp.pop %v8920
        %v8984 = vmul.f32 1.0, %v8983
        %v8985 = vmul.f32 %v8667, %v8922
        %v8986 = vmul.f32 %v8670, %v8924
        %v8987 = vmul.f32 %v8675, %v8926
        %v8988 = vmul.f32 %v8678, %v8928
        %v8989 = vmul.f32 %v8683, %v8930
        %v8990 = vmul.f32 %v8686, %v8932
        %v8991 = vmul.f32 %v8691, %v8934
        %v8992 = vmul.f32 %v8694, %v8936
        %v8993 = vmul.f32 %v8699, %v8938
        %v8994 = vmul.f32 %v8702, %v8940
        %v8995 = vmul.f32 %v8707, %v8942
        %v8996 = vmul.f32 %v8710, %v8944
        %v8997 = vmul.f32 %v8715, %v8946
        %v8998 = vmul.f32 %v8718, %v8948
        %v8999 = vmul.f32 %v8723, %v8950
        %v9000 = vmul.f32 %v8726, %v8952
        %v9001 = vmul.f32 %v8731, %v8954
        %v9002 = vmul.f32 %v8734, %v8956
        %v9003 = vmul.f32 %v8739, %v8958
        %v9004 = vmul.f32 %v8742, %v8960
        %v9005 = vmul.f32 %v8747, %v8962
        %v9006 = vmul.f32 %v8750, %v8964
        %v9007 = vmul.f32 %v8755, %v8966
        %v9008 = vmul.f32 %v8758, %v8968
        %v9009 = vmul.f32 %v8763, %v8970
        %v9010 = vmul.f32 %v8766, %v8972
        %v9011 = vmul.f32 %v8771, %v8974
        %v9012 = vmul.f32 %v8774, %v8976
        %v9013 = vmul.f32 %v8779, %v8978
        %v9014 = vmul.f32 %v8782, %v8980
        %v9015 = vmul.f32 %v8787, %v8982
        %v9016 = vmul.f32 %v8790, %v8984
        %9017 = vxpose.xlu0.b32.start [1/16] %v8985, 128
        %9018 = vxpose.xlu0.b32.cont [2/16] %v8986, 128
        %9019 = vxpose.xlu0.b32.cont [3/16] %v8987, 128
        %9020 = vxpose.xlu0.b32.cont [4/16] %v8988, 128
        %9021 = vxpose.xlu0.b32.cont [5/16] %v8989, 128
        %9022 = vxpose.xlu0.b32.cont [6/16] %v8990, 128
        %9023 = vxpose.xlu0.b32.cont [7/16] %v8991, 128
        %9024 = vxpose.xlu0.b32.cont [8/16] %v8992, 128
        %9025 = vxpose.xlu0.b32.cont [9/16] %v8993, 128
        %9026 = vxpose.xlu0.b32.cont [10/16] %v8994, 128
        %9027 = vxpose.xlu0.b32.cont [11/16] %v8995, 128
        %9028 = vxpose.xlu0.b32.cont [12/16] %v8996, 128
        %9029 = vxpose.xlu0.b32.cont [13/16] %v8997, 128
        %9030 = vxpose.xlu0.b32.cont [14/16] %v8998, 128
        %9031 = vxpose.xlu0.b32.cont [15/16] %v8999, 128
        %9032 = vxpose.xlu0.b32.end [16/16] %v9000, 128
        %v9033 = vpop.trf.xlu0
        %v9034 = vpop.trf.xlu0
        %v9035 = vpop.trf.xlu0
        %v9036 = vpop.trf.xlu0
        %v9037 = vpop.trf.xlu0
        %v9038 = vpop.trf.xlu0
        %v9039 = vpop.trf.xlu0
        %v9040 = vpop.trf.xlu0
        %v9041 = vpop.trf.xlu0
        %v9042 = vpop.trf.xlu0
        %v9043 = vpop.trf.xlu0
        %v9044 = vpop.trf.xlu0
        %v9045 = vpop.trf.xlu0
        %v9046 = vpop.trf.xlu0
        %v9047 = vpop.trf.xlu0
        %v9048 = vpop.trf.xlu0
        %9049 = vxpose.xlu0.b32.start [1/16] %v9001, 128
        %9050 = vxpose.xlu0.b32.cont [2/16] %v9002, 128
        %9051 = vxpose.xlu0.b32.cont [3/16] %v9003, 128
        %9052 = vxpose.xlu0.b32.cont [4/16] %v9004, 128
        %9053 = vxpose.xlu0.b32.cont [5/16] %v9005, 128
        %9054 = vxpose.xlu0.b32.cont [6/16] %v9006, 128
        %9055 = vxpose.xlu0.b32.cont [7/16] %v9007, 128
        %9056 = vxpose.xlu0.b32.cont [8/16] %v9008, 128
        %9057 = vxpose.xlu0.b32.cont [9/16] %v9009, 128
        %9058 = vxpose.xlu0.b32.cont [10/16] %v9010, 128
        %9059 = vxpose.xlu0.b32.cont [11/16] %v9011, 128
        %9060 = vxpose.xlu0.b32.cont [12/16] %v9012, 128
        %9061 = vxpose.xlu0.b32.cont [13/16] %v9013, 128
        %9062 = vxpose.xlu0.b32.cont [14/16] %v9014, 128
        %9063 = vxpose.xlu0.b32.cont [15/16] %v9015, 128
        %9064 = vxpose.xlu0.b32.end [16/16] %v9016, 128
        %v9065 = vpop.trf.xlu0
        %v9066 = vpop.trf.xlu0
        %v9067 = vpop.trf.xlu0
        %v9068 = vpop.trf.xlu0
        %v9069 = vpop.trf.xlu0
        %v9070 = vpop.trf.xlu0
        %v9071 = vpop.trf.xlu0
        %v9072 = vpop.trf.xlu0
        %v9073 = vpop.trf.xlu0
        %v9074 = vpop.trf.xlu0
        %v9075 = vpop.trf.xlu0
        %v9076 = vpop.trf.xlu0
        %v9077 = vpop.trf.xlu0
        %v9078 = vpop.trf.xlu0
        %v9079 = vpop.trf.xlu0
        %v9080 = vpop.trf.xlu0
        %9081 = vst [vmem:[%s448] sm:$0xff] %v9033
        %9082 = vst [vmem:[%s448 + $0x8] sm:$0xff] %v9065
        %9083 = vst [vmem:[%s448 + $0x10] sm:$0xff] %v9034
        %9084 = vst [vmem:[%s448 + $0x18] sm:$0xff] %v9066
        %9085 = vst [vmem:[%s448 + $0x20] sm:$0xff] %v9035
        %9086 = vst [vmem:[%s448 + $0x28] sm:$0xff] %v9067
        %9087 = vst [vmem:[%s448 + $0x30] sm:$0xff] %v9036
        %9088 = vst [vmem:[%s448 + $0x38] sm:$0xff] %v9068
        %v9121 = vcombine.high %v8985, %v8985
        %v9123 = vunpack.c.l.s4 1983009808
        %v9124 = vunpack.c.0.s8 %v9123
        %v9125 = vlaneseq
        %v9126 = vshrl.u32 %v9125, 7
        %v9127 = vsub.s32 %v9124, %v9126
        %v9128 = vrot.slane %v8985, %v9127
        %v9130 = vunpack.c.l.s4 1983009808
        %v9131 = vunpack.c.0.s8 %v9130
        %v9132 = vlaneseq
        %v9133 = vshrl.u32 %v9132, 7
        %v9134 = vsub.s32 %v9131, %v9133
        %v9135 = vrot.slane %v9121, %v9134
        %v9136 = vcombine.high %v9128, %v9128
        %v9137 = vcombine.high %v9135, %v9135
        %v9138 = vcombine.high %v8986, %v8986
        %v9140 = vunpack.c.l.s4 1983009808
        %v9141 = vunpack.c.0.s8 %v9140
        %v9142 = vlaneseq
        %v9143 = vshrl.u32 %v9142, 7
        %v9144 = vsub.s32 %v9141, %v9143
        %v9145 = vrot.slane %v8986, %v9144
        %v9147 = vunpack.c.l.s4 1983009808
        %v9148 = vunpack.c.0.s8 %v9147
        %v9149 = vlaneseq
        %v9150 = vshrl.u32 %v9149, 7
        %v9151 = vsub.s32 %v9148, %v9150
        %v9152 = vrot.slane %v9138, %v9151
        %v9153 = vcombine.high %v9145, %v9145
        %v9154 = vcombine.high %v9152, %v9152
        %v9155 = vcombine.high %v8987, %v8987
        %v9157 = vunpack.c.l.s4 1983009808
        %v9158 = vunpack.c.0.s8 %v9157
        %v9159 = vlaneseq
        %v9160 = vshrl.u32 %v9159, 7
        %v9161 = vsub.s32 %v9158, %v9160
        %v9162 = vrot.slane %v8987, %v9161
        %v9164 = vunpack.c.l.s4 1983009808
        %v9165 = vunpack.c.0.s8 %v9164
        %v9166 = vlaneseq
        %v9167 = vshrl.u32 %v9166, 7
        %v9168 = vsub.s32 %v9165, %v9167
        %v9169 = vrot.slane %v9155, %v9168
        %v9170 = vcombine.high %v9162, %v9162
        %v9171 = vcombine.high %v9169, %v9169
        %v9172 = vcombine.high %v8988, %v8988
        %v9174 = vunpack.c.l.s4 1983009808
        %v9175 = vunpack.c.0.s8 %v9174
        %v9176 = vlaneseq
        %v9177 = vshrl.u32 %v9176, 7
        %v9178 = vsub.s32 %v9175, %v9177
        %v9179 = vrot.slane %v8988, %v9178
        %v9181 = vunpack.c.l.s4 1983009808
        %v9182 = vunpack.c.0.s8 %v9181
        %v9183 = vlaneseq
        %v9184 = vshrl.u32 %v9183, 7
        %v9185 = vsub.s32 %v9182, %v9184
        %v9186 = vrot.slane %v9172, %v9185
        %v9187 = vcombine.high %v9179, %v9179
        %v9188 = vcombine.high %v9186, %v9186
        %v9189 = vcombine.high %v8989, %v8989
        %v9191 = vunpack.c.l.s4 1983009808
        %v9192 = vunpack.c.0.s8 %v9191
        %v9193 = vlaneseq
        %v9194 = vshrl.u32 %v9193, 7
        %v9195 = vsub.s32 %v9192, %v9194
        %v9196 = vrot.slane %v8989, %v9195
        %v9198 = vunpack.c.l.s4 1983009808
        %v9199 = vunpack.c.0.s8 %v9198
        %v9200 = vlaneseq
        %v9201 = vshrl.u32 %v9200, 7
        %v9202 = vsub.s32 %v9199, %v9201
        %v9203 = vrot.slane %v9189, %v9202
        %v9204 = vcombine.high %v9196, %v9196
        %v9205 = vcombine.high %v9203, %v9203
        %v9206 = vcombine.high %v8990, %v8990
        %v9208 = vunpack.c.l.s4 1983009808
        %v9209 = vunpack.c.0.s8 %v9208
        %v9210 = vlaneseq
        %v9211 = vshrl.u32 %v9210, 7
        %v9212 = vsub.s32 %v9209, %v9211
        %v9213 = vrot.slane %v8990, %v9212
        %v9215 = vunpack.c.l.s4 1983009808
        %v9216 = vunpack.c.0.s8 %v9215
        %v9217 = vlaneseq
        %v9218 = vshrl.u32 %v9217, 7
        %v9219 = vsub.s32 %v9216, %v9218
        %v9220 = vrot.slane %v9206, %v9219
        %v9221 = vcombine.high %v9213, %v9213
        %v9222 = vcombine.high %v9220, %v9220
        %v9223 = vcombine.high %v8991, %v8991
        %v9225 = vunpack.c.l.s4 1983009808
        %v9226 = vunpack.c.0.s8 %v9225
        %v9227 = vlaneseq
        %v9228 = vshrl.u32 %v9227, 7
        %v9229 = vsub.s32 %v9226, %v9228
        %v9230 = vrot.slane %v8991, %v9229
        %v9232 = vunpack.c.l.s4 1983009808
        %v9233 = vunpack.c.0.s8 %v9232
        %v9234 = vlaneseq
        %v9235 = vshrl.u32 %v9234, 7
        %v9236 = vsub.s32 %v9233, %v9235
        %v9237 = vrot.slane %v9223, %v9236
        %v9238 = vcombine.high %v9230, %v9230
        %v9239 = vcombine.high %v9237, %v9237
        %v9240 = vcombine.high %v8992, %v8992
        %v9242 = vunpack.c.l.s4 1983009808
        %v9243 = vunpack.c.0.s8 %v9242
        %v9244 = vlaneseq
        %v9245 = vshrl.u32 %v9244, 7
        %v9246 = vsub.s32 %v9243, %v9245
        %v9247 = vrot.slane %v8992, %v9246
        %v9249 = vunpack.c.l.s4 1983009808
        %v9250 = vunpack.c.0.s8 %v9249
        %v9251 = vlaneseq
        %v9252 = vshrl.u32 %v9251, 7
        %v9253 = vsub.s32 %v9250, %v9252
        %v9254 = vrot.slane %v9240, %v9253
        %v9255 = vcombine.high %v9247, %v9247
        %v9256 = vcombine.high %v9254, %v9254
        %v9257 = vcombine.high %v8993, %v8993
        %v9259 = vunpack.c.l.s4 1983009808
        %v9260 = vunpack.c.0.s8 %v9259
        %v9261 = vlaneseq
        %v9262 = vshrl.u32 %v9261, 7
        %v9263 = vsub.s32 %v9260, %v9262
        %v9264 = vrot.slane %v8993, %v9263
        %v9266 = vunpack.c.l.s4 1983009808
        %v9267 = vunpack.c.0.s8 %v9266
        %v9268 = vlaneseq
        %v9269 = vshrl.u32 %v9268, 7
        %v9270 = vsub.s32 %v9267, %v9269
        %v9271 = vrot.slane %v9257, %v9270
        %v9272 = vcombine.high %v9264, %v9264
        %v9273 = vcombine.high %v9271, %v9271
        %v9274 = vcombine.high %v8994, %v8994
        %v9276 = vunpack.c.l.s4 1983009808
        %v9277 = vunpack.c.0.s8 %v9276
        %v9278 = vlaneseq
        %v9279 = vshrl.u32 %v9278, 7
        %v9280 = vsub.s32 %v9277, %v9279
        %v9281 = vrot.slane %v8994, %v9280
        %v9283 = vunpack.c.l.s4 1983009808
        %v9284 = vunpack.c.0.s8 %v9283
        %v9285 = vlaneseq
        %v9286 = vshrl.u32 %v9285, 7
        %v9287 = vsub.s32 %v9284, %v9286
        %v9288 = vrot.slane %v9274, %v9287
        %v9289 = vcombine.high %v9281, %v9281
        %v9290 = vcombine.high %v9288, %v9288
        %v9291 = vcombine.high %v8995, %v8995
        %v9293 = vunpack.c.l.s4 1983009808
        %v9294 = vunpack.c.0.s8 %v9293
        %v9295 = vlaneseq
        %v9296 = vshrl.u32 %v9295, 7
        %v9297 = vsub.s32 %v9294, %v9296
        %v9298 = vrot.slane %v8995, %v9297
        %v9300 = vunpack.c.l.s4 1983009808
        %v9301 = vunpack.c.0.s8 %v9300
        %v9302 = vlaneseq
        %v9303 = vshrl.u32 %v9302, 7
        %v9304 = vsub.s32 %v9301, %v9303
        %v9305 = vrot.slane %v9291, %v9304
        %v9306 = vcombine.high %v9298, %v9298
        %v9307 = vcombine.high %v9305, %v9305
        %v9308 = vcombine.high %v8996, %v8996
        %v9310 = vunpack.c.l.s4 1983009808
        %v9311 = vunpack.c.0.s8 %v9310
        %v9312 = vlaneseq
        %v9313 = vshrl.u32 %v9312, 7
        %v9314 = vsub.s32 %v9311, %v9313
        %v9315 = vrot.slane %v8996, %v9314
        %v9317 = vunpack.c.l.s4 1983009808
        %v9318 = vunpack.c.0.s8 %v9317
        %v9319 = vlaneseq
        %v9320 = vshrl.u32 %v9319, 7
        %v9321 = vsub.s32 %v9318, %v9320
        %v9322 = vrot.slane %v9308, %v9321
        %v9323 = vcombine.high %v9315, %v9315
        %v9324 = vcombine.high %v9322, %v9322
        %v9325 = vcombine.high %v8997, %v8997
        %v9327 = vunpack.c.l.s4 1983009808
        %v9328 = vunpack.c.0.s8 %v9327
        %v9329 = vlaneseq
        %v9330 = vshrl.u32 %v9329, 7
        %v9331 = vsub.s32 %v9328, %v9330
        %v9332 = vrot.slane %v8997, %v9331
        %v9334 = vunpack.c.l.s4 1983009808
        %v9335 = vunpack.c.0.s8 %v9334
        %v9336 = vlaneseq
        %v9337 = vshrl.u32 %v9336, 7
        %v9338 = vsub.s32 %v9335, %v9337
        %v9339 = vrot.slane %v9325, %v9338
        %v9340 = vcombine.high %v9332, %v9332
        %v9341 = vcombine.high %v9339, %v9339
        %v9342 = vcombine.high %v8998, %v8998
        %v9344 = vunpack.c.l.s4 1983009808
        %v9345 = vunpack.c.0.s8 %v9344
        %v9346 = vlaneseq
        %v9347 = vshrl.u32 %v9346, 7
        %v9348 = vsub.s32 %v9345, %v9347
        %v9349 = vrot.slane %v8998, %v9348
        %v9351 = vunpack.c.l.s4 1983009808
        %v9352 = vunpack.c.0.s8 %v9351
        %v9353 = vlaneseq
        %v9354 = vshrl.u32 %v9353, 7
        %v9355 = vsub.s32 %v9352, %v9354
        %v9356 = vrot.slane %v9342, %v9355
        %v9357 = vcombine.high %v9349, %v9349
        %v9358 = vcombine.high %v9356, %v9356
        %v9359 = vcombine.high %v8999, %v8999
        %v9361 = vunpack.c.l.s4 1983009808
        %v9362 = vunpack.c.0.s8 %v9361
        %v9363 = vlaneseq
        %v9364 = vshrl.u32 %v9363, 7
        %v9365 = vsub.s32 %v9362, %v9364
        %v9366 = vrot.slane %v8999, %v9365
        %v9368 = vunpack.c.l.s4 1983009808
        %v9369 = vunpack.c.0.s8 %v9368
        %v9370 = vlaneseq
        %v9371 = vshrl.u32 %v9370, 7
        %v9372 = vsub.s32 %v9369, %v9371
        %v9373 = vrot.slane %v9359, %v9372
        %v9374 = vcombine.high %v9366, %v9366
        %v9375 = vcombine.high %v9373, %v9373
        %v9376 = vcombine.high %v9000, %v9000
        %v9378 = vunpack.c.l.s4 1983009808
        %v9379 = vunpack.c.0.s8 %v9378
        %v9380 = vlaneseq
        %v9381 = vshrl.u32 %v9380, 7
        %v9382 = vsub.s32 %v9379, %v9381
        %v9383 = vrot.slane %v9000, %v9382
        %v9385 = vunpack.c.l.s4 1983009808
        %v9386 = vunpack.c.0.s8 %v9385
        %v9387 = vlaneseq
        %v9388 = vshrl.u32 %v9387, 7
        %v9389 = vsub.s32 %v9386, %v9388
        %v9390 = vrot.slane %v9376, %v9389
        %v9391 = vcombine.high %v9383, %v9383
        %v9392 = vcombine.high %v9390, %v9390
        %v9393 = vcombine.high %v9001, %v9001
        %v9395 = vunpack.c.l.s4 1983009808
        %v9396 = vunpack.c.0.s8 %v9395
        %v9397 = vlaneseq
        %v9398 = vshrl.u32 %v9397, 7
        %v9399 = vsub.s32 %v9396, %v9398
        %v9400 = vrot.slane %v9001, %v9399
        %v9402 = vunpack.c.l.s4 1983009808
        %v9403 = vunpack.c.0.s8 %v9402
        %v9404 = vlaneseq
        %v9405 = vshrl.u32 %v9404, 7
        %v9406 = vsub.s32 %v9403, %v9405
        %v9407 = vrot.slane %v9393, %v9406
        %v9408 = vcombine.high %v9400, %v9400
        %v9409 = vcombine.high %v9407, %v9407
        %v9410 = vcombine.high %v9002, %v9002
        %v9412 = vunpack.c.l.s4 1983009808
        %v9413 = vunpack.c.0.s8 %v9412
        %v9414 = vlaneseq
        %v9415 = vshrl.u32 %v9414, 7
        %v9416 = vsub.s32 %v9413, %v9415
        %v9417 = vrot.slane %v9002, %v9416
        %v9419 = vunpack.c.l.s4 1983009808
        %v9420 = vunpack.c.0.s8 %v9419
        %v9421 = vlaneseq
        %v9422 = vshrl.u32 %v9421, 7
        %v9423 = vsub.s32 %v9420, %v9422
        %v9424 = vrot.slane %v9410, %v9423
        %v9425 = vcombine.high %v9417, %v9417
        %v9426 = vcombine.high %v9424, %v9424
        %v9427 = vcombine.high %v9003, %v9003
        %v9429 = vunpack.c.l.s4 1983009808
        %v9430 = vunpack.c.0.s8 %v9429
        %v9431 = vlaneseq
        %v9432 = vshrl.u32 %v9431, 7
        %v9433 = vsub.s32 %v9430, %v9432
        %v9434 = vrot.slane %v9003, %v9433
        %v9436 = vunpack.c.l.s4 1983009808
        %v9437 = vunpack.c.0.s8 %v9436
        %v9438 = vlaneseq
        %v9439 = vshrl.u32 %v9438, 7
        %v9440 = vsub.s32 %v9437, %v9439
        %v9441 = vrot.slane %v9427, %v9440
        %v9442 = vcombine.high %v9434, %v9434
        %v9443 = vcombine.high %v9441, %v9441
        %v9444 = vcombine.high %v9004, %v9004
        %v9446 = vunpack.c.l.s4 1983009808
        %v9447 = vunpack.c.0.s8 %v9446
        %v9448 = vlaneseq
        %v9449 = vshrl.u32 %v9448, 7
        %v9450 = vsub.s32 %v9447, %v9449
        %v9451 = vrot.slane %v9004, %v9450
        %v9453 = vunpack.c.l.s4 1983009808
        %v9454 = vunpack.c.0.s8 %v9453
        %v9455 = vlaneseq
        %v9456 = vshrl.u32 %v9455, 7
        %v9457 = vsub.s32 %v9454, %v9456
        %v9458 = vrot.slane %v9444, %v9457
        %v9459 = vcombine.high %v9451, %v9451
        %v9460 = vcombine.high %v9458, %v9458
        %v9461 = vcombine.high %v9005, %v9005
        %v9463 = vunpack.c.l.s4 1983009808
        %v9464 = vunpack.c.0.s8 %v9463
        %v9465 = vlaneseq
        %v9466 = vshrl.u32 %v9465, 7
        %v9467 = vsub.s32 %v9464, %v9466
        %v9468 = vrot.slane %v9005, %v9467
        %v9470 = vunpack.c.l.s4 1983009808
        %v9471 = vunpack.c.0.s8 %v9470
        %v9472 = vlaneseq
        %v9473 = vshrl.u32 %v9472, 7
        %v9474 = vsub.s32 %v9471, %v9473
        %v9475 = vrot.slane %v9461, %v9474
        %v9476 = vcombine.high %v9468, %v9468
        %v9477 = vcombine.high %v9475, %v9475
        %v9478 = vcombine.high %v9006, %v9006
        %v9480 = vunpack.c.l.s4 1983009808
        %v9481 = vunpack.c.0.s8 %v9480
        %v9482 = vlaneseq
        %v9483 = vshrl.u32 %v9482, 7
        %v9484 = vsub.s32 %v9481, %v9483
        %v9485 = vrot.slane %v9006, %v9484
        %v9487 = vunpack.c.l.s4 1983009808
        %v9488 = vunpack.c.0.s8 %v9487
        %v9489 = vlaneseq
        %v9490 = vshrl.u32 %v9489, 7
        %v9491 = vsub.s32 %v9488, %v9490
        %v9492 = vrot.slane %v9478, %v9491
        %v9493 = vcombine.high %v9485, %v9485
        %v9494 = vcombine.high %v9492, %v9492
        %v9495 = vcombine.high %v9007, %v9007
        %v9497 = vunpack.c.l.s4 1983009808
        %v9498 = vunpack.c.0.s8 %v9497
        %v9499 = vlaneseq
        %v9500 = vshrl.u32 %v9499, 7
        %v9501 = vsub.s32 %v9498, %v9500
        %v9502 = vrot.slane %v9007, %v9501
        %v9504 = vunpack.c.l.s4 1983009808
        %v9505 = vunpack.c.0.s8 %v9504
        %v9506 = vlaneseq
        %v9507 = vshrl.u32 %v9506, 7
        %v9508 = vsub.s32 %v9505, %v9507
        %v9509 = vrot.slane %v9495, %v9508
        %v9510 = vcombine.high %v9502, %v9502
        %v9511 = vcombine.high %v9509, %v9509
        %v9512 = vcombine.high %v9008, %v9008
        %v9514 = vunpack.c.l.s4 1983009808
        %v9515 = vunpack.c.0.s8 %v9514
        %v9516 = vlaneseq
        %v9517 = vshrl.u32 %v9516, 7
        %v9518 = vsub.s32 %v9515, %v9517
        %v9519 = vrot.slane %v9008, %v9518
        %v9521 = vunpack.c.l.s4 1983009808
        %v9522 = vunpack.c.0.s8 %v9521
        %v9523 = vlaneseq
        %v9524 = vshrl.u32 %v9523, 7
        %v9525 = vsub.s32 %v9522, %v9524
        %v9526 = vrot.slane %v9512, %v9525
        %v9527 = vcombine.high %v9519, %v9519
        %v9528 = vcombine.high %v9526, %v9526
        %v9529 = vcombine.high %v9009, %v9009
        %v9531 = vunpack.c.l.s4 1983009808
        %v9532 = vunpack.c.0.s8 %v9531
        %v9533 = vlaneseq
        %v9534 = vshrl.u32 %v9533, 7
        %v9535 = vsub.s32 %v9532, %v9534
        %v9536 = vrot.slane %v9009, %v9535
        %v9538 = vunpack.c.l.s4 1983009808
        %v9539 = vunpack.c.0.s8 %v9538
        %v9540 = vlaneseq
        %v9541 = vshrl.u32 %v9540, 7
        %v9542 = vsub.s32 %v9539, %v9541
        %v9543 = vrot.slane %v9529, %v9542
        %v9544 = vcombine.high %v9536, %v9536
        %v9545 = vcombine.high %v9543, %v9543
        %v9546 = vcombine.high %v9010, %v9010
        %v9548 = vunpack.c.l.s4 1983009808
        %v9549 = vunpack.c.0.s8 %v9548
        %v9550 = vlaneseq
        %v9551 = vshrl.u32 %v9550, 7
        %v9552 = vsub.s32 %v9549, %v9551
        %v9553 = vrot.slane %v9010, %v9552
        %v9555 = vunpack.c.l.s4 1983009808
        %v9556 = vunpack.c.0.s8 %v9555
        %v9557 = vlaneseq
        %v9558 = vshrl.u32 %v9557, 7
        %v9559 = vsub.s32 %v9556, %v9558
        %v9560 = vrot.slane %v9546, %v9559
        %v9561 = vcombine.high %v9553, %v9553
        %v9562 = vcombine.high %v9560, %v9560
        %v9563 = vcombine.high %v9011, %v9011
        %v9565 = vunpack.c.l.s4 1983009808
        %v9566 = vunpack.c.0.s8 %v9565
        %v9567 = vlaneseq
        %v9568 = vshrl.u32 %v9567, 7
        %v9569 = vsub.s32 %v9566, %v9568
        %v9570 = vrot.slane %v9011, %v9569
        %v9572 = vunpack.c.l.s4 1983009808
        %v9573 = vunpack.c.0.s8 %v9572
        %v9574 = vlaneseq
        %v9575 = vshrl.u32 %v9574, 7
        %v9576 = vsub.s32 %v9573, %v9575
        %v9577 = vrot.slane %v9563, %v9576
        %v9578 = vcombine.high %v9570, %v9570
        %v9579 = vcombine.high %v9577, %v9577
        %v9580 = vcombine.high %v9012, %v9012
        %v9582 = vunpack.c.l.s4 1983009808
        %v9583 = vunpack.c.0.s8 %v9582
        %v9584 = vlaneseq
        %v9585 = vshrl.u32 %v9584, 7
        %v9586 = vsub.s32 %v9583, %v9585
        %v9587 = vrot.slane %v9012, %v9586
        %v9589 = vunpack.c.l.s4 1983009808
        %v9590 = vunpack.c.0.s8 %v9589
        %v9591 = vlaneseq
        %v9592 = vshrl.u32 %v9591, 7
        %v9593 = vsub.s32 %v9590, %v9592
        %v9594 = vrot.slane %v9580, %v9593
        %v9595 = vcombine.high %v9587, %v9587
        %v9596 = vcombine.high %v9594, %v9594
        %v9597 = vcombine.high %v9013, %v9013
        %v9599 = vunpack.c.l.s4 1983009808
        %v9600 = vunpack.c.0.s8 %v9599
        %v9601 = vlaneseq
        %v9602 = vshrl.u32 %v9601, 7
        %v9603 = vsub.s32 %v9600, %v9602
        %v9604 = vrot.slane %v9013, %v9603
        %v9606 = vunpack.c.l.s4 1983009808
        %v9607 = vunpack.c.0.s8 %v9606
        %v9608 = vlaneseq
        %v9609 = vshrl.u32 %v9608, 7
        %v9610 = vsub.s32 %v9607, %v9609
        %v9611 = vrot.slane %v9597, %v9610
        %v9612 = vcombine.high %v9604, %v9604
        %v9613 = vcombine.high %v9611, %v9611
        %v9614 = vcombine.high %v9014, %v9014
        %v9616 = vunpack.c.l.s4 1983009808
        %v9617 = vunpack.c.0.s8 %v9616
        %v9618 = vlaneseq
        %v9619 = vshrl.u32 %v9618, 7
        %v9620 = vsub.s32 %v9617, %v9619
        %v9621 = vrot.slane %v9014, %v9620
        %v9623 = vunpack.c.l.s4 1983009808
        %v9624 = vunpack.c.0.s8 %v9623
        %v9625 = vlaneseq
        %v9626 = vshrl.u32 %v9625, 7
        %v9627 = vsub.s32 %v9624, %v9626
        %v9628 = vrot.slane %v9614, %v9627
        %v9629 = vcombine.high %v9621, %v9621
        %v9630 = vcombine.high %v9628, %v9628
        %v9631 = vcombine.high %v9015, %v9015
        %v9633 = vunpack.c.l.s4 1983009808
        %v9634 = vunpack.c.0.s8 %v9633
        %v9635 = vlaneseq
        %v9636 = vshrl.u32 %v9635, 7
        %v9637 = vsub.s32 %v9634, %v9636
        %v9638 = vrot.slane %v9015, %v9637
        %v9640 = vunpack.c.l.s4 1983009808
        %v9641 = vunpack.c.0.s8 %v9640
        %v9642 = vlaneseq
        %v9643 = vshrl.u32 %v9642, 7
        %v9644 = vsub.s32 %v9641, %v9643
        %v9645 = vrot.slane %v9631, %v9644
        %v9646 = vcombine.high %v9638, %v9638
        %v9647 = vcombine.high %v9645, %v9645
        %v9648 = vcombine.high %v9016, %v9016
        %v9650 = vunpack.c.l.s4 1983009808
        %v9651 = vunpack.c.0.s8 %v9650
        %v9652 = vlaneseq
        %v9653 = vshrl.u32 %v9652, 7
        %v9654 = vsub.s32 %v9651, %v9653
        %v9655 = vrot.slane %v9016, %v9654
        %v9657 = vunpack.c.l.s4 1983009808
        %v9658 = vunpack.c.0.s8 %v9657
        %v9659 = vlaneseq
        %v9660 = vshrl.u32 %v9659, 7
        %v9661 = vsub.s32 %v9658, %v9660
        %v9662 = vrot.slane %v9648, %v9661
        %v9663 = vcombine.high %v9655, %v9655
        %v9664 = vcombine.high %v9662, %v9662
        %v9793 = vrot.slane %v9128, 7
        %v9794 = vrot.slane %v9793, 2
        %v9795 = vrot.slane %v9136, 7
        %v9796 = vrot.slane %v9795, 2
        %v9797 = vrot.slane %v9135, 7
        %v9798 = vrot.slane %v9797, 2
        %v9799 = vrot.slane %v9137, 7
        %v9800 = vrot.slane %v9799, 2
        %v9801 = vrot.slane %v9145, 7
        %v9802 = vrot.slane %v9801, 2
        %v9803 = vrot.slane %v9153, 7
        %v9804 = vrot.slane %v9803, 2
        %v9805 = vrot.slane %v9152, 7
        %v9806 = vrot.slane %v9805, 2
        %v9807 = vrot.slane %v9154, 7
        %v9808 = vrot.slane %v9807, 2
        %v9809 = vrot.slane %v9196, 7
        %v9810 = vrot.slane %v9809, 2
        %v9811 = vrot.slane %v9204, 7
        %v9812 = vrot.slane %v9811, 2
        %v9813 = vrot.slane %v9203, 7
        %v9814 = vrot.slane %v9813, 2
        %v9815 = vrot.slane %v9205, 7
        %v9816 = vrot.slane %v9815, 2
        %v9817 = vrot.slane %v9213, 7
        %v9818 = vrot.slane %v9817, 2
        %v9819 = vrot.slane %v9221, 7
        %v9820 = vrot.slane %v9819, 2
        %v9821 = vrot.slane %v9220, 7
        %v9822 = vrot.slane %v9821, 2
        %v9823 = vrot.slane %v9222, 7
        %v9824 = vrot.slane %v9823, 2
        %v9825 = vrot.slane %v9264, 7
        %v9826 = vrot.slane %v9825, 2
        %v9827 = vrot.slane %v9272, 7
        %v9828 = vrot.slane %v9827, 2
        %v9829 = vrot.slane %v9271, 7
        %v9830 = vrot.slane %v9829, 2
        %v9831 = vrot.slane %v9273, 7
        %v9832 = vrot.slane %v9831, 2
        %v9833 = vrot.slane %v9281, 7
        %v9834 = vrot.slane %v9833, 2
        %v9835 = vrot.slane %v9289, 7
        %v9836 = vrot.slane %v9835, 2
        %v9837 = vrot.slane %v9288, 7
        %v9838 = vrot.slane %v9837, 2
        %v9839 = vrot.slane %v9290, 7
        %v9840 = vrot.slane %v9839, 2
        %v9841 = vrot.slane %v9332, 7
        %v9842 = vrot.slane %v9841, 2
        %v9843 = vrot.slane %v9340, 7
        %v9844 = vrot.slane %v9843, 2
        %v9845 = vrot.slane %v9339, 7
        %v9846 = vrot.slane %v9845, 2
        %v9847 = vrot.slane %v9341, 7
        %v9848 = vrot.slane %v9847, 2
        %v9849 = vrot.slane %v9349, 7
        %v9850 = vrot.slane %v9849, 2
        %v9851 = vrot.slane %v9357, 7
        %v9852 = vrot.slane %v9851, 2
        %v9853 = vrot.slane %v9356, 7
        %v9854 = vrot.slane %v9853, 2
        %v9855 = vrot.slane %v9358, 7
        %v9856 = vrot.slane %v9855, 2
        %v9857 = vrot.slane %v9400, 7
        %v9858 = vrot.slane %v9857, 2
        %v9859 = vrot.slane %v9408, 7
        %v9860 = vrot.slane %v9859, 2
        %v9861 = vrot.slane %v9407, 7
        %v9862 = vrot.slane %v9861, 2
        %v9863 = vrot.slane %v9409, 7
        %v9864 = vrot.slane %v9863, 2
        %v9865 = vrot.slane %v9417, 7
        %v9866 = vrot.slane %v9865, 2
        %v9867 = vrot.slane %v9425, 7
        %v9868 = vrot.slane %v9867, 2
        %v9869 = vrot.slane %v9424, 7
        %v9870 = vrot.slane %v9869, 2
        %v9871 = vrot.slane %v9426, 7
        %v9872 = vrot.slane %v9871, 2
        %v9873 = vrot.slane %v9468, 7
        %v9874 = vrot.slane %v9873, 2
        %v9875 = vrot.slane %v9476, 7
        %v9876 = vrot.slane %v9875, 2
        %v9877 = vrot.slane %v9475, 7
        %v9878 = vrot.slane %v9877, 2
        %v9879 = vrot.slane %v9477, 7
        %v9880 = vrot.slane %v9879, 2
        %v9881 = vrot.slane %v9485, 7
        %v9882 = vrot.slane %v9881, 2
        %v9883 = vrot.slane %v9493, 7
        %v9884 = vrot.slane %v9883, 2
        %v9885 = vrot.slane %v9492, 7
        %v9886 = vrot.slane %v9885, 2
        %v9887 = vrot.slane %v9494, 7
        %v9888 = vrot.slane %v9887, 2
        %v9889 = vrot.slane %v9536, 7
        %v9890 = vrot.slane %v9889, 2
        %v9891 = vrot.slane %v9544, 7
        %v9892 = vrot.slane %v9891, 2
        %v9893 = vrot.slane %v9543, 7
        %v9894 = vrot.slane %v9893, 2
        %v9895 = vrot.slane %v9545, 7
        %v9896 = vrot.slane %v9895, 2
        %v9897 = vrot.slane %v9553, 7
        %v9898 = vrot.slane %v9897, 2
        %v9899 = vrot.slane %v9561, 7
        %v9900 = vrot.slane %v9899, 2
        %v9901 = vrot.slane %v9560, 7
        %v9902 = vrot.slane %v9901, 2
        %v9903 = vrot.slane %v9562, 7
        %v9904 = vrot.slane %v9903, 2
        %v9905 = vrot.slane %v9604, 7
        %v9906 = vrot.slane %v9905, 2
        %v9907 = vrot.slane %v9612, 7
        %v9908 = vrot.slane %v9907, 2
        %v9909 = vrot.slane %v9611, 7
        %v9910 = vrot.slane %v9909, 2
        %v9911 = vrot.slane %v9613, 7
        %v9912 = vrot.slane %v9911, 2
        %v9913 = vrot.slane %v9621, 7
        %v9914 = vrot.slane %v9913, 2
        %v9915 = vrot.slane %v9629, 7
        %v9916 = vrot.slane %v9915, 2
        %v9917 = vrot.slane %v9628, 7
        %v9918 = vrot.slane %v9917, 2
        %v9919 = vrot.slane %v9630, 7
        %v9920 = vrot.slane %v9919, 2
        %v9985 = vmax.f32 %v9128, %v9794
        %v9986 = vmax.f32 %v9136, %v9796
        %v9987 = vmax.f32 %v9135, %v9798
        %v9988 = vmax.f32 %v9137, %v9800
        %v9989 = vmax.f32 %v9145, %v9802
        %v9990 = vmax.f32 %v9153, %v9804
        %v9991 = vmax.f32 %v9152, %v9806
        %v9992 = vmax.f32 %v9154, %v9808
        %v9993 = vmax.f32 %v9196, %v9810
        %v9994 = vmax.f32 %v9204, %v9812
        %v9995 = vmax.f32 %v9203, %v9814
        %v9996 = vmax.f32 %v9205, %v9816
        %v9997 = vmax.f32 %v9213, %v9818
        %v9998 = vmax.f32 %v9221, %v9820
        %v9999 = vmax.f32 %v9220, %v9822
        %v10000 = vmax.f32 %v9222, %v9824
        %v10001 = vmax.f32 %v9264, %v9826
        %v10002 = vmax.f32 %v9272, %v9828
        %v10003 = vmax.f32 %v9271, %v9830
        %v10004 = vmax.f32 %v9273, %v9832
        %v10005 = vmax.f32 %v9281, %v9834
        %v10006 = vmax.f32 %v9289, %v9836
        %v10007 = vmax.f32 %v9288, %v9838
        %v10008 = vmax.f32 %v9290, %v9840
        %v10009 = vmax.f32 %v9332, %v9842
        %v10010 = vmax.f32 %v9340, %v9844
        %v10011 = vmax.f32 %v9339, %v9846
        %v10012 = vmax.f32 %v9341, %v9848
        %v10013 = vmax.f32 %v9349, %v9850
        %v10014 = vmax.f32 %v9357, %v9852
        %v10015 = vmax.f32 %v9356, %v9854
        %v10016 = vmax.f32 %v9358, %v9856
        %v10017 = vmax.f32 %v9400, %v9858
        %v10018 = vmax.f32 %v9408, %v9860
        %v10019 = vmax.f32 %v9407, %v9862
        %v10020 = vmax.f32 %v9409, %v9864
        %v10021 = vmax.f32 %v9417, %v9866
        %v10022 = vmax.f32 %v9425, %v9868
        %v10023 = vmax.f32 %v9424, %v9870
        %v10024 = vmax.f32 %v9426, %v9872
        %v10025 = vmax.f32 %v9468, %v9874
        %v10026 = vmax.f32 %v9476, %v9876
        %v10027 = vmax.f32 %v9475, %v9878
        %v10028 = vmax.f32 %v9477, %v9880
        %v10029 = vmax.f32 %v9485, %v9882
        %v10030 = vmax.f32 %v9493, %v9884
        %v10031 = vmax.f32 %v9492, %v9886
        %v10032 = vmax.f32 %v9494, %v9888
        %v10033 = vmax.f32 %v9536, %v9890
        %v10034 = vmax.f32 %v9544, %v9892
        %v10035 = vmax.f32 %v9543, %v9894
        %v10036 = vmax.f32 %v9545, %v9896
        %v10037 = vmax.f32 %v9553, %v9898
        %v10038 = vmax.f32 %v9561, %v9900
        %v10039 = vmax.f32 %v9560, %v9902
        %v10040 = vmax.f32 %v9562, %v9904
        %v10041 = vmax.f32 %v9604, %v9906
        %v10042 = vmax.f32 %v9612, %v9908
        %v10043 = vmax.f32 %v9611, %v9910
        %v10044 = vmax.f32 %v9613, %v9912
        %v10045 = vmax.f32 %v9621, %v9914
        %v10046 = vmax.f32 %v9629, %v9916
        %v10047 = vmax.f32 %v9628, %v9918
        %v10048 = vmax.f32 %v9630, %v9920
        %v10049 = vrot.slane %v9162, 7
        %v10050 = vrot.slane %v10049, 2
        %v10051 = vrot.slane %v9170, 7
        %v10052 = vrot.slane %v10051, 2
        %v10053 = vrot.slane %v9169, 7
        %v10054 = vrot.slane %v10053, 2
        %v10055 = vrot.slane %v9171, 7
        %v10056 = vrot.slane %v10055, 2
        %v10057 = vrot.slane %v9179, 7
        %v10058 = vrot.slane %v10057, 2
        %v10059 = vrot.slane %v9187, 7
        %v10060 = vrot.slane %v10059, 2
        %v10061 = vrot.slane %v9186, 7
        %v10062 = vrot.slane %v10061, 2
        %v10063 = vrot.slane %v9188, 7
        %v10064 = vrot.slane %v10063, 2
        %v10065 = vrot.slane %v9230, 7
        %v10066 = vrot.slane %v10065, 2
        %v10067 = vrot.slane %v9238, 7
        %v10068 = vrot.slane %v10067, 2
        %v10069 = vrot.slane %v9237, 7
        %v10070 = vrot.slane %v10069, 2
        %v10071 = vrot.slane %v9239, 7
        %v10072 = vrot.slane %v10071, 2
        %v10073 = vrot.slane %v9247, 7
        %v10074 = vrot.slane %v10073, 2
        %v10075 = vrot.slane %v9255, 7
        %v10076 = vrot.slane %v10075, 2
        %v10077 = vrot.slane %v9254, 7
        %v10078 = vrot.slane %v10077, 2
        %v10079 = vrot.slane %v9256, 7
        %v10080 = vrot.slane %v10079, 2
        %v10081 = vrot.slane %v9298, 7
        %v10082 = vrot.slane %v10081, 2
        %v10083 = vrot.slane %v9306, 7
        %v10084 = vrot.slane %v10083, 2
        %v10085 = vrot.slane %v9305, 7
        %v10086 = vrot.slane %v10085, 2
        %v10087 = vrot.slane %v9307, 7
        %v10088 = vrot.slane %v10087, 2
        %v10089 = vrot.slane %v9315, 7
        %v10090 = vrot.slane %v10089, 2
        %v10091 = vrot.slane %v9323, 7
        %v10092 = vrot.slane %v10091, 2
        %v10093 = vrot.slane %v9322, 7
        %v10094 = vrot.slane %v10093, 2
        %v10095 = vrot.slane %v9324, 7
        %v10096 = vrot.slane %v10095, 2
        %v10097 = vrot.slane %v9366, 7
        %v10098 = vrot.slane %v10097, 2
        %v10099 = vrot.slane %v9374, 7
        %v10100 = vrot.slane %v10099, 2
        %v10101 = vrot.slane %v9373, 7
        %v10102 = vrot.slane %v10101, 2
        %v10103 = vrot.slane %v9375, 7
        %v10104 = vrot.slane %v10103, 2
        %v10105 = vrot.slane %v9383, 7
        %v10106 = vrot.slane %v10105, 2
        %v10107 = vrot.slane %v9391, 7
        %v10108 = vrot.slane %v10107, 2
        %v10109 = vrot.slane %v9390, 7
        %v10110 = vrot.slane %v10109, 2
        %v10111 = vrot.slane %v9392, 7
        %v10112 = vrot.slane %v10111, 2
        %v10113 = vrot.slane %v9434, 7
        %v10114 = vrot.slane %v10113, 2
        %v10115 = vrot.slane %v9442, 7
        %v10116 = vrot.slane %v10115, 2
        %v10117 = vrot.slane %v9441, 7
        %v10118 = vrot.slane %v10117, 2
        %v10119 = vrot.slane %v9443, 7
        %v10120 = vrot.slane %v10119, 2
        %v10121 = vrot.slane %v9451, 7
        %v10122 = vrot.slane %v10121, 2
        %v10123 = vrot.slane %v9459, 7
        %v10124 = vrot.slane %v10123, 2
        %v10125 = vrot.slane %v9458, 7
        %v10126 = vrot.slane %v10125, 2
        %v10127 = vrot.slane %v9460, 7
        %v10128 = vrot.slane %v10127, 2
        %v10129 = vrot.slane %v9502, 7
        %v10130 = vrot.slane %v10129, 2
        %v10131 = vrot.slane %v9510, 7
        %v10132 = vrot.slane %v10131, 2
        %v10133 = vrot.slane %v9509, 7
        %v10134 = vrot.slane %v10133, 2
        %v10135 = vrot.slane %v9511, 7
        %v10136 = vrot.slane %v10135, 2
        %v10137 = vrot.slane %v9519, 7
        %v10138 = vrot.slane %v10137, 2
        %v10139 = vrot.slane %v9527, 7
        %v10140 = vrot.slane %v10139, 2
        %v10141 = vrot.slane %v9526, 7
        %v10142 = vrot.slane %v10141, 2
        %v10143 = vrot.slane %v9528, 7
        %v10144 = vrot.slane %v10143, 2
        %v10145 = vrot.slane %v9570, 7
        %v10146 = vrot.slane %v10145, 2
        %v10147 = vrot.slane %v9578, 7
        %v10148 = vrot.slane %v10147, 2
        %v10149 = vrot.slane %v9577, 7
        %v10150 = vrot.slane %v10149, 2
        %v10151 = vrot.slane %v9579, 7
        %v10152 = vrot.slane %v10151, 2
        %v10153 = vrot.slane %v9587, 7
        %v10154 = vrot.slane %v10153, 2
        %v10155 = vrot.slane %v9595, 7
        %v10156 = vrot.slane %v10155, 2
        %v10157 = vrot.slane %v9594, 7
        %v10158 = vrot.slane %v10157, 2
        %v10159 = vrot.slane %v9596, 7
        %v10160 = vrot.slane %v10159, 2
        %v10161 = vrot.slane %v9638, 7
        %v10162 = vrot.slane %v10161, 2
        %v10163 = vrot.slane %v9646, 7
        %v10164 = vrot.slane %v10163, 2
        %v10165 = vrot.slane %v9645, 7
        %v10166 = vrot.slane %v10165, 2
        %v10167 = vrot.slane %v9647, 7
        %v10168 = vrot.slane %v10167, 2
        %v10169 = vrot.slane %v9655, 7
        %v10170 = vrot.slane %v10169, 2
        %v10171 = vrot.slane %v9663, 7
        %v10172 = vrot.slane %v10171, 2
        %v10173 = vrot.slane %v9662, 7
        %v10174 = vrot.slane %v10173, 2
        %v10175 = vrot.slane %v9664, 7
        %v10176 = vrot.slane %v10175, 2
        %v10241 = vmax.f32 %v9162, %v10050
        %v10242 = vmax.f32 %v9170, %v10052
        %v10243 = vmax.f32 %v9169, %v10054
        %v10244 = vmax.f32 %v9171, %v10056
        %v10245 = vmax.f32 %v9179, %v10058
        %v10246 = vmax.f32 %v9187, %v10060
        %v10247 = vmax.f32 %v9186, %v10062
        %v10248 = vmax.f32 %v9188, %v10064
        %v10249 = vmax.f32 %v9230, %v10066
        %v10250 = vmax.f32 %v9238, %v10068
        %v10251 = vmax.f32 %v9237, %v10070
        %v10252 = vmax.f32 %v9239, %v10072
        %v10253 = vmax.f32 %v9247, %v10074
        %v10254 = vmax.f32 %v9255, %v10076
        %v10255 = vmax.f32 %v9254, %v10078
        %v10256 = vmax.f32 %v9256, %v10080
        %v10257 = vmax.f32 %v9298, %v10082
        %v10258 = vmax.f32 %v9306, %v10084
        %v10259 = vmax.f32 %v9305, %v10086
        %v10260 = vmax.f32 %v9307, %v10088
        %v10261 = vmax.f32 %v9315, %v10090
        %v10262 = vmax.f32 %v9323, %v10092
        %v10263 = vmax.f32 %v9322, %v10094
        %v10264 = vmax.f32 %v9324, %v10096
        %v10265 = vmax.f32 %v9366, %v10098
        %v10266 = vmax.f32 %v9374, %v10100
        %v10267 = vmax.f32 %v9373, %v10102
        %v10268 = vmax.f32 %v9375, %v10104
        %v10269 = vmax.f32 %v9383, %v10106
        %v10270 = vmax.f32 %v9391, %v10108
        %v10271 = vmax.f32 %v9390, %v10110
        %v10272 = vmax.f32 %v9392, %v10112
        %v10273 = vmax.f32 %v9434, %v10114
        %v10274 = vmax.f32 %v9442, %v10116
        %v10275 = vmax.f32 %v9441, %v10118
        %v10276 = vmax.f32 %v9443, %v10120
        %v10277 = vmax.f32 %v9451, %v10122
        %v10278 = vmax.f32 %v9459, %v10124
        %v10279 = vmax.f32 %v9458, %v10126
        %v10280 = vmax.f32 %v9460, %v10128
        %v10281 = vmax.f32 %v9502, %v10130
        %v10282 = vmax.f32 %v9510, %v10132
        %v10283 = vmax.f32 %v9509, %v10134
        %v10284 = vmax.f32 %v9511, %v10136
        %v10285 = vmax.f32 %v9519, %v10138
        %v10286 = vmax.f32 %v9527, %v10140
        %v10287 = vmax.f32 %v9526, %v10142
        %v10288 = vmax.f32 %v9528, %v10144
        %v10289 = vmax.f32 %v9570, %v10146
        %v10290 = vmax.f32 %v9578, %v10148
        %v10291 = vmax.f32 %v9577, %v10150
        %v10292 = vmax.f32 %v9579, %v10152
        %v10293 = vmax.f32 %v9587, %v10154
        %v10294 = vmax.f32 %v9595, %v10156
        %v10295 = vmax.f32 %v9594, %v10158
        %v10296 = vmax.f32 %v9596, %v10160
        %v10297 = vmax.f32 %v9638, %v10162
        %v10298 = vmax.f32 %v9646, %v10164
        %v10299 = vmax.f32 %v9645, %v10166
        %v10300 = vmax.f32 %v9647, %v10168
        %v10301 = vmax.f32 %v9655, %v10170
        %v10302 = vmax.f32 %v9663, %v10172
        %v10303 = vmax.f32 %v9662, %v10174
        %v10304 = vmax.f32 %v9664, %v10176
        %v10305 = vmax.f32 %v9985, %v10241
        %v10306 = vmax.f32 %v9986, %v10242
        %v10307 = vmax.f32 %v9987, %v10243
        %v10308 = vmax.f32 %v9988, %v10244
        %v10309 = vmax.f32 %v9989, %v10245
        %v10310 = vmax.f32 %v9990, %v10246
        %v10311 = vmax.f32 %v9991, %v10247
        %v10312 = vmax.f32 %v9992, %v10248
        %v10313 = vmax.f32 %v9993, %v10249
        %v10314 = vmax.f32 %v9994, %v10250
        %v10315 = vmax.f32 %v9995, %v10251
        %v10316 = vmax.f32 %v9996, %v10252
        %v10317 = vmax.f32 %v9997, %v10253
        %v10318 = vmax.f32 %v9998, %v10254
        %v10319 = vmax.f32 %v9999, %v10255
        %v10320 = vmax.f32 %v10000, %v10256
        %v10321 = vmax.f32 %v10001, %v10257
        %v10322 = vmax.f32 %v10002, %v10258
        %v10323 = vmax.f32 %v10003, %v10259
        %v10324 = vmax.f32 %v10004, %v10260
        %v10325 = vmax.f32 %v10005, %v10261
        %v10326 = vmax.f32 %v10006, %v10262
        %v10327 = vmax.f32 %v10007, %v10263
        %v10328 = vmax.f32 %v10008, %v10264
        %v10329 = vmax.f32 %v10009, %v10265
        %v10330 = vmax.f32 %v10010, %v10266
        %v10331 = vmax.f32 %v10011, %v10267
        %v10332 = vmax.f32 %v10012, %v10268
        %v10333 = vmax.f32 %v10013, %v10269
        %v10334 = vmax.f32 %v10014, %v10270
        %v10335 = vmax.f32 %v10015, %v10271
        %v10336 = vmax.f32 %v10016, %v10272
        %v10337 = vmax.f32 %v10017, %v10273
        %v10338 = vmax.f32 %v10018, %v10274
        %v10339 = vmax.f32 %v10019, %v10275
        %v10340 = vmax.f32 %v10020, %v10276
        %v10341 = vmax.f32 %v10021, %v10277
        %v10342 = vmax.f32 %v10022, %v10278
        %v10343 = vmax.f32 %v10023, %v10279
        %v10344 = vmax.f32 %v10024, %v10280
        %v10345 = vmax.f32 %v10025, %v10281
        %v10346 = vmax.f32 %v10026, %v10282
        %v10347 = vmax.f32 %v10027, %v10283
        %v10348 = vmax.f32 %v10028, %v10284
        %v10349 = vmax.f32 %v10029, %v10285
        %v10350 = vmax.f32 %v10030, %v10286
        %v10351 = vmax.f32 %v10031, %v10287
        %v10352 = vmax.f32 %v10032, %v10288
        %v10353 = vmax.f32 %v10033, %v10289
        %v10354 = vmax.f32 %v10034, %v10290
        %v10355 = vmax.f32 %v10035, %v10291
        %v10356 = vmax.f32 %v10036, %v10292
        %v10357 = vmax.f32 %v10037, %v10293
        %v10358 = vmax.f32 %v10038, %v10294
        %v10359 = vmax.f32 %v10039, %v10295
        %v10360 = vmax.f32 %v10040, %v10296
        %v10361 = vmax.f32 %v10041, %v10297
        %v10362 = vmax.f32 %v10042, %v10298
        %v10363 = vmax.f32 %v10043, %v10299
        %v10364 = vmax.f32 %v10044, %v10300
        %v10365 = vmax.f32 %v10045, %v10301
        %v10366 = vmax.f32 %v10046, %v10302
        %v10367 = vmax.f32 %v10047, %v10303
        %v10368 = vmax.f32 %v10048, %v10304
        %v10433 = vlaneseq
        %v10434 = vshrl.u32 %v10433, 7
        %v10435 = vsub.s32 0, %v10434
        %v10436 = vrot.slane %v10305, %v10435
        %v10437 = vlaneseq
        %v10438 = vshrl.u32 %v10437, 7
        %v10439 = vsub.s32 0, %v10438
        %v10440 = vrot.slane %v10306, %v10439
        %v10441 = vlaneseq
        %v10442 = vshrl.u32 %v10441, 7
        %v10443 = vsub.s32 0, %v10442
        %v10444 = vrot.slane %v10307, %v10443
        %v10445 = vlaneseq
        %v10446 = vshrl.u32 %v10445, 7
        %v10447 = vsub.s32 0, %v10446
        %v10448 = vrot.slane %v10308, %v10447
        %v10449 = vlaneseq
        %v10450 = vshrl.u32 %v10449, 7
        %v10451 = vsub.s32 0, %v10450
        %v10452 = vrot.slane %v10309, %v10451
        %v10453 = vlaneseq
        %v10454 = vshrl.u32 %v10453, 7
        %v10455 = vsub.s32 0, %v10454
        %v10456 = vrot.slane %v10310, %v10455
        %v10457 = vlaneseq
        %v10458 = vshrl.u32 %v10457, 7
        %v10459 = vsub.s32 0, %v10458
        %v10460 = vrot.slane %v10311, %v10459
        %v10461 = vlaneseq
        %v10462 = vshrl.u32 %v10461, 7
        %v10463 = vsub.s32 0, %v10462
        %v10464 = vrot.slane %v10312, %v10463
        %v10465 = vlaneseq
        %v10466 = vshrl.u32 %v10465, 7
        %v10467 = vsub.s32 0, %v10466
        %v10468 = vrot.slane %v10313, %v10467
        %v10469 = vlaneseq
        %v10470 = vshrl.u32 %v10469, 7
        %v10471 = vsub.s32 0, %v10470
        %v10472 = vrot.slane %v10314, %v10471
        %v10473 = vlaneseq
        %v10474 = vshrl.u32 %v10473, 7
        %v10475 = vsub.s32 0, %v10474
        %v10476 = vrot.slane %v10315, %v10475
        %v10477 = vlaneseq
        %v10478 = vshrl.u32 %v10477, 7
        %v10479 = vsub.s32 0, %v10478
        %v10480 = vrot.slane %v10316, %v10479
        %v10481 = vlaneseq
        %v10482 = vshrl.u32 %v10481, 7
        %v10483 = vsub.s32 0, %v10482
        %v10484 = vrot.slane %v10317, %v10483
        %v10485 = vlaneseq
        %v10486 = vshrl.u32 %v10485, 7
        %v10487 = vsub.s32 0, %v10486
        %v10488 = vrot.slane %v10318, %v10487
        %v10489 = vlaneseq
        %v10490 = vshrl.u32 %v10489, 7
        %v10491 = vsub.s32 0, %v10490
        %v10492 = vrot.slane %v10319, %v10491
        %v10493 = vlaneseq
        %v10494 = vshrl.u32 %v10493, 7
        %v10495 = vsub.s32 0, %v10494
        %v10496 = vrot.slane %v10320, %v10495
        %v10497 = vlaneseq
        %v10498 = vshrl.u32 %v10497, 7
        %v10499 = vsub.s32 0, %v10498
        %v10500 = vrot.slane %v10321, %v10499
        %v10501 = vlaneseq
        %v10502 = vshrl.u32 %v10501, 7
        %v10503 = vsub.s32 0, %v10502
        %v10504 = vrot.slane %v10322, %v10503
        %v10505 = vlaneseq
        %v10506 = vshrl.u32 %v10505, 7
        %v10507 = vsub.s32 0, %v10506
        %v10508 = vrot.slane %v10323, %v10507
        %v10509 = vlaneseq
        %v10510 = vshrl.u32 %v10509, 7
        %v10511 = vsub.s32 0, %v10510
        %v10512 = vrot.slane %v10324, %v10511
        %v10513 = vlaneseq
        %v10514 = vshrl.u32 %v10513, 7
        %v10515 = vsub.s32 0, %v10514
        %v10516 = vrot.slane %v10325, %v10515
        %v10517 = vlaneseq
        %v10518 = vshrl.u32 %v10517, 7
        %v10519 = vsub.s32 0, %v10518
        %v10520 = vrot.slane %v10326, %v10519
        %v10521 = vlaneseq
        %v10522 = vshrl.u32 %v10521, 7
        %v10523 = vsub.s32 0, %v10522
        %v10524 = vrot.slane %v10327, %v10523
        %v10525 = vlaneseq
        %v10526 = vshrl.u32 %v10525, 7
        %v10527 = vsub.s32 0, %v10526
        %v10528 = vrot.slane %v10328, %v10527
        %v10529 = vlaneseq
        %v10530 = vshrl.u32 %v10529, 7
        %v10531 = vsub.s32 0, %v10530
        %v10532 = vrot.slane %v10329, %v10531
        %v10533 = vlaneseq
        %v10534 = vshrl.u32 %v10533, 7
        %v10535 = vsub.s32 0, %v10534
        %v10536 = vrot.slane %v10330, %v10535
        %v10537 = vlaneseq
        %v10538 = vshrl.u32 %v10537, 7
        %v10539 = vsub.s32 0, %v10538
        %v10540 = vrot.slane %v10331, %v10539
        %v10541 = vlaneseq
        %v10542 = vshrl.u32 %v10541, 7
        %v10543 = vsub.s32 0, %v10542
        %v10544 = vrot.slane %v10332, %v10543
        %v10545 = vlaneseq
        %v10546 = vshrl.u32 %v10545, 7
        %v10547 = vsub.s32 0, %v10546
        %v10548 = vrot.slane %v10333, %v10547
        %v10549 = vlaneseq
        %v10550 = vshrl.u32 %v10549, 7
        %v10551 = vsub.s32 0, %v10550
        %v10552 = vrot.slane %v10334, %v10551
        %v10553 = vlaneseq
        %v10554 = vshrl.u32 %v10553, 7
        %v10555 = vsub.s32 0, %v10554
        %v10556 = vrot.slane %v10335, %v10555
        %v10557 = vlaneseq
        %v10558 = vshrl.u32 %v10557, 7
        %v10559 = vsub.s32 0, %v10558
        %v10560 = vrot.slane %v10336, %v10559
        %v10561 = vlaneseq
        %v10562 = vshrl.u32 %v10561, 7
        %v10563 = vsub.s32 0, %v10562
        %v10564 = vrot.slane %v10337, %v10563
        %v10565 = vlaneseq
        %v10566 = vshrl.u32 %v10565, 7
        %v10567 = vsub.s32 0, %v10566
        %v10568 = vrot.slane %v10338, %v10567
        %v10569 = vlaneseq
        %v10570 = vshrl.u32 %v10569, 7
        %v10571 = vsub.s32 0, %v10570
        %v10572 = vrot.slane %v10339, %v10571
        %v10573 = vlaneseq
        %v10574 = vshrl.u32 %v10573, 7
        %v10575 = vsub.s32 0, %v10574
        %v10576 = vrot.slane %v10340, %v10575
        %v10577 = vlaneseq
        %v10578 = vshrl.u32 %v10577, 7
        %v10579 = vsub.s32 0, %v10578
        %v10580 = vrot.slane %v10341, %v10579
        %v10581 = vlaneseq
        %v10582 = vshrl.u32 %v10581, 7
        %v10583 = vsub.s32 0, %v10582
        %v10584 = vrot.slane %v10342, %v10583
        %v10585 = vlaneseq
        %v10586 = vshrl.u32 %v10585, 7
        %v10587 = vsub.s32 0, %v10586
        %v10588 = vrot.slane %v10343, %v10587
        %v10589 = vlaneseq
        %v10590 = vshrl.u32 %v10589, 7
        %v10591 = vsub.s32 0, %v10590
        %v10592 = vrot.slane %v10344, %v10591
        %v10593 = vlaneseq
        %v10594 = vshrl.u32 %v10593, 7
        %v10595 = vsub.s32 0, %v10594
        %v10596 = vrot.slane %v10345, %v10595
        %v10597 = vlaneseq
        %v10598 = vshrl.u32 %v10597, 7
        %v10599 = vsub.s32 0, %v10598
        %v10600 = vrot.slane %v10346, %v10599
        %v10601 = vlaneseq
        %v10602 = vshrl.u32 %v10601, 7
        %v10603 = vsub.s32 0, %v10602
        %v10604 = vrot.slane %v10347, %v10603
        %v10605 = vlaneseq
        %v10606 = vshrl.u32 %v10605, 7
        %v10607 = vsub.s32 0, %v10606
        %v10608 = vrot.slane %v10348, %v10607
        %v10609 = vlaneseq
        %v10610 = vshrl.u32 %v10609, 7
        %v10611 = vsub.s32 0, %v10610
        %v10612 = vrot.slane %v10349, %v10611
        %v10613 = vlaneseq
        %v10614 = vshrl.u32 %v10613, 7
        %v10615 = vsub.s32 0, %v10614
        %v10616 = vrot.slane %v10350, %v10615
        %v10617 = vlaneseq
        %v10618 = vshrl.u32 %v10617, 7
        %v10619 = vsub.s32 0, %v10618
        %v10620 = vrot.slane %v10351, %v10619
        %v10621 = vlaneseq
        %v10622 = vshrl.u32 %v10621, 7
        %v10623 = vsub.s32 0, %v10622
        %v10624 = vrot.slane %v10352, %v10623
        %v10625 = vlaneseq
        %v10626 = vshrl.u32 %v10625, 7
        %v10627 = vsub.s32 0, %v10626
        %v10628 = vrot.slane %v10353, %v10627
        %v10629 = vlaneseq
        %v10630 = vshrl.u32 %v10629, 7
        %v10631 = vsub.s32 0, %v10630
        %v10632 = vrot.slane %v10354, %v10631
        %v10633 = vlaneseq
        %v10634 = vshrl.u32 %v10633, 7
        %v10635 = vsub.s32 0, %v10634
        %v10636 = vrot.slane %v10355, %v10635
        %v10637 = vlaneseq
        %v10638 = vshrl.u32 %v10637, 7
        %v10639 = vsub.s32 0, %v10638
        %v10640 = vrot.slane %v10356, %v10639
        %v10641 = vlaneseq
        %v10642 = vshrl.u32 %v10641, 7
        %v10643 = vsub.s32 0, %v10642
        %v10644 = vrot.slane %v10357, %v10643
        %v10645 = vlaneseq
        %v10646 = vshrl.u32 %v10645, 7
        %v10647 = vsub.s32 0, %v10646
        %v10648 = vrot.slane %v10358, %v10647
        %v10649 = vlaneseq
        %v10650 = vshrl.u32 %v10649, 7
        %v10651 = vsub.s32 0, %v10650
        %v10652 = vrot.slane %v10359, %v10651
        %v10653 = vlaneseq
        %v10654 = vshrl.u32 %v10653, 7
        %v10655 = vsub.s32 0, %v10654
        %v10656 = vrot.slane %v10360, %v10655
        %v10657 = vlaneseq
        %v10658 = vshrl.u32 %v10657, 7
        %v10659 = vsub.s32 0, %v10658
        %v10660 = vrot.slane %v10361, %v10659
        %v10661 = vlaneseq
        %v10662 = vshrl.u32 %v10661, 7
        %v10663 = vsub.s32 0, %v10662
        %v10664 = vrot.slane %v10362, %v10663
        %v10665 = vlaneseq
        %v10666 = vshrl.u32 %v10665, 7
        %v10667 = vsub.s32 0, %v10666
        %v10668 = vrot.slane %v10363, %v10667
        %v10669 = vlaneseq
        %v10670 = vshrl.u32 %v10669, 7
        %v10671 = vsub.s32 0, %v10670
        %v10672 = vrot.slane %v10364, %v10671
        %v10673 = vlaneseq
        %v10674 = vshrl.u32 %v10673, 7
        %v10675 = vsub.s32 0, %v10674
        %v10676 = vrot.slane %v10365, %v10675
        %v10677 = vlaneseq
        %v10678 = vshrl.u32 %v10677, 7
        %v10679 = vsub.s32 0, %v10678
        %v10680 = vrot.slane %v10366, %v10679
        %v10681 = vlaneseq
        %v10682 = vshrl.u32 %v10681, 7
        %v10683 = vsub.s32 0, %v10682
        %v10684 = vrot.slane %v10367, %v10683
        %v10685 = vlaneseq
        %v10686 = vshrl.u32 %v10685, 7
        %v10687 = vsub.s32 0, %v10686
        %v10688 = vrot.slane %v10368, %v10687
        %vm10689 = vcmask 1041409
        %v10690 = vsel %vm10689, %v10440, %v10436
        %vm10691 = vcmask 1042434
        %v10692 = vsel %vm10691, %v10444, %v10690
        %vm10693 = vcmask 1043459
        %v10694 = vsel %vm10693, %v10448, %v10692
        %vm10695 = vcmask 1044484
        %v10696 = vsel %vm10695, %v10452, %v10694
        %vm10697 = vcmask 1045509
        %v10698 = vsel %vm10697, %v10456, %v10696
        %vm10699 = vcmask 1046534
        %v10700 = vsel %vm10699, %v10460, %v10698
        %vm10701 = vcmask 1047559
        %v10702 = vsel %vm10701, %v10464, %v10700
        %v10703 = vsel %vm10689, %v10472, %v10468
        %v10704 = vsel %vm10691, %v10476, %v10703
        %v10705 = vsel %vm10693, %v10480, %v10704
        %v10706 = vsel %vm10695, %v10484, %v10705
        %v10707 = vsel %vm10697, %v10488, %v10706
        %v10708 = vsel %vm10699, %v10492, %v10707
        %v10709 = vsel %vm10701, %v10496, %v10708
        %v10710 = vsel %vm10689, %v10504, %v10500
        %v10711 = vsel %vm10691, %v10508, %v10710
        %v10712 = vsel %vm10693, %v10512, %v10711
        %v10713 = vsel %vm10695, %v10516, %v10712
        %v10714 = vsel %vm10697, %v10520, %v10713
        %v10715 = vsel %vm10699, %v10524, %v10714
        %v10716 = vsel %vm10701, %v10528, %v10715
        %v10717 = vsel %vm10689, %v10536, %v10532
        %v10718 = vsel %vm10691, %v10540, %v10717
        %v10719 = vsel %vm10693, %v10544, %v10718
        %v10720 = vsel %vm10695, %v10548, %v10719
        %v10721 = vsel %vm10697, %v10552, %v10720
        %v10722 = vsel %vm10699, %v10556, %v10721
        %v10723 = vsel %vm10701, %v10560, %v10722
        %v10724 = vsel %vm10689, %v10568, %v10564
        %v10725 = vsel %vm10691, %v10572, %v10724
        %v10726 = vsel %vm10693, %v10576, %v10725
        %v10727 = vsel %vm10695, %v10580, %v10726
        %v10728 = vsel %vm10697, %v10584, %v10727
        %v10729 = vsel %vm10699, %v10588, %v10728
        %v10730 = vsel %vm10701, %v10592, %v10729
        %v10731 = vsel %vm10689, %v10600, %v10596
        %v10732 = vsel %vm10691, %v10604, %v10731
        %v10733 = vsel %vm10693, %v10608, %v10732
        %v10734 = vsel %vm10695, %v10612, %v10733
        %v10735 = vsel %vm10697, %v10616, %v10734
        %v10736 = vsel %vm10699, %v10620, %v10735
        %v10737 = vsel %vm10701, %v10624, %v10736
        %v10738 = vsel %vm10689, %v10632, %v10628
        %v10739 = vsel %vm10691, %v10636, %v10738
        %v10740 = vsel %vm10693, %v10640, %v10739
        %v10741 = vsel %vm10695, %v10644, %v10740
        %v10742 = vsel %vm10697, %v10648, %v10741
        %v10743 = vsel %vm10699, %v10652, %v10742
        %v10744 = vsel %vm10701, %v10656, %v10743
        %v10745 = vsel %vm10689, %v10664, %v10660
        %v10746 = vsel %vm10691, %v10668, %v10745
        %v10747 = vsel %vm10693, %v10672, %v10746
        %v10748 = vsel %vm10695, %v10676, %v10747
        %v10749 = vsel %vm10697, %v10680, %v10748
        %v10750 = vsel %vm10699, %v10684, %v10749
        %v10751 = vsel %vm10701, %v10688, %v10750
        %10760 = vxpose.xlu0.b32.start [1/16] %v10702, 128
        %10761 = vxpose.xlu0.b32.cont [2/16] %v10709, 128
        %10762 = vxpose.xlu0.b32.cont [3/16] %v10716, 128
        %10763 = vxpose.xlu0.b32.cont [4/16] %v10723, 128
        %10764 = vxpose.xlu0.b32.cont [5/16] %v10730, 128
        %10765 = vxpose.xlu0.b32.cont [6/16] %v10737, 128
        %10766 = vxpose.xlu0.b32.cont [7/16] %v10744, 128
        %10767 = vxpose.xlu0.b32.cont [8/16] %v10751, 128
        %10768 = vxpose.xlu0.b32.cont [9/16] 0.0, 128
        %10769 = vxpose.xlu0.b32.cont [10/16] 0.0, 128
        %10770 = vxpose.xlu0.b32.cont [11/16] 0.0, 128
        %10771 = vxpose.xlu0.b32.cont [12/16] 0.0, 128
        %10772 = vxpose.xlu0.b32.cont [13/16] 0.0, 128
        %10773 = vxpose.xlu0.b32.cont [14/16] 0.0, 128
        %10774 = vxpose.xlu0.b32.cont [15/16] 0.0, 128
        %10775 = vxpose.xlu0.b32.end [16/16] 0.0, 128
        %v10776 = vpop.trf.xlu0
        %v10777 = vpop.trf.xlu0
        %v10778 = vpop.trf.xlu0
        %v10779 = vpop.trf.xlu0
        %v10780 = vpop.trf.xlu0
        %v10781 = vpop.trf.xlu0
        %v10782 = vpop.trf.xlu0
        %v10783 = vpop.trf.xlu0
        %v10784 = vpop.trf.xlu0
        %v10785 = vpop.trf.xlu0
        %v10786 = vpop.trf.xlu0
        %v10787 = vpop.trf.xlu0
        %v10788 = vpop.trf.xlu0
        %v10789 = vpop.trf.xlu0
        %v10790 = vpop.trf.xlu0
        %v10791 = vpop.trf.xlu0
        %10792 = vst.msk [vmem:[%s455] sm:$0xff] %vm8062, %v10776
        %10793 = vst.msk [vmem:[%s455 + $0x8] sm:$0xff] %vm8062, %v10777
        %10794 = vst.msk [vmem:[%s455 + $0x10] sm:$0xff] %vm8062, %v10778
        %10795 = vst.msk [vmem:[%s455 + $0x18] sm:$0xff] %vm8062, %v10779
        %s10796 = sand.u32 %s301, 1
        %s10797 = scalar_lea.sflag [#allocation5], %s10796
        %s10798 = sand.u32 %s301, 1
        %s10799 = smul.addr %s10798, 64
        %s10800 = scalar_lea.vmem [#allocation4], %s10799
        %s10801 = sand.u32 %s327, 1
        %s10802 = scalar_lea.sflag [#allocation7], %s10801
        %s10803 = sand.u32 %s327, 1
        %s10804 = smul.addr %s10803, 32
        %s10805 = scalar_lea.vmem [#allocation6], %s10804
        // Predicated region
        $region69: #{tpu_custom_call.1} parent=67 // pred_check
          %p10806 = pneg %p311
        $region70: #{tpu_custom_call.1} parent=67 // pred_check_branch
          %10808 = sbr.rel (%p10806) target = $region72
        $region71: #{tpu_custom_call.1} parent=67 // pred_region
          %s10810 = ssub.s32 1024, 1024
          %10811 = vsyncadd %s10797, %s10810
          %s10812 = smul.addr %s31, 8
          %s10813 = smul.addr %s10812, 128
          %s10814 = scalar_lea.hbm %s12, %s10813
          %s10815 = sshll.u32 %s10800, 4
          %s10816 = int_to_ptr.vmem [resolvable:$true] %s10815
          %10821 = dma.vmem_to_hbm [thread:$0]  %s10816, 1024, %s10814, %s10797, 256, 256, 16
        $region72: #{tpu_custom_call.1} parent=67 // pred_fallthru
          _
        // Predicated region
        $region73: #{tpu_custom_call.1} parent=67 // pred_check
          %p10822 = pneg %p337
        $region74: #{tpu_custom_call.1} parent=67 // pred_check_branch
          %10824 = sbr.rel (%p10822) target = $region76
        $region75: #{tpu_custom_call.1} parent=67 // pred_region
          %s10826 = ssub.s32 512, 512
          %10827 = vsyncadd %s10802, %s10826
          %s10828 = smul.addr %s31, 4
          %s10829 = smul.addr %s10828, 128
          %s10830 = scalar_lea.hbm %s13, %s10829
          %s10831 = sshll.u32 %s10805, 4
          %s10832 = int_to_ptr.vmem [resolvable:$true] %s10831
          %10837 = dma.vmem_to_hbm [thread:$0]  %s10832, 512, %s10830, %s10802, 128, 128, 8
        $region76: #{tpu_custom_call.1} parent=67 // pred_fallthru
          _
      $region68: #{tpu_custom_call.1} parent=5 // pred_fallthru
        _
      %p10838 = scmp.le.s32.totalorder 2, %s26
      // Predicated region
      $region77: #{tpu_custom_call.1} parent=5 // pred_check
        %p10839 = pneg %p10838
      $region78: #{tpu_custom_call.1} parent=5 // pred_check_branch
        %10841 = sbr.rel (%p10839) target = $region80
      $region79: #{tpu_custom_call.1} parent=5 // pred_region
        %s10842 = ssub.s32 %s26, 2
        // Predicated region
        $region81: #{tpu_custom_call.1} parent=79 // pred_check
          %p10843 = pneg %p317
        $region82: #{tpu_custom_call.1} parent=79 // pred_check_branch
          %10845 = sbr.rel (%p10843) target = $region84
        $region83: #{tpu_custom_call.1} parent=79 // pred_region
          %s10846 = sand.u32 %s302, 1
          %s10847 = scalar_lea.sflag [#allocation5], %s10846
          %s10848 = sand.u32 %s302, 1
          %s10849 = smul.addr %s10848, 64
          %s10850 = scalar_lea.vmem [#allocation4], %s10849
          %10851 = dma.done %s10847, 1024
        $region84: #{tpu_custom_call.1} parent=79 // pred_fallthru
          _
        // Predicated region
        $region85: #{tpu_custom_call.1} parent=79 // pred_check
          %p10852 = pneg %p343
        $region86: #{tpu_custom_call.1} parent=79 // pred_check_branch
          %10854 = sbr.rel (%p10852) target = $region88
        $region87: #{tpu_custom_call.1} parent=79 // pred_region
          %s10855 = sand.u32 %s328, 1
          %s10856 = scalar_lea.sflag [#allocation7], %s10855
          %s10857 = sand.u32 %s328, 1
          %s10858 = smul.addr %s10857, 32
          %s10859 = scalar_lea.vmem [#allocation6], %s10858
          %10860 = dma.done %s10856, 512
        $region88: #{tpu_custom_call.1} parent=79 // pred_fallthru
          _
      $region80: #{tpu_custom_call.1} parent=5 // pred_fallthru
        _
    $region6: #{tpu_custom_call.1} parent=1 // loop_footer
      %s30 = sadd.s32 1, %s26
    $region7: #{tpu_custom_call.1} parent=1 // loop_footer_branch
      %25 = sbr.rel target = $region3
    $region8: #{tpu_custom_call.1} parent=1 // loop_exit
      _
    %10861 = vsyncpa [#allocation5], 1
    %s10862 = scalar_lea.sflag [#allocation5], 1
    %10863 = vsyncpa %s10862, 1
    %10864 = vsyncpa [#allocation7], 1
    %s10865 = scalar_lea.sflag [#allocation7], 1
    %10866 = vsyncpa %s10865, 1

</llo_original>
